<compile_context>
chip_gen: v5e
topology: v5e:2x2
jax: 0.10.0
libtpu: 0.0.40
codegen_flags: <defaults>
</compile_context>

<pallas_src>
import math

import jax
import jax.numpy as jnp
from jax.experimental import pallas as pl
from jax.experimental.pallas import tpu as pltpu

# Safe scoped-VMEM request on v5e / v6e / v7x (<= every generation's physical budget).
VMEM_LIMIT = 32 * 1024 * 1024


def _round_up(x, m):
    return (x + m - 1) // m * m


# ------------------------------- Pallas kernels -------------------------------

def _bn_psum_kernel(x_ref, psum_ref):
    """Per-row-tile partial sums for BatchNorm statistics.  Each grid step writes its
    own (1, 2, C) block ('parallel'-safe); a tiny XLA reduction combines them."""
    x = x_ref[...].astype(jnp.float32)
    psum_ref[0, 0:1, :] = jnp.sum(x, axis=0, keepdims=True)
    psum_ref[0, 1:2, :] = jnp.sum(x * x, axis=0, keepdims=True)


def _make_conv_kernel(*, kh, kw, pad_t, pad_l, h_in, w_in, c_in, c_out, c_short,
                      compute_shortcut, add_residual):
    """Fused  BN-apply+ReLU -> in-kernel im2col -> k*k accumulated MXU dots
    [-> 1x1 projection-shortcut dot] [-> residual add] -> bf16 store
    -> BN partial sums for the BatchNorm that consumes this conv's output.

    One image per grid step (grid=(N,), 'parallel').  The halo-padded activation lives
    in a bf16 VMEM scratch; the halo is re-zeroed every step (megacore-safe) so the
    conv's zero padding is exact (padding is never BN-shifted)."""
    ho, wo = h_in, w_in   # stride-1 'same' output (strided convs are space-to-depth'd)

    def kernel(*refs):
        it = iter(refs)
        x_ref = next(it)
        ss_ref = next(it)
        w_ref = next(it)
        ws_ref = next(it) if compute_shortcut else None
        r_ref = next(it) if add_residual else None
        o_ref = next(it)
        res_ref = next(it) if compute_shortcut else None
        psum_ref = next(it)
        a_pad = next(it)

        # ---- BN (scale/shift, f32 math) + ReLU into the zero halo-padded VMEM tile ----
        a_pad[...] = jnp.zeros_like(a_pad)
        scale = ss_ref[0:1, :].reshape(1, 1, c_in)
        shift = ss_ref[1:2, :].reshape(1, 1, c_in)
        x = x_ref[0].astype(jnp.float32)
        a = jnp.maximum(x * scale + shift, 0.0)
        a_pad[pad_t:pad_t + h_in, pad_l:pad_l + w_in, :] = a.astype(a_pad.dtype)

        # ---- in-kernel im2col: k*k shifted unit-stride taps, accumulated MXU dots ----
        acc = jnp.zeros((ho * wo, c_out), jnp.float32)
        for dy in range(kh):
            for dx in range(kw):
                tap = a_pad[dy:dy + ho, dx:dx + wo, :].reshape(ho * wo, c_in)
                acc = acc + jnp.dot(tap, w_ref[dy * kw + dx],
                                    preferred_element_type=jnp.float32)

        # ---- 1x1 projection shortcut: one narrow dot on the centre tap (channels of
        #      the (0,0) polyphase group for space-to-depth'd strided convs) ----
        if compute_shortcut:
            ctr = a_pad[kh // 2:kh // 2 + ho, kw // 2:kw // 2 + wo, :c_short]
            r = jnp.dot(ctr.reshape(ho * wo, c_short), ws_ref[...],
                        preferred_element_type=jnp.float32)
            res_ref[0] = r.reshape(ho, wo, c_out).astype(res_ref.dtype)

        if add_residual:
            acc = acc + r_ref[0].reshape(ho * wo, c_out).astype(jnp.float32)

        o_ref[0] = acc.reshape(ho, wo, c_out).astype(o_ref.dtype)

        # ---- BN partial sums over this conv's output (on the f32 accumulator) ----
        psum_ref[0, 0:1, :] = jnp.sum(acc, axis=0, keepdims=True)
        psum_ref[0, 1:2, :] = jnp.sum(acc * acc, axis=0, keepdims=True)

    return kernel


# ------------------------------ Pallas wrappers -------------------------------

def bn_partial_sums_pallas(x_rows):
    """Row-tiled per-tile (sum, sum-of-squares) of a (R, C) slab -> (G, 2, C) f32."""
    rows, c = x_rows.shape
    tr = min(1024, _round_up(rows, 8))
    rows_p = _round_up(rows, tr)
    if rows_p != rows:
        # Zero pad rows don't change the sums; the caller divides by the true row count.
        x_rows = jnp.pad(x_rows, ((0, rows_p - rows), (0, 0)))
    grid = rows_p // tr
    return pl.pallas_call(
        _bn_psum_kernel,
        out_shape=jax.ShapeDtypeStruct((grid, 2, c), jnp.float32),
        grid=(grid,),
        in_specs=[pl.BlockSpec((tr, c), lambda i: (i, 0))],
        out_specs=pl.BlockSpec((1, 2, c), lambda i: (i, 0, 0)),
        compiler_params=pltpu.CompilerParams(dimension_semantics=("parallel",),
                                             vmem_limit_bytes=VMEM_LIMIT),
    )(x_rows)


def conv_bn_pallas(x, ss, w_flat, *, kh, kw, ws=None, c_short=0, residual=None,
                   out_dtype=jnp.bfloat16):
    """Fused BN-apply+ReLU + kxk 'same' stride-1 conv (+ optional 1x1 projection
    shortcut, + optional residual add) with BN partial sums of the output.

    x: (N, H, W, Cin) NHWC (pre-BN);  ss: (2, Cin) f32 scale/shift of the preceding BN;
    w_flat: (kh*kw, Cin, Cout) bf16;  ws: optional (c_short, Cout) shortcut weight;
    residual: optional (N, H, W, Cout) added to the conv output.
    Returns (out[, shortcut_out], bn_partial_sums)."""
    n, h_in, w_in, c_in = x.shape
    kk, c_in_w, c_out = w_flat.shape
    assert kk == kh * kw and c_in_w == c_in
    pad_t = pad_l = 1
    ho, wo = h_in, w_in
    hp, wp = h_in + kh - 1, w_in + kw - 1
    compute_shortcut = ws is not None
    add_residual = residual is not None

    kernel = _make_conv_kernel(
        kh=kh, kw=kw, pad_t=pad_t, pad_l=pad_l, h_in=h_in, w_in=w_in,
        c_in=c_in, c_out=c_out, c_short=c_short,
        compute_shortcut=compute_shortcut, add_residual=add_residual)

    # TODO(synk): request single-buffering (pipeline_mode=pl.Buffered(1)) for the
    #             grid-invariant weight / scale-shift blocks once plumbed for
    #             pallas_call, to reclaim their second VMEM buffer at WRN widths.
    in_specs = [
        pl.BlockSpec((1, h_in, w_in, c_in), lambda i: (i, 0, 0, 0)),
        pl.BlockSpec((2, c_in), lambda i: (0, 0)),
        pl.BlockSpec((kk, c_in, c_out), lambda i: (0, 0, 0)),
    ]
    args = [x, ss, w_flat]
    if compute_shortcut:
        in_specs.append(pl.BlockSpec((c_short, c_out), lambda i: (0, 0)))
        args.append(ws)
    if add_residual:
        in_specs.append(pl.BlockSpec((1, ho, wo, c_out), lambda i: (i, 0, 0, 0)))
        args.append(residual)

    out_shape = [jax.ShapeDtypeStruct((n, ho, wo, c_out), out_dtype)]
    out_specs = [pl.BlockSpec((1, ho, wo, c_out), lambda i: (i, 0, 0, 0))]
    if compute_shortcut:
        out_shape.append(jax.ShapeDtypeStruct((n, ho, wo, c_out), jnp.bfloat16))
        out_specs.append(pl.BlockSpec((1, ho, wo, c_out), lambda i: (i, 0, 0, 0)))
    out_shape.append(jax.ShapeDtypeStruct((n, 2, c_out), jnp.float32))
    out_specs.append(pl.BlockSpec((1, 2, c_out), lambda i: (i, 0, 0)))

    flops = 2 * n * ho * wo * c_out * (kk * c_in + (c_short if compute_shortcut else 0))
    bytes_acc = sum(int(a.size) * a.dtype.itemsize for a in args)
    bytes_acc += sum(math.prod(o.shape) * jnp.dtype(o.dtype).itemsize for o in out_shape)

    return pl.pallas_call(
        kernel,
        out_shape=tuple(out_shape),
        grid=(n,),
        in_specs=in_specs,
        out_specs=tuple(out_specs),
        scratch_shapes=[pltpu.VMEM((hp, wp, c_in), jnp.bfloat16)],
        compiler_params=pltpu.CompilerParams(dimension_semantics=("parallel",),
                                             vmem_limit_bytes=VMEM_LIMIT),
        cost_estimate=pl.CostEstimate(flops=flops, transcendentals=0,
                                      bytes_accessed=bytes_acc),
    )(*args)


# ------------------------------ XLA-side glue ---------------------------------

def _bn_scale_shift(psum, gamma, beta, count, eps):
    """Combine per-tile partial sums into per-channel scale/shift (biased variance)."""
    s = jnp.sum(psum, axis=0)                       # (2, C) f32
    mean = s[0] / count
    var = s[1] / count - mean * mean
    scale = gamma.astype(jnp.float32) * jax.lax.rsqrt(var + eps)
    shift = beta.astype(jnp.float32) - mean * scale
    return jnp.stack([scale, shift], axis=0)        # (2, C) f32


def _space_to_depth(x):
    """(N, H, W, C) -> (N, H/2, W/2, 4C); channel group g = 2*py + px holds polyphase
    (py, px) of the 2x2 decomposition."""
    n, h, w, c = x.shape
    x = x.reshape(n, h // 2, 2, w // 2, 2, c)
    x = jnp.transpose(x, (0, 1, 3, 2, 4, 5))
    return x.reshape(n, h // 2, w // 2, 4 * c)


def _weight_space_to_depth(w):
    """Rearrange a (3,3,C,Co) stride-2 pad-1 conv weight into the equivalent
    (2,2,4C,Co) stride-1 weight acting on the space-to-depth input (pad top/left = 1)."""
    _, _, c, co = w.shape
    out = jnp.zeros((2, 2, 4 * c, co), w.dtype)
    for dy in range(3):
        py, wy = (dy - 1) % 2, (dy + 1) // 2
        for dx in range(3):
            px, wx = (dx - 1) % 2, (dx + 1) // 2
            g = 2 * py + px
            out = out.at[wy, wx, g * c:(g + 1) * c, :].set(w[dy, dx])
    return out


# ------------------------- module forward (Pallas path) -----------------------

def wrn_basic_block_forward(x, ss1, p, stride, eps):
    """One pre-activation WRN basic block.  x: (N,H,W,Cin) NHWC; ss1: (2,Cin) f32
    scale/shift of this block's bn1.  Returns (y, psum_y): y (N,Ho,Wo,Cout) bf16 plus
    per-image partial sums of y for the next block's bn1."""
    n, h, w, c_in = x.shape
    c_out = p["w1"].shape[3]
    has_short = "ws" in p

    if stride == 1:
        xc, ssc = x, ss1
        w1 = p["w1"].reshape(9, c_in, c_out)
        kh = kw = 3
    else:
        # stride-2 3x3 conv == stride-1 2x2 conv on the space-to-depth input, keeping the
        # kernel free of strided slicing.  TODO(synk): only stride in {1, 2} supported.
        assert stride == 2 and h % 2 == 0 and w % 2 == 0
        xc = _space_to_depth(x)
        ssc = jnp.tile(ss1, (1, 4))
        w1 = _weight_space_to_depth(p["w1"]).reshape(4, 4 * c_in, c_out)
        kh = kw = 2
    w1 = w1.astype(jnp.bfloat16)
    ws = p["ws"].reshape(c_in, c_out).astype(jnp.bfloat16) if has_short else None

    # conv1 (+ fused bn1-apply/relu, + projection shortcut, + bn2 partial sums)
    outs = conv_bn_pallas(xc, ssc, w1, kh=kh, kw=kw, ws=ws, c_short=c_in)
    if has_short:
        h1, res, psum_h = outs
    else:
        h1, psum_h = outs
        res = x                       # identity shortcut (stride 1, Cin == Cout)
    ho, wo = h1.shape[1], h1.shape[2]

    # conv2 (+ fused bn2-apply/relu, + residual add, + next bn1 partial sums)
    ss2 = _bn_scale_shift(psum_h, p["g2"], p["b2"], n * ho * wo, eps)
    w2 = p["w2"].reshape(9, c_out, c_out).astype(jnp.bfloat16)
    y, psum_y = conv_bn_pallas(h1, ss2, w2, kh=3, kw=3, residual=res)
    return y, psum_y


def wrn_network_block_forward(x_nchw, params, stride, eps):
    x = jnp.transpose(x_nchw, (0, 2, 3, 1))          # NCHW -> NHWC (channels on lanes)
    n, h, w, c = x.shape
    # bn1 of the first block has no producing conv -> standalone partial-sum pass.
    psum = bn_partial_sums_pallas(x.reshape(n * h * w, c))
    ss_next = _bn_scale_shift(psum, params[0]["g1"], params[0]["b1"], n * h * w, eps)
    for layer, p in enumerate(params):
        s = stride if layer == 0 else 1
        x, psum = wrn_basic_block_forward(x, ss_next, p, s, eps)
        if layer + 1 < len(params):
            nxt = params[layer + 1]
            rows = x.shape[0] * x.shape[1] * x.shape[2]
            ss_next = _bn_scale_shift(psum, nxt["g1"], nxt["b1"], rows, eps)
    return jnp.transpose(x, (0, 3, 1, 2)).astype(jnp.float32)   # NHWC -> NCHW


# ----------------------------- pure-JAX reference -----------------------------

def _conv_ref(x, w, stride, padding):
    return jax.lax.conv_general_dilated(
        x, w, (stride, stride), [(padding, padding), (padding, padding)],
        dimension_numbers=("NHWC", "HWIO", "NHWC"),
        precision=jax.lax.Precision.HIGHEST,
    )


def _bn_relu_ref(x, g, b, eps):
    m = x.mean(axis=(0, 1, 2), keepdims=True)
    v = jnp.square(x - m).mean(axis=(0, 1, 2), keepdims=True)
    y = (x - m) * jax.lax.rsqrt(v + eps) * g.reshape(1, 1, 1, -1) + b.reshape(1, 1, 1, -1)
    return jnp.maximum(y, 0.0)


def wrn_network_block_ref(x_nchw, params, stride, eps):
    x = jnp.transpose(x_nchw, (0, 2, 3, 1))
    for layer, p in enumerate(params):
        s = stride if layer == 0 else 1
        a = _bn_relu_ref(x, p["g1"], p["b1"], eps)
        h = _conv_ref(a, p["w1"], s, 1)
        h = _bn_relu_ref(h, p["g2"], p["b2"], eps)
        h = _conv_ref(h, p["w2"], 1, 1)
        res = _conv_ref(a, p["ws"], s, 0) if "ws" in p else x
        x = res + h
    return jnp.transpose(x, (0, 3, 1, 2))


# ------------------------------- parameter init -------------------------------

def init_params(key, nb_layers, in_planes, out_planes, stride):
    params = []
    for layer in range(nb_layers):
        cin = in_planes if layer == 0 else out_planes
        s = stride if layer == 0 else 1
        key, *ks = jax.random.split(key, 8)
        p = {
            "g1": 1.0 + 0.1 * jax.random.normal(ks[0], (cin,), jnp.float32),
            "b1": 0.1 * jax.random.normal(ks[1], (cin,), jnp.float32),
            "w1": 0.2 * jax.random.normal(ks[2], (3, 3, cin, out_planes), jnp.float32),
            "g2": 1.0 + 0.1 * jax.random.normal(ks[3], (out_planes,), jnp.float32),
            "b2": 0.1 * jax.random.normal(ks[4], (out_planes,), jnp.float32),
            "w2": 0.2 * jax.random.normal(ks[5], (3, 3, out_planes, out_planes), jnp.float32),
        }
        use_identity = (cin == out_planes) and (s == 1)
        if not use_identity:
            p["ws"] = 0.2 * jax.random.normal(ks[6], (1, 1, cin, out_planes), jnp.float32)
        params.append(p)
    return params


# ------------------------------------ main -------------------------------------

if __name__ == "__main__":
    nb_layers, in_planes, out_planes, stride, eps = 2, 4, 8, 2, 1e-5
    key = jax.random.PRNGKey(0)
    kx, kp = jax.random.split(key)
    x = jax.random.normal(kx, (2, in_planes, 16, 16), jnp.float32)   # NCHW input
    params = init_params(kp, nb_layers, in_planes, out_planes, stride)

    fwd = jax.jit(lambda xx, pp: wrn_network_block_forward(xx, pp, stride, eps))
    out = jax.block_until_ready(fwd(x, params))

    ref = jax.block_until_ready(wrn_network_block_ref(x, params, stride, eps))
    assert out.shape == ref.shape == (2, out_planes, 8, 8), (out.shape, ref.shape)
    max_err = float(jnp.max(jnp.abs(out - ref)))
    ref_scale = float(jnp.max(jnp.abs(ref)))
    # Tolerance covers bf16 operand/activation storage + default-precision (bf16-pass)
    # MXU vs the HIGHEST-precision f32 reference; structural errors would be
    # O(ref_scale).
    assert max_err <= 7.5e-2 * max(1.0, ref_scale), f"mismatch: {max_err} (scale {ref_scale})"

    print("KERNEL_OK")
</pallas_src>

<mosaic_0001>
module attributes {stable_mosaic.version = 11 : i64} {
  func.func @_bn_psum_kernel(%arg0: i32, %arg1: memref<512x4xf32, #tpu.memory_space<vmem>>, %arg2: memref<1x2x4xf32, #tpu.memory_space<vmem>>) attributes {dimension_semantics = [#tpu.dimension_semantics<parallel>], iteration_bounds = array<i64: 1>, scalar_prefetch = 0 : i64, scratch_operands = 0 : i64, tpu.core_type = #tpu.core_type<tc>, window_params = [{transform_indices = @transform_0, window_bounds = array<i64: 512, 4>}, {transform_indices = @transform_1, window_bounds = array<i64: 1, 2, 4>}]} {
    %c0 = arith.constant 0 : index
    %c0_0 = arith.constant 0 : index
    %0 = vector.load %arg1[%c0, %c0_0] : memref<512x4xf32, #tpu.memory_space<vmem>>, vector<512x4xf32>
    %cst = arith.constant dense<0.000000e+00> : vector<4xf32>
    %1 = vector.multi_reduction <add>, %0, %cst [0] : vector<512x4xf32> to vector<4xf32>
    %2 = vector.shape_cast %1 : vector<4xf32> to vector<1x4xf32>
    %c0_1 = arith.constant 0 : index
    %c0_2 = arith.constant 0 : index
    %c0_3 = arith.constant 0 : index
    %3 = vector.load %arg2[%c0_1, %c0_2, %c0_3] : memref<1x2x4xf32, #tpu.memory_space<vmem>>, vector<1x1x4xf32>
    %4 = vector.shape_cast %3 : vector<1x1x4xf32> to vector<1x4xf32>
    %5 = vector.shape_cast %2 : vector<1x4xf32> to vector<1x1x4xf32>
    tpu.vector_store %arg2[%c0_1, %c0_2, %c0_3], %5 {strides = array<i32>} : memref<1x2x4xf32, #tpu.memory_space<vmem>>, vector<1x1x4xf32>,
    %6 = arith.mulf %0, %0 : vector<512x4xf32>
    %cst_4 = arith.constant dense<0.000000e+00> : vector<4xf32>
    %7 = vector.multi_reduction <add>, %6, %cst_4 [0] : vector<512x4xf32> to vector<4xf32>
    %8 = vector.shape_cast %7 : vector<4xf32> to vector<1x4xf32>
    %c0_5 = arith.constant 0 : index
    %c1 = arith.constant 1 : index
    %c0_6 = arith.constant 0 : index
    %9 = vector.load %arg2[%c0_5, %c1, %c0_6] : memref<1x2x4xf32, #tpu.memory_space<vmem>>, vector<1x1x4xf32>
    %10 = vector.shape_cast %9 : vector<1x1x4xf32> to vector<1x4xf32>
    %11 = vector.shape_cast %8 : vector<1x4xf32> to vector<1x1x4xf32>
    tpu.vector_store %arg2[%c0_5, %c1, %c0_6], %11 {strides = array<i32>} : memref<1x2x4xf32, #tpu.memory_space<vmem>>, vector<1x1x4xf32>,
    return
  }
  func.func @transform_0(%arg0: i32) -> (i32, i32) {
    %c0_i32 = arith.constant 0 : i32
    %c0_i32_0 = arith.constant 0 : i32
    return %arg0, %c0_i32 : i32, i32
  }
  func.func @transform_1(%arg0: i32) -> (i32, i32, i32) {
    %c0_i32 = arith.constant 0 : i32
    %c0_i32_0 = arith.constant 0 : i32
    %c0_i32_1 = arith.constant 0 : i32
    return %arg0, %c0_i32, %c0_i32_0 : i32, i32, i32
  }
}

module attributes {stable_mosaic.version = 11 : i64} {
  func.func @kernel(%arg0: i32, %arg1: memref<1x8x8x16xf32, #tpu.memory_space<vmem>>, %arg2: memref<2x16xf32, #tpu.memory_space<vmem>>, %arg3: memref<4x16x8xbf16, #tpu.memory_space<vmem>>, %arg4: memref<4x8xbf16, #tpu.memory_space<vmem>>, %arg5: memref<1x8x8x8xbf16, #tpu.memory_space<vmem>>, %arg6: memref<1x8x8x8xbf16, #tpu.memory_space<vmem>>, %arg7: memref<1x2x8xf32, #tpu.memory_space<vmem>>, %arg8: memref<9x9x16xbf16, #tpu.memory_space<vmem>>) attributes {dimension_semantics = [#tpu.dimension_semantics<parallel>], iteration_bounds = array<i64: 2>, scalar_prefetch = 0 : i64, scratch_operands = 1 : i64, tpu.core_type = #tpu.core_type<tc>, window_params = [{transform_indices = @transform_0, window_bounds = array<i64: 1, 8, 8, 16>}, {pipeline_mode = #tpu.pipeline_mode<synchronous>, transform_indices = @transform_1, window_bounds = array<i64: 2, 16>}, {pipeline_mode = #tpu.pipeline_mode<synchronous>, transform_indices = @transform_2, window_bounds = array<i64: 4, 16, 8>}, {pipeline_mode = #tpu.pipeline_mode<synchronous>, transform_indices = @transform_3, window_bounds = array<i64: 4, 8>}, {transform_indices = @transform_4, window_bounds = array<i64: 1, 8, 8, 8>}, {transform_indices = @transform_5, window_bounds = array<i64: 1, 8, 8, 8>}, {transform_indices = @transform_6, window_bounds = array<i64: 1, 2, 8>}]} {
    %cst = arith.constant 0.000000e+00 : bf16
    %0 = vector.broadcast %cst : bf16 to vector<9x9x16xbf16>
    %c0 = arith.constant 0 : index
    %c0_0 = arith.constant 0 : index
    %c0_1 = arith.constant 0 : index
    %1 = vector.load %arg8[%c0, %c0_0, %c0_1] : memref<9x9x16xbf16, #tpu.memory_space<vmem>>, vector<9x9x16xbf16>
    tpu.vector_store %arg8[%c0, %c0_0, %c0_1], %0 {strides = array<i32>} : memref<9x9x16xbf16, #tpu.memory_space<vmem>>, vector<9x9x16xbf16>,
    %c0_2 = arith.constant 0 : index
    %c0_3 = arith.constant 0 : index
    %2 = vector.load %arg2[%c0_2, %c0_3] : memref<2x16xf32, #tpu.memory_space<vmem>>, vector<1x16xf32>
    %3 = vector.shape_cast %2 : vector<1x16xf32> to vector<1x1x16xf32>
    %c1 = arith.constant 1 : index
    %c0_4 = arith.constant 0 : index
    %4 = vector.load %arg2[%c1, %c0_4] : memref<2x16xf32, #tpu.memory_space<vmem>>, vector<1x16xf32>
    %5 = vector.shape_cast %4 : vector<1x16xf32> to vector<1x1x16xf32>
    %c0_5 = arith.constant 0 : index
    %c0_6 = arith.constant 0 : index
    %c0_7 = arith.constant 0 : index
    %c0_8 = arith.constant 0 : index
    %6 = vector.load %arg1[%c0_5, %c0_6, %c0_7, %c0_8] : memref<1x8x8x16xf32, #tpu.memory_space<vmem>>, vector<1x8x8x16xf32>
    %7 = vector.shape_cast %6 : vector<1x8x8x16xf32> to vector<8x8x16xf32>
    %8 = vector.broadcast %3 : vector<1x1x16xf32> to vector<8x8x16xf32>
    %9 = arith.mulf %7, %8 : vector<8x8x16xf32>
    %10 = vector.broadcast %5 : vector<1x1x16xf32> to vector<8x8x16xf32>
    %11 = arith.addf %9, %10 : vector<8x8x16xf32>
    %cst_9 = arith.constant 0.000000e+00 : f32
    %12 = vector.broadcast %cst_9 : f32 to vector<8x8x16xf32>
    %13 = arith.maximumf %11, %12 : vector<8x8x16xf32>
    %14 = arith.truncf %13 : vector<8x8x16xf32> to vector<8x8x16xbf16>
    %c1_10 = arith.constant 1 : index
    %c1_11 = arith.constant 1 : index
    %c0_12 = arith.constant 0 : index
    %15 = vector.load %arg8[%c1_10, %c1_11, %c0_12] : memref<9x9x16xbf16, #tpu.memory_space<vmem>>, vector<8x8x16xbf16>
    tpu.vector_store %arg8[%c1_10, %c1_11, %c0_12], %14 {strides = array<i32>} : memref<9x9x16xbf16, #tpu.memory_space<vmem>>, vector<8x8x16xbf16>,
    %cst_13 = arith.constant 0.000000e+00 : f32
    %16 = vector.broadcast %cst_13 : f32 to vector<64x8xf32>
    %c0_14 = arith.constant 0 : index
    %c0_15 = arith.constant 0 : index
    %c0_16 = arith.constant 0 : index
    %17 = vector.load %arg8[%c0_14, %c0_15, %c0_16] : memref<9x9x16xbf16, #tpu.memory_space<vmem>>, vector<8x8x16xbf16>
    %18 = vector.shape_cast %17 : vector<8x8x16xbf16> to vector<64x16xbf16>
    %c0_17 = arith.constant 0 : index
    %c0_18 = arith.constant 0 : index
    %c0_19 = arith.constant 0 : index
    %19 = vector.load %arg3[%c0_17, %c0_18, %c0_19] : memref<4x16x8xbf16, #tpu.memory_space<vmem>>, vector<1x16x8xbf16>
    %20 = vector.shape_cast %19 : vector<1x16x8xbf16> to vector<16x8xbf16>
    %cst_20 = arith.constant dense<0.000000e+00> : vector<64x8xf32>
    %21 = tpu.matmul %18, %20, %cst_20 {dimension_numbers = #tpu.dot_dimension_numbers<[1], [0], [0], [1], [0, 0, 1, 1], [], []>} : vector<64x16xbf16>, vector<16x8xbf16>, vector<64x8xf32> -> vector<64x8xf32>
    %22 = arith.addf %16, %21 : vector<64x8xf32>
    %c0_21 = arith.constant 0 : index
    %c1_22 = arith.constant 1 : index
    %c0_23 = arith.constant 0 : index
    %23 = vector.load %arg8[%c0_21, %c1_22, %c0_23] : memref<9x9x16xbf16, #tpu.memory_space<vmem>>, vector<8x8x16xbf16>
    %24 = vector.shape_cast %23 : vector<8x8x16xbf16> to vector<64x16xbf16>
    %c1_24 = arith.constant 1 : index
    %c0_25 = arith.constant 0 : index
    %c0_26 = arith.constant 0 : index
    %25 = vector.load %arg3[%c1_24, %c0_25, %c0_26] : memref<4x16x8xbf16, #tpu.memory_space<vmem>>, vector<1x16x8xbf16>
    %26 = vector.shape_cast %25 : vector<1x16x8xbf16> to vector<16x8xbf16>
    %cst_27 = arith.constant dense<0.000000e+00> : vector<64x8xf32>
    %27 = tpu.matmul %24, %26, %cst_27 {dimension_numbers = #tpu.dot_dimension_numbers<[1], [0], [0], [1], [0, 0, 1, 1], [], []>} : vector<64x16xbf16>, vector<16x8xbf16>, vector<64x8xf32> -> vector<64x8xf32>
    %28 = arith.addf %22, %27 : vector<64x8xf32>
    %c1_28 = arith.constant 1 : index
    %c0_29 = arith.constant 0 : index
    %c0_30 = arith.constant 0 : index
    %29 = vector.load %arg8[%c1_28, %c0_29, %c0_30] : memref<9x9x16xbf16, #tpu.memory_space<vmem>>, vector<8x8x16xbf16>
    %30 = vector.shape_cast %29 : vector<8x8x16xbf16> to vector<64x16xbf16>
    %c2 = arith.constant 2 : index
    %c0_31 = arith.constant 0 : index
    %c0_32 = arith.constant 0 : index
    %31 = vector.load %arg3[%c2, %c0_31, %c0_32] : memref<4x16x8xbf16, #tpu.memory_space<vmem>>, vector<1x16x8xbf16>
    %32 = vector.shape_cast %31 : vector<1x16x8xbf16> to vector<16x8xbf16>
    %cst_33 = arith.constant dense<0.000000e+00> : vector<64x8xf32>
    %33 = tpu.matmul %30, %32, %cst_33 {dimension_numbers = #tpu.dot_dimension_numbers<[1], [0], [0], [1], [0, 0, 1, 1], [], []>} : vector<64x16xbf16>, vector<16x8xbf16>, vector<64x8xf32> -> vector<64x8xf32>
    %34 = arith.addf %28, %33 : vector<64x8xf32>
    %c1_34 = arith.constant 1 : index
    %c1_35 = arith.constant 1 : index
    %c0_36 = arith.constant 0 : index
    %35 = vector.load %arg8[%c1_34, %c1_35, %c0_36] : memref<9x9x16xbf16, #tpu.memory_space<vmem>>, vector<8x8x16xbf16>
    %36 = vector.shape_cast %35 : vector<8x8x16xbf16> to vector<64x16xbf16>
    %c3 = arith.constant 3 : index
    %c0_37 = arith.constant 0 : index
    %c0_38 = arith.constant 0 : index
    %37 = vector.load %arg3[%c3, %c0_37, %c0_38] : memref<4x16x8xbf16, #tpu.memory_space<vmem>>, vector<1x16x8xbf16>
    %38 = vector.shape_cast %37 : vector<1x16x8xbf16> to vector<16x8xbf16>
    %cst_39 = arith.constant dense<0.000000e+00> : vector<64x8xf32>
    %39 = tpu.matmul %36, %38, %cst_39 {dimension_numbers = #tpu.dot_dimension_numbers<[1], [0], [0], [1], [0, 0, 1, 1], [], []>} : vector<64x16xbf16>, vector<16x8xbf16>, vector<64x8xf32> -> vector<64x8xf32>
    %40 = arith.addf %34, %39 : vector<64x8xf32>
    %c1_40 = arith.constant 1 : index
    %c1_41 = arith.constant 1 : index
    %c0_42 = arith.constant 0 : index
    %41 = vector.load %arg8[%c1_40, %c1_41, %c0_42] : memref<9x9x16xbf16, #tpu.memory_space<vmem>>, vector<8x8x4xbf16>
    %42 = vector.shape_cast %41 : vector<8x8x4xbf16> to vector<64x4xbf16>
    %c0_43 = arith.constant 0 : index
    %c0_44 = arith.constant 0 : index
    %43 = vector.load %arg4[%c0_43, %c0_44] : memref<4x8xbf16, #tpu.memory_space<vmem>>, vector<4x8xbf16>
    %cst_45 = arith.constant dense<0.000000e+00> : vector<64x8xf32>
    %44 = tpu.matmul %42, %43, %cst_45 {dimension_numbers = #tpu.dot_dimension_numbers<[1], [0], [0], [1], [0, 0, 1, 1], [], []>} : vector<64x4xbf16>, vector<4x8xbf16>, vector<64x8xf32> -> vector<64x8xf32>
    %45 = vector.shape_cast %44 : vector<64x8xf32> to vector<8x8x8xf32>
    %46 = arith.truncf %45 : vector<8x8x8xf32> to vector<8x8x8xbf16>
    %c0_46 = arith.constant 0 : index
    %c0_47 = arith.constant 0 : index
    %c0_48 = arith.constant 0 : index
    %c0_49 = arith.constant 0 : index
    %47 = vector.load %arg6[%c0_46, %c0_47, %c0_48, %c0_49] : memref<1x8x8x8xbf16, #tpu.memory_space<vmem>>, vector<1x8x8x8xbf16>
    %48 = vector.shape_cast %47 : vector<1x8x8x8xbf16> to vector<8x8x8xbf16>
    %49 = vector.shape_cast %46 : vector<8x8x8xbf16> to vector<1x8x8x8xbf16>
    tpu.vector_store %arg6[%c0_46, %c0_47, %c0_48, %c0_49], %49 {strides = array<i32>} : memref<1x8x8x8xbf16, #tpu.memory_space<vmem>>, vector<1x8x8x8xbf16>,
    %50 = vector.shape_cast %40 : vector<64x8xf32> to vector<8x8x8xf32>
    %51 = arith.truncf %50 : vector<8x8x8xf32> to vector<8x8x8xbf16>
    %c0_50 = arith.constant 0 : index
    %c0_51 = arith.constant 0 : index
    %c0_52 = arith.constant 0 : index
    %c0_53 = arith.constant 0 : index
    %52 = vector.load %arg5[%c0_50, %c0_51, %c0_52, %c0_53] : memref<1x8x8x8xbf16, #tpu.memory_space<vmem>>, vector<1x8x8x8xbf16>
    %53 = vector.shape_cast %52 : vector<1x8x8x8xbf16> to vector<8x8x8xbf16>
    %54 = vector.shape_cast %51 : vector<8x8x8xbf16> to vector<1x8x8x8xbf16>
    tpu.vector_store %arg5[%c0_50, %c0_51, %c0_52, %c0_53], %54 {strides = array<i32>} : memref<1x8x8x8xbf16, #tpu.memory_space<vmem>>, vector<1x8x8x8xbf16>,
    %cst_54 = arith.constant dense<0.000000e+00> : vector<8xf32>
    %55 = vector.multi_reduction <add>, %40, %cst_54 [0] : vector<64x8xf32> to vector<8xf32>
    %56 = vector.shape_cast %55 : vector<8xf32> to vector<1x8xf32>
    %c0_55 = arith.constant 0 : index
    %c0_56 = arith.constant 0 : index
    %c0_57 = arith.constant 0 : index
    %57 = vector.load %arg7[%c0_55, %c0_56, %c0_57] : memref<1x2x8xf32, #tpu.memory_space<vmem>>, vector<1x1x8xf32>
    %58 = vector.shape_cast %57 : vector<1x1x8xf32> to vector<1x8xf32>
    %59 = vector.shape_cast %56 : vector<1x8xf32> to vector<1x1x8xf32>
    tpu.vector_store %arg7[%c0_55, %c0_56, %c0_57], %59 {strides = array<i32>} : memref<1x2x8xf32, #tpu.memory_space<vmem>>, vector<1x1x8xf32>,
    %60 = arith.mulf %40, %40 : vector<64x8xf32>
    %cst_58 = arith.constant dense<0.000000e+00> : vector<8xf32>
    %61 = vector.multi_reduction <add>, %60, %cst_58 [0] : vector<64x8xf32> to vector<8xf32>
    %62 = vector.shape_cast %61 : vector<8xf32> to vector<1x8xf32>
    %c0_59 = arith.constant 0 : index
    %c1_60 = arith.constant 1 : index
    %c0_61 = arith.constant 0 : index
    %63 = vector.load %arg7[%c0_59, %c1_60, %c0_61] : memref<1x2x8xf32, #tpu.memory_space<vmem>>, vector<1x1x8xf32>
    %64 = vector.shape_cast %63 : vector<1x1x8xf32> to vector<1x8xf32>
    %65 = vector.shape_cast %62 : vector<1x8xf32> to vector<1x1x8xf32>
    tpu.vector_store %arg7[%c0_59, %c1_60, %c0_61], %65 {strides = array<i32>} : memref<1x2x8xf32, #tpu.memory_space<vmem>>, vector<1x1x8xf32>,
    return
  }
  func.func @transform_0(%arg0: i32) -> (i32, i32, i32, i32) {
    %c0_i32 = arith.constant 0 : i32
    %c0_i32_0 = arith.constant 0 : i32
    %c0_i32_1 = arith.constant 0 : i32
    %c0_i32_2 = arith.constant 0 : i32
    return %arg0, %c0_i32, %c0_i32_0, %c0_i32_1 : i32, i32, i32, i32
  }
  func.func @transform_1(%arg0: i32) -> (i32, i32) {
    %c0_i32 = arith.constant 0 : i32
    %c0_i32_0 = arith.constant 0 : i32
    %c0_i32_1 = arith.constant 0 : i32
    return %c0_i32, %c0_i32_0 : i32, i32
  }
  func.func @transform_2(%arg0: i32) -> (i32, i32, i32) {
    %c0_i32 = arith.constant 0 : i32
    %c0_i32_0 = arith.constant 0 : i32
    %c0_i32_1 = arith.constant 0 : i32
    %c0_i32_2 = arith.constant 0 : i32
    return %c0_i32, %c0_i32_0, %c0_i32_1 : i32, i32, i32
  }
  func.func @transform_3(%arg0: i32) -> (i32, i32) {
    %c0_i32 = arith.constant 0 : i32
    %c0_i32_0 = arith.constant 0 : i32
    %c0_i32_1 = arith.constant 0 : i32
    return %c0_i32, %c0_i32_0 : i32, i32
  }
  func.func @transform_4(%arg0: i32) -> (i32, i32, i32, i32) {
    %c0_i32 = arith.constant 0 : i32
    %c0_i32_0 = arith.constant 0 : i32
    %c0_i32_1 = arith.constant 0 : i32
    %c0_i32_2 = arith.constant 0 : i32
    return %arg0, %c0_i32, %c0_i32_0, %c0_i32_1 : i32, i32, i32, i32
  }
  func.func @transform_5(%arg0: i32) -> (i32, i32, i32, i32) {
    %c0_i32 = arith.constant 0 : i32
    %c0_i32_0 = arith.constant 0 : i32
    %c0_i32_1 = arith.constant 0 : i32
    %c0_i32_2 = arith.constant 0 : i32
    return %arg0, %c0_i32, %c0_i32_0, %c0_i32_1 : i32, i32, i32, i32
  }
  func.func @transform_6(%arg0: i32) -> (i32, i32, i32) {
    %c0_i32 = arith.constant 0 : i32
    %c0_i32_0 = arith.constant 0 : i32
    %c0_i32_1 = arith.constant 0 : i32
    return %arg0, %c0_i32, %c0_i32_0 : i32, i32, i32
  }
}

module attributes {stable_mosaic.version = 11 : i64} {
  func.func @kernel(%arg0: i32, %arg1: memref<1x8x8x8xbf16, #tpu.memory_space<vmem>>, %arg2: memref<2x8xf32, #tpu.memory_space<vmem>>, %arg3: memref<9x8x8xbf16, #tpu.memory_space<vmem>>, %arg4: memref<1x8x8x8xbf16, #tpu.memory_space<vmem>>, %arg5: memref<1x8x8x8xbf16, #tpu.memory_space<vmem>>, %arg6: memref<1x2x8xf32, #tpu.memory_space<vmem>>, %arg7: memref<10x10x8xbf16, #tpu.memory_space<vmem>>) attributes {dimension_semantics = [#tpu.dimension_semantics<parallel>], iteration_bounds = array<i64: 2>, scalar_prefetch = 0 : i64, scratch_operands = 1 : i64, tpu.core_type = #tpu.core_type<tc>, window_params = [{transform_indices = @transform_0, window_bounds = array<i64: 1, 8, 8, 8>}, {pipeline_mode = #tpu.pipeline_mode<synchronous>, transform_indices = @transform_1, window_bounds = array<i64: 2, 8>}, {pipeline_mode = #tpu.pipeline_mode<synchronous>, transform_indices = @transform_2, window_bounds = array<i64: 9, 8, 8>}, {transform_indices = @transform_3, window_bounds = array<i64: 1, 8, 8, 8>}, {transform_indices = @transform_4, window_bounds = array<i64: 1, 8, 8, 8>}, {transform_indices = @transform_5, window_bounds = array<i64: 1, 2, 8>}]} {
    %cst = arith.constant 0.000000e+00 : bf16
    %0 = vector.broadcast %cst : bf16 to vector<10x10x8xbf16>
    %c0 = arith.constant 0 : index
    %c0_0 = arith.constant 0 : index
    %c0_1 = arith.constant 0 : index
    %1 = vector.load %arg7[%c0, %c0_0, %c0_1] : memref<10x10x8xbf16, #tpu.memory_space<vmem>>, vector<10x10x8xbf16>
    tpu.vector_store %arg7[%c0, %c0_0, %c0_1], %0 {strides = array<i32>} : memref<10x10x8xbf16, #tpu.memory_space<vmem>>, vector<10x10x8xbf16>,
    %c0_2 = arith.constant 0 : index
    %c0_3 = arith.constant 0 : index
    %2 = vector.load %arg2[%c0_2, %c0_3] : memref<2x8xf32, #tpu.memory_space<vmem>>, vector<1x8xf32>
    %3 = vector.shape_cast %2 : vector<1x8xf32> to vector<1x1x8xf32>
    %c1 = arith.constant 1 : index
    %c0_4 = arith.constant 0 : index
    %4 = vector.load %arg2[%c1, %c0_4] : memref<2x8xf32, #tpu.memory_space<vmem>>, vector<1x8xf32>
    %5 = vector.shape_cast %4 : vector<1x8xf32> to vector<1x1x8xf32>
    %c0_5 = arith.constant 0 : index
    %c0_6 = arith.constant 0 : index
    %c0_7 = arith.constant 0 : index
    %c0_8 = arith.constant 0 : index
    %6 = vector.load %arg1[%c0_5, %c0_6, %c0_7, %c0_8] : memref<1x8x8x8xbf16, #tpu.memory_space<vmem>>, vector<1x8x8x8xbf16>
    %7 = vector.shape_cast %6 : vector<1x8x8x8xbf16> to vector<8x8x8xbf16>
    %8 = arith.extf %7 : vector<8x8x8xbf16> to vector<8x8x8xf32>
    %9 = vector.broadcast %3 : vector<1x1x8xf32> to vector<8x8x8xf32>
    %10 = arith.mulf %8, %9 : vector<8x8x8xf32>
    %11 = vector.broadcast %5 : vector<1x1x8xf32> to vector<8x8x8xf32>
    %12 = arith.addf %10, %11 : vector<8x8x8xf32>
    %cst_9 = arith.constant 0.000000e+00 : f32
    %13 = vector.broadcast %cst_9 : f32 to vector<8x8x8xf32>
    %14 = arith.maximumf %12, %13 : vector<8x8x8xf32>
    %15 = arith.truncf %14 : vector<8x8x8xf32> to vector<8x8x8xbf16>
    %c1_10 = arith.constant 1 : index
    %c1_11 = arith.constant 1 : index
    %c0_12 = arith.constant 0 : index
    %16 = vector.load %arg7[%c1_10, %c1_11, %c0_12] : memref<10x10x8xbf16, #tpu.memory_space<vmem>>, vector<8x8x8xbf16>
    tpu.vector_store %arg7[%c1_10, %c1_11, %c0_12], %15 {strides = array<i32>} : memref<10x10x8xbf16, #tpu.memory_space<vmem>>, vector<8x8x8xbf16>,
    %cst_13 = arith.constant 0.000000e+00 : f32
    %17 = vector.broadcast %cst_13 : f32 to vector<64x8xf32>
    %c0_14 = arith.constant 0 : index
    %c0_15 = arith.constant 0 : index
    %c0_16 = arith.constant 0 : index
    %18 = vector.load %arg7[%c0_14, %c0_15, %c0_16] : memref<10x10x8xbf16, #tpu.memory_space<vmem>>, vector<8x8x8xbf16>
    %19 = vector.shape_cast %18 : vector<8x8x8xbf16> to vector<64x8xbf16>
    %c0_17 = arith.constant 0 : index
    %c0_18 = arith.constant 0 : index
    %c0_19 = arith.constant 0 : index
    %20 = vector.load %arg3[%c0_17, %c0_18, %c0_19] : memref<9x8x8xbf16, #tpu.memory_space<vmem>>, vector<1x8x8xbf16>
    %21 = vector.shape_cast %20 : vector<1x8x8xbf16> to vector<8x8xbf16>
    %cst_20 = arith.constant dense<0.000000e+00> : vector<64x8xf32>
    %22 = tpu.matmul %19, %21, %cst_20 {dimension_numbers = #tpu.dot_dimension_numbers<[1], [0], [0], [1], [0, 0, 1, 1], [], []>} : vector<64x8xbf16>, vector<8x8xbf16>, vector<64x8xf32> -> vector<64x8xf32>
    %23 = arith.addf %17, %22 : vector<64x8xf32>
    %c0_21 = arith.constant 0 : index
    %c1_22 = arith.constant 1 : index
    %c0_23 = arith.constant 0 : index
    %24 = vector.load %arg7[%c0_21, %c1_22, %c0_23] : memref<10x10x8xbf16, #tpu.memory_space<vmem>>, vector<8x8x8xbf16>
    %25 = vector.shape_cast %24 : vector<8x8x8xbf16> to vector<64x8xbf16>
    %c1_24 = arith.constant 1 : index
    %c0_25 = arith.constant 0 : index
    %c0_26 = arith.constant 0 : index
    %26 = vector.load %arg3[%c1_24, %c0_25, %c0_26] : memref<9x8x8xbf16, #tpu.memory_space<vmem>>, vector<1x8x8xbf16>
    %27 = vector.shape_cast %26 : vector<1x8x8xbf16> to vector<8x8xbf16>
    %cst_27 = arith.constant dense<0.000000e+00> : vector<64x8xf32>
    %28 = tpu.matmul %25, %27, %cst_27 {dimension_numbers = #tpu.dot_dimension_numbers<[1], [0], [0], [1], [0, 0, 1, 1], [], []>} : vector<64x8xbf16>, vector<8x8xbf16>, vector<64x8xf32> -> vector<64x8xf32>
    %29 = arith.addf %23, %28 : vector<64x8xf32>
    %c0_28 = arith.constant 0 : index
    %c2 = arith.constant 2 : index
    %c0_29 = arith.constant 0 : index
    %30 = vector.load %arg7[%c0_28, %c2, %c0_29] : memref<10x10x8xbf16, #tpu.memory_space<vmem>>, vector<8x8x8xbf16>
    %31 = vector.shape_cast %30 : vector<8x8x8xbf16> to vector<64x8xbf16>
    %c2_30 = arith.constant 2 : index
    %c0_31 = arith.constant 0 : index
    %c0_32 = arith.constant 0 : index
    %32 = vector.load %arg3[%c2_30, %c0_31, %c0_32] : memref<9x8x8xbf16, #tpu.memory_space<vmem>>, vector<1x8x8xbf16>
    %33 = vector.shape_cast %32 : vector<1x8x8xbf16> to vector<8x8xbf16>
    %cst_33 = arith.constant dense<0.000000e+00> : vector<64x8xf32>
    %34 = tpu.matmul %31, %33, %cst_33 {dimension_numbers = #tpu.dot_dimension_numbers<[1], [0], [0], [1], [0, 0, 1, 1], [], []>} : vector<64x8xbf16>, vector<8x8xbf16>, vector<64x8xf32> -> vector<64x8xf32>
    %35 = arith.addf %29, %34 : vector<64x8xf32>
    %c1_34 = arith.constant 1 : index
    %c0_35 = arith.constant 0 : index
    %c0_36 = arith.constant 0 : index
    %36 = vector.load %arg7[%c1_34, %c0_35, %c0_36] : memref<10x10x8xbf16, #tpu.memory_space<vmem>>, vector<8x8x8xbf16>
    %37 = vector.shape_cast %36 : vector<8x8x8xbf16> to vector<64x8xbf16>
    %c3 = arith.constant 3 : index
    %c0_37 = arith.constant 0 : index
    %c0_38 = arith.constant 0 : index
    %38 = vector.load %arg3[%c3, %c0_37, %c0_38] : memref<9x8x8xbf16, #tpu.memory_space<vmem>>, vector<1x8x8xbf16>
    %39 = vector.shape_cast %38 : vector<1x8x8xbf16> to vector<8x8xbf16>
    %cst_39 = arith.constant dense<0.000000e+00> : vector<64x8xf32>
    %40 = tpu.matmul %37, %39, %cst_39 {dimension_numbers = #tpu.dot_dimension_numbers<[1], [0], [0], [1], [0, 0, 1, 1], [], []>} : vector<64x8xbf16>, vector<8x8xbf16>, vector<64x8xf32> -> vector<64x8xf32>
    %41 = arith.addf %35, %40 : vector<64x8xf32>
    %c1_40 = arith.constant 1 : index
    %c1_41 = arith.constant 1 : index
    %c0_42 = arith.constant 0 : index
    %42 = vector.load %arg7[%c1_40, %c1_41, %c0_42] : memref<10x10x8xbf16, #tpu.memory_space<vmem>>, vector<8x8x8xbf16>
    %43 = vector.shape_cast %42 : vector<8x8x8xbf16> to vector<64x8xbf16>
    %c4 = arith.constant 4 : index
    %c0_43 = arith.constant 0 : index
    %c0_44 = arith.constant 0 : index
    %44 = vector.load %arg3[%c4, %c0_43, %c0_44] : memref<9x8x8xbf16, #tpu.memory_space<vmem>>, vector<1x8x8xbf16>
    %45 = vector.shape_cast %44 : vector<1x8x8xbf16> to vector<8x8xbf16>
    %cst_45 = arith.constant dense<0.000000e+00> : vector<64x8xf32>
    %46 = tpu.matmul %43, %45, %cst_45 {dimension_numbers = #tpu.dot_dimension_numbers<[1], [0], [0], [1], [0, 0, 1, 1], [], []>} : vector<64x8xbf16>, vector<8x8xbf16>, vector<64x8xf32> -> vector<64x8xf32>
    %47 = arith.addf %41, %46 : vector<64x8xf32>
    %c1_46 = arith.constant 1 : index
    %c2_47 = arith.constant 2 : index
    %c0_48 = arith.constant 0 : index
    %48 = vector.load %arg7[%c1_46, %c2_47, %c0_48] : memref<10x10x8xbf16, #tpu.memory_space<vmem>>, vector<8x8x8xbf16>
    %49 = vector.shape_cast %48 : vector<8x8x8xbf16> to vector<64x8xbf16>
    %c5 = arith.constant 5 : index
    %c0_49 = arith.constant 0 : index
    %c0_50 = arith.constant 0 : index
    %50 = vector.load %arg3[%c5, %c0_49, %c0_50] : memref<9x8x8xbf16, #tpu.memory_space<vmem>>, vector<1x8x8xbf16>
    %51 = vector.shape_cast %50 : vector<1x8x8xbf16> to vector<8x8xbf16>
    %cst_51 = arith.constant dense<0.000000e+00> : vector<64x8xf32>
    %52 = tpu.matmul %49, %51, %cst_51 {dimension_numbers = #tpu.dot_dimension_numbers<[1], [0], [0], [1], [0, 0, 1, 1], [], []>} : vector<64x8xbf16>, vector<8x8xbf16>, vector<64x8xf32> -> vector<64x8xf32>
    %53 = arith.addf %47, %52 : vector<64x8xf32>
    %c2_52 = arith.constant 2 : index
    %c0_53 = arith.constant 0 : index
    %c0_54 = arith.constant 0 : index
    %54 = vector.load %arg7[%c2_52, %c0_53, %c0_54] : memref<10x10x8xbf16, #tpu.memory_space<vmem>>, vector<8x8x8xbf16>
    %55 = vector.shape_cast %54 : vector<8x8x8xbf16> to vector<64x8xbf16>
    %c6 = arith.constant 6 : index
    %c0_55 = arith.constant 0 : index
    %c0_56 = arith.constant 0 : index
    %56 = vector.load %arg3[%c6, %c0_55, %c0_56] : memref<9x8x8xbf16, #tpu.memory_space<vmem>>, vector<1x8x8xbf16>
    %57 = vector.shape_cast %56 : vector<1x8x8xbf16> to vector<8x8xbf16>
    %cst_57 = arith.constant dense<0.000000e+00> : vector<64x8xf32>
    %58 = tpu.matmul %55, %57, %cst_57 {dimension_numbers = #tpu.dot_dimension_numbers<[1], [0], [0], [1], [0, 0, 1, 1], [], []>} : vector<64x8xbf16>, vector<8x8xbf16>, vector<64x8xf32> -> vector<64x8xf32>
    %59 = arith.addf %53, %58 : vector<64x8xf32>
    %c2_58 = arith.constant 2 : index
    %c1_59 = arith.constant 1 : index
    %c0_60 = arith.constant 0 : index
    %60 = vector.load %arg7[%c2_58, %c1_59, %c0_60] : memref<10x10x8xbf16, #tpu.memory_space<vmem>>, vector<8x8x8xbf16>
    %61 = vector.shape_cast %60 : vector<8x8x8xbf16> to vector<64x8xbf16>
    %c7 = arith.constant 7 : index
    %c0_61 = arith.constant 0 : index
    %c0_62 = arith.constant 0 : index
    %62 = vector.load %arg3[%c7, %c0_61, %c0_62] : memref<9x8x8xbf16, #tpu.memory_space<vmem>>, vector<1x8x8xbf16>
    %63 = vector.shape_cast %62 : vector<1x8x8xbf16> to vector<8x8xbf16>
    %cst_63 = arith.constant dense<0.000000e+00> : vector<64x8xf32>
    %64 = tpu.matmul %61, %63, %cst_63 {dimension_numbers = #tpu.dot_dimension_numbers<[1], [0], [0], [1], [0, 0, 1, 1], [], []>} : vector<64x8xbf16>, vector<8x8xbf16>, vector<64x8xf32> -> vector<64x8xf32>
    %65 = arith.addf %59, %64 : vector<64x8xf32>
    %c2_64 = arith.constant 2 : index
    %c2_65 = arith.constant 2 : index
    %c0_66 = arith.constant 0 : index
    %66 = vector.load %arg7[%c2_64, %c2_65, %c0_66] : memref<10x10x8xbf16, #tpu.memory_space<vmem>>, vector<8x8x8xbf16>
    %67 = vector.shape_cast %66 : vector<8x8x8xbf16> to vector<64x8xbf16>
    %c8 = arith.constant 8 : index
    %c0_67 = arith.constant 0 : index
    %c0_68 = arith.constant 0 : index
    %68 = vector.load %arg3[%c8, %c0_67, %c0_68] : memref<9x8x8xbf16, #tpu.memory_space<vmem>>, vector<1x8x8xbf16>
    %69 = vector.shape_cast %68 : vector<1x8x8xbf16> to vector<8x8xbf16>
    %cst_69 = arith.constant dense<0.000000e+00> : vector<64x8xf32>
    %70 = tpu.matmul %67, %69, %cst_69 {dimension_numbers = #tpu.dot_dimension_numbers<[1], [0], [0], [1], [0, 0, 1, 1], [], []>} : vector<64x8xbf16>, vector<8x8xbf16>, vector<64x8xf32> -> vector<64x8xf32>
    %71 = arith.addf %65, %70 : vector<64x8xf32>
    %c0_70 = arith.constant 0 : index
    %c0_71 = arith.constant 0 : index
    %c0_72 = arith.constant 0 : index
    %c0_73 = arith.constant 0 : index
    %72 = vector.load %arg4[%c0_70, %c0_71, %c0_72, %c0_73] : memref<1x8x8x8xbf16, #tpu.memory_space<vmem>>, vector<1x8x8x8xbf16>
    %73 = vector.shape_cast %72 : vector<1x8x8x8xbf16> to vector<8x8x8xbf16>
    %74 = vector.shape_cast %73 : vector<8x8x8xbf16> to vector<64x8xbf16>
    %75 = arith.extf %74 : vector<64x8xbf16> to vector<64x8xf32>
    %76 = arith.addf %71, %75 : vector<64x8xf32>
    %77 = vector.shape_cast %76 : vector<64x8xf32> to vector<8x8x8xf32>
    %78 = arith.truncf %77 : vector<8x8x8xf32> to vector<8x8x8xbf16>
    %c0_74 = arith.constant 0 : index
    %c0_75 = arith.constant 0 : index
    %c0_76 = arith.constant 0 : index
    %c0_77 = arith.constant 0 : index
    %79 = vector.load %arg5[%c0_74, %c0_75, %c0_76, %c0_77] : memref<1x8x8x8xbf16, #tpu.memory_space<vmem>>, vector<1x8x8x8xbf16>
    %80 = vector.shape_cast %79 : vector<1x8x8x8xbf16> to vector<8x8x8xbf16>
    %81 = vector.shape_cast %78 : vector<8x8x8xbf16> to vector<1x8x8x8xbf16>
    tpu.vector_store %arg5[%c0_74, %c0_75, %c0_76, %c0_77], %81 {strides = array<i32>} : memref<1x8x8x8xbf16, #tpu.memory_space<vmem>>, vector<1x8x8x8xbf16>,
    %cst_78 = arith.constant dense<0.000000e+00> : vector<8xf32>
    %82 = vector.multi_reduction <add>, %76, %cst_78 [0] : vector<64x8xf32> to vector<8xf32>
    %83 = vector.shape_cast %82 : vector<8xf32> to vector<1x8xf32>
    %c0_79 = arith.constant 0 : index
    %c0_80 = arith.constant 0 : index
    %c0_81 = arith.constant 0 : index
    %84 = vector.load %arg6[%c0_79, %c0_80, %c0_81] : memref<1x2x8xf32, #tpu.memory_space<vmem>>, vector<1x1x8xf32>
    %85 = vector.shape_cast %84 : vector<1x1x8xf32> to vector<1x8xf32>
    %86 = vector.shape_cast %83 : vector<1x8xf32> to vector<1x1x8xf32>
    tpu.vector_store %arg6[%c0_79, %c0_80, %c0_81], %86 {strides = array<i32>} : memref<1x2x8xf32, #tpu.memory_space<vmem>>, vector<1x1x8xf32>,
    %87 = arith.mulf %76, %76 : vector<64x8xf32>
    %cst_82 = arith.constant dense<0.000000e+00> : vector<8xf32>
    %88 = vector.multi_reduction <add>, %87, %cst_82 [0] : vector<64x8xf32> to vector<8xf32>
    %89 = vector.shape_cast %88 : vector<8xf32> to vector<1x8xf32>
    %c0_83 = arith.constant 0 : index
    %c1_84 = arith.constant 1 : index
    %c0_85 = arith.constant 0 : index
    %90 = vector.load %arg6[%c0_83, %c1_84, %c0_85] : memref<1x2x8xf32, #tpu.memory_space<vmem>>, vector<1x1x8xf32>
    %91 = vector.shape_cast %90 : vector<1x1x8xf32> to vector<1x8xf32>
    %92 = vector.shape_cast %89 : vector<1x8xf32> to vector<1x1x8xf32>
    tpu.vector_store %arg6[%c0_83, %c1_84, %c0_85], %92 {strides = array<i32>} : memref<1x2x8xf32, #tpu.memory_space<vmem>>, vector<1x1x8xf32>,
    return
  }
  func.func @transform_0(%arg0: i32) -> (i32, i32, i32, i32) {
    %c0_i32 = arith.constant 0 : i32
    %c0_i32_0 = arith.constant 0 : i32
    %c0_i32_1 = arith.constant 0 : i32
    %c0_i32_2 = arith.constant 0 : i32
    return %arg0, %c0_i32, %c0_i32_0, %c0_i32_1 : i32, i32, i32, i32
  }
  func.func @transform_1(%arg0: i32) -> (i32, i32) {
    %c0_i32 = arith.constant 0 : i32
    %c0_i32_0 = arith.constant 0 : i32
    %c0_i32_1 = arith.constant 0 : i32
    return %c0_i32, %c0_i32_0 : i32, i32
  }
  func.func @transform_2(%arg0: i32) -> (i32, i32, i32) {
    %c0_i32 = arith.constant 0 : i32
    %c0_i32_0 = arith.constant 0 : i32
    %c0_i32_1 = arith.constant 0 : i32
    %c0_i32_2 = arith.constant 0 : i32
    return %c0_i32, %c0_i32_0, %c0_i32_1 : i32, i32, i32
  }
  func.func @transform_3(%arg0: i32) -> (i32, i32, i32, i32) {
    %c0_i32 = arith.constant 0 : i32
    %c0_i32_0 = arith.constant 0 : i32
    %c0_i32_1 = arith.constant 0 : i32
    %c0_i32_2 = arith.constant 0 : i32
    return %arg0, %c0_i32, %c0_i32_0, %c0_i32_1 : i32, i32, i32, i32
  }
  func.func @transform_4(%arg0: i32) -> (i32, i32, i32, i32) {
    %c0_i32 = arith.constant 0 : i32
    %c0_i32_0 = arith.constant 0 : i32
    %c0_i32_1 = arith.constant 0 : i32
    %c0_i32_2 = arith.constant 0 : i32
    return %arg0, %c0_i32, %c0_i32_0, %c0_i32_1 : i32, i32, i32, i32
  }
  func.func @transform_5(%arg0: i32) -> (i32, i32, i32) {
    %c0_i32 = arith.constant 0 : i32
    %c0_i32_0 = arith.constant 0 : i32
    %c0_i32_1 = arith.constant 0 : i32
    return %arg0, %c0_i32, %c0_i32_0 : i32, i32, i32
  }
}

module attributes {stable_mosaic.version = 11 : i64} {
  func.func @kernel(%arg0: i32, %arg1: memref<1x8x8x8xbf16, #tpu.memory_space<vmem>>, %arg2: memref<2x8xf32, #tpu.memory_space<vmem>>, %arg3: memref<9x8x8xbf16, #tpu.memory_space<vmem>>, %arg4: memref<1x8x8x8xbf16, #tpu.memory_space<vmem>>, %arg5: memref<1x2x8xf32, #tpu.memory_space<vmem>>, %arg6: memref<10x10x8xbf16, #tpu.memory_space<vmem>>) attributes {dimension_semantics = [#tpu.dimension_semantics<parallel>], iteration_bounds = array<i64: 2>, scalar_prefetch = 0 : i64, scratch_operands = 1 : i64, tpu.core_type = #tpu.core_type<tc>, window_params = [{transform_indices = @transform_0, window_bounds = array<i64: 1, 8, 8, 8>}, {pipeline_mode = #tpu.pipeline_mode<synchronous>, transform_indices = @transform_1, window_bounds = array<i64: 2, 8>}, {pipeline_mode = #tpu.pipeline_mode<synchronous>, transform_indices = @transform_2, window_bounds = array<i64: 9, 8, 8>}, {transform_indices = @transform_3, window_bounds = array<i64: 1, 8, 8, 8>}, {transform_indices = @transform_4, window_bounds = array<i64: 1, 2, 8>}]} {
    %cst = arith.constant 0.000000e+00 : bf16
    %0 = vector.broadcast %cst : bf16 to vector<10x10x8xbf16>
    %c0 = arith.constant 0 : index
    %c0_0 = arith.constant 0 : index
    %c0_1 = arith.constant 0 : index
    %1 = vector.load %arg6[%c0, %c0_0, %c0_1] : memref<10x10x8xbf16, #tpu.memory_space<vmem>>, vector<10x10x8xbf16>
    tpu.vector_store %arg6[%c0, %c0_0, %c0_1], %0 {strides = array<i32>} : memref<10x10x8xbf16, #tpu.memory_space<vmem>>, vector<10x10x8xbf16>,
    %c0_2 = arith.constant 0 : index
    %c0_3 = arith.constant 0 : index
    %2 = vector.load %arg2[%c0_2, %c0_3] : memref<2x8xf32, #tpu.memory_space<vmem>>, vector<1x8xf32>
    %3 = vector.shape_cast %2 : vector<1x8xf32> to vector<1x1x8xf32>
    %c1 = arith.constant 1 : index
    %c0_4 = arith.constant 0 : index
    %4 = vector.load %arg2[%c1, %c0_4] : memref<2x8xf32, #tpu.memory_space<vmem>>, vector<1x8xf32>
    %5 = vector.shape_cast %4 : vector<1x8xf32> to vector<1x1x8xf32>
    %c0_5 = arith.constant 0 : index
    %c0_6 = arith.constant 0 : index
    %c0_7 = arith.constant 0 : index
    %c0_8 = arith.constant 0 : index
    %6 = vector.load %arg1[%c0_5, %c0_6, %c0_7, %c0_8] : memref<1x8x8x8xbf16, #tpu.memory_space<vmem>>, vector<1x8x8x8xbf16>
    %7 = vector.shape_cast %6 : vector<1x8x8x8xbf16> to vector<8x8x8xbf16>
    %8 = arith.extf %7 : vector<8x8x8xbf16> to vector<8x8x8xf32>
    %9 = vector.broadcast %3 : vector<1x1x8xf32> to vector<8x8x8xf32>
    %10 = arith.mulf %8, %9 : vector<8x8x8xf32>
    %11 = vector.broadcast %5 : vector<1x1x8xf32> to vector<8x8x8xf32>
    %12 = arith.addf %10, %11 : vector<8x8x8xf32>
    %cst_9 = arith.constant 0.000000e+00 : f32
    %13 = vector.broadcast %cst_9 : f32 to vector<8x8x8xf32>
    %14 = arith.maximumf %12, %13 : vector<8x8x8xf32>
    %15 = arith.truncf %14 : vector<8x8x8xf32> to vector<8x8x8xbf16>
    %c1_10 = arith.constant 1 : index
    %c1_11 = arith.constant 1 : index
    %c0_12 = arith.constant 0 : index
    %16 = vector.load %arg6[%c1_10, %c1_11, %c0_12] : memref<10x10x8xbf16, #tpu.memory_space<vmem>>, vector<8x8x8xbf16>
    tpu.vector_store %arg6[%c1_10, %c1_11, %c0_12], %15 {strides = array<i32>} : memref<10x10x8xbf16, #tpu.memory_space<vmem>>, vector<8x8x8xbf16>,
    %cst_13 = arith.constant 0.000000e+00 : f32
    %17 = vector.broadcast %cst_13 : f32 to vector<64x8xf32>
    %c0_14 = arith.constant 0 : index
    %c0_15 = arith.constant 0 : index
    %c0_16 = arith.constant 0 : index
    %18 = vector.load %arg6[%c0_14, %c0_15, %c0_16] : memref<10x10x8xbf16, #tpu.memory_space<vmem>>, vector<8x8x8xbf16>
    %19 = vector.shape_cast %18 : vector<8x8x8xbf16> to vector<64x8xbf16>
    %c0_17 = arith.constant 0 : index
    %c0_18 = arith.constant 0 : index
    %c0_19 = arith.constant 0 : index
    %20 = vector.load %arg3[%c0_17, %c0_18, %c0_19] : memref<9x8x8xbf16, #tpu.memory_space<vmem>>, vector<1x8x8xbf16>
    %21 = vector.shape_cast %20 : vector<1x8x8xbf16> to vector<8x8xbf16>
    %cst_20 = arith.constant dense<0.000000e+00> : vector<64x8xf32>
    %22 = tpu.matmul %19, %21, %cst_20 {dimension_numbers = #tpu.dot_dimension_numbers<[1], [0], [0], [1], [0, 0, 1, 1], [], []>} : vector<64x8xbf16>, vector<8x8xbf16>, vector<64x8xf32> -> vector<64x8xf32>
    %23 = arith.addf %17, %22 : vector<64x8xf32>
    %c0_21 = arith.constant 0 : index
    %c1_22 = arith.constant 1 : index
    %c0_23 = arith.constant 0 : index
    %24 = vector.load %arg6[%c0_21, %c1_22, %c0_23] : memref<10x10x8xbf16, #tpu.memory_space<vmem>>, vector<8x8x8xbf16>
    %25 = vector.shape_cast %24 : vector<8x8x8xbf16> to vector<64x8xbf16>
    %c1_24 = arith.constant 1 : index
    %c0_25 = arith.constant 0 : index
    %c0_26 = arith.constant 0 : index
    %26 = vector.load %arg3[%c1_24, %c0_25, %c0_26] : memref<9x8x8xbf16, #tpu.memory_space<vmem>>, vector<1x8x8xbf16>
    %27 = vector.shape_cast %26 : vector<1x8x8xbf16> to vector<8x8xbf16>
    %cst_27 = arith.constant dense<0.000000e+00> : vector<64x8xf32>
    %28 = tpu.matmul %25, %27, %cst_27 {dimension_numbers = #tpu.dot_dimension_numbers<[1], [0], [0], [1], [0, 0, 1, 1], [], []>} : vector<64x8xbf16>, vector<8x8xbf16>, vector<64x8xf32> -> vector<64x8xf32>
    %29 = arith.addf %23, %28 : vector<64x8xf32>
    %c0_28 = arith.constant 0 : index
    %c2 = arith.constant 2 : index
    %c0_29 = arith.constant 0 : index
    %30 = vector.load %arg6[%c0_28, %c2, %c0_29] : memref<10x10x8xbf16, #tpu.memory_space<vmem>>, vector<8x8x8xbf16>
    %31 = vector.shape_cast %30 : vector<8x8x8xbf16> to vector<64x8xbf16>
    %c2_30 = arith.constant 2 : index
    %c0_31 = arith.constant 0 : index
    %c0_32 = arith.constant 0 : index
    %32 = vector.load %arg3[%c2_30, %c0_31, %c0_32] : memref<9x8x8xbf16, #tpu.memory_space<vmem>>, vector<1x8x8xbf16>
    %33 = vector.shape_cast %32 : vector<1x8x8xbf16> to vector<8x8xbf16>
    %cst_33 = arith.constant dense<0.000000e+00> : vector<64x8xf32>
    %34 = tpu.matmul %31, %33, %cst_33 {dimension_numbers = #tpu.dot_dimension_numbers<[1], [0], [0], [1], [0, 0, 1, 1], [], []>} : vector<64x8xbf16>, vector<8x8xbf16>, vector<64x8xf32> -> vector<64x8xf32>
    %35 = arith.addf %29, %34 : vector<64x8xf32>
    %c1_34 = arith.constant 1 : index
    %c0_35 = arith.constant 0 : index
    %c0_36 = arith.constant 0 : index
    %36 = vector.load %arg6[%c1_34, %c0_35, %c0_36] : memref<10x10x8xbf16, #tpu.memory_space<vmem>>, vector<8x8x8xbf16>
    %37 = vector.shape_cast %36 : vector<8x8x8xbf16> to vector<64x8xbf16>
    %c3 = arith.constant 3 : index
    %c0_37 = arith.constant 0 : index
    %c0_38 = arith.constant 0 : index
    %38 = vector.load %arg3[%c3, %c0_37, %c0_38] : memref<9x8x8xbf16, #tpu.memory_space<vmem>>, vector<1x8x8xbf16>
    %39 = vector.shape_cast %38 : vector<1x8x8xbf16> to vector<8x8xbf16>
    %cst_39 = arith.constant dense<0.000000e+00> : vector<64x8xf32>
    %40 = tpu.matmul %37, %39, %cst_39 {dimension_numbers = #tpu.dot_dimension_numbers<[1], [0], [0], [1], [0, 0, 1, 1], [], []>} : vector<64x8xbf16>, vector<8x8xbf16>, vector<64x8xf32> -> vector<64x8xf32>
    %41 = arith.addf %35, %40 : vector<64x8xf32>
    %c1_40 = arith.constant 1 : index
    %c1_41 = arith.constant 1 : index
    %c0_42 = arith.constant 0 : index
    %42 = vector.load %arg6[%c1_40, %c1_41, %c0_42] : memref<10x10x8xbf16, #tpu.memory_space<vmem>>, vector<8x8x8xbf16>
    %43 = vector.shape_cast %42 : vector<8x8x8xbf16> to vector<64x8xbf16>
    %c4 = arith.constant 4 : index
    %c0_43 = arith.constant 0 : index
    %c0_44 = arith.constant 0 : index
    %44 = vector.load %arg3[%c4, %c0_43, %c0_44] : memref<9x8x8xbf16, #tpu.memory_space<vmem>>, vector<1x8x8xbf16>
    %45 = vector.shape_cast %44 : vector<1x8x8xbf16> to vector<8x8xbf16>
    %cst_45 = arith.constant dense<0.000000e+00> : vector<64x8xf32>
    %46 = tpu.matmul %43, %45, %cst_45 {dimension_numbers = #tpu.dot_dimension_numbers<[1], [0], [0], [1], [0, 0, 1, 1], [], []>} : vector<64x8xbf16>, vector<8x8xbf16>, vector<64x8xf32> -> vector<64x8xf32>
    %47 = arith.addf %41, %46 : vector<64x8xf32>
    %c1_46 = arith.constant 1 : index
    %c2_47 = arith.constant 2 : index
    %c0_48 = arith.constant 0 : index
    %48 = vector.load %arg6[%c1_46, %c2_47, %c0_48] : memref<10x10x8xbf16, #tpu.memory_space<vmem>>, vector<8x8x8xbf16>
    %49 = vector.shape_cast %48 : vector<8x8x8xbf16> to vector<64x8xbf16>
    %c5 = arith.constant 5 : index
    %c0_49 = arith.constant 0 : index
    %c0_50 = arith.constant 0 : index
    %50 = vector.load %arg3[%c5, %c0_49, %c0_50] : memref<9x8x8xbf16, #tpu.memory_space<vmem>>, vector<1x8x8xbf16>
    %51 = vector.shape_cast %50 : vector<1x8x8xbf16> to vector<8x8xbf16>
    %cst_51 = arith.constant dense<0.000000e+00> : vector<64x8xf32>
    %52 = tpu.matmul %49, %51, %cst_51 {dimension_numbers = #tpu.dot_dimension_numbers<[1], [0], [0], [1], [0, 0, 1, 1], [], []>} : vector<64x8xbf16>, vector<8x8xbf16>, vector<64x8xf32> -> vector<64x8xf32>
    %53 = arith.addf %47, %52 : vector<64x8xf32>
    %c2_52 = arith.constant 2 : index
    %c0_53 = arith.constant 0 : index
    %c0_54 = arith.constant 0 : index
    %54 = vector.load %arg6[%c2_52, %c0_53, %c0_54] : memref<10x10x8xbf16, #tpu.memory_space<vmem>>, vector<8x8x8xbf16>
    %55 = vector.shape_cast %54 : vector<8x8x8xbf16> to vector<64x8xbf16>
    %c6 = arith.constant 6 : index
    %c0_55 = arith.constant 0 : index
    %c0_56 = arith.constant 0 : index
    %56 = vector.load %arg3[%c6, %c0_55, %c0_56] : memref<9x8x8xbf16, #tpu.memory_space<vmem>>, vector<1x8x8xbf16>
    %57 = vector.shape_cast %56 : vector<1x8x8xbf16> to vector<8x8xbf16>
    %cst_57 = arith.constant dense<0.000000e+00> : vector<64x8xf32>
    %58 = tpu.matmul %55, %57, %cst_57 {dimension_numbers = #tpu.dot_dimension_numbers<[1], [0], [0], [1], [0, 0, 1, 1], [], []>} : vector<64x8xbf16>, vector<8x8xbf16>, vector<64x8xf32> -> vector<64x8xf32>
    %59 = arith.addf %53, %58 : vector<64x8xf32>
    %c2_58 = arith.constant 2 : index
    %c1_59 = arith.constant 1 : index
    %c0_60 = arith.constant 0 : index
    %60 = vector.load %arg6[%c2_58, %c1_59, %c0_60] : memref<10x10x8xbf16, #tpu.memory_space<vmem>>, vector<8x8x8xbf16>
    %61 = vector.shape_cast %60 : vector<8x8x8xbf16> to vector<64x8xbf16>
    %c7 = arith.constant 7 : index
    %c0_61 = arith.constant 0 : index
    %c0_62 = arith.constant 0 : index
    %62 = vector.load %arg3[%c7, %c0_61, %c0_62] : memref<9x8x8xbf16, #tpu.memory_space<vmem>>, vector<1x8x8xbf16>
    %63 = vector.shape_cast %62 : vector<1x8x8xbf16> to vector<8x8xbf16>
    %cst_63 = arith.constant dense<0.000000e+00> : vector<64x8xf32>
    %64 = tpu.matmul %61, %63, %cst_63 {dimension_numbers = #tpu.dot_dimension_numbers<[1], [0], [0], [1], [0, 0, 1, 1], [], []>} : vector<64x8xbf16>, vector<8x8xbf16>, vector<64x8xf32> -> vector<64x8xf32>
    %65 = arith.addf %59, %64 : vector<64x8xf32>
    %c2_64 = arith.constant 2 : index
    %c2_65 = arith.constant 2 : index
    %c0_66 = arith.constant 0 : index
    %66 = vector.load %arg6[%c2_64, %c2_65, %c0_66] : memref<10x10x8xbf16, #tpu.memory_space<vmem>>, vector<8x8x8xbf16>
    %67 = vector.shape_cast %66 : vector<8x8x8xbf16> to vector<64x8xbf16>
    %c8 = arith.constant 8 : index
    %c0_67 = arith.constant 0 : index
    %c0_68 = arith.constant 0 : index
    %68 = vector.load %arg3[%c8, %c0_67, %c0_68] : memref<9x8x8xbf16, #tpu.memory_space<vmem>>, vector<1x8x8xbf16>
    %69 = vector.shape_cast %68 : vector<1x8x8xbf16> to vector<8x8xbf16>
    %cst_69 = arith.constant dense<0.000000e+00> : vector<64x8xf32>
    %70 = tpu.matmul %67, %69, %cst_69 {dimension_numbers = #tpu.dot_dimension_numbers<[1], [0], [0], [1], [0, 0, 1, 1], [], []>} : vector<64x8xbf16>, vector<8x8xbf16>, vector<64x8xf32> -> vector<64x8xf32>
    %71 = arith.addf %65, %70 : vector<64x8xf32>
    %72 = vector.shape_cast %71 : vector<64x8xf32> to vector<8x8x8xf32>
    %73 = arith.truncf %72 : vector<8x8x8xf32> to vector<8x8x8xbf16>
    %c0_70 = arith.constant 0 : index
    %c0_71 = arith.constant 0 : index
    %c0_72 = arith.constant 0 : index
    %c0_73 = arith.constant 0 : index
    %74 = vector.load %arg4[%c0_70, %c0_71, %c0_72, %c0_73] : memref<1x8x8x8xbf16, #tpu.memory_space<vmem>>, vector<1x8x8x8xbf16>
    %75 = vector.shape_cast %74 : vector<1x8x8x8xbf16> to vector<8x8x8xbf16>
    %76 = vector.shape_cast %73 : vector<8x8x8xbf16> to vector<1x8x8x8xbf16>
    tpu.vector_store %arg4[%c0_70, %c0_71, %c0_72, %c0_73], %76 {strides = array<i32>} : memref<1x8x8x8xbf16, #tpu.memory_space<vmem>>, vector<1x8x8x8xbf16>,
    %cst_74 = arith.constant dense<0.000000e+00> : vector<8xf32>
    %77 = vector.multi_reduction <add>, %71, %cst_74 [0] : vector<64x8xf32> to vector<8xf32>
    %78 = vector.shape_cast %77 : vector<8xf32> to vector<1x8xf32>
    %c0_75 = arith.constant 0 : index
    %c0_76 = arith.constant 0 : index
    %c0_77 = arith.constant 0 : index
    %79 = vector.load %arg5[%c0_75, %c0_76, %c0_77] : memref<1x2x8xf32, #tpu.memory_space<vmem>>, vector<1x1x8xf32>
    %80 = vector.shape_cast %79 : vector<1x1x8xf32> to vector<1x8xf32>
    %81 = vector.shape_cast %78 : vector<1x8xf32> to vector<1x1x8xf32>
    tpu.vector_store %arg5[%c0_75, %c0_76, %c0_77], %81 {strides = array<i32>} : memref<1x2x8xf32, #tpu.memory_space<vmem>>, vector<1x1x8xf32>,
    %82 = arith.mulf %71, %71 : vector<64x8xf32>
    %cst_78 = arith.constant dense<0.000000e+00> : vector<8xf32>
    %83 = vector.multi_reduction <add>, %82, %cst_78 [0] : vector<64x8xf32> to vector<8xf32>
    %84 = vector.shape_cast %83 : vector<8xf32> to vector<1x8xf32>
    %c0_79 = arith.constant 0 : index
    %c1_80 = arith.constant 1 : index
    %c0_81 = arith.constant 0 : index
    %85 = vector.load %arg5[%c0_79, %c1_80, %c0_81] : memref<1x2x8xf32, #tpu.memory_space<vmem>>, vector<1x1x8xf32>
    %86 = vector.shape_cast %85 : vector<1x1x8xf32> to vector<1x8xf32>
    %87 = vector.shape_cast %84 : vector<1x8xf32> to vector<1x1x8xf32>
    tpu.vector_store %arg5[%c0_79, %c1_80, %c0_81], %87 {strides = array<i32>} : memref<1x2x8xf32, #tpu.memory_space<vmem>>, vector<1x1x8xf32>,
    return
  }
  func.func @transform_0(%arg0: i32) -> (i32, i32, i32, i32) {
    %c0_i32 = arith.constant 0 : i32
    %c0_i32_0 = arith.constant 0 : i32
    %c0_i32_1 = arith.constant 0 : i32
    %c0_i32_2 = arith.constant 0 : i32
    return %arg0, %c0_i32, %c0_i32_0, %c0_i32_1 : i32, i32, i32, i32
  }
  func.func @transform_1(%arg0: i32) -> (i32, i32) {
    %c0_i32 = arith.constant 0 : i32
    %c0_i32_0 = arith.constant 0 : i32
    %c0_i32_1 = arith.constant 0 : i32
    return %c0_i32, %c0_i32_0 : i32, i32
  }
  func.func @transform_2(%arg0: i32) -> (i32, i32, i32) {
    %c0_i32 = arith.constant 0 : i32
    %c0_i32_0 = arith.constant 0 : i32
    %c0_i32_1 = arith.constant 0 : i32
    %c0_i32_2 = arith.constant 0 : i32
    return %c0_i32, %c0_i32_0, %c0_i32_1 : i32, i32, i32
  }
  func.func @transform_3(%arg0: i32) -> (i32, i32, i32, i32) {
    %c0_i32 = arith.constant 0 : i32
    %c0_i32_0 = arith.constant 0 : i32
    %c0_i32_1 = arith.constant 0 : i32
    %c0_i32_2 = arith.constant 0 : i32
    return %arg0, %c0_i32, %c0_i32_0, %c0_i32_1 : i32, i32, i32, i32
  }
  func.func @transform_4(%arg0: i32) -> (i32, i32, i32) {
    %c0_i32 = arith.constant 0 : i32
    %c0_i32_0 = arith.constant 0 : i32
    %c0_i32_1 = arith.constant 0 : i32
    return %arg0, %c0_i32, %c0_i32_0 : i32, i32, i32
  }
}

module attributes {stable_mosaic.version = 11 : i64} {
  func.func @kernel(%arg0: i32, %arg1: memref<1x8x8x8xbf16, #tpu.memory_space<vmem>>, %arg2: memref<2x8xf32, #tpu.memory_space<vmem>>, %arg3: memref<9x8x8xbf16, #tpu.memory_space<vmem>>, %arg4: memref<1x8x8x8xbf16, #tpu.memory_space<vmem>>, %arg5: memref<1x8x8x8xbf16, #tpu.memory_space<vmem>>, %arg6: memref<1x2x8xf32, #tpu.memory_space<vmem>>, %arg7: memref<10x10x8xbf16, #tpu.memory_space<vmem>>) attributes {dimension_semantics = [#tpu.dimension_semantics<parallel>], iteration_bounds = array<i64: 2>, scalar_prefetch = 0 : i64, scratch_operands = 1 : i64, tpu.core_type = #tpu.core_type<tc>, window_params = [{transform_indices = @transform_0, window_bounds = array<i64: 1, 8, 8, 8>}, {pipeline_mode = #tpu.pipeline_mode<synchronous>, transform_indices = @transform_1, window_bounds = array<i64: 2, 8>}, {pipeline_mode = #tpu.pipeline_mode<synchronous>, transform_indices = @transform_2, window_bounds = array<i64: 9, 8, 8>}, {transform_indices = @transform_3, window_bounds = array<i64: 1, 8, 8, 8>}, {transform_indices = @transform_4, window_bounds = array<i64: 1, 8, 8, 8>}, {transform_indices = @transform_5, window_bounds = array<i64: 1, 2, 8>}]} {
    %cst = arith.constant 0.000000e+00 : bf16
    %0 = vector.broadcast %cst : bf16 to vector<10x10x8xbf16>
    %c0 = arith.constant 0 : index
    %c0_0 = arith.constant 0 : index
    %c0_1 = arith.constant 0 : index
    %1 = vector.load %arg7[%c0, %c0_0, %c0_1] : memref<10x10x8xbf16, #tpu.memory_space<vmem>>, vector<10x10x8xbf16>
    tpu.vector_store %arg7[%c0, %c0_0, %c0_1], %0 {strides = array<i32>} : memref<10x10x8xbf16, #tpu.memory_space<vmem>>, vector<10x10x8xbf16>,
    %c0_2 = arith.constant 0 : index
    %c0_3 = arith.constant 0 : index
    %2 = vector.load %arg2[%c0_2, %c0_3] : memref<2x8xf32, #tpu.memory_space<vmem>>, vector<1x8xf32>
    %3 = vector.shape_cast %2 : vector<1x8xf32> to vector<1x1x8xf32>
    %c1 = arith.constant 1 : index
    %c0_4 = arith.constant 0 : index
    %4 = vector.load %arg2[%c1, %c0_4] : memref<2x8xf32, #tpu.memory_space<vmem>>, vector<1x8xf32>
    %5 = vector.shape_cast %4 : vector<1x8xf32> to vector<1x1x8xf32>
    %c0_5 = arith.constant 0 : index
    %c0_6 = arith.constant 0 : index
    %c0_7 = arith.constant 0 : index
    %c0_8 = arith.constant 0 : index
    %6 = vector.load %arg1[%c0_5, %c0_6, %c0_7, %c0_8] : memref<1x8x8x8xbf16, #tpu.memory_space<vmem>>, vector<1x8x8x8xbf16>
    %7 = vector.shape_cast %6 : vector<1x8x8x8xbf16> to vector<8x8x8xbf16>
    %8 = arith.extf %7 : vector<8x8x8xbf16> to vector<8x8x8xf32>
    %9 = vector.broadcast %3 : vector<1x1x8xf32> to vector<8x8x8xf32>
    %10 = arith.mulf %8, %9 : vector<8x8x8xf32>
    %11 = vector.broadcast %5 : vector<1x1x8xf32> to vector<8x8x8xf32>
    %12 = arith.addf %10, %11 : vector<8x8x8xf32>
    %cst_9 = arith.constant 0.000000e+00 : f32
    %13 = vector.broadcast %cst_9 : f32 to vector<8x8x8xf32>
    %14 = arith.maximumf %12, %13 : vector<8x8x8xf32>
    %15 = arith.truncf %14 : vector<8x8x8xf32> to vector<8x8x8xbf16>
    %c1_10 = arith.constant 1 : index
    %c1_11 = arith.constant 1 : index
    %c0_12 = arith.constant 0 : index
    %16 = vector.load %arg7[%c1_10, %c1_11, %c0_12] : memref<10x10x8xbf16, #tpu.memory_space<vmem>>, vector<8x8x8xbf16>
    tpu.vector_store %arg7[%c1_10, %c1_11, %c0_12], %15 {strides = array<i32>} : memref<10x10x8xbf16, #tpu.memory_space<vmem>>, vector<8x8x8xbf16>,
    %cst_13 = arith.constant 0.000000e+00 : f32
    %17 = vector.broadcast %cst_13 : f32 to vector<64x8xf32>
    %c0_14 = arith.constant 0 : index
    %c0_15 = arith.constant 0 : index
    %c0_16 = arith.constant 0 : index
    %18 = vector.load %arg7[%c0_14, %c0_15, %c0_16] : memref<10x10x8xbf16, #tpu.memory_space<vmem>>, vector<8x8x8xbf16>
    %19 = vector.shape_cast %18 : vector<8x8x8xbf16> to vector<64x8xbf16>
    %c0_17 = arith.constant 0 : index
    %c0_18 = arith.constant 0 : index
    %c0_19 = arith.constant 0 : index
    %20 = vector.load %arg3[%c0_17, %c0_18, %c0_19] : memref<9x8x8xbf16, #tpu.memory_space<vmem>>, vector<1x8x8xbf16>
    %21 = vector.shape_cast %20 : vector<1x8x8xbf16> to vector<8x8xbf16>
    %cst_20 = arith.constant dense<0.000000e+00> : vector<64x8xf32>
    %22 = tpu.matmul %19, %21, %cst_20 {dimension_numbers = #tpu.dot_dimension_numbers<[1], [0], [0], [1], [0, 0, 1, 1], [], []>} : vector<64x8xbf16>, vector<8x8xbf16>, vector<64x8xf32> -> vector<64x8xf32>
    %23 = arith.addf %17, %22 : vector<64x8xf32>
    %c0_21 = arith.constant 0 : index
    %c1_22 = arith.constant 1 : index
    %c0_23 = arith.constant 0 : index
    %24 = vector.load %arg7[%c0_21, %c1_22, %c0_23] : memref<10x10x8xbf16, #tpu.memory_space<vmem>>, vector<8x8x8xbf16>
    %25 = vector.shape_cast %24 : vector<8x8x8xbf16> to vector<64x8xbf16>
    %c1_24 = arith.constant 1 : index
    %c0_25 = arith.constant 0 : index
    %c0_26 = arith.constant 0 : index
    %26 = vector.load %arg3[%c1_24, %c0_25, %c0_26] : memref<9x8x8xbf16, #tpu.memory_space<vmem>>, vector<1x8x8xbf16>
    %27 = vector.shape_cast %26 : vector<1x8x8xbf16> to vector<8x8xbf16>
    %cst_27 = arith.constant dense<0.000000e+00> : vector<64x8xf32>
    %28 = tpu.matmul %25, %27, %cst_27 {dimension_numbers = #tpu.dot_dimension_numbers<[1], [0], [0], [1], [0, 0, 1, 1], [], []>} : vector<64x8xbf16>, vector<8x8xbf16>, vector<64x8xf32> -> vector<64x8xf32>
    %29 = arith.addf %23, %28 : vector<64x8xf32>
    %c0_28 = arith.constant 0 : index
    %c2 = arith.constant 2 : index
    %c0_29 = arith.constant 0 : index
    %30 = vector.load %arg7[%c0_28, %c2, %c0_29] : memref<10x10x8xbf16, #tpu.memory_space<vmem>>, vector<8x8x8xbf16>
    %31 = vector.shape_cast %30 : vector<8x8x8xbf16> to vector<64x8xbf16>
    %c2_30 = arith.constant 2 : index
    %c0_31 = arith.constant 0 : index
    %c0_32 = arith.constant 0 : index
    %32 = vector.load %arg3[%c2_30, %c0_31, %c0_32] : memref<9x8x8xbf16, #tpu.memory_space<vmem>>, vector<1x8x8xbf16>
    %33 = vector.shape_cast %32 : vector<1x8x8xbf16> to vector<8x8xbf16>
    %cst_33 = arith.constant dense<0.000000e+00> : vector<64x8xf32>
    %34 = tpu.matmul %31, %33, %cst_33 {dimension_numbers = #tpu.dot_dimension_numbers<[1], [0], [0], [1], [0, 0, 1, 1], [], []>} : vector<64x8xbf16>, vector<8x8xbf16>, vector<64x8xf32> -> vector<64x8xf32>
    %35 = arith.addf %29, %34 : vector<64x8xf32>
    %c1_34 = arith.constant 1 : index
    %c0_35 = arith.constant 0 : index
    %c0_36 = arith.constant 0 : index
    %36 = vector.load %arg7[%c1_34, %c0_35, %c0_36] : memref<10x10x8xbf16, #tpu.memory_space<vmem>>, vector<8x8x8xbf16>
    %37 = vector.shape_cast %36 : vector<8x8x8xbf16> to vector<64x8xbf16>
    %c3 = arith.constant 3 : index
    %c0_37 = arith.constant 0 : index
    %c0_38 = arith.constant 0 : index
    %38 = vector.load %arg3[%c3, %c0_37, %c0_38] : memref<9x8x8xbf16, #tpu.memory_space<vmem>>, vector<1x8x8xbf16>
    %39 = vector.shape_cast %38 : vector<1x8x8xbf16> to vector<8x8xbf16>
    %cst_39 = arith.constant dense<0.000000e+00> : vector<64x8xf32>
    %40 = tpu.matmul %37, %39, %cst_39 {dimension_numbers = #tpu.dot_dimension_numbers<[1], [0], [0], [1], [0, 0, 1, 1], [], []>} : vector<64x8xbf16>, vector<8x8xbf16>, vector<64x8xf32> -> vector<64x8xf32>
    %41 = arith.addf %35, %40 : vector<64x8xf32>
    %c1_40 = arith.constant 1 : index
    %c1_41 = arith.constant 1 : index
    %c0_42 = arith.constant 0 : index
    %42 = vector.load %arg7[%c1_40, %c1_41, %c0_42] : memref<10x10x8xbf16, #tpu.memory_space<vmem>>, vector<8x8x8xbf16>
    %43 = vector.shape_cast %42 : vector<8x8x8xbf16> to vector<64x8xbf16>
    %c4 = arith.constant 4 : index
    %c0_43 = arith.constant 0 : index
    %c0_44 = arith.constant 0 : index
    %44 = vector.load %arg3[%c4, %c0_43, %c0_44] : memref<9x8x8xbf16, #tpu.memory_space<vmem>>, vector<1x8x8xbf16>
    %45 = vector.shape_cast %44 : vector<1x8x8xbf16> to vector<8x8xbf16>
    %cst_45 = arith.constant dense<0.000000e+00> : vector<64x8xf32>
    %46 = tpu.matmul %43, %45, %cst_45 {dimension_numbers = #tpu.dot_dimension_numbers<[1], [0], [0], [1], [0, 0, 1, 1], [], []>} : vector<64x8xbf16>, vector<8x8xbf16>, vector<64x8xf32> -> vector<64x8xf32>
    %47 = arith.addf %41, %46 : vector<64x8xf32>
    %c1_46 = arith.constant 1 : index
    %c2_47 = arith.constant 2 : index
    %c0_48 = arith.constant 0 : index
    %48 = vector.load %arg7[%c1_46, %c2_47, %c0_48] : memref<10x10x8xbf16, #tpu.memory_space<vmem>>, vector<8x8x8xbf16>
    %49 = vector.shape_cast %48 : vector<8x8x8xbf16> to vector<64x8xbf16>
    %c5 = arith.constant 5 : index
    %c0_49 = arith.constant 0 : index
    %c0_50 = arith.constant 0 : index
    %50 = vector.load %arg3[%c5, %c0_49, %c0_50] : memref<9x8x8xbf16, #tpu.memory_space<vmem>>, vector<1x8x8xbf16>
    %51 = vector.shape_cast %50 : vector<1x8x8xbf16> to vector<8x8xbf16>
    %cst_51 = arith.constant dense<0.000000e+00> : vector<64x8xf32>
    %52 = tpu.matmul %49, %51, %cst_51 {dimension_numbers = #tpu.dot_dimension_numbers<[1], [0], [0], [1], [0, 0, 1, 1], [], []>} : vector<64x8xbf16>, vector<8x8xbf16>, vector<64x8xf32> -> vector<64x8xf32>
    %53 = arith.addf %47, %52 : vector<64x8xf32>
    %c2_52 = arith.constant 2 : index
    %c0_53 = arith.constant 0 : index
    %c0_54 = arith.constant 0 : index
    %54 = vector.load %arg7[%c2_52, %c0_53, %c0_54] : memref<10x10x8xbf16, #tpu.memory_space<vmem>>, vector<8x8x8xbf16>
    %55 = vector.shape_cast %54 : vector<8x8x8xbf16> to vector<64x8xbf16>
    %c6 = arith.constant 6 : index
    %c0_55 = arith.constant 0 : index
    %c0_56 = arith.constant 0 : index
    %56 = vector.load %arg3[%c6, %c0_55, %c0_56] : memref<9x8x8xbf16, #tpu.memory_space<vmem>>, vector<1x8x8xbf16>
    %57 = vector.shape_cast %56 : vector<1x8x8xbf16> to vector<8x8xbf16>
    %cst_57 = arith.constant dense<0.000000e+00> : vector<64x8xf32>
    %58 = tpu.matmul %55, %57, %cst_57 {dimension_numbers = #tpu.dot_dimension_numbers<[1], [0], [0], [1], [0, 0, 1, 1], [], []>} : vector<64x8xbf16>, vector<8x8xbf16>, vector<64x8xf32> -> vector<64x8xf32>
    %59 = arith.addf %53, %58 : vector<64x8xf32>
    %c2_58 = arith.constant 2 : index
    %c1_59 = arith.constant 1 : index
    %c0_60 = arith.constant 0 : index
    %60 = vector.load %arg7[%c2_58, %c1_59, %c0_60] : memref<10x10x8xbf16, #tpu.memory_space<vmem>>, vector<8x8x8xbf16>
    %61 = vector.shape_cast %60 : vector<8x8x8xbf16> to vector<64x8xbf16>
    %c7 = arith.constant 7 : index
    %c0_61 = arith.constant 0 : index
    %c0_62 = arith.constant 0 : index
    %62 = vector.load %arg3[%c7, %c0_61, %c0_62] : memref<9x8x8xbf16, #tpu.memory_space<vmem>>, vector<1x8x8xbf16>
    %63 = vector.shape_cast %62 : vector<1x8x8xbf16> to vector<8x8xbf16>
    %cst_63 = arith.constant dense<0.000000e+00> : vector<64x8xf32>
    %64 = tpu.matmul %61, %63, %cst_63 {dimension_numbers = #tpu.dot_dimension_numbers<[1], [0], [0], [1], [0, 0, 1, 1], [], []>} : vector<64x8xbf16>, vector<8x8xbf16>, vector<64x8xf32> -> vector<64x8xf32>
    %65 = arith.addf %59, %64 : vector<64x8xf32>
    %c2_64 = arith.constant 2 : index
    %c2_65 = arith.constant 2 : index
    %c0_66 = arith.constant 0 : index
    %66 = vector.load %arg7[%c2_64, %c2_65, %c0_66] : memref<10x10x8xbf16, #tpu.memory_space<vmem>>, vector<8x8x8xbf16>
    %67 = vector.shape_cast %66 : vector<8x8x8xbf16> to vector<64x8xbf16>
    %c8 = arith.constant 8 : index
    %c0_67 = arith.constant 0 : index
    %c0_68 = arith.constant 0 : index
    %68 = vector.load %arg3[%c8, %c0_67, %c0_68] : memref<9x8x8xbf16, #tpu.memory_space<vmem>>, vector<1x8x8xbf16>
    %69 = vector.shape_cast %68 : vector<1x8x8xbf16> to vector<8x8xbf16>
    %cst_69 = arith.constant dense<0.000000e+00> : vector<64x8xf32>
    %70 = tpu.matmul %67, %69, %cst_69 {dimension_numbers = #tpu.dot_dimension_numbers<[1], [0], [0], [1], [0, 0, 1, 1], [], []>} : vector<64x8xbf16>, vector<8x8xbf16>, vector<64x8xf32> -> vector<64x8xf32>
    %71 = arith.addf %65, %70 : vector<64x8xf32>
    %c0_70 = arith.constant 0 : index
    %c0_71 = arith.constant 0 : index
    %c0_72 = arith.constant 0 : index
    %c0_73 = arith.constant 0 : index
    %72 = vector.load %arg4[%c0_70, %c0_71, %c0_72, %c0_73] : memref<1x8x8x8xbf16, #tpu.memory_space<vmem>>, vector<1x8x8x8xbf16>
    %73 = vector.shape_cast %72 : vector<1x8x8x8xbf16> to vector<8x8x8xbf16>
    %74 = vector.shape_cast %73 : vector<8x8x8xbf16> to vector<64x8xbf16>
    %75 = arith.extf %74 : vector<64x8xbf16> to vector<64x8xf32>
    %76 = arith.addf %71, %75 : vector<64x8xf32>
    %77 = vector.shape_cast %76 : vector<64x8xf32> to vector<8x8x8xf32>
    %78 = arith.truncf %77 : vector<8x8x8xf32> to vector<8x8x8xbf16>
    %c0_74 = arith.constant 0 : index
    %c0_75 = arith.constant 0 : index
    %c0_76 = arith.constant 0 : index
    %c0_77 = arith.constant 0 : index
    %79 = vector.load %arg5[%c0_74, %c0_75, %c0_76, %c0_77] : memref<1x8x8x8xbf16, #tpu.memory_space<vmem>>, vector<1x8x8x8xbf16>
    %80 = vector.shape_cast %79 : vector<1x8x8x8xbf16> to vector<8x8x8xbf16>
    %81 = vector.shape_cast %78 : vector<8x8x8xbf16> to vector<1x8x8x8xbf16>
    tpu.vector_store %arg5[%c0_74, %c0_75, %c0_76, %c0_77], %81 {strides = array<i32>} : memref<1x8x8x8xbf16, #tpu.memory_space<vmem>>, vector<1x8x8x8xbf16>,
    %cst_78 = arith.constant dense<0.000000e+00> : vector<8xf32>
    %82 = vector.multi_reduction <add>, %76, %cst_78 [0] : vector<64x8xf32> to vector<8xf32>
    %83 = vector.shape_cast %82 : vector<8xf32> to vector<1x8xf32>
    %c0_79 = arith.constant 0 : index
    %c0_80 = arith.constant 0 : index
    %c0_81 = arith.constant 0 : index
    %84 = vector.load %arg6[%c0_79, %c0_80, %c0_81] : memref<1x2x8xf32, #tpu.memory_space<vmem>>, vector<1x1x8xf32>
    %85 = vector.shape_cast %84 : vector<1x1x8xf32> to vector<1x8xf32>
    %86 = vector.shape_cast %83 : vector<1x8xf32> to vector<1x1x8xf32>
    tpu.vector_store %arg6[%c0_79, %c0_80, %c0_81], %86 {strides = array<i32>} : memref<1x2x8xf32, #tpu.memory_space<vmem>>, vector<1x1x8xf32>,
    %87 = arith.mulf %76, %76 : vector<64x8xf32>
    %cst_82 = arith.constant dense<0.000000e+00> : vector<8xf32>
    %88 = vector.multi_reduction <add>, %87, %cst_82 [0] : vector<64x8xf32> to vector<8xf32>
    %89 = vector.shape_cast %88 : vector<8xf32> to vector<1x8xf32>
    %c0_83 = arith.constant 0 : index
    %c1_84 = arith.constant 1 : index
    %c0_85 = arith.constant 0 : index
    %90 = vector.load %arg6[%c0_83, %c1_84, %c0_85] : memref<1x2x8xf32, #tpu.memory_space<vmem>>, vector<1x1x8xf32>
    %91 = vector.shape_cast %90 : vector<1x1x8xf32> to vector<1x8xf32>
    %92 = vector.shape_cast %89 : vector<1x8xf32> to vector<1x1x8xf32>
    tpu.vector_store %arg6[%c0_83, %c1_84, %c0_85], %92 {strides = array<i32>} : memref<1x2x8xf32, #tpu.memory_space<vmem>>, vector<1x1x8xf32>,
    return
  }
  func.func @transform_0(%arg0: i32) -> (i32, i32, i32, i32) {
    %c0_i32 = arith.constant 0 : i32
    %c0_i32_0 = arith.constant 0 : i32
    %c0_i32_1 = arith.constant 0 : i32
    %c0_i32_2 = arith.constant 0 : i32
    return %arg0, %c0_i32, %c0_i32_0, %c0_i32_1 : i32, i32, i32, i32
  }
  func.func @transform_1(%arg0: i32) -> (i32, i32) {
    %c0_i32 = arith.constant 0 : i32
    %c0_i32_0 = arith.constant 0 : i32
    %c0_i32_1 = arith.constant 0 : i32
    return %c0_i32, %c0_i32_0 : i32, i32
  }
  func.func @transform_2(%arg0: i32) -> (i32, i32, i32) {
    %c0_i32 = arith.constant 0 : i32
    %c0_i32_0 = arith.constant 0 : i32
    %c0_i32_1 = arith.constant 0 : i32
    %c0_i32_2 = arith.constant 0 : i32
    return %c0_i32, %c0_i32_0, %c0_i32_1 : i32, i32, i32
  }
  func.func @transform_3(%arg0: i32) -> (i32, i32, i32, i32) {
    %c0_i32 = arith.constant 0 : i32
    %c0_i32_0 = arith.constant 0 : i32
    %c0_i32_1 = arith.constant 0 : i32
    %c0_i32_2 = arith.constant 0 : i32
    return %arg0, %c0_i32, %c0_i32_0, %c0_i32_1 : i32, i32, i32, i32
  }
  func.func @transform_4(%arg0: i32) -> (i32, i32, i32, i32) {
    %c0_i32 = arith.constant 0 : i32
    %c0_i32_0 = arith.constant 0 : i32
    %c0_i32_1 = arith.constant 0 : i32
    %c0_i32_2 = arith.constant 0 : i32
    return %arg0, %c0_i32, %c0_i32_0, %c0_i32_1 : i32, i32, i32, i32
  }
  func.func @transform_5(%arg0: i32) -> (i32, i32, i32) {
    %c0_i32 = arith.constant 0 : i32
    %c0_i32_0 = arith.constant 0 : i32
    %c0_i32_1 = arith.constant 0 : i32
    return %arg0, %c0_i32, %c0_i32_0 : i32, i32, i32
  }
}

</mosaic_0001>

<llo_original>
// kernel: tile.9
$region0: #{tile.9}
  %s0 = inlined_call_operand.vmem [shape: f32[2,4,4], index: 0, kind: input, shape index: {}]
  %s1 = inlined_call_operand.vmem [shape: f32[2,16], index: 1, kind: output, shape index: {}]
  $region1: #{tile.9} parent=0
    #allocation0 [shape = 'u8[4096]{0}', space=vmem, size = 0x1000, scoped, tag = 'scoped mem for output reshape']
    #allocation1 [shape = 'u8[8192]{0}', space=vmem, size = 0x2000, scoped, tag = 'scoped mem for input reshape']
    %s3 = ssub.s32 16, 1
    %s4 = scalar_lea.vmem %s0, 4
    %v5 = vld [vmem:[%s4] sm:%s3]
    %s6 = scalar_lea.vmem [#allocation1], 8
    %7 = vst [vmem:[%s6] sm:%s3] %v5
    %v8 = vld [vmem:[%s0] sm:%s3]
    %9 = vst [vmem:[#allocation1] sm:%s3] %v8
    %s10 = smov 3
    %v11 = vld [vmem:[#allocation1] ss:$8 sm:%s10]
    %vm12 = vcmask 31744
    %13 = vst.msk [vmem:[#allocation0] sm:$0x3] %vm12, %v11
    %s14 = scalar_lea.vmem [#allocation1], 3
    %s15 = smov 3
    %v16 = vld [vmem:[%s14] ss:$8 sm:%s15]
    %17 = vrot.lane.b32.xlu0 %v16, 12
    %v18 = vpop.permute.xlu0 %17
    %vm19 = vcmask 130144
    %20 = vst.msk [vmem:[#allocation0] sm:$0x3] %vm19, %v18
    %s21 = scalar_lea.vmem [#allocation1], 2
    %s22 = smov 3
    %v23 = vld [vmem:[%s21] ss:$8 sm:%s22]
    %24 = vrot.lane.b32.xlu0 %v23, 8
    %v25 = vpop.permute.xlu0 %24
    %vm26 = vcmask 97344
    %27 = vst.msk [vmem:[#allocation0] sm:$0x3] %vm26, %v25
    %s28 = scalar_lea.vmem [#allocation1], 1
    %s29 = smov 3
    %v30 = vld [vmem:[%s28] ss:$8 sm:%s29]
    %31 = vrot.lane.b32.xlu0 %v30, 4
    %v32 = vpop.permute.xlu0 %31
    %vm33 = vcmask 64544
    %34 = vst.msk [vmem:[#allocation0] sm:$0x3] %vm33, %v32
    %s36 = ssub.s32 4, 1
    %v37 = vld [vmem:[#allocation0] sm:%s36]
    %s39 = ssub.s32 4, 1
    %40 = vst [vmem:[%s1] sm:%s39] %v37

// kernel: _lambda_.5
$region0: #{_lambda_.5}
  #allocation0 [shape = 'u32[]', space=smem, size = 0x4, offset = 0x4, fixed_abs, tag = 'smem constant byte address 0x4 - core index']
  #allocation1 [shape = 'u32[72,128]{1,0:T(1,128)}', space=vmem, size = 0x9000, scoped, tag = 'internal scratch']
  %s0 = inlined_call_operand.vmem [shape: f32[512,4], index: 0, kind: input, shape index: {}]
  %s1 = inlined_call_operand.vmem [shape: f32[1,2,4], index: 1, kind: output, shape index: {}]
  %s2 = sld [smem:[#allocation0]]
  $region14: #{_lambda_.5} parent=0
    _
  %s4 = ssub.s32 1, %s2
  %s5 = scalar_select 0, %s4, %s2
  // Predicated region
  $region2: #{_lambda_.5} parent=0 // pred_check
    _
  $region3: #{_lambda_.5} parent=0 // pred_check_branch
    %7 = sbr.rel (0) target = $region5
  $region4: #{_lambda_.5} parent=0 // pred_region
    _
  $region5: #{_lambda_.5} parent=0 // pred_fallthru
    _
  %v8 = vld [vmem:[%s0] sm:$0xff]
  %v9 = vld [vmem:[%s0 + $0x8] sm:$0xff]
  %v10 = vld [vmem:[%s0 + $0x10] sm:$0xff]
  %v11 = vld [vmem:[%s0 + $0x18] sm:$0xff]
  %v12 = vld [vmem:[%s0 + $0x20] sm:$0xff]
  %v13 = vld [vmem:[%s0 + $0x28] sm:$0xff]
  %v14 = vld [vmem:[%s0 + $0x30] sm:$0xff]
  %v15 = vld [vmem:[%s0 + $0x38] sm:$0xff]
  %v16 = vld [vmem:[%s0 + $0x40] sm:$0xff]
  %v17 = vld [vmem:[%s0 + $0x48] sm:$0xff]
  %v18 = vld [vmem:[%s0 + $0x50] sm:$0xff]
  %v19 = vld [vmem:[%s0 + $0x58] sm:$0xff]
  %v20 = vld [vmem:[%s0 + $0x60] sm:$0xff]
  %v21 = vld [vmem:[%s0 + $0x68] sm:$0xff]
  %v22 = vld [vmem:[%s0 + $0x70] sm:$0xff]
  %v23 = vld [vmem:[%s0 + $0x78] sm:$0xff]
  %v24 = vld [vmem:[%s0 + $0x80] sm:$0xff]
  %v25 = vld [vmem:[%s0 + $0x88] sm:$0xff]
  %v26 = vld [vmem:[%s0 + $0x90] sm:$0xff]
  %v27 = vld [vmem:[%s0 + $0x98] sm:$0xff]
  %v28 = vld [vmem:[%s0 + $0xa0] sm:$0xff]
  %v29 = vld [vmem:[%s0 + $0xa8] sm:$0xff]
  %v30 = vld [vmem:[%s0 + $0xb0] sm:$0xff]
  %v31 = vld [vmem:[%s0 + $0xb8] sm:$0xff]
  %v32 = vld [vmem:[%s0 + $0xc0] sm:$0xff]
  %v33 = vld [vmem:[%s0 + $0xc8] sm:$0xff]
  %v34 = vld [vmem:[%s0 + $0xd0] sm:$0xff]
  %v35 = vld [vmem:[%s0 + $0xd8] sm:$0xff]
  %v36 = vld [vmem:[%s0 + $0xe0] sm:$0xff]
  %v37 = vld [vmem:[%s0 + $0xe8] sm:$0xff]
  %v38 = vld [vmem:[%s0 + $0xf0] sm:$0xff]
  %v39 = vld [vmem:[%s0 + $0xf8] sm:$0xff]
  %v40 = vld [vmem:[%s0 + $0x100] sm:$0xff]
  %v41 = vld [vmem:[%s0 + $0x108] sm:$0xff]
  %v42 = vld [vmem:[%s0 + $0x110] sm:$0xff]
  %v43 = vld [vmem:[%s0 + $0x118] sm:$0xff]
  %v44 = vld [vmem:[%s0 + $0x120] sm:$0xff]
  %v45 = vld [vmem:[%s0 + $0x128] sm:$0xff]
  %v46 = vld [vmem:[%s0 + $0x130] sm:$0xff]
  %v47 = vld [vmem:[%s0 + $0x138] sm:$0xff]
  %v48 = vld [vmem:[%s0 + $0x140] sm:$0xff]
  %v49 = vld [vmem:[%s0 + $0x148] sm:$0xff]
  %v50 = vld [vmem:[%s0 + $0x150] sm:$0xff]
  %v51 = vld [vmem:[%s0 + $0x158] sm:$0xff]
  %v52 = vld [vmem:[%s0 + $0x160] sm:$0xff]
  %v53 = vld [vmem:[%s0 + $0x168] sm:$0xff]
  %v54 = vld [vmem:[%s0 + $0x170] sm:$0xff]
  %v55 = vld [vmem:[%s0 + $0x178] sm:$0xff]
  %v56 = vld [vmem:[%s0 + $0x180] sm:$0xff]
  %v57 = vld [vmem:[%s0 + $0x188] sm:$0xff]
  %v58 = vld [vmem:[%s0 + $0x190] sm:$0xff]
  %v59 = vld [vmem:[%s0 + $0x198] sm:$0xff]
  %v60 = vld [vmem:[%s0 + $0x1a0] sm:$0xff]
  %v61 = vld [vmem:[%s0 + $0x1a8] sm:$0xff]
  %v62 = vld [vmem:[%s0 + $0x1b0] sm:$0xff]
  %v63 = vld [vmem:[%s0 + $0x1b8] sm:$0xff]
  %v64 = vld [vmem:[%s0 + $0x1c0] sm:$0xff]
  %v65 = vld [vmem:[%s0 + $0x1c8] sm:$0xff]
  %v66 = vld [vmem:[%s0 + $0x1d0] sm:$0xff]
  %v67 = vld [vmem:[%s0 + $0x1d8] sm:$0xff]
  %v68 = vld [vmem:[%s0 + $0x1e0] sm:$0xff]
  %v69 = vld [vmem:[%s0 + $0x1e8] sm:$0xff]
  %v70 = vld [vmem:[%s0 + $0x1f0] sm:$0xff]
  %v71 = vld [vmem:[%s0 + $0x1f8] sm:$0xff]
  %vm72 = vcmask 31744
  %v73 = vsel %vm72, %v8, 0.0
  %v74 = vsel %vm72, %v9, 0.0
  %v75 = vadd.f32 %v73, %v74
  %v76 = vsel %vm72, %v10, 0.0
  %v77 = vadd.f32 %v75, %v76
  %v78 = vsel %vm72, %v11, 0.0
  %v79 = vadd.f32 %v77, %v78
  %v80 = vsel %vm72, %v12, 0.0
  %v81 = vadd.f32 %v79, %v80
  %v82 = vsel %vm72, %v13, 0.0
  %v83 = vadd.f32 %v81, %v82
  %v84 = vsel %vm72, %v14, 0.0
  %v85 = vadd.f32 %v83, %v84
  %v86 = vsel %vm72, %v15, 0.0
  %v87 = vadd.f32 %v85, %v86
  %v88 = vsel %vm72, %v16, 0.0
  %v89 = vadd.f32 %v87, %v88
  %v90 = vsel %vm72, %v17, 0.0
  %v91 = vadd.f32 %v89, %v90
  %v92 = vsel %vm72, %v18, 0.0
  %v93 = vadd.f32 %v91, %v92
  %v94 = vsel %vm72, %v19, 0.0
  %v95 = vadd.f32 %v93, %v94
  %v96 = vsel %vm72, %v20, 0.0
  %v97 = vadd.f32 %v95, %v96
  %v98 = vsel %vm72, %v21, 0.0
  %v99 = vadd.f32 %v97, %v98
  %v100 = vsel %vm72, %v22, 0.0
  %v101 = vadd.f32 %v99, %v100
  %v102 = vsel %vm72, %v23, 0.0
  %v103 = vadd.f32 %v101, %v102
  %v104 = vsel %vm72, %v24, 0.0
  %v105 = vadd.f32 %v103, %v104
  %v106 = vsel %vm72, %v25, 0.0
  %v107 = vadd.f32 %v105, %v106
  %v108 = vsel %vm72, %v26, 0.0
  %v109 = vadd.f32 %v107, %v108
  %v110 = vsel %vm72, %v27, 0.0
  %v111 = vadd.f32 %v109, %v110
  %v112 = vsel %vm72, %v28, 0.0
  %v113 = vadd.f32 %v111, %v112
  %v114 = vsel %vm72, %v29, 0.0
  %v115 = vadd.f32 %v113, %v114
  %v116 = vsel %vm72, %v30, 0.0
  %v117 = vadd.f32 %v115, %v116
  %v118 = vsel %vm72, %v31, 0.0
  %v119 = vadd.f32 %v117, %v118
  %v120 = vsel %vm72, %v32, 0.0
  %v121 = vadd.f32 %v119, %v120
  %v122 = vsel %vm72, %v33, 0.0
  %v123 = vadd.f32 %v121, %v122
  %v124 = vsel %vm72, %v34, 0.0
  %v125 = vadd.f32 %v123, %v124
  %v126 = vsel %vm72, %v35, 0.0
  %v127 = vadd.f32 %v125, %v126
  %v128 = vsel %vm72, %v36, 0.0
  %v129 = vadd.f32 %v127, %v128
  %v130 = vsel %vm72, %v37, 0.0
  %v131 = vadd.f32 %v129, %v130
  %v132 = vsel %vm72, %v38, 0.0
  %v133 = vadd.f32 %v131, %v132
  %v134 = vsel %vm72, %v39, 0.0
  %v135 = vadd.f32 %v133, %v134
  %v136 = vsel %vm72, %v40, 0.0
  %v137 = vadd.f32 %v135, %v136
  %v138 = vsel %vm72, %v41, 0.0
  %v139 = vadd.f32 %v137, %v138
  %v140 = vsel %vm72, %v42, 0.0
  %v141 = vadd.f32 %v139, %v140
  %v142 = vsel %vm72, %v43, 0.0
  %v143 = vadd.f32 %v141, %v142
  %v144 = vsel %vm72, %v44, 0.0
  %v145 = vadd.f32 %v143, %v144
  %v146 = vsel %vm72, %v45, 0.0
  %v147 = vadd.f32 %v145, %v146
  %v148 = vsel %vm72, %v46, 0.0
  %v149 = vadd.f32 %v147, %v148
  %v150 = vsel %vm72, %v47, 0.0
  %v151 = vadd.f32 %v149, %v150
  %v152 = vsel %vm72, %v48, 0.0
  %v153 = vadd.f32 %v151, %v152
  %v154 = vsel %vm72, %v49, 0.0
  %v155 = vadd.f32 %v153, %v154
  %v156 = vsel %vm72, %v50, 0.0
  %v157 = vadd.f32 %v155, %v156
  %v158 = vsel %vm72, %v51, 0.0
  %v159 = vadd.f32 %v157, %v158
  %v160 = vsel %vm72, %v52, 0.0
  %v161 = vadd.f32 %v159, %v160
  %v162 = vsel %vm72, %v53, 0.0
  %v163 = vadd.f32 %v161, %v162
  %v164 = vsel %vm72, %v54, 0.0
  %v165 = vadd.f32 %v163, %v164
  %v166 = vsel %vm72, %v55, 0.0
  %v167 = vadd.f32 %v165, %v166
  %v168 = vsel %vm72, %v56, 0.0
  %v169 = vadd.f32 %v167, %v168
  %v170 = vsel %vm72, %v57, 0.0
  %v171 = vadd.f32 %v169, %v170
  %v172 = vsel %vm72, %v58, 0.0
  %v173 = vadd.f32 %v171, %v172
  %v174 = vsel %vm72, %v59, 0.0
  %v175 = vadd.f32 %v173, %v174
  %v176 = vsel %vm72, %v60, 0.0
  %v177 = vadd.f32 %v175, %v176
  %v178 = vsel %vm72, %v61, 0.0
  %v179 = vadd.f32 %v177, %v178
  %v180 = vsel %vm72, %v62, 0.0
  %v181 = vadd.f32 %v179, %v180
  %v182 = vsel %vm72, %v63, 0.0
  %v183 = vadd.f32 %v181, %v182
  %v184 = vsel %vm72, %v64, 0.0
  %v185 = vadd.f32 %v183, %v184
  %v186 = vsel %vm72, %v65, 0.0
  %v187 = vadd.f32 %v185, %v186
  %v188 = vsel %vm72, %v66, 0.0
  %v189 = vadd.f32 %v187, %v188
  %v190 = vsel %vm72, %v67, 0.0
  %v191 = vadd.f32 %v189, %v190
  %v192 = vsel %vm72, %v68, 0.0
  %v193 = vadd.f32 %v191, %v192
  %v194 = vsel %vm72, %v69, 0.0
  %v195 = vadd.f32 %v193, %v194
  %v196 = vsel %vm72, %v70, 0.0
  %v197 = vadd.f32 %v195, %v196
  %v198 = vsel %vm72, %v71, 0.0
  %v199 = vadd.f32 %v197, %v198
  %v200 = vrot.slane %v199, 4
  %v201 = vadd.f32 %v199, %v200
  %v202 = vrot.slane %v201, 2
  %v203 = vadd.f32 %v201, %v202
  %v204 = vrot.slane %v203, 1
  %v205 = vadd.f32 %v203, %v204
  %vm206 = vcmask 24576
  %207 = vst.msk [vmem:[%s1] sm:$0x1] %vm206, %v205
  %v208 = vmul.f32 %v8, %v8
  %v209 = vmul.f32 %v9, %v9
  %v210 = vmul.f32 %v10, %v10
  %v211 = vmul.f32 %v11, %v11
  %v212 = vmul.f32 %v12, %v12
  %v213 = vmul.f32 %v13, %v13
  %v214 = vmul.f32 %v14, %v14
  %v215 = vmul.f32 %v15, %v15
  %v216 = vmul.f32 %v16, %v16
  %v217 = vmul.f32 %v17, %v17
  %v218 = vmul.f32 %v18, %v18
  %v219 = vmul.f32 %v19, %v19
  %v220 = vmul.f32 %v20, %v20
  %v221 = vmul.f32 %v21, %v21
  %v222 = vmul.f32 %v22, %v22
  %v223 = vmul.f32 %v23, %v23
  %v224 = vmul.f32 %v24, %v24
  %v225 = vmul.f32 %v25, %v25
  %v226 = vmul.f32 %v26, %v26
  %v227 = vmul.f32 %v27, %v27
  %v228 = vmul.f32 %v28, %v28
  %v229 = vmul.f32 %v29, %v29
  %v230 = vmul.f32 %v30, %v30
  %v231 = vmul.f32 %v31, %v31
  %v232 = vmul.f32 %v32, %v32
  %v233 = vmul.f32 %v33, %v33
  %v234 = vmul.f32 %v34, %v34
  %v235 = vmul.f32 %v35, %v35
  %v236 = vmul.f32 %v36, %v36
  %v237 = vmul.f32 %v37, %v37
  %v238 = vmul.f32 %v38, %v38
  %v239 = vmul.f32 %v39, %v39
  %v240 = vmul.f32 %v40, %v40
  %v241 = vmul.f32 %v41, %v41
  %v242 = vmul.f32 %v42, %v42
  %v243 = vmul.f32 %v43, %v43
  %v244 = vmul.f32 %v44, %v44
  %v245 = vmul.f32 %v45, %v45
  %v246 = vmul.f32 %v46, %v46
  %v247 = vmul.f32 %v47, %v47
  %v248 = vmul.f32 %v48, %v48
  %v249 = vmul.f32 %v49, %v49
  %v250 = vmul.f32 %v50, %v50
  %v251 = vmul.f32 %v51, %v51
  %v252 = vmul.f32 %v52, %v52
  %v253 = vmul.f32 %v53, %v53
  %v254 = vmul.f32 %v54, %v54
  %v255 = vmul.f32 %v55, %v55
  %v256 = vmul.f32 %v56, %v56
  %v257 = vmul.f32 %v57, %v57
  %v258 = vmul.f32 %v58, %v58
  %v259 = vmul.f32 %v59, %v59
  %v260 = vmul.f32 %v60, %v60
  %v261 = vmul.f32 %v61, %v61
  %v262 = vmul.f32 %v62, %v62
  %v263 = vmul.f32 %v63, %v63
  %v264 = vmul.f32 %v64, %v64
  %v265 = vmul.f32 %v65, %v65
  %v266 = vmul.f32 %v66, %v66
  %v267 = vmul.f32 %v67, %v67
  %v268 = vmul.f32 %v68, %v68
  %v269 = vmul.f32 %v69, %v69
  %v270 = vmul.f32 %v70, %v70
  %v271 = vmul.f32 %v71, %v71
  %v272 = vsel %vm72, %v208, 0.0
  %v273 = vsel %vm72, %v209, 0.0
  %v274 = vadd.f32 %v272, %v273
  %v275 = vsel %vm72, %v210, 0.0
  %v276 = vadd.f32 %v274, %v275
  %v277 = vsel %vm72, %v211, 0.0
  %v278 = vadd.f32 %v276, %v277
  %v279 = vsel %vm72, %v212, 0.0
  %v280 = vadd.f32 %v278, %v279
  %v281 = vsel %vm72, %v213, 0.0
  %v282 = vadd.f32 %v280, %v281
  %v283 = vsel %vm72, %v214, 0.0
  %v284 = vadd.f32 %v282, %v283
  %v285 = vsel %vm72, %v215, 0.0
  %v286 = vadd.f32 %v284, %v285
  %v287 = vsel %vm72, %v216, 0.0
  %v288 = vadd.f32 %v286, %v287
  %v289 = vsel %vm72, %v217, 0.0
  %v290 = vadd.f32 %v288, %v289
  %v291 = vsel %vm72, %v218, 0.0
  %v292 = vadd.f32 %v290, %v291
  %v293 = vsel %vm72, %v219, 0.0
  %v294 = vadd.f32 %v292, %v293
  %v295 = vsel %vm72, %v220, 0.0
  %v296 = vadd.f32 %v294, %v295
  %v297 = vsel %vm72, %v221, 0.0
  %v298 = vadd.f32 %v296, %v297
  %v299 = vsel %vm72, %v222, 0.0
  %v300 = vadd.f32 %v298, %v299
  %v301 = vsel %vm72, %v223, 0.0
  %v302 = vadd.f32 %v300, %v301
  %v303 = vsel %vm72, %v224, 0.0
  %v304 = vadd.f32 %v302, %v303
  %v305 = vsel %vm72, %v225, 0.0
  %v306 = vadd.f32 %v304, %v305
  %v307 = vsel %vm72, %v226, 0.0
  %v308 = vadd.f32 %v306, %v307
  %v309 = vsel %vm72, %v227, 0.0
  %v310 = vadd.f32 %v308, %v309
  %v311 = vsel %vm72, %v228, 0.0
  %v312 = vadd.f32 %v310, %v311
  %v313 = vsel %vm72, %v229, 0.0
  %v314 = vadd.f32 %v312, %v313
  %v315 = vsel %vm72, %v230, 0.0
  %v316 = vadd.f32 %v314, %v315
  %v317 = vsel %vm72, %v231, 0.0
  %v318 = vadd.f32 %v316, %v317
  %v319 = vsel %vm72, %v232, 0.0
  %v320 = vadd.f32 %v318, %v319
  %v321 = vsel %vm72, %v233, 0.0
  %v322 = vadd.f32 %v320, %v321
  %v323 = vsel %vm72, %v234, 0.0
  %v324 = vadd.f32 %v322, %v323
  %v325 = vsel %vm72, %v235, 0.0
  %v326 = vadd.f32 %v324, %v325
  %v327 = vsel %vm72, %v236, 0.0
  %v328 = vadd.f32 %v326, %v327
  %v329 = vsel %vm72, %v237, 0.0
  %v330 = vadd.f32 %v328, %v329
  %v331 = vsel %vm72, %v238, 0.0
  %v332 = vadd.f32 %v330, %v331
  %v333 = vsel %vm72, %v239, 0.0
  %v334 = vadd.f32 %v332, %v333
  %v335 = vsel %vm72, %v240, 0.0
  %v336 = vadd.f32 %v334, %v335
  %v337 = vsel %vm72, %v241, 0.0
  %v338 = vadd.f32 %v336, %v337
  %v339 = vsel %vm72, %v242, 0.0
  %v340 = vadd.f32 %v338, %v339
  %v341 = vsel %vm72, %v243, 0.0
  %v342 = vadd.f32 %v340, %v341
  %v343 = vsel %vm72, %v244, 0.0
  %v344 = vadd.f32 %v342, %v343
  %v345 = vsel %vm72, %v245, 0.0
  %v346 = vadd.f32 %v344, %v345
  %v347 = vsel %vm72, %v246, 0.0
  %v348 = vadd.f32 %v346, %v347
  %v349 = vsel %vm72, %v247, 0.0
  %v350 = vadd.f32 %v348, %v349
  %v351 = vsel %vm72, %v248, 0.0
  %v352 = vadd.f32 %v350, %v351
  %v353 = vsel %vm72, %v249, 0.0
  %v354 = vadd.f32 %v352, %v353
  %v355 = vsel %vm72, %v250, 0.0
  %v356 = vadd.f32 %v354, %v355
  %v357 = vsel %vm72, %v251, 0.0
  %v358 = vadd.f32 %v356, %v357
  %v359 = vsel %vm72, %v252, 0.0
  %v360 = vadd.f32 %v358, %v359
  %v361 = vsel %vm72, %v253, 0.0
  %v362 = vadd.f32 %v360, %v361
  %v363 = vsel %vm72, %v254, 0.0
  %v364 = vadd.f32 %v362, %v363
  %v365 = vsel %vm72, %v255, 0.0
  %v366 = vadd.f32 %v364, %v365
  %v367 = vsel %vm72, %v256, 0.0
  %v368 = vadd.f32 %v366, %v367
  %v369 = vsel %vm72, %v257, 0.0
  %v370 = vadd.f32 %v368, %v369
  %v371 = vsel %vm72, %v258, 0.0
  %v372 = vadd.f32 %v370, %v371
  %v373 = vsel %vm72, %v259, 0.0
  %v374 = vadd.f32 %v372, %v373
  %v375 = vsel %vm72, %v260, 0.0
  %v376 = vadd.f32 %v374, %v375
  %v377 = vsel %vm72, %v261, 0.0
  %v378 = vadd.f32 %v376, %v377
  %v379 = vsel %vm72, %v262, 0.0
  %v380 = vadd.f32 %v378, %v379
  %v381 = vsel %vm72, %v263, 0.0
  %v382 = vadd.f32 %v380, %v381
  %v383 = vsel %vm72, %v264, 0.0
  %v384 = vadd.f32 %v382, %v383
  %v385 = vsel %vm72, %v265, 0.0
  %v386 = vadd.f32 %v384, %v385
  %v387 = vsel %vm72, %v266, 0.0
  %v388 = vadd.f32 %v386, %v387
  %v389 = vsel %vm72, %v267, 0.0
  %v390 = vadd.f32 %v388, %v389
  %v391 = vsel %vm72, %v268, 0.0
  %v392 = vadd.f32 %v390, %v391
  %v393 = vsel %vm72, %v269, 0.0
  %v394 = vadd.f32 %v392, %v393
  %v395 = vsel %vm72, %v270, 0.0
  %v396 = vadd.f32 %v394, %v395
  %v397 = vsel %vm72, %v271, 0.0
  %v398 = vadd.f32 %v396, %v397
  %v399 = vrot.slane %v398, 4
  %v400 = vadd.f32 %v398, %v399
  %v401 = vrot.slane %v400, 2
  %v402 = vadd.f32 %v400, %v401
  %v403 = vrot.slane %v402, 1
  %v404 = vadd.f32 %v402, %v403
  %405 = vst.msk [vmem:[%s1 + $0x1] sm:$0x1] %vm206, %v404
  // Predicated region
  $region6: #{_lambda_.5} parent=0 // pred_check
    _
  $region7: #{_lambda_.5} parent=0 // pred_check_branch
    %407 = sbr.rel (0) target = $region9
  $region8: #{_lambda_.5} parent=0 // pred_region
    _
  $region9: #{_lambda_.5} parent=0 // pred_fallthru
    _
  // Predicated region
  $region10: #{_lambda_.5} parent=0 // pred_check
    _
  $region11: #{_lambda_.5} parent=0 // pred_check_branch
    %409 = sbr.rel (0) target = $region13
  $region12: #{_lambda_.5} parent=0 // pred_region
    _
  $region13: #{_lambda_.5} parent=0 // pred_fallthru
    _

// kernel: _lambda_.6
$region0: #{_lambda_.6}
  #allocation0 [shape = 'u32[]', space=smem, size = 0x4, offset = 0x4, fixed_abs, tag = 'smem constant byte address 0x4 - core index']
  #allocation1 [shape = 'u32[72,128]{1,0:T(1,128)}', space=vmem, size = 0x9000, scoped, tag = 'internal scratch']
  #allocation2 [shape = 'bf16[9,9,16]{2,1,0:T(8,128)(2,1)}', space=vmem, size = 0x9000, scoped, tag = 'scratch operand']
  %s0 = inlined_call_operand.vmem [shape: f32[2,8,8,16], index: 0, kind: input, shape index: {}]
  %s1 = inlined_call_operand.vmem [shape: f32[2,16], index: 1, kind: input, shape index: {}]
  %s2 = inlined_call_operand.vmem [shape: bf16[4,16,8], index: 2, kind: input, shape index: {}]
  %s3 = inlined_call_operand.vmem [shape: bf16[4,8], index: 3, kind: input, shape index: {}]
  %s4 = inlined_call_operand.vmem [shape: bf16[2,8,8,8], index: 4, kind: output, shape index: {0}]
  %s5 = inlined_call_operand.vmem [shape: bf16[2,8,8,8], index: 5, kind: output, shape index: {1}]
  %s6 = inlined_call_operand.vmem [shape: f32[2,2,8], index: 6, kind: output, shape index: {2}]
  %7 = xla_tuple %s4, %s5, %s6
  %s8 = sld [smem:[#allocation0]]
  $region65: #{_lambda_.6} parent=0
    _
  %s10 = ssub.s32 1, %s8
  %s11 = scalar_select 0, %s10, %s8
  loop: start=0, step=1, limit=4
  $region2: #{_lambda_.6} parent=0 // loop_pre_header
    _
  $region3: #{_lambda_.6} parent=0 // loop_header
    %s13 = sphi 0, %s17
    %p14 = scmp.ge.s32.totalorder %s13, 4
    %s23 = sphi 0, %s25
    %s26 = sphi 0, %s23
    %s27 = sphi 0, %s26
    %s43 = sphi 0, %s27
    %s47 = sphi 0, %s47
    %s49 = sphi 0, %s47
    %s50 = sphi 0, %s49
    %s64 = sphi 0, %s50
    %s68 = sphi 0, %s68
    %s70 = sphi 0, %s68
    %s71 = sphi 0, %s70
    %s85 = sphi 0, %s71
    %s89 = sphi 0, %s89
    %s91 = sphi 0, %s89
    %s92 = sphi 0, %s91
    %s106 = sphi 0, %s92
    %s112 = sphi 0, %s114
    %s115 = sphi 0, %s112
    %s116 = sphi 0, %s115
    %s132 = sphi 0, %s116
    %s138 = sphi 0, %s140
    %s141 = sphi 0, %s138
    %s142 = sphi 0, %s141
    %s158 = sphi 0, %s142
    %s164 = sphi 0, %s166
    %s167 = sphi 0, %s164
    %s168 = sphi 0, %s167
    %s184 = sphi 0, %s168
  $region4: #{_lambda_.6} parent=0 // loop_header_branch
    %16 = sbr.rel (%p14) target = $region8
  $region5: #{_lambda_.6} parent=0 // loop_body
    %s18 = ssub.s32 %s13, 1
    %s19 = ssub.s32 %s13, 2
    %s20 = sadd.s32 %s13, 1
    %s21 = ssub.s32 %s13, %s20
    %p22 = scmp.eq.s32.totalorder %s21, 0
    %s24 = sadd.s32 %s23, 1
    %s25 = scalar_select %p22, %s23, %s24
    %p28 = pneg %p22
    %p29 = scmp.eq.s32.totalorder %s13, 1
    %p30 = por %p28, %p29
    %p31 = scmp.ne.s32.totalorder %s23, %s26
    %p32 = scmp.eq.s32.totalorder %s13, 0
    %p33 = por %p31, %p32
    %p34 = scmp.ne.s32.totalorder %s23, %s26
    %p35 = scmp.eq.s32.totalorder %s18, 1
    %p36 = por %p34, %p35
    %p37 = scmp.ne.s32.totalorder %s26, %s27
    %p38 = scmp.eq.s32.totalorder %s18, 0
    %p39 = por %p37, %p38
    %p40 = scmp.ne.s32.totalorder %s26, %s27
    %p41 = scmp.eq.s32.totalorder %s19, 1
    %p42 = por %p40, %p41
    %p44 = scmp.ne.s32.totalorder %s27, %s43
    %p45 = scmp.eq.s32.totalorder %s19, 0
    %p46 = por %p44, %p45
    %s48 = sadd.s32 %s47, 1
    %p51 = scmp.eq.s32.totalorder %s13, 1
    %p52 = scmp.ne.s32.totalorder %s47, %s49
    %p53 = scmp.eq.s32.totalorder %s13, 0
    %p54 = por %p52, %p53
    %p55 = scmp.ne.s32.totalorder %s47, %s49
    %p56 = scmp.eq.s32.totalorder %s18, 1
    %p57 = por %p55, %p56
    %p58 = scmp.ne.s32.totalorder %s49, %s50
    %p59 = scmp.eq.s32.totalorder %s18, 0
    %p60 = por %p58, %p59
    %p61 = scmp.ne.s32.totalorder %s49, %s50
    %p62 = scmp.eq.s32.totalorder %s19, 1
    %p63 = por %p61, %p62
    %p65 = scmp.ne.s32.totalorder %s50, %s64
    %p66 = scmp.eq.s32.totalorder %s19, 0
    %p67 = por %p65, %p66
    %s69 = sadd.s32 %s68, 1
    %p72 = scmp.eq.s32.totalorder %s13, 1
    %p73 = scmp.ne.s32.totalorder %s68, %s70
    %p74 = scmp.eq.s32.totalorder %s13, 0
    %p75 = por %p73, %p74
    %p76 = scmp.ne.s32.totalorder %s68, %s70
    %p77 = scmp.eq.s32.totalorder %s18, 1
    %p78 = por %p76, %p77
    %p79 = scmp.ne.s32.totalorder %s70, %s71
    %p80 = scmp.eq.s32.totalorder %s18, 0
    %p81 = por %p79, %p80
    %p82 = scmp.ne.s32.totalorder %s70, %s71
    %p83 = scmp.eq.s32.totalorder %s19, 1
    %p84 = por %p82, %p83
    %p86 = scmp.ne.s32.totalorder %s71, %s85
    %p87 = scmp.eq.s32.totalorder %s19, 0
    %p88 = por %p86, %p87
    %s90 = sadd.s32 %s89, 1
    %p93 = scmp.eq.s32.totalorder %s13, 1
    %p94 = scmp.ne.s32.totalorder %s89, %s91
    %p95 = scmp.eq.s32.totalorder %s13, 0
    %p96 = por %p94, %p95
    %p97 = scmp.ne.s32.totalorder %s89, %s91
    %p98 = scmp.eq.s32.totalorder %s18, 1
    %p99 = por %p97, %p98
    %p100 = scmp.ne.s32.totalorder %s91, %s92
    %p101 = scmp.eq.s32.totalorder %s18, 0
    %p102 = por %p100, %p101
    %p103 = scmp.ne.s32.totalorder %s91, %s92
    %p104 = scmp.eq.s32.totalorder %s19, 1
    %p105 = por %p103, %p104
    %p107 = scmp.ne.s32.totalorder %s92, %s106
    %p108 = scmp.eq.s32.totalorder %s19, 0
    %p109 = por %p107, %p108
    %s110 = ssub.s32 %s13, %s20
    %p111 = scmp.eq.s32.totalorder %s110, 0
    %s113 = sadd.s32 %s112, 1
    %s114 = scalar_select %p111, %s112, %s113
    %p117 = pneg %p111
    %p118 = scmp.eq.s32.totalorder %s13, 1
    %p119 = por %p117, %p118
    %p120 = scmp.ne.s32.totalorder %s112, %s115
    %p121 = scmp.eq.s32.totalorder %s13, 0
    %p122 = por %p120, %p121
    %p123 = scmp.ne.s32.totalorder %s112, %s115
    %p124 = scmp.eq.s32.totalorder %s18, 1
    %p125 = por %p123, %p124
    %p126 = scmp.ne.s32.totalorder %s115, %s116
    %p127 = scmp.eq.s32.totalorder %s18, 0
    %p128 = por %p126, %p127
    %p129 = scmp.ne.s32.totalorder %s115, %s116
    %p130 = scmp.eq.s32.totalorder %s19, 1
    %p131 = por %p129, %p130
    %p133 = scmp.ne.s32.totalorder %s116, %s132
    %p134 = scmp.eq.s32.totalorder %s19, 0
    %p135 = por %p133, %p134
    %s136 = ssub.s32 %s13, %s20
    %p137 = scmp.eq.s32.totalorder %s136, 0
    %s139 = sadd.s32 %s138, 1
    %s140 = scalar_select %p137, %s138, %s139
    %p143 = pneg %p137
    %p144 = scmp.eq.s32.totalorder %s13, 1
    %p145 = por %p143, %p144
    %p146 = scmp.ne.s32.totalorder %s138, %s141
    %p147 = scmp.eq.s32.totalorder %s13, 0
    %p148 = por %p146, %p147
    %p149 = scmp.ne.s32.totalorder %s138, %s141
    %p150 = scmp.eq.s32.totalorder %s18, 1
    %p151 = por %p149, %p150
    %p152 = scmp.ne.s32.totalorder %s141, %s142
    %p153 = scmp.eq.s32.totalorder %s18, 0
    %p154 = por %p152, %p153
    %p155 = scmp.ne.s32.totalorder %s141, %s142
    %p156 = scmp.eq.s32.totalorder %s19, 1
    %p157 = por %p155, %p156
    %p159 = scmp.ne.s32.totalorder %s142, %s158
    %p160 = scmp.eq.s32.totalorder %s19, 0
    %p161 = por %p159, %p160
    %s162 = ssub.s32 %s13, %s20
    %p163 = scmp.eq.s32.totalorder %s162, 0
    %s165 = sadd.s32 %s164, 1
    %s166 = scalar_select %p163, %s164, %s165
    %p169 = pneg %p163
    %p170 = scmp.eq.s32.totalorder %s13, 1
    %p171 = por %p169, %p170
    %p172 = scmp.ne.s32.totalorder %s164, %s167
    %p173 = scmp.eq.s32.totalorder %s13, 0
    %p174 = por %p172, %p173
    %p175 = scmp.ne.s32.totalorder %s164, %s167
    %p176 = scmp.eq.s32.totalorder %s18, 1
    %p177 = por %p175, %p176
    %p178 = scmp.ne.s32.totalorder %s167, %s168
    %p179 = scmp.eq.s32.totalorder %s18, 0
    %p180 = por %p178, %p179
    %p181 = scmp.ne.s32.totalorder %s167, %s168
    %p182 = scmp.eq.s32.totalorder %s19, 1
    %p183 = por %p181, %p182
    %p185 = scmp.ne.s32.totalorder %s168, %s184
    %p186 = scmp.eq.s32.totalorder %s19, 0
    %p187 = por %p185, %p186
    %p188 = scmp.le.s32.totalorder 1, %s13
    %p189 = scmp.lt.s32.totalorder %s13, 3
    %p190 = pnand %p188, %p189
    %p191 = pneg %p190
    // Predicated region
    $region9: #{_lambda_.6} parent=5 // pred_check
      _
    $region10: #{_lambda_.6} parent=5 // pred_check_branch
      %193 = sbr.rel (%p190) target = $region12
    $region11: #{_lambda_.6} parent=5 // pred_region
      %s194 = ssub.s32 %s13, 1
      // Predicated region
      $region13: #{_lambda_.6} parent=11 // pred_check
        %p195 = pneg %p60
      $region14: #{_lambda_.6} parent=11 // pred_check_branch
        %197 = sbr.rel (%p195) target = $region16
      $region15: #{_lambda_.6} parent=11 // pred_region
        _
      $region16: #{_lambda_.6} parent=11 // pred_fallthru
        _
      // Predicated region
      $region17: #{_lambda_.6} parent=11 // pred_check
        %p198 = pneg %p81
      $region18: #{_lambda_.6} parent=11 // pred_check_branch
        %200 = sbr.rel (%p198) target = $region20
      $region19: #{_lambda_.6} parent=11 // pred_region
        _
      $region20: #{_lambda_.6} parent=11 // pred_fallthru
        _
      // Predicated region
      $region21: #{_lambda_.6} parent=11 // pred_check
        %p201 = pneg %p102
      $region22: #{_lambda_.6} parent=11 // pred_check_branch
        %203 = sbr.rel (%p201) target = $region24
      $region23: #{_lambda_.6} parent=11 // pred_region
        _
      $region24: #{_lambda_.6} parent=11 // pred_fallthru
        _
    $region12: #{_lambda_.6} parent=5 // pred_fallthru
      _
    %p204 = scmp.lt.s32.totalorder %s13, 2
    // Predicated region
    $region25: #{_lambda_.6} parent=5 // pred_check
      %p205 = pneg %p204
    $region26: #{_lambda_.6} parent=5 // pred_check_branch
      %207 = sbr.rel (%p205) target = $region28
    $region27: #{_lambda_.6} parent=5 // pred_region
      // Predicated region
      $region29: #{_lambda_.6} parent=27 // pred_check
        %p208 = pneg %p33
      $region30: #{_lambda_.6} parent=27 // pred_check_branch
        %210 = sbr.rel (%p208) target = $region32
      $region31: #{_lambda_.6} parent=27 // pred_region
        %p211 = scmp.lt.s32.totalorder %s13, 1
        %s212 = scalar_select %p211, %s13, 1
        %s213 = smul.addr %s212, 8
        %s214 = smul.addr %s213, 8
        %s215 = scalar_lea.vmem %s0, %s214
      $region32: #{_lambda_.6} parent=27 // pred_fallthru
        _
    $region28: #{_lambda_.6} parent=5 // pred_fallthru
      _
    %p216 = scmp.le.s32.totalorder 1, %s13
    %p217 = scmp.lt.s32.totalorder %s13, 3
    %p218 = pnand %p216, %p217
    %p219 = pneg %p218
    // Predicated region
    $region33: #{_lambda_.6} parent=5 // pred_check
      _
    $region34: #{_lambda_.6} parent=5 // pred_check_branch
      %221 = sbr.rel (%p218) target = $region36
    $region35: #{_lambda_.6} parent=5 // pred_region
      %s222 = ssub.s32 %s13, 1
      %p223 = scmp.lt.s32.totalorder %s18, 1
      %s224 = scalar_select %p223, %s18, 1
      %s225 = smul.addr %s224, 8
      %s226 = smul.addr %s225, 8
      %s227 = scalar_lea.vmem %s0, %s226
      %p228 = pneg %p39
      %p229 = pneg %p36
      %p230 = pneg %p60
      %p231 = pneg %p57
      %p232 = pneg %p81
      %p233 = pneg %p78
      %p234 = pneg %p102
      %p235 = pneg %p99
      %p236 = pneg %p128
      %p237 = pneg %p125
      %p238 = scmp.lt.s32.totalorder %s18, 1
      %s239 = scalar_select %p238, %s18, 1
      %s240 = smul.addr %s239, 8
      %s241 = smul.addr %s240, 4
      %s242 = scalar_lea.vmem %s4, %s241
      %p243 = pneg %p154
      %p244 = pneg %p151
      %p245 = scmp.lt.s32.totalorder %s18, 1
      %s246 = scalar_select %p245, %s18, 1
      %s247 = smul.addr %s246, 8
      %s248 = smul.addr %s247, 4
      %s249 = scalar_lea.vmem %s5, %s248
      %p250 = pneg %p180
      %p251 = pneg %p177
      %p252 = scmp.lt.s32.totalorder %s18, 1
      %s253 = scalar_select %p252, %s18, 1
      %s254 = smul.addr %s253, 2
      %s255 = scalar_lea.vmem %s6, %s254
      %p256 = scmp.lt.s32.totalorder %s18, 1
      %s257 = scalar_select %p256, %s18, 1
      %s258 = smul.addr %s257, 8
      %s259 = smul.addr %s258, 8
      %s260 = scalar_lea.vmem %s0, %s259
      %p261 = scmp.lt.s32.totalorder %s18, 1
      %s262 = scalar_select %p261, %s18, 1
      %s263 = smul.addr %s262, 8
      %s264 = smul.addr %s263, 4
      %s265 = scalar_lea.vmem %s4, %s264
      %p266 = scmp.lt.s32.totalorder %s18, 1
      %s267 = scalar_select %p266, %s18, 1
      %s268 = smul.addr %s267, 8
      %s269 = smul.addr %s268, 4
      %s270 = scalar_lea.vmem %s5, %s269
      %p271 = scmp.lt.s32.totalorder %s18, 1
      %s272 = scalar_select %p271, %s18, 1
      %s273 = smul.addr %s272, 2
      %s274 = scalar_lea.vmem %s6, %s273
      %vm276 = vcmask 125952
      %277 = vst.msk [vmem:[#allocation2] sm:$0xf] %vm276, 0
      %vm278 = vcmask 122880
      %vm279 = vsmask.f32 256
      %vm280 = vmand %vm278, %vm279
      %v281 = vld [vmem:[#allocation2 + $0x4] sm:$0x1]
      %v282 = vsel %vm280, 0, %v281
      %283 = vst [vmem:[#allocation2 + $0x4] sm:$0x1] %v282
      %284 = vst.msk [vmem:[#allocation2 + $0x8] sm:$0xf] %vm276, 0
      %v285 = vld [vmem:[#allocation2 + $0xc] sm:$0x1]
      %v286 = vsel %vm280, 0, %v285
      %287 = vst [vmem:[#allocation2 + $0xc] sm:$0x1] %v286
      %288 = vst.msk [vmem:[#allocation2 + $0x10] sm:$0xf] %vm276, 0
      %v289 = vld [vmem:[#allocation2 + $0x14] sm:$0x1]
      %v290 = vsel %vm280, 0, %v289
      %291 = vst [vmem:[#allocation2 + $0x14] sm:$0x1] %v290
      %292 = vst.msk [vmem:[#allocation2 + $0x18] sm:$0xf] %vm276, 0
      %v293 = vld [vmem:[#allocation2 + $0x1c] sm:$0x1]
      %v294 = vsel %vm280, 0, %v293
      %295 = vst [vmem:[#allocation2 + $0x1c] sm:$0x1] %v294
      %296 = vst.msk [vmem:[#allocation2 + $0x20] sm:$0xf] %vm276, 0
      %v297 = vld [vmem:[#allocation2 + $0x24] sm:$0x1]
      %v298 = vsel %vm280, 0, %v297
      %299 = vst [vmem:[#allocation2 + $0x24] sm:$0x1] %v298
      %300 = vst.msk [vmem:[#allocation2 + $0x28] sm:$0xf] %vm276, 0
      %v301 = vld [vmem:[#allocation2 + $0x2c] sm:$0x1]
      %v302 = vsel %vm280, 0, %v301
      %303 = vst [vmem:[#allocation2 + $0x2c] sm:$0x1] %v302
      %304 = vst.msk [vmem:[#allocation2 + $0x30] sm:$0xf] %vm276, 0
      %v305 = vld [vmem:[#allocation2 + $0x34] sm:$0x1]
      %v306 = vsel %vm280, 0, %v305
      %307 = vst [vmem:[#allocation2 + $0x34] sm:$0x1] %v306
      %308 = vst.msk [vmem:[#allocation2 + $0x38] sm:$0xf] %vm276, 0
      %v309 = vld [vmem:[#allocation2 + $0x3c] sm:$0x1]
      %v310 = vsel %vm280, 0, %v309
      %311 = vst [vmem:[#allocation2 + $0x3c] sm:$0x1] %v310
      %312 = vst.msk [vmem:[#allocation2 + $0x40] sm:$0xf] %vm276, 0
      %v313 = vld [vmem:[#allocation2 + $0x44] sm:$0x1]
      %v314 = vsel %vm280, 0, %v313
      %315 = vst [vmem:[#allocation2 + $0x44] sm:$0x1] %v314
      %v316 = vld [vmem:[%s1] sm:$0x1]
      %v317 = vld [vmem:[%s1 + $0x1] sm:$0x1]
      %v318 = vld [vmem:[%s260] sm:$0xff]
      %v319 = vld [vmem:[%s260 + $0x8] sm:$0xff]
      %v320 = vld [vmem:[%s260 + $0x10] sm:$0xff]
      %v321 = vld [vmem:[%s260 + $0x18] sm:$0xff]
      %v322 = vld [vmem:[%s260 + $0x20] sm:$0xff]
      %v323 = vld [vmem:[%s260 + $0x28] sm:$0xff]
      %v324 = vld [vmem:[%s260 + $0x30] sm:$0xff]
      %v325 = vld [vmem:[%s260 + $0x38] sm:$0xff]
      %v326 = vperm.slane %v316, 0
      %v327 = vmul.f32 %v318, %v326
      %v328 = vmul.f32 %v319, %v326
      %v329 = vmul.f32 %v320, %v326
      %v330 = vmul.f32 %v321, %v326
      %v331 = vmul.f32 %v322, %v326
      %v332 = vmul.f32 %v323, %v326
      %v333 = vmul.f32 %v324, %v326
      %v334 = vmul.f32 %v325, %v326
      %v335 = vperm.slane %v317, 0
      %v336 = vadd.f32 %v327, %v335
      %v337 = vadd.f32 %v328, %v335
      %v338 = vadd.f32 %v329, %v335
      %v339 = vadd.f32 %v330, %v335
      %v340 = vadd.f32 %v331, %v335
      %v341 = vadd.f32 %v332, %v335
      %v342 = vadd.f32 %v333, %v335
      %v343 = vadd.f32 %v334, %v335
      %v344 = vmax.f32 %v336, 0.0
      %v345 = vmax.f32 %v337, 0.0
      %v346 = vmax.f32 %v338, 0.0
      %v347 = vmax.f32 %v339, 0.0
      %v348 = vmax.f32 %v340, 0.0
      %v349 = vmax.f32 %v341, 0.0
      %v350 = vmax.f32 %v342, 0.0
      %v351 = vmax.f32 %v343, 0.0
      %v352 = vpack.c.bf16 %v344, %v344
      %v353 = vpack.c.bf16 %v345, %v345
      %v354 = vpack.c.bf16 %v346, %v346
      %v355 = vpack.c.bf16 %v347, %v347
      %v356 = vpack.c.bf16 %v348, %v348
      %v357 = vpack.c.bf16 %v349, %v349
      %v358 = vpack.c.bf16 %v350, %v350
      %v359 = vpack.c.bf16 %v351, %v351
      %v361 = vshrl.u32 %v352, 16
      %v363 = vrot.slane %v361, 7
      %v364 = vshll.u32 %v352, 16
      %v366 = vor.u32 %v363, %v364
      %v367 = vrot.slane %v363, 4
      %v369 = vshrl.u32 %v353, 16
      %v371 = vrot.slane %v369, 7
      %v372 = vshll.u32 %v353, 16
      %v374 = vor.u32 %v371, %v372
      %v375 = vrot.slane %v371, 4
      %v377 = vshrl.u32 %v354, 16
      %v379 = vrot.slane %v377, 7
      %v380 = vshll.u32 %v354, 16
      %v382 = vor.u32 %v379, %v380
      %v383 = vrot.slane %v379, 4
      %v385 = vshrl.u32 %v355, 16
      %v387 = vrot.slane %v385, 7
      %v388 = vshll.u32 %v355, 16
      %v390 = vor.u32 %v387, %v388
      %v391 = vrot.slane %v387, 4
      %v393 = vshrl.u32 %v356, 16
      %v395 = vrot.slane %v393, 7
      %v396 = vshll.u32 %v356, 16
      %v398 = vor.u32 %v395, %v396
      %v399 = vrot.slane %v395, 4
      %v401 = vshrl.u32 %v357, 16
      %v403 = vrot.slane %v401, 7
      %v404 = vshll.u32 %v357, 16
      %v406 = vor.u32 %v403, %v404
      %v407 = vrot.slane %v403, 4
      %v409 = vshrl.u32 %v358, 16
      %v411 = vrot.slane %v409, 7
      %v412 = vshll.u32 %v358, 16
      %v414 = vor.u32 %v411, %v412
      %v415 = vrot.slane %v411, 4
      %v417 = vshrl.u32 %v359, 16
      %v419 = vrot.slane %v417, 7
      %v420 = vshll.u32 %v359, 16
      %v422 = vor.u32 %v419, %v420
      %v423 = vrot.slane %v419, 4
      %s440 = scalar_lea.vmem [#allocation2], 8
      %vm441 = vcmask 125952
      %vm442 = vsmask.f32 7938
      %vm443 = vmand %vm441, %vm442
      %v444 = vld [vmem:[%s440] sm:$0xf]
      %v445 = vsel %vm443, %v366, %v444
      %446 = vst [vmem:[%s440] sm:$0xf] %v445
      %v447 = vld [vmem:[%s440 + $0x4] sm:$0x1]
      %v448 = vsel %vm280, %v367, %v447
      %449 = vst [vmem:[%s440 + $0x4] sm:$0x1] %v448
      %v450 = vld [vmem:[%s440 + $0x8] sm:$0xf]
      %v451 = vsel %vm443, %v374, %v450
      %452 = vst [vmem:[%s440 + $0x8] sm:$0xf] %v451
      %v453 = vld [vmem:[%s440 + $0xc] sm:$0x1]
      %v454 = vsel %vm280, %v375, %v453
      %455 = vst [vmem:[%s440 + $0xc] sm:$0x1] %v454
      %v456 = vld [vmem:[%s440 + $0x10] sm:$0xf]
      %v457 = vsel %vm443, %v382, %v456
      %458 = vst [vmem:[%s440 + $0x10] sm:$0xf] %v457
      %v459 = vld [vmem:[%s440 + $0x14] sm:$0x1]
      %v460 = vsel %vm280, %v383, %v459
      %461 = vst [vmem:[%s440 + $0x14] sm:$0x1] %v460
      %v462 = vld [vmem:[%s440 + $0x18] sm:$0xf]
      %v463 = vsel %vm443, %v390, %v462
      %464 = vst [vmem:[%s440 + $0x18] sm:$0xf] %v463
      %v465 = vld [vmem:[%s440 + $0x1c] sm:$0x1]
      %v466 = vsel %vm280, %v391, %v465
      %467 = vst [vmem:[%s440 + $0x1c] sm:$0x1] %v466
      %v468 = vld [vmem:[%s440 + $0x20] sm:$0xf]
      %v469 = vsel %vm443, %v398, %v468
      %470 = vst [vmem:[%s440 + $0x20] sm:$0xf] %v469
      %v471 = vld [vmem:[%s440 + $0x24] sm:$0x1]
      %v472 = vsel %vm280, %v399, %v471
      %473 = vst [vmem:[%s440 + $0x24] sm:$0x1] %v472
      %v474 = vld [vmem:[%s440 + $0x28] sm:$0xf]
      %v475 = vsel %vm443, %v406, %v474
      %476 = vst [vmem:[%s440 + $0x28] sm:$0xf] %v475
      %v477 = vld [vmem:[%s440 + $0x2c] sm:$0x1]
      %v478 = vsel %vm280, %v407, %v477
      %479 = vst [vmem:[%s440 + $0x2c] sm:$0x1] %v478
      %v480 = vld [vmem:[%s440 + $0x30] sm:$0xf]
      %v481 = vsel %vm443, %v414, %v480
      %482 = vst [vmem:[%s440 + $0x30] sm:$0xf] %v481
      %v483 = vld [vmem:[%s440 + $0x34] sm:$0x1]
      %v484 = vsel %vm280, %v415, %v483
      %485 = vst [vmem:[%s440 + $0x34] sm:$0x1] %v484
      %v486 = vld [vmem:[%s440 + $0x38] sm:$0xf]
      %v487 = vsel %vm443, %v422, %v486
      %488 = vst [vmem:[%s440 + $0x38] sm:$0xf] %v487
      %v489 = vld [vmem:[%s440 + $0x3c] sm:$0x1]
      %v490 = vsel %vm280, %v423, %v489
      %491 = vst [vmem:[%s440 + $0x3c] sm:$0x1] %v490
      %v492 = vld [vmem:[#allocation2] sm:$0xf]
      %v493 = vld [vmem:[#allocation2 + $0x8] sm:$0xf]
      %v494 = vld [vmem:[#allocation2 + $0x10] sm:$0xf]
      %v495 = vld [vmem:[#allocation2 + $0x18] sm:$0xf]
      %v496 = vld [vmem:[#allocation2 + $0x20] sm:$0xf]
      %v497 = vld [vmem:[#allocation2 + $0x28] sm:$0xf]
      %v498 = vld [vmem:[#allocation2 + $0x30] sm:$0xf]
      %v499 = vld [vmem:[#allocation2 + $0x38] sm:$0xf]
      %v500 = vld [vmem:[%s2] sm:$0xf]
      %v501 = vld [vmem:[%s2 + $0x4] sm:$0xf]
      %v502 = vld [vmem:[#allocation2 + $0x4] sm:$0x1]
      %v503 = vld [vmem:[#allocation2 + $0xc] sm:$0x1]
      %v504 = vld [vmem:[#allocation2 + $0x14] sm:$0x1]
      %v505 = vld [vmem:[#allocation2 + $0x1c] sm:$0x1]
      %v506 = vld [vmem:[#allocation2 + $0x24] sm:$0x1]
      %v507 = vld [vmem:[#allocation2 + $0x2c] sm:$0x1]
      %v508 = vld [vmem:[#allocation2 + $0x34] sm:$0x1]
      %v509 = vld [vmem:[#allocation2 + $0x3c] sm:$0x1]
      %vm510 = vsmask.f32 3328
      %vm511 = vsmask.f32 7440
      %vm512 = vmor %vm510, %vm511
      %v514 = vshrl.u32 %v492, 16
      %v516 = vrot.slane %v514, 4
      %v517 = vshll.u32 %v492, 16
      %v519 = vrot.slane %v517, 5
      %v520 = vor.u32 %v516, %v519
      %v521 = vrot.slane %v520, 4
      %v523 = vshll.u32 %v502, 16
      %v525 = vrot.slane %v523, 5
      %v526 = vsel %vm512, %v521, %v525
      %v528 = vshrl.u32 %v493, 16
      %v530 = vrot.slane %v528, 4
      %v531 = vshll.u32 %v493, 16
      %v533 = vrot.slane %v531, 5
      %v534 = vor.u32 %v530, %v533
      %v535 = vrot.slane %v534, 4
      %v537 = vshll.u32 %v503, 16
      %v539 = vrot.slane %v537, 5
      %v540 = vsel %vm512, %v535, %v539
      %v542 = vshrl.u32 %v494, 16
      %v544 = vrot.slane %v542, 4
      %v545 = vshll.u32 %v494, 16
      %v547 = vrot.slane %v545, 5
      %v548 = vor.u32 %v544, %v547
      %v549 = vrot.slane %v548, 4
      %v551 = vshll.u32 %v504, 16
      %v553 = vrot.slane %v551, 5
      %v554 = vsel %vm512, %v549, %v553
      %v556 = vshrl.u32 %v495, 16
      %v558 = vrot.slane %v556, 4
      %v559 = vshll.u32 %v495, 16
      %v561 = vrot.slane %v559, 5
      %v562 = vor.u32 %v558, %v561
      %v563 = vrot.slane %v562, 4
      %v565 = vshll.u32 %v505, 16
      %v567 = vrot.slane %v565, 5
      %v568 = vsel %vm512, %v563, %v567
      %v570 = vshrl.u32 %v496, 16
      %v572 = vrot.slane %v570, 4
      %v573 = vshll.u32 %v496, 16
      %v575 = vrot.slane %v573, 5
      %v576 = vor.u32 %v572, %v575
      %v577 = vrot.slane %v576, 4
      %v579 = vshll.u32 %v506, 16
      %v581 = vrot.slane %v579, 5
      %v582 = vsel %vm512, %v577, %v581
      %v584 = vshrl.u32 %v497, 16
      %v586 = vrot.slane %v584, 4
      %v587 = vshll.u32 %v497, 16
      %v589 = vrot.slane %v587, 5
      %v590 = vor.u32 %v586, %v589
      %v591 = vrot.slane %v590, 4
      %v593 = vshll.u32 %v507, 16
      %v595 = vrot.slane %v593, 5
      %v596 = vsel %vm512, %v591, %v595
      %v598 = vshrl.u32 %v498, 16
      %v600 = vrot.slane %v598, 4
      %v601 = vshll.u32 %v498, 16
      %v603 = vrot.slane %v601, 5
      %v604 = vor.u32 %v600, %v603
      %v605 = vrot.slane %v604, 4
      %v607 = vshll.u32 %v508, 16
      %v609 = vrot.slane %v607, 5
      %v610 = vsel %vm512, %v605, %v609
      %v612 = vshrl.u32 %v499, 16
      %v614 = vrot.slane %v612, 4
      %v615 = vshll.u32 %v499, 16
      %v617 = vrot.slane %v615, 5
      %v618 = vor.u32 %v614, %v617
      %v619 = vrot.slane %v618, 4
      %v621 = vshll.u32 %v509, 16
      %v623 = vrot.slane %v621, 5
      %v624 = vsel %vm512, %v619, %v623
      %s625 = scalar_lea.vmem %s2, 8
      %v626 = vld [vmem:[%s625] sm:$0xf]
      %v627 = vld [vmem:[%s625 + $0x4] sm:$0xf]
      %v628 = vunpack.c.l.b16 %v526
      %v629 = vunpack.c.l.b16 %v540
      %v630 = vunpack.c.l.b16 %v554
      %v631 = vunpack.c.l.b16 %v568
      %v632 = vunpack.c.l.b16 %v582
      %v633 = vunpack.c.l.b16 %v596
      %v634 = vunpack.c.l.b16 %v610
      %v635 = vunpack.c.l.b16 %v624
      %v636 = vpack.c.b16 %v629, %v628
      %v637 = vpack.c.b16 %v631, %v630
      %v638 = vpack.c.b16 %v633, %v632
      %v639 = vpack.c.b16 %v635, %v634
      %v642 = vunpack.c.l.b16 %v626
      %v643 = vunpack.c.l.b16 %v627
      %v644 = vpack.c.b16 %v643, %v642
      %vm646 = vcmask 130048
      %v648 = vsel %vm646, %v636, 0
      %v651 = vsel %vm646, %v637, 0
      %v654 = vsel %vm646, %v638, 0
      %v657 = vsel %vm646, %v639, 0
      %659 = vmatpush.bf16.msra.mxu0 0
      %660 = vmatpush.bf16.msra.mxu0 0
      %661 = vmatpush.bf16.msra.mxu0 0
      %662 = vmatpush.bf16.msra.mxu0 0
      %663 = vmatpush.bf16.msra.mxu0 0
      %664 = vmatpush.bf16.msra.mxu0 0
      %665 = vmatpush.bf16.msra.mxu0 0
      %666 = vmatpush.bf16.msra.mxu0 %v644
      %667 = vmatmul.bf16.gmra.mxu0 %v648
      %v668 = vpop.f32.mrf.mxu0
      %v669 = vadd.f32 0.0, %v668
      %v670 = vpop.f32.mrf.mxu0
      %v671 = vadd.f32 0.0, %v670
      %672 = vmatmul.bf16.gmra.mxu0 %v651
      %v673 = vpop.f32.mrf.mxu0
      %v674 = vadd.f32 0.0, %v673
      %v675 = vpop.f32.mrf.mxu0
      %v676 = vadd.f32 0.0, %v675
      %677 = vmatmul.bf16.gmra.mxu0 %v654
      %v678 = vpop.f32.mrf.mxu0
      %v679 = vadd.f32 0.0, %v678
      %v680 = vpop.f32.mrf.mxu0
      %v681 = vadd.f32 0.0, %v680
      %682 = vmatmul.bf16.gmra.mxu0 %v657
      %v683 = vpop.f32.mrf.mxu0
      %v684 = vadd.f32 0.0, %v683
      %v685 = vpop.f32.mrf.mxu0
      %v686 = vadd.f32 0.0, %v685
      %687 = vdwg.mxu0
      %v696 = vunpack.c.l.b16 %v492
      %v697 = vunpack.c.l.b16 %v493
      %v698 = vunpack.c.l.b16 %v494
      %v699 = vunpack.c.l.b16 %v495
      %v700 = vunpack.c.l.b16 %v496
      %v701 = vunpack.c.l.b16 %v497
      %v702 = vunpack.c.l.b16 %v498
      %v703 = vunpack.c.l.b16 %v499
      %v704 = vpack.c.b16 %v697, %v696
      %v705 = vpack.c.b16 %v699, %v698
      %v706 = vpack.c.b16 %v701, %v700
      %v707 = vpack.c.b16 %v703, %v702
      %v710 = vunpack.c.l.b16 %v500
      %v711 = vunpack.c.l.b16 %v501
      %v712 = vpack.c.b16 %v711, %v710
      %v715 = vsel %vm646, %v704, 0
      %v718 = vsel %vm646, %v705, 0
      %v721 = vsel %vm646, %v706, 0
      %v724 = vsel %vm646, %v707, 0
      %726 = vmatpush.bf16.msra.mxu0 0
      %727 = vmatpush.bf16.msra.mxu0 0
      %728 = vmatpush.bf16.msra.mxu0 0
      %729 = vmatpush.bf16.msra.mxu0 0
      %730 = vmatpush.bf16.msra.mxu0 0
      %731 = vmatpush.bf16.msra.mxu0 0
      %732 = vmatpush.bf16.msra.mxu0 0
      %733 = vmatpush.bf16.msra.mxu0 %v712
      %734 = vmatmul.bf16.gmra.mxu0 %v715
      %v735 = vpop.f32.mrf.mxu0
      %v736 = vadd.f32 %v669, %v735
      %v737 = vpop.f32.mrf.mxu0
      %v738 = vadd.f32 %v671, %v737
      %739 = vmatmul.bf16.gmra.mxu0 %v718
      %v740 = vpop.f32.mrf.mxu0
      %v741 = vadd.f32 %v674, %v740
      %v742 = vpop.f32.mrf.mxu0
      %v743 = vadd.f32 %v676, %v742
      %744 = vmatmul.bf16.gmra.mxu0 %v721
      %v745 = vpop.f32.mrf.mxu0
      %v746 = vadd.f32 %v679, %v745
      %v747 = vpop.f32.mrf.mxu0
      %v748 = vadd.f32 %v681, %v747
      %749 = vmatmul.bf16.gmra.mxu0 %v724
      %v750 = vpop.f32.mrf.mxu0
      %v751 = vadd.f32 %v684, %v750
      %v752 = vpop.f32.mrf.mxu0
      %v753 = vadd.f32 %v686, %v752
      %754 = vdwg.mxu0
      %v755 = vld [vmem:[%s440] sm:$0xf]
      %v756 = vld [vmem:[%s440 + $0x8] sm:$0xf]
      %v757 = vld [vmem:[%s440 + $0x10] sm:$0xf]
      %v758 = vld [vmem:[%s440 + $0x18] sm:$0xf]
      %v759 = vld [vmem:[%s440 + $0x20] sm:$0xf]
      %v760 = vld [vmem:[%s440 + $0x28] sm:$0xf]
      %v761 = vld [vmem:[%s440 + $0x30] sm:$0xf]
      %v762 = vld [vmem:[%s440 + $0x38] sm:$0xf]
      %s763 = scalar_lea.vmem %s2, 16
      %v764 = vld [vmem:[%s763] sm:$0xf]
      %v765 = vld [vmem:[%s763 + $0x4] sm:$0xf]
      %v774 = vunpack.c.l.b16 %v755
      %v775 = vunpack.c.l.b16 %v756
      %v776 = vunpack.c.l.b16 %v757
      %v777 = vunpack.c.l.b16 %v758
      %v778 = vunpack.c.l.b16 %v759
      %v779 = vunpack.c.l.b16 %v760
      %v780 = vunpack.c.l.b16 %v761
      %v781 = vunpack.c.l.b16 %v762
      %v782 = vpack.c.b16 %v775, %v774
      %v783 = vpack.c.b16 %v777, %v776
      %v784 = vpack.c.b16 %v779, %v778
      %v785 = vpack.c.b16 %v781, %v780
      %v788 = vunpack.c.l.b16 %v764
      %v789 = vunpack.c.l.b16 %v765
      %v790 = vpack.c.b16 %v789, %v788
      %v793 = vsel %vm646, %v782, 0
      %v796 = vsel %vm646, %v783, 0
      %v799 = vsel %vm646, %v784, 0
      %v802 = vsel %vm646, %v785, 0
      %804 = vmatpush.bf16.msra.mxu0 0
      %805 = vmatpush.bf16.msra.mxu0 0
      %806 = vmatpush.bf16.msra.mxu0 0
      %807 = vmatpush.bf16.msra.mxu0 0
      %808 = vmatpush.bf16.msra.mxu0 0
      %809 = vmatpush.bf16.msra.mxu0 0
      %810 = vmatpush.bf16.msra.mxu0 0
      %811 = vmatpush.bf16.msra.mxu0 %v790
      %812 = vmatmul.bf16.gmra.mxu0 %v793
      %v813 = vpop.f32.mrf.mxu0
      %v814 = vadd.f32 0.0, %v813
      %v815 = vpop.f32.mrf.mxu0
      %v816 = vadd.f32 0.0, %v815
      %817 = vmatmul.bf16.gmra.mxu0 %v796
      %v818 = vpop.f32.mrf.mxu0
      %v819 = vadd.f32 0.0, %v818
      %v820 = vpop.f32.mrf.mxu0
      %v821 = vadd.f32 0.0, %v820
      %822 = vmatmul.bf16.gmra.mxu0 %v799
      %v823 = vpop.f32.mrf.mxu0
      %v824 = vadd.f32 0.0, %v823
      %v825 = vpop.f32.mrf.mxu0
      %v826 = vadd.f32 0.0, %v825
      %827 = vmatmul.bf16.gmra.mxu0 %v802
      %v828 = vpop.f32.mrf.mxu0
      %v829 = vadd.f32 0.0, %v828
      %v830 = vpop.f32.mrf.mxu0
      %v831 = vadd.f32 0.0, %v830
      %832 = vdwg.mxu0
      %v833 = vadd.f32 %v736, %v814
      %v834 = vadd.f32 %v738, %v816
      %v835 = vadd.f32 %v741, %v819
      %v836 = vadd.f32 %v743, %v821
      %v837 = vadd.f32 %v746, %v824
      %v838 = vadd.f32 %v748, %v826
      %v839 = vadd.f32 %v751, %v829
      %v840 = vadd.f32 %v753, %v831
      %v841 = vld [vmem:[%s440] sm:$0xf]
      %v842 = vld [vmem:[%s440 + $0x4] sm:$0x1]
      %v843 = vld [vmem:[%s440 + $0x8] sm:$0xf]
      %v844 = vld [vmem:[%s440 + $0xc] sm:$0x1]
      %v845 = vld [vmem:[%s440 + $0x10] sm:$0xf]
      %v846 = vld [vmem:[%s440 + $0x14] sm:$0x1]
      %v847 = vld [vmem:[%s440 + $0x18] sm:$0xf]
      %v848 = vld [vmem:[%s440 + $0x1c] sm:$0x1]
      %v849 = vld [vmem:[%s440 + $0x20] sm:$0xf]
      %v850 = vld [vmem:[%s440 + $0x24] sm:$0x1]
      %v851 = vld [vmem:[%s440 + $0x28] sm:$0xf]
      %v852 = vld [vmem:[%s440 + $0x2c] sm:$0x1]
      %v853 = vld [vmem:[%s440 + $0x30] sm:$0xf]
      %v854 = vld [vmem:[%s440 + $0x34] sm:$0x1]
      %v855 = vld [vmem:[%s440 + $0x38] sm:$0xf]
      %v856 = vld [vmem:[%s440 + $0x3c] sm:$0x1]
      %v858 = vshrl.u32 %v841, 16
      %v860 = vrot.slane %v858, 4
      %v861 = vshll.u32 %v841, 16
      %v863 = vrot.slane %v861, 5
      %v864 = vor.u32 %v860, %v863
      %v865 = vrot.slane %v864, 4
      %v867 = vshll.u32 %v842, 16
      %v869 = vrot.slane %v867, 5
      %v870 = vsel %vm512, %v865, %v869
      %v872 = vshrl.u32 %v843, 16
      %v874 = vrot.slane %v872, 4
      %v875 = vshll.u32 %v843, 16
      %v877 = vrot.slane %v875, 5
      %v878 = vor.u32 %v874, %v877
      %v879 = vrot.slane %v878, 4
      %v881 = vshll.u32 %v844, 16
      %v883 = vrot.slane %v881, 5
      %v884 = vsel %vm512, %v879, %v883
      %v886 = vshrl.u32 %v845, 16
      %v888 = vrot.slane %v886, 4
      %v889 = vshll.u32 %v845, 16
      %v891 = vrot.slane %v889, 5
      %v892 = vor.u32 %v888, %v891
      %v893 = vrot.slane %v892, 4
      %v895 = vshll.u32 %v846, 16
      %v897 = vrot.slane %v895, 5
      %v898 = vsel %vm512, %v893, %v897
      %v900 = vshrl.u32 %v847, 16
      %v902 = vrot.slane %v900, 4
      %v903 = vshll.u32 %v847, 16
      %v905 = vrot.slane %v903, 5
      %v906 = vor.u32 %v902, %v905
      %v907 = vrot.slane %v906, 4
      %v909 = vshll.u32 %v848, 16
      %v911 = vrot.slane %v909, 5
      %v912 = vsel %vm512, %v907, %v911
      %v914 = vshrl.u32 %v849, 16
      %v916 = vrot.slane %v914, 4
      %v917 = vshll.u32 %v849, 16
      %v919 = vrot.slane %v917, 5
      %v920 = vor.u32 %v916, %v919
      %v921 = vrot.slane %v920, 4
      %v923 = vshll.u32 %v850, 16
      %v925 = vrot.slane %v923, 5
      %v926 = vsel %vm512, %v921, %v925
      %v928 = vshrl.u32 %v851, 16
      %v930 = vrot.slane %v928, 4
      %v931 = vshll.u32 %v851, 16
      %v933 = vrot.slane %v931, 5
      %v934 = vor.u32 %v930, %v933
      %v935 = vrot.slane %v934, 4
      %v937 = vshll.u32 %v852, 16
      %v939 = vrot.slane %v937, 5
      %v940 = vsel %vm512, %v935, %v939
      %v942 = vshrl.u32 %v853, 16
      %v944 = vrot.slane %v942, 4
      %v945 = vshll.u32 %v853, 16
      %v947 = vrot.slane %v945, 5
      %v948 = vor.u32 %v944, %v947
      %v949 = vrot.slane %v948, 4
      %v951 = vshll.u32 %v854, 16
      %v953 = vrot.slane %v951, 5
      %v954 = vsel %vm512, %v949, %v953
      %v956 = vshrl.u32 %v855, 16
      %v958 = vrot.slane %v956, 4
      %v959 = vshll.u32 %v855, 16
      %v961 = vrot.slane %v959, 5
      %v962 = vor.u32 %v958, %v961
      %v963 = vrot.slane %v962, 4
      %v965 = vshll.u32 %v856, 16
      %v967 = vrot.slane %v965, 5
      %v968 = vsel %vm512, %v963, %v967
      %s969 = scalar_lea.vmem %s2, 24
      %v970 = vld [vmem:[%s969] sm:$0xf]
      %v971 = vld [vmem:[%s969 + $0x4] sm:$0xf]
      %v972 = vunpack.c.l.b16 %v870
      %v973 = vunpack.c.l.b16 %v884
      %v974 = vunpack.c.l.b16 %v898
      %v975 = vunpack.c.l.b16 %v912
      %v976 = vunpack.c.l.b16 %v926
      %v977 = vunpack.c.l.b16 %v940
      %v978 = vunpack.c.l.b16 %v954
      %v979 = vunpack.c.l.b16 %v968
      %v980 = vpack.c.b16 %v973, %v972
      %v981 = vpack.c.b16 %v975, %v974
      %v982 = vpack.c.b16 %v977, %v976
      %v983 = vpack.c.b16 %v979, %v978
      %v986 = vunpack.c.l.b16 %v970
      %v987 = vunpack.c.l.b16 %v971
      %v988 = vpack.c.b16 %v987, %v986
      %v991 = vsel %vm646, %v980, 0
      %v994 = vsel %vm646, %v981, 0
      %v997 = vsel %vm646, %v982, 0
      %v1000 = vsel %vm646, %v983, 0
      %1002 = vmatpush.bf16.msra.mxu0 0
      %1003 = vmatpush.bf16.msra.mxu0 0
      %1004 = vmatpush.bf16.msra.mxu0 0
      %1005 = vmatpush.bf16.msra.mxu0 0
      %1006 = vmatpush.bf16.msra.mxu0 0
      %1007 = vmatpush.bf16.msra.mxu0 0
      %1008 = vmatpush.bf16.msra.mxu0 0
      %1009 = vmatpush.bf16.msra.mxu0 %v988
      %1010 = vmatmul.bf16.gmra.mxu0 %v991
      %v1011 = vpop.f32.mrf.mxu0
      %v1012 = vadd.f32 0.0, %v1011
      %v1013 = vpop.f32.mrf.mxu0
      %v1014 = vadd.f32 0.0, %v1013
      %1015 = vmatmul.bf16.gmra.mxu0 %v994
      %v1016 = vpop.f32.mrf.mxu0
      %v1017 = vadd.f32 0.0, %v1016
      %v1018 = vpop.f32.mrf.mxu0
      %v1019 = vadd.f32 0.0, %v1018
      %1020 = vmatmul.bf16.gmra.mxu0 %v997
      %v1021 = vpop.f32.mrf.mxu0
      %v1022 = vadd.f32 0.0, %v1021
      %v1023 = vpop.f32.mrf.mxu0
      %v1024 = vadd.f32 0.0, %v1023
      %1025 = vmatmul.bf16.gmra.mxu0 %v1000
      %v1026 = vpop.f32.mrf.mxu0
      %v1027 = vadd.f32 0.0, %v1026
      %v1028 = vpop.f32.mrf.mxu0
      %v1029 = vadd.f32 0.0, %v1028
      %1030 = vdwg.mxu0
      %v1031 = vadd.f32 %v833, %v1012
      %v1032 = vadd.f32 %v834, %v1014
      %v1033 = vadd.f32 %v835, %v1017
      %v1034 = vadd.f32 %v836, %v1019
      %v1035 = vadd.f32 %v837, %v1022
      %v1036 = vadd.f32 %v838, %v1024
      %v1037 = vadd.f32 %v839, %v1027
      %v1038 = vadd.f32 %v840, %v1029
      %v1039 = vld [vmem:[%s3] sm:$0x3]
      %vm1040 = vcmask 31744
      %v1041 = vsel %vm1040, %v980, 0
      %v1043 = vsel %vm1040, %v981, 0
      %v1045 = vsel %vm1040, %v982, 0
      %v1047 = vsel %vm1040, %v983, 0
      %vm1049 = vcmask 1041408
      %v1051 = vsel %vm1049, %v1039, 0
      %1053 = vmatpush.bf16.msra.mxu0 0
      %1054 = vmatpush.bf16.msra.mxu0 0
      %1055 = vmatpush.bf16.msra.mxu0 0
      %1056 = vmatpush.bf16.msra.mxu0 0
      %1057 = vmatpush.bf16.msra.mxu0 0
      %1058 = vmatpush.bf16.msra.mxu0 0
      %1059 = vmatpush.bf16.msra.mxu0 0
      %1060 = vmatpush.bf16.msra.mxu0 %v1051
      %1061 = vmatmul.bf16.gmra.mxu0 %v1041
      %v1062 = vpop.f32.mrf.mxu0
      %v1063 = vadd.f32 0.0, %v1062
      %v1064 = vpop.f32.mrf.mxu0
      %v1065 = vadd.f32 0.0, %v1064
      %1066 = vmatmul.bf16.gmra.mxu0 %v1043
      %v1067 = vpop.f32.mrf.mxu0
      %v1068 = vadd.f32 0.0, %v1067
      %v1069 = vpop.f32.mrf.mxu0
      %v1070 = vadd.f32 0.0, %v1069
      %1071 = vmatmul.bf16.gmra.mxu0 %v1045
      %v1072 = vpop.f32.mrf.mxu0
      %v1073 = vadd.f32 0.0, %v1072
      %v1074 = vpop.f32.mrf.mxu0
      %v1075 = vadd.f32 0.0, %v1074
      %1076 = vmatmul.bf16.gmra.mxu0 %v1047
      %v1077 = vpop.f32.mrf.mxu0
      %v1078 = vadd.f32 0.0, %v1077
      %v1079 = vpop.f32.mrf.mxu0
      %v1080 = vadd.f32 0.0, %v1079
      %1081 = vdwg.mxu0
      %v1082 = vpack.c.bf16 %v1063, %v1063
      %v1083 = vpack.c.bf16 %v1065, %v1065
      %v1084 = vpack.c.bf16 %v1068, %v1068
      %v1085 = vpack.c.bf16 %v1070, %v1070
      %v1086 = vpack.c.bf16 %v1073, %v1073
      %v1087 = vpack.c.bf16 %v1075, %v1075
      %v1088 = vpack.c.bf16 %v1078, %v1078
      %v1089 = vpack.c.bf16 %v1080, %v1080
      %vm1090 = vcmask 60416
      %1091 = vst.msk [vmem:[%s270] sm:$0xf] %vm1090, %v1082
      %1092 = vst.msk [vmem:[%s270 + $0x4] sm:$0xf] %vm1090, %v1083
      %1093 = vst.msk [vmem:[%s270 + $0x8] sm:$0xf] %vm1090, %v1084
      %1094 = vst.msk [vmem:[%s270 + $0xc] sm:$0xf] %vm1090, %v1085
      %1095 = vst.msk [vmem:[%s270 + $0x10] sm:$0xf] %vm1090, %v1086
      %1096 = vst.msk [vmem:[%s270 + $0x14] sm:$0xf] %vm1090, %v1087
      %1097 = vst.msk [vmem:[%s270 + $0x18] sm:$0xf] %vm1090, %v1088
      %1098 = vst.msk [vmem:[%s270 + $0x1c] sm:$0xf] %vm1090, %v1089
      %v1099 = vpack.c.bf16 %v1031, %v1031
      %v1100 = vpack.c.bf16 %v1032, %v1032
      %v1101 = vpack.c.bf16 %v1033, %v1033
      %v1102 = vpack.c.bf16 %v1034, %v1034
      %v1103 = vpack.c.bf16 %v1035, %v1035
      %v1104 = vpack.c.bf16 %v1036, %v1036
      %v1105 = vpack.c.bf16 %v1037, %v1037
      %v1106 = vpack.c.bf16 %v1038, %v1038
      %1107 = vst.msk [vmem:[%s265] sm:$0xf] %vm1090, %v1099
      %1108 = vst.msk [vmem:[%s265 + $0x4] sm:$0xf] %vm1090, %v1100
      %1109 = vst.msk [vmem:[%s265 + $0x8] sm:$0xf] %vm1090, %v1101
      %1110 = vst.msk [vmem:[%s265 + $0xc] sm:$0xf] %vm1090, %v1102
      %1111 = vst.msk [vmem:[%s265 + $0x10] sm:$0xf] %vm1090, %v1103
      %1112 = vst.msk [vmem:[%s265 + $0x14] sm:$0xf] %vm1090, %v1104
      %1113 = vst.msk [vmem:[%s265 + $0x18] sm:$0xf] %vm1090, %v1105
      %1114 = vst.msk [vmem:[%s265 + $0x1c] sm:$0xf] %vm1090, %v1106
      %vm1115 = vcmask 64512
      %v1116 = vsel %vm1115, %v1031, 0.0
      %v1117 = vsel %vm1115, %v1032, 0.0
      %v1118 = vadd.f32 %v1116, %v1117
      %v1119 = vsel %vm1115, %v1033, 0.0
      %v1120 = vadd.f32 %v1118, %v1119
      %v1121 = vsel %vm1115, %v1034, 0.0
      %v1122 = vadd.f32 %v1120, %v1121
      %v1123 = vsel %vm1115, %v1035, 0.0
      %v1124 = vadd.f32 %v1122, %v1123
      %v1125 = vsel %vm1115, %v1036, 0.0
      %v1126 = vadd.f32 %v1124, %v1125
      %v1127 = vsel %vm1115, %v1037, 0.0
      %v1128 = vadd.f32 %v1126, %v1127
      %v1129 = vsel %vm1115, %v1038, 0.0
      %v1130 = vadd.f32 %v1128, %v1129
      %v1131 = vrot.slane %v1130, 4
      %v1132 = vadd.f32 %v1130, %v1131
      %v1133 = vrot.slane %v1132, 2
      %v1134 = vadd.f32 %v1132, %v1133
      %v1135 = vrot.slane %v1134, 1
      %v1136 = vadd.f32 %v1134, %v1135
      %vm1137 = vcmask 57344
      %1138 = vst.msk [vmem:[%s274] sm:$0x1] %vm1137, %v1136
      %v1139 = vmul.f32 %v1031, %v1031
      %v1140 = vmul.f32 %v1032, %v1032
      %v1141 = vmul.f32 %v1033, %v1033
      %v1142 = vmul.f32 %v1034, %v1034
      %v1143 = vmul.f32 %v1035, %v1035
      %v1144 = vmul.f32 %v1036, %v1036
      %v1145 = vmul.f32 %v1037, %v1037
      %v1146 = vmul.f32 %v1038, %v1038
      %v1147 = vsel %vm1115, %v1139, 0.0
      %v1148 = vsel %vm1115, %v1140, 0.0
      %v1149 = vadd.f32 %v1147, %v1148
      %v1150 = vsel %vm1115, %v1141, 0.0
      %v1151 = vadd.f32 %v1149, %v1150
      %v1152 = vsel %vm1115, %v1142, 0.0
      %v1153 = vadd.f32 %v1151, %v1152
      %v1154 = vsel %vm1115, %v1143, 0.0
      %v1155 = vadd.f32 %v1153, %v1154
      %v1156 = vsel %vm1115, %v1144, 0.0
      %v1157 = vadd.f32 %v1155, %v1156
      %v1158 = vsel %vm1115, %v1145, 0.0
      %v1159 = vadd.f32 %v1157, %v1158
      %v1160 = vsel %vm1115, %v1146, 0.0
      %v1161 = vadd.f32 %v1159, %v1160
      %v1162 = vrot.slane %v1161, 4
      %v1163 = vadd.f32 %v1161, %v1162
      %v1164 = vrot.slane %v1163, 2
      %v1165 = vadd.f32 %v1163, %v1164
      %v1166 = vrot.slane %v1165, 1
      %v1167 = vadd.f32 %v1165, %v1166
      %1168 = vst.msk [vmem:[%s274 + $0x1] sm:$0x1] %vm1137, %v1167
      %p1169 = scmp.lt.s32.totalorder %s18, 1
      %s1170 = scalar_select %p1169, %s18, 1
      %s1171 = smul.addr %s1170, 8
      %s1172 = smul.addr %s1171, 4
      %s1173 = scalar_lea.vmem %s4, %s1172
      %p1174 = scmp.lt.s32.totalorder %s18, 1
      %s1175 = scalar_select %p1174, %s18, 1
      %s1176 = smul.addr %s1175, 8
      %s1177 = smul.addr %s1176, 4
      %s1178 = scalar_lea.vmem %s5, %s1177
      %p1179 = scmp.lt.s32.totalorder %s18, 1
      %s1180 = scalar_select %p1179, %s18, 1
      %s1181 = smul.addr %s1180, 2
      %s1182 = scalar_lea.vmem %s6, %s1181
      // Predicated region
      $region37: #{_lambda_.6} parent=35 // pred_check
        %p1183 = pneg %p125
      $region38: #{_lambda_.6} parent=35 // pred_check_branch
        %1185 = sbr.rel (%p1183) target = $region40
      $region39: #{_lambda_.6} parent=35 // pred_region
        _
      $region40: #{_lambda_.6} parent=35 // pred_fallthru
        _
      // Predicated region
      $region41: #{_lambda_.6} parent=35 // pred_check
        %p1186 = pneg %p151
      $region42: #{_lambda_.6} parent=35 // pred_check_branch
        %1188 = sbr.rel (%p1186) target = $region44
      $region43: #{_lambda_.6} parent=35 // pred_region
        _
      $region44: #{_lambda_.6} parent=35 // pred_fallthru
        _
      // Predicated region
      $region45: #{_lambda_.6} parent=35 // pred_check
        %p1189 = pneg %p177
      $region46: #{_lambda_.6} parent=35 // pred_check_branch
        %1191 = sbr.rel (%p1189) target = $region48
      $region47: #{_lambda_.6} parent=35 // pred_region
        _
      $region48: #{_lambda_.6} parent=35 // pred_fallthru
        _
    $region36: #{_lambda_.6} parent=5 // pred_fallthru
      _
    %p1192 = scmp.le.s32.totalorder 2, %s13
    // Predicated region
    $region49: #{_lambda_.6} parent=5 // pred_check
      %p1193 = pneg %p1192
    $region50: #{_lambda_.6} parent=5 // pred_check_branch
      %1195 = sbr.rel (%p1193) target = $region52
    $region51: #{_lambda_.6} parent=5 // pred_region
      %s1196 = ssub.s32 %s13, 2
      // Predicated region
      $region53: #{_lambda_.6} parent=51 // pred_check
        %p1197 = pneg %p131
      $region54: #{_lambda_.6} parent=51 // pred_check_branch
        %1199 = sbr.rel (%p1197) target = $region56
      $region55: #{_lambda_.6} parent=51 // pred_region
        %p1200 = scmp.lt.s32.totalorder %s19, 1
        %s1201 = scalar_select %p1200, %s19, 1
        %s1202 = smul.addr %s1201, 8
        %s1203 = smul.addr %s1202, 4
        %s1204 = scalar_lea.vmem %s4, %s1203
      $region56: #{_lambda_.6} parent=51 // pred_fallthru
        _
      // Predicated region
      $region57: #{_lambda_.6} parent=51 // pred_check
        %p1205 = pneg %p157
      $region58: #{_lambda_.6} parent=51 // pred_check_branch
        %1207 = sbr.rel (%p1205) target = $region60
      $region59: #{_lambda_.6} parent=51 // pred_region
        %p1208 = scmp.lt.s32.totalorder %s19, 1
        %s1209 = scalar_select %p1208, %s19, 1
        %s1210 = smul.addr %s1209, 8
        %s1211 = smul.addr %s1210, 4
        %s1212 = scalar_lea.vmem %s5, %s1211
      $region60: #{_lambda_.6} parent=51 // pred_fallthru
        _
      // Predicated region
      $region61: #{_lambda_.6} parent=51 // pred_check
        %p1213 = pneg %p183
      $region62: #{_lambda_.6} parent=51 // pred_check_branch
        %1215 = sbr.rel (%p1213) target = $region64
      $region63: #{_lambda_.6} parent=51 // pred_region
        %p1216 = scmp.lt.s32.totalorder %s19, 1
        %s1217 = scalar_select %p1216, %s19, 1
        %s1218 = smul.addr %s1217, 2
        %s1219 = scalar_lea.vmem %s6, %s1218
      $region64: #{_lambda_.6} parent=51 // pred_fallthru
        _
    $region52: #{_lambda_.6} parent=5 // pred_fallthru
      _
  $region6: #{_lambda_.6} parent=0 // loop_footer
    %s17 = sadd.s32 1, %s13
  $region7: #{_lambda_.6} parent=0 // loop_footer_branch
    %12 = sbr.rel target = $region3
  $region8: #{_lambda_.6} parent=0 // loop_exit
    _

// kernel: _lambda_.7
$region0: #{_lambda_.7}
  #allocation0 [shape = 'u32[]', space=smem, size = 0x4, offset = 0x4, fixed_abs, tag = 'smem constant byte address 0x4 - core index']
  #allocation1 [shape = 'u32[72,128]{1,0:T(1,128)}', space=vmem, size = 0x9000, scoped, tag = 'internal scratch']
  #allocation2 [shape = 'bf16[10,10,8]{2,1,0:T(8,128)(2,1)}', space=vmem, size = 0xa000, scoped, tag = 'scratch operand']
  %s0 = inlined_call_operand.vmem [shape: bf16[2,8,8,8], index: 0, kind: input, shape index: {}]
  %s1 = inlined_call_operand.vmem [shape: f32[2,8], index: 1, kind: input, shape index: {}]
  %s2 = inlined_call_operand.vmem [shape: bf16[9,8,8], index: 2, kind: input, shape index: {}]
  %s3 = inlined_call_operand.vmem [shape: bf16[2,8,8,8], index: 3, kind: input, shape index: {}]
  %s4 = inlined_call_operand.vmem [shape: bf16[2,8,8,8], index: 4, kind: output, shape index: {0}]
  %s5 = inlined_call_operand.vmem [shape: f32[2,2,8], index: 5, kind: output, shape index: {1}]
  %6 = xla_tuple %s4, %s5
  %s7 = sld [smem:[#allocation0]]
  $region57: #{_lambda_.7} parent=0
    _
  %s9 = ssub.s32 1, %s7
  %s10 = scalar_select 0, %s9, %s7
  loop: start=0, step=1, limit=4
  $region2: #{_lambda_.7} parent=0 // loop_pre_header
    _
  $region3: #{_lambda_.7} parent=0 // loop_header
    %s12 = sphi 0, %s16
    %p13 = scmp.ge.s32.totalorder %s12, 4
    %s22 = sphi 0, %s24
    %s25 = sphi 0, %s22
    %s26 = sphi 0, %s25
    %s42 = sphi 0, %s26
    %s46 = sphi 0, %s46
    %s48 = sphi 0, %s46
    %s49 = sphi 0, %s48
    %s63 = sphi 0, %s49
    %s67 = sphi 0, %s67
    %s69 = sphi 0, %s67
    %s70 = sphi 0, %s69
    %s84 = sphi 0, %s70
    %s90 = sphi 0, %s92
    %s93 = sphi 0, %s90
    %s94 = sphi 0, %s93
    %s110 = sphi 0, %s94
    %s116 = sphi 0, %s118
    %s119 = sphi 0, %s116
    %s120 = sphi 0, %s119
    %s136 = sphi 0, %s120
    %s142 = sphi 0, %s144
    %s145 = sphi 0, %s142
    %s146 = sphi 0, %s145
    %s162 = sphi 0, %s146
  $region4: #{_lambda_.7} parent=0 // loop_header_branch
    %15 = sbr.rel (%p13) target = $region8
  $region5: #{_lambda_.7} parent=0 // loop_body
    %s17 = ssub.s32 %s12, 1
    %s18 = ssub.s32 %s12, 2
    %s19 = sadd.s32 %s12, 1
    %s20 = ssub.s32 %s12, %s19
    %p21 = scmp.eq.s32.totalorder %s20, 0
    %s23 = sadd.s32 %s22, 1
    %s24 = scalar_select %p21, %s22, %s23
    %p27 = pneg %p21
    %p28 = scmp.eq.s32.totalorder %s12, 1
    %p29 = por %p27, %p28
    %p30 = scmp.ne.s32.totalorder %s22, %s25
    %p31 = scmp.eq.s32.totalorder %s12, 0
    %p32 = por %p30, %p31
    %p33 = scmp.ne.s32.totalorder %s22, %s25
    %p34 = scmp.eq.s32.totalorder %s17, 1
    %p35 = por %p33, %p34
    %p36 = scmp.ne.s32.totalorder %s25, %s26
    %p37 = scmp.eq.s32.totalorder %s17, 0
    %p38 = por %p36, %p37
    %p39 = scmp.ne.s32.totalorder %s25, %s26
    %p40 = scmp.eq.s32.totalorder %s18, 1
    %p41 = por %p39, %p40
    %p43 = scmp.ne.s32.totalorder %s26, %s42
    %p44 = scmp.eq.s32.totalorder %s18, 0
    %p45 = por %p43, %p44
    %s47 = sadd.s32 %s46, 1
    %p50 = scmp.eq.s32.totalorder %s12, 1
    %p51 = scmp.ne.s32.totalorder %s46, %s48
    %p52 = scmp.eq.s32.totalorder %s12, 0
    %p53 = por %p51, %p52
    %p54 = scmp.ne.s32.totalorder %s46, %s48
    %p55 = scmp.eq.s32.totalorder %s17, 1
    %p56 = por %p54, %p55
    %p57 = scmp.ne.s32.totalorder %s48, %s49
    %p58 = scmp.eq.s32.totalorder %s17, 0
    %p59 = por %p57, %p58
    %p60 = scmp.ne.s32.totalorder %s48, %s49
    %p61 = scmp.eq.s32.totalorder %s18, 1
    %p62 = por %p60, %p61
    %p64 = scmp.ne.s32.totalorder %s49, %s63
    %p65 = scmp.eq.s32.totalorder %s18, 0
    %p66 = por %p64, %p65
    %s68 = sadd.s32 %s67, 1
    %p71 = scmp.eq.s32.totalorder %s12, 1
    %p72 = scmp.ne.s32.totalorder %s67, %s69
    %p73 = scmp.eq.s32.totalorder %s12, 0
    %p74 = por %p72, %p73
    %p75 = scmp.ne.s32.totalorder %s67, %s69
    %p76 = scmp.eq.s32.totalorder %s17, 1
    %p77 = por %p75, %p76
    %p78 = scmp.ne.s32.totalorder %s69, %s70
    %p79 = scmp.eq.s32.totalorder %s17, 0
    %p80 = por %p78, %p79
    %p81 = scmp.ne.s32.totalorder %s69, %s70
    %p82 = scmp.eq.s32.totalorder %s18, 1
    %p83 = por %p81, %p82
    %p85 = scmp.ne.s32.totalorder %s70, %s84
    %p86 = scmp.eq.s32.totalorder %s18, 0
    %p87 = por %p85, %p86
    %s88 = ssub.s32 %s12, %s19
    %p89 = scmp.eq.s32.totalorder %s88, 0
    %s91 = sadd.s32 %s90, 1
    %s92 = scalar_select %p89, %s90, %s91
    %p95 = pneg %p89
    %p96 = scmp.eq.s32.totalorder %s12, 1
    %p97 = por %p95, %p96
    %p98 = scmp.ne.s32.totalorder %s90, %s93
    %p99 = scmp.eq.s32.totalorder %s12, 0
    %p100 = por %p98, %p99
    %p101 = scmp.ne.s32.totalorder %s90, %s93
    %p102 = scmp.eq.s32.totalorder %s17, 1
    %p103 = por %p101, %p102
    %p104 = scmp.ne.s32.totalorder %s93, %s94
    %p105 = scmp.eq.s32.totalorder %s17, 0
    %p106 = por %p104, %p105
    %p107 = scmp.ne.s32.totalorder %s93, %s94
    %p108 = scmp.eq.s32.totalorder %s18, 1
    %p109 = por %p107, %p108
    %p111 = scmp.ne.s32.totalorder %s94, %s110
    %p112 = scmp.eq.s32.totalorder %s18, 0
    %p113 = por %p111, %p112
    %s114 = ssub.s32 %s12, %s19
    %p115 = scmp.eq.s32.totalorder %s114, 0
    %s117 = sadd.s32 %s116, 1
    %s118 = scalar_select %p115, %s116, %s117
    %p121 = pneg %p115
    %p122 = scmp.eq.s32.totalorder %s12, 1
    %p123 = por %p121, %p122
    %p124 = scmp.ne.s32.totalorder %s116, %s119
    %p125 = scmp.eq.s32.totalorder %s12, 0
    %p126 = por %p124, %p125
    %p127 = scmp.ne.s32.totalorder %s116, %s119
    %p128 = scmp.eq.s32.totalorder %s17, 1
    %p129 = por %p127, %p128
    %p130 = scmp.ne.s32.totalorder %s119, %s120
    %p131 = scmp.eq.s32.totalorder %s17, 0
    %p132 = por %p130, %p131
    %p133 = scmp.ne.s32.totalorder %s119, %s120
    %p134 = scmp.eq.s32.totalorder %s18, 1
    %p135 = por %p133, %p134
    %p137 = scmp.ne.s32.totalorder %s120, %s136
    %p138 = scmp.eq.s32.totalorder %s18, 0
    %p139 = por %p137, %p138
    %s140 = ssub.s32 %s12, %s19
    %p141 = scmp.eq.s32.totalorder %s140, 0
    %s143 = sadd.s32 %s142, 1
    %s144 = scalar_select %p141, %s142, %s143
    %p147 = pneg %p141
    %p148 = scmp.eq.s32.totalorder %s12, 1
    %p149 = por %p147, %p148
    %p150 = scmp.ne.s32.totalorder %s142, %s145
    %p151 = scmp.eq.s32.totalorder %s12, 0
    %p152 = por %p150, %p151
    %p153 = scmp.ne.s32.totalorder %s142, %s145
    %p154 = scmp.eq.s32.totalorder %s17, 1
    %p155 = por %p153, %p154
    %p156 = scmp.ne.s32.totalorder %s145, %s146
    %p157 = scmp.eq.s32.totalorder %s17, 0
    %p158 = por %p156, %p157
    %p159 = scmp.ne.s32.totalorder %s145, %s146
    %p160 = scmp.eq.s32.totalorder %s18, 1
    %p161 = por %p159, %p160
    %p163 = scmp.ne.s32.totalorder %s146, %s162
    %p164 = scmp.eq.s32.totalorder %s18, 0
    %p165 = por %p163, %p164
    %p166 = scmp.le.s32.totalorder 1, %s12
    %p167 = scmp.lt.s32.totalorder %s12, 3
    %p168 = pnand %p166, %p167
    %p169 = pneg %p168
    // Predicated region
    $region9: #{_lambda_.7} parent=5 // pred_check
      _
    $region10: #{_lambda_.7} parent=5 // pred_check_branch
      %171 = sbr.rel (%p168) target = $region12
    $region11: #{_lambda_.7} parent=5 // pred_region
      %s172 = ssub.s32 %s12, 1
      // Predicated region
      $region13: #{_lambda_.7} parent=11 // pred_check
        %p173 = pneg %p59
      $region14: #{_lambda_.7} parent=11 // pred_check_branch
        %175 = sbr.rel (%p173) target = $region16
      $region15: #{_lambda_.7} parent=11 // pred_region
        _
      $region16: #{_lambda_.7} parent=11 // pred_fallthru
        _
      // Predicated region
      $region17: #{_lambda_.7} parent=11 // pred_check
        %p176 = pneg %p80
      $region18: #{_lambda_.7} parent=11 // pred_check_branch
        %178 = sbr.rel (%p176) target = $region20
      $region19: #{_lambda_.7} parent=11 // pred_region
        _
      $region20: #{_lambda_.7} parent=11 // pred_fallthru
        _
    $region12: #{_lambda_.7} parent=5 // pred_fallthru
      _
    %p179 = scmp.lt.s32.totalorder %s12, 2
    // Predicated region
    $region21: #{_lambda_.7} parent=5 // pred_check
      %p180 = pneg %p179
    $region22: #{_lambda_.7} parent=5 // pred_check_branch
      %182 = sbr.rel (%p180) target = $region24
    $region23: #{_lambda_.7} parent=5 // pred_region
      // Predicated region
      $region25: #{_lambda_.7} parent=23 // pred_check
        %p183 = pneg %p32
      $region26: #{_lambda_.7} parent=23 // pred_check_branch
        %185 = sbr.rel (%p183) target = $region28
      $region27: #{_lambda_.7} parent=23 // pred_region
        %p186 = scmp.lt.s32.totalorder %s12, 1
        %s187 = scalar_select %p186, %s12, 1
        %s188 = smul.addr %s187, 8
        %s189 = smul.addr %s188, 4
        %s190 = scalar_lea.vmem %s0, %s189
      $region28: #{_lambda_.7} parent=23 // pred_fallthru
        _
      // Predicated region
      $region29: #{_lambda_.7} parent=23 // pred_check
        %p191 = pneg %p100
      $region30: #{_lambda_.7} parent=23 // pred_check_branch
        %193 = sbr.rel (%p191) target = $region32
      $region31: #{_lambda_.7} parent=23 // pred_region
        %p194 = scmp.lt.s32.totalorder %s12, 1
        %s195 = scalar_select %p194, %s12, 1
        %s196 = smul.addr %s195, 8
        %s197 = smul.addr %s196, 4
        %s198 = scalar_lea.vmem %s3, %s197
      $region32: #{_lambda_.7} parent=23 // pred_fallthru
        _
    $region24: #{_lambda_.7} parent=5 // pred_fallthru
      _
    %p199 = scmp.le.s32.totalorder 1, %s12
    %p200 = scmp.lt.s32.totalorder %s12, 3
    %p201 = pnand %p199, %p200
    %p202 = pneg %p201
    // Predicated region
    $region33: #{_lambda_.7} parent=5 // pred_check
      _
    $region34: #{_lambda_.7} parent=5 // pred_check_branch
      %204 = sbr.rel (%p201) target = $region36
    $region35: #{_lambda_.7} parent=5 // pred_region
      %s205 = ssub.s32 %s12, 1
      %p206 = scmp.lt.s32.totalorder %s17, 1
      %s207 = scalar_select %p206, %s17, 1
      %s208 = smul.addr %s207, 8
      %s209 = smul.addr %s208, 4
      %s210 = scalar_lea.vmem %s0, %s209
      %p211 = pneg %p38
      %p212 = pneg %p35
      %p213 = pneg %p59
      %p214 = pneg %p56
      %p215 = pneg %p80
      %p216 = pneg %p77
      %p217 = scmp.lt.s32.totalorder %s17, 1
      %s218 = scalar_select %p217, %s17, 1
      %s219 = smul.addr %s218, 8
      %s220 = smul.addr %s219, 4
      %s221 = scalar_lea.vmem %s3, %s220
      %p222 = pneg %p106
      %p223 = pneg %p103
      %p224 = pneg %p132
      %p225 = pneg %p129
      %p226 = scmp.lt.s32.totalorder %s17, 1
      %s227 = scalar_select %p226, %s17, 1
      %s228 = smul.addr %s227, 8
      %s229 = smul.addr %s228, 4
      %s230 = scalar_lea.vmem %s4, %s229
      %p231 = pneg %p158
      %p232 = pneg %p155
      %p233 = scmp.lt.s32.totalorder %s17, 1
      %s234 = scalar_select %p233, %s17, 1
      %s235 = smul.addr %s234, 2
      %s236 = scalar_lea.vmem %s5, %s235
      %p237 = scmp.lt.s32.totalorder %s17, 1
      %s238 = scalar_select %p237, %s17, 1
      %s239 = smul.addr %s238, 8
      %s240 = smul.addr %s239, 4
      %s241 = scalar_lea.vmem %s0, %s240
      %p242 = scmp.lt.s32.totalorder %s17, 1
      %s243 = scalar_select %p242, %s17, 1
      %s244 = smul.addr %s243, 8
      %s245 = smul.addr %s244, 4
      %s246 = scalar_lea.vmem %s3, %s245
      %p247 = scmp.lt.s32.totalorder %s17, 1
      %s248 = scalar_select %p247, %s17, 1
      %s249 = smul.addr %s248, 8
      %s250 = smul.addr %s249, 4
      %s251 = scalar_lea.vmem %s4, %s250
      %p252 = scmp.lt.s32.totalorder %s17, 1
      %s253 = scalar_select %p252, %s17, 1
      %s254 = smul.addr %s253, 2
      %s255 = scalar_lea.vmem %s5, %s254
      %vm257 = vcmask 60416
      %258 = vst.msk [vmem:[#allocation2] sm:$0xf] %vm257, 0
      %vm259 = vcmask 57344
      %260 = vst.msk [vmem:[#allocation2 + $0x4] sm:$0x1] %vm259, 0
      %261 = vst.msk [vmem:[#allocation2 + $0x8] sm:$0xf] %vm257, 0
      %262 = vst.msk [vmem:[#allocation2 + $0xc] sm:$0x1] %vm259, 0
      %263 = vst.msk [vmem:[#allocation2 + $0x10] sm:$0xf] %vm257, 0
      %264 = vst.msk [vmem:[#allocation2 + $0x14] sm:$0x1] %vm259, 0
      %265 = vst.msk [vmem:[#allocation2 + $0x18] sm:$0xf] %vm257, 0
      %266 = vst.msk [vmem:[#allocation2 + $0x1c] sm:$0x1] %vm259, 0
      %267 = vst.msk [vmem:[#allocation2 + $0x20] sm:$0xf] %vm257, 0
      %268 = vst.msk [vmem:[#allocation2 + $0x24] sm:$0x1] %vm259, 0
      %269 = vst.msk [vmem:[#allocation2 + $0x28] sm:$0xf] %vm257, 0
      %270 = vst.msk [vmem:[#allocation2 + $0x2c] sm:$0x1] %vm259, 0
      %271 = vst.msk [vmem:[#allocation2 + $0x30] sm:$0xf] %vm257, 0
      %272 = vst.msk [vmem:[#allocation2 + $0x34] sm:$0x1] %vm259, 0
      %273 = vst.msk [vmem:[#allocation2 + $0x38] sm:$0xf] %vm257, 0
      %274 = vst.msk [vmem:[#allocation2 + $0x3c] sm:$0x1] %vm259, 0
      %275 = vst.msk [vmem:[#allocation2 + $0x40] sm:$0xf] %vm257, 0
      %276 = vst.msk [vmem:[#allocation2 + $0x44] sm:$0x1] %vm259, 0
      %277 = vst.msk [vmem:[#allocation2 + $0x48] sm:$0xf] %vm257, 0
      %278 = vst.msk [vmem:[#allocation2 + $0x4c] sm:$0x1] %vm259, 0
      %v279 = vld [vmem:[%s1] sm:$0x1]
      %v280 = vld [vmem:[%s1 + $0x1] sm:$0x1]
      %v281 = vld [vmem:[%s241] sm:$0xf]
      %v282 = vld [vmem:[%s241 + $0x4] sm:$0xf]
      %v283 = vld [vmem:[%s241 + $0x8] sm:$0xf]
      %v284 = vld [vmem:[%s241 + $0xc] sm:$0xf]
      %v285 = vld [vmem:[%s241 + $0x10] sm:$0xf]
      %v286 = vld [vmem:[%s241 + $0x14] sm:$0xf]
      %v287 = vld [vmem:[%s241 + $0x18] sm:$0xf]
      %v288 = vld [vmem:[%s241 + $0x1c] sm:$0xf]
      %v289 = vunpack.c.l.bf16 %v281
      %v290 = vunpack.c.l.bf16 %v282
      %v291 = vunpack.c.l.bf16 %v283
      %v292 = vunpack.c.l.bf16 %v284
      %v293 = vunpack.c.l.bf16 %v285
      %v294 = vunpack.c.l.bf16 %v286
      %v295 = vunpack.c.l.bf16 %v287
      %v296 = vunpack.c.l.bf16 %v288
      %v297 = vperm.slane %v279, 0
      %v298 = vmul.f32 %v289, %v297
      %v299 = vmul.f32 %v290, %v297
      %v300 = vmul.f32 %v291, %v297
      %v301 = vmul.f32 %v292, %v297
      %v302 = vmul.f32 %v293, %v297
      %v303 = vmul.f32 %v294, %v297
      %v304 = vmul.f32 %v295, %v297
      %v305 = vmul.f32 %v296, %v297
      %v306 = vperm.slane %v280, 0
      %v307 = vadd.f32 %v298, %v306
      %v308 = vadd.f32 %v299, %v306
      %v309 = vadd.f32 %v300, %v306
      %v310 = vadd.f32 %v301, %v306
      %v311 = vadd.f32 %v302, %v306
      %v312 = vadd.f32 %v303, %v306
      %v313 = vadd.f32 %v304, %v306
      %v314 = vadd.f32 %v305, %v306
      %v315 = vmax.f32 %v307, 0.0
      %v316 = vmax.f32 %v308, 0.0
      %v317 = vmax.f32 %v309, 0.0
      %v318 = vmax.f32 %v310, 0.0
      %v319 = vmax.f32 %v311, 0.0
      %v320 = vmax.f32 %v312, 0.0
      %v321 = vmax.f32 %v313, 0.0
      %v322 = vmax.f32 %v314, 0.0
      %v323 = vpack.c.bf16 %v315, %v315
      %v324 = vpack.c.bf16 %v316, %v316
      %v325 = vpack.c.bf16 %v317, %v317
      %v326 = vpack.c.bf16 %v318, %v318
      %v327 = vpack.c.bf16 %v319, %v319
      %v328 = vpack.c.bf16 %v320, %v320
      %v329 = vpack.c.bf16 %v321, %v321
      %v330 = vpack.c.bf16 %v322, %v322
      %v332 = vshrl.u32 %v323, 16
      %v334 = vrot.slane %v332, 7
      %v335 = vshll.u32 %v323, 16
      %v337 = vor.u32 %v334, %v335
      %v338 = vrot.slane %v334, 4
      %v340 = vshrl.u32 %v324, 16
      %v342 = vrot.slane %v340, 7
      %v343 = vshll.u32 %v324, 16
      %v345 = vor.u32 %v342, %v343
      %v346 = vrot.slane %v342, 4
      %v348 = vshrl.u32 %v325, 16
      %v350 = vrot.slane %v348, 7
      %v351 = vshll.u32 %v325, 16
      %v353 = vor.u32 %v350, %v351
      %v354 = vrot.slane %v350, 4
      %v356 = vshrl.u32 %v326, 16
      %v358 = vrot.slane %v356, 7
      %v359 = vshll.u32 %v326, 16
      %v361 = vor.u32 %v358, %v359
      %v362 = vrot.slane %v358, 4
      %v364 = vshrl.u32 %v327, 16
      %v366 = vrot.slane %v364, 7
      %v367 = vshll.u32 %v327, 16
      %v369 = vor.u32 %v366, %v367
      %v370 = vrot.slane %v366, 4
      %v372 = vshrl.u32 %v328, 16
      %v374 = vrot.slane %v372, 7
      %v375 = vshll.u32 %v328, 16
      %v377 = vor.u32 %v374, %v375
      %v378 = vrot.slane %v374, 4
      %v380 = vshrl.u32 %v329, 16
      %v382 = vrot.slane %v380, 7
      %v383 = vshll.u32 %v329, 16
      %v385 = vor.u32 %v382, %v383
      %v386 = vrot.slane %v382, 4
      %v388 = vshrl.u32 %v330, 16
      %v390 = vrot.slane %v388, 7
      %v391 = vshll.u32 %v330, 16
      %v393 = vor.u32 %v390, %v391
      %v394 = vrot.slane %v390, 4
      %s411 = scalar_lea.vmem [#allocation2], 8
      %vm412 = vcmask 60416
      %vm413 = vsmask.f32 7938
      %vm414 = vmand %vm412, %vm413
      %v415 = vld [vmem:[%s411] sm:$0xf]
      %v416 = vsel %vm414, %v337, %v415
      %417 = vst [vmem:[%s411] sm:$0xf] %v416
      %vm418 = vcmask 57344
      %vm419 = vsmask.f32 256
      %vm420 = vmand %vm418, %vm419
      %v421 = vld [vmem:[%s411 + $0x4] sm:$0x1]
      %v422 = vsel %vm420, %v338, %v421
      %423 = vst [vmem:[%s411 + $0x4] sm:$0x1] %v422
      %v424 = vld [vmem:[%s411 + $0x8] sm:$0xf]
      %v425 = vsel %vm414, %v345, %v424
      %426 = vst [vmem:[%s411 + $0x8] sm:$0xf] %v425
      %v427 = vld [vmem:[%s411 + $0xc] sm:$0x1]
      %v428 = vsel %vm420, %v346, %v427
      %429 = vst [vmem:[%s411 + $0xc] sm:$0x1] %v428
      %v430 = vld [vmem:[%s411 + $0x10] sm:$0xf]
      %v431 = vsel %vm414, %v353, %v430
      %432 = vst [vmem:[%s411 + $0x10] sm:$0xf] %v431
      %v433 = vld [vmem:[%s411 + $0x14] sm:$0x1]
      %v434 = vsel %vm420, %v354, %v433
      %435 = vst [vmem:[%s411 + $0x14] sm:$0x1] %v434
      %v436 = vld [vmem:[%s411 + $0x18] sm:$0xf]
      %v437 = vsel %vm414, %v361, %v436
      %438 = vst [vmem:[%s411 + $0x18] sm:$0xf] %v437
      %v439 = vld [vmem:[%s411 + $0x1c] sm:$0x1]
      %v440 = vsel %vm420, %v362, %v439
      %441 = vst [vmem:[%s411 + $0x1c] sm:$0x1] %v440
      %v442 = vld [vmem:[%s411 + $0x20] sm:$0xf]
      %v443 = vsel %vm414, %v369, %v442
      %444 = vst [vmem:[%s411 + $0x20] sm:$0xf] %v443
      %v445 = vld [vmem:[%s411 + $0x24] sm:$0x1]
      %v446 = vsel %vm420, %v370, %v445
      %447 = vst [vmem:[%s411 + $0x24] sm:$0x1] %v446
      %v448 = vld [vmem:[%s411 + $0x28] sm:$0xf]
      %v449 = vsel %vm414, %v377, %v448
      %450 = vst [vmem:[%s411 + $0x28] sm:$0xf] %v449
      %v451 = vld [vmem:[%s411 + $0x2c] sm:$0x1]
      %v452 = vsel %vm420, %v378, %v451
      %453 = vst [vmem:[%s411 + $0x2c] sm:$0x1] %v452
      %v454 = vld [vmem:[%s411 + $0x30] sm:$0xf]
      %v455 = vsel %vm414, %v385, %v454
      %456 = vst [vmem:[%s411 + $0x30] sm:$0xf] %v455
      %v457 = vld [vmem:[%s411 + $0x34] sm:$0x1]
      %v458 = vsel %vm420, %v386, %v457
      %459 = vst [vmem:[%s411 + $0x34] sm:$0x1] %v458
      %v460 = vld [vmem:[%s411 + $0x38] sm:$0xf]
      %v461 = vsel %vm414, %v393, %v460
      %462 = vst [vmem:[%s411 + $0x38] sm:$0xf] %v461
      %v463 = vld [vmem:[%s411 + $0x3c] sm:$0x1]
      %v464 = vsel %vm420, %v394, %v463
      %465 = vst [vmem:[%s411 + $0x3c] sm:$0x1] %v464
      %v466 = vld [vmem:[#allocation2] sm:$0xf]
      %v467 = vld [vmem:[#allocation2 + $0x8] sm:$0xf]
      %v468 = vld [vmem:[#allocation2 + $0x10] sm:$0xf]
      %v469 = vld [vmem:[#allocation2 + $0x18] sm:$0xf]
      %v470 = vld [vmem:[#allocation2 + $0x20] sm:$0xf]
      %v471 = vld [vmem:[#allocation2 + $0x28] sm:$0xf]
      %v472 = vld [vmem:[#allocation2 + $0x30] sm:$0xf]
      %v473 = vld [vmem:[#allocation2 + $0x38] sm:$0xf]
      %v474 = vld [vmem:[%s2] sm:$0xf]
      %v475 = vld [vmem:[#allocation2 + $0x4] sm:$0x1]
      %v476 = vld [vmem:[#allocation2 + $0xc] sm:$0x1]
      %v477 = vld [vmem:[#allocation2 + $0x14] sm:$0x1]
      %v478 = vld [vmem:[#allocation2 + $0x1c] sm:$0x1]
      %v479 = vld [vmem:[#allocation2 + $0x24] sm:$0x1]
      %v480 = vld [vmem:[#allocation2 + $0x2c] sm:$0x1]
      %v481 = vld [vmem:[#allocation2 + $0x34] sm:$0x1]
      %v482 = vld [vmem:[#allocation2 + $0x3c] sm:$0x1]
      %vm483 = vsmask.f32 3328
      %vm484 = vsmask.f32 7440
      %vm485 = vmor %vm483, %vm484
      %v487 = vshrl.u32 %v466, 16
      %v489 = vrot.slane %v487, 4
      %v490 = vshll.u32 %v466, 16
      %v492 = vrot.slane %v490, 5
      %v493 = vor.u32 %v489, %v492
      %v494 = vrot.slane %v493, 4
      %v496 = vshll.u32 %v475, 16
      %v498 = vrot.slane %v496, 5
      %v499 = vsel %vm485, %v494, %v498
      %v501 = vshrl.u32 %v467, 16
      %v503 = vrot.slane %v501, 4
      %v504 = vshll.u32 %v467, 16
      %v506 = vrot.slane %v504, 5
      %v507 = vor.u32 %v503, %v506
      %v508 = vrot.slane %v507, 4
      %v510 = vshll.u32 %v476, 16
      %v512 = vrot.slane %v510, 5
      %v513 = vsel %vm485, %v508, %v512
      %v515 = vshrl.u32 %v468, 16
      %v517 = vrot.slane %v515, 4
      %v518 = vshll.u32 %v468, 16
      %v520 = vrot.slane %v518, 5
      %v521 = vor.u32 %v517, %v520
      %v522 = vrot.slane %v521, 4
      %v524 = vshll.u32 %v477, 16
      %v526 = vrot.slane %v524, 5
      %v527 = vsel %vm485, %v522, %v526
      %v529 = vshrl.u32 %v469, 16
      %v531 = vrot.slane %v529, 4
      %v532 = vshll.u32 %v469, 16
      %v534 = vrot.slane %v532, 5
      %v535 = vor.u32 %v531, %v534
      %v536 = vrot.slane %v535, 4
      %v538 = vshll.u32 %v478, 16
      %v540 = vrot.slane %v538, 5
      %v541 = vsel %vm485, %v536, %v540
      %v543 = vshrl.u32 %v470, 16
      %v545 = vrot.slane %v543, 4
      %v546 = vshll.u32 %v470, 16
      %v548 = vrot.slane %v546, 5
      %v549 = vor.u32 %v545, %v548
      %v550 = vrot.slane %v549, 4
      %v552 = vshll.u32 %v479, 16
      %v554 = vrot.slane %v552, 5
      %v555 = vsel %vm485, %v550, %v554
      %v557 = vshrl.u32 %v471, 16
      %v559 = vrot.slane %v557, 4
      %v560 = vshll.u32 %v471, 16
      %v562 = vrot.slane %v560, 5
      %v563 = vor.u32 %v559, %v562
      %v564 = vrot.slane %v563, 4
      %v566 = vshll.u32 %v480, 16
      %v568 = vrot.slane %v566, 5
      %v569 = vsel %vm485, %v564, %v568
      %v571 = vshrl.u32 %v472, 16
      %v573 = vrot.slane %v571, 4
      %v574 = vshll.u32 %v472, 16
      %v576 = vrot.slane %v574, 5
      %v577 = vor.u32 %v573, %v576
      %v578 = vrot.slane %v577, 4
      %v580 = vshll.u32 %v481, 16
      %v582 = vrot.slane %v580, 5
      %v583 = vsel %vm485, %v578, %v582
      %v585 = vshrl.u32 %v473, 16
      %v587 = vrot.slane %v585, 4
      %v588 = vshll.u32 %v473, 16
      %v590 = vrot.slane %v588, 5
      %v591 = vor.u32 %v587, %v590
      %v592 = vrot.slane %v591, 4
      %v594 = vshll.u32 %v482, 16
      %v596 = vrot.slane %v594, 5
      %v597 = vsel %vm485, %v592, %v596
      %s598 = scalar_lea.vmem %s2, 4
      %v599 = vld [vmem:[%s598] sm:$0xf]
      %v600 = vunpack.c.l.b16 %v499
      %v601 = vunpack.c.l.b16 %v513
      %v602 = vunpack.c.l.b16 %v527
      %v603 = vunpack.c.l.b16 %v541
      %v604 = vunpack.c.l.b16 %v555
      %v605 = vunpack.c.l.b16 %v569
      %v606 = vunpack.c.l.b16 %v583
      %v607 = vunpack.c.l.b16 %v597
      %v608 = vpack.c.b16 %v601, %v600
      %v609 = vpack.c.b16 %v603, %v602
      %v610 = vpack.c.b16 %v605, %v604
      %v611 = vpack.c.b16 %v607, %v606
      %vm612 = vcmask 64512
      %v614 = vsel %vm612, %v608, 0
      %v617 = vsel %vm612, %v609, 0
      %v620 = vsel %vm612, %v610, 0
      %v623 = vsel %vm612, %v611, 0
      %vm625 = vcmask 1043456
      %v627 = vsel %vm625, %v599, 0
      %629 = vmatpush.bf16.msra.mxu0 0
      %630 = vmatpush.bf16.msra.mxu0 0
      %631 = vmatpush.bf16.msra.mxu0 0
      %632 = vmatpush.bf16.msra.mxu0 0
      %633 = vmatpush.bf16.msra.mxu0 0
      %634 = vmatpush.bf16.msra.mxu0 0
      %635 = vmatpush.bf16.msra.mxu0 0
      %636 = vmatpush.bf16.msra.mxu0 %v627
      %637 = vmatmul.bf16.gmra.mxu0 %v614
      %v638 = vpop.f32.mrf.mxu0
      %v639 = vadd.f32 0.0, %v638
      %v640 = vpop.f32.mrf.mxu0
      %v641 = vadd.f32 0.0, %v640
      %642 = vmatmul.bf16.gmra.mxu0 %v617
      %v643 = vpop.f32.mrf.mxu0
      %v644 = vadd.f32 0.0, %v643
      %v645 = vpop.f32.mrf.mxu0
      %v646 = vadd.f32 0.0, %v645
      %647 = vmatmul.bf16.gmra.mxu0 %v620
      %v648 = vpop.f32.mrf.mxu0
      %v649 = vadd.f32 0.0, %v648
      %v650 = vpop.f32.mrf.mxu0
      %v651 = vadd.f32 0.0, %v650
      %652 = vmatmul.bf16.gmra.mxu0 %v623
      %v653 = vpop.f32.mrf.mxu0
      %v654 = vadd.f32 0.0, %v653
      %v655 = vpop.f32.mrf.mxu0
      %v656 = vadd.f32 0.0, %v655
      %657 = vdwg.mxu0
      %v666 = vunpack.c.l.b16 %v466
      %v667 = vunpack.c.l.b16 %v467
      %v668 = vunpack.c.l.b16 %v468
      %v669 = vunpack.c.l.b16 %v469
      %v670 = vunpack.c.l.b16 %v470
      %v671 = vunpack.c.l.b16 %v471
      %v672 = vunpack.c.l.b16 %v472
      %v673 = vunpack.c.l.b16 %v473
      %v674 = vpack.c.b16 %v667, %v666
      %v675 = vpack.c.b16 %v669, %v668
      %v676 = vpack.c.b16 %v671, %v670
      %v677 = vpack.c.b16 %v673, %v672
      %v679 = vsel %vm612, %v674, 0
      %v682 = vsel %vm612, %v675, 0
      %v685 = vsel %vm612, %v676, 0
      %v688 = vsel %vm612, %v677, 0
      %v691 = vsel %vm625, %v474, 0
      %693 = vmatpush.bf16.msra.mxu0 0
      %694 = vmatpush.bf16.msra.mxu0 0
      %695 = vmatpush.bf16.msra.mxu0 0
      %696 = vmatpush.bf16.msra.mxu0 0
      %697 = vmatpush.bf16.msra.mxu0 0
      %698 = vmatpush.bf16.msra.mxu0 0
      %699 = vmatpush.bf16.msra.mxu0 0
      %700 = vmatpush.bf16.msra.mxu0 %v691
      %701 = vmatmul.bf16.gmra.mxu0 %v679
      %v702 = vpop.f32.mrf.mxu0
      %v703 = vadd.f32 %v639, %v702
      %v704 = vpop.f32.mrf.mxu0
      %v705 = vadd.f32 %v641, %v704
      %706 = vmatmul.bf16.gmra.mxu0 %v682
      %v707 = vpop.f32.mrf.mxu0
      %v708 = vadd.f32 %v644, %v707
      %v709 = vpop.f32.mrf.mxu0
      %v710 = vadd.f32 %v646, %v709
      %711 = vmatmul.bf16.gmra.mxu0 %v685
      %v712 = vpop.f32.mrf.mxu0
      %v713 = vadd.f32 %v649, %v712
      %v714 = vpop.f32.mrf.mxu0
      %v715 = vadd.f32 %v651, %v714
      %716 = vmatmul.bf16.gmra.mxu0 %v688
      %v717 = vpop.f32.mrf.mxu0
      %v718 = vadd.f32 %v654, %v717
      %v719 = vpop.f32.mrf.mxu0
      %v720 = vadd.f32 %v656, %v719
      %721 = vdwg.mxu0
      %v722 = vld [vmem:[#allocation2] sm:$0xe]
      %v723 = vld [vmem:[#allocation2 + $0x8] sm:$0xe]
      %v724 = vld [vmem:[#allocation2 + $0x10] sm:$0xe]
      %v725 = vld [vmem:[#allocation2 + $0x18] sm:$0xe]
      %v726 = vld [vmem:[#allocation2 + $0x20] sm:$0xe]
      %v727 = vld [vmem:[#allocation2 + $0x28] sm:$0xe]
      %v728 = vld [vmem:[#allocation2 + $0x30] sm:$0xe]
      %v729 = vld [vmem:[#allocation2 + $0x38] sm:$0xe]
      %vm746 = vcmask 1042432
      %vm747 = vcmask 1046532
      %vm748 = vmor %vm746, %vm747
      %v749 = vrot.slane %v722, 5
      %v750 = vrot.slane %v749, 4
      %v751 = vrot.slane %v475, 5
      %v752 = vsel %vm748, %v750, %v751
      %v753 = vrot.slane %v723, 5
      %v754 = vrot.slane %v753, 4
      %v755 = vrot.slane %v476, 5
      %v756 = vsel %vm748, %v754, %v755
      %v757 = vrot.slane %v724, 5
      %v758 = vrot.slane %v757, 4
      %v759 = vrot.slane %v477, 5
      %v760 = vsel %vm748, %v758, %v759
      %v761 = vrot.slane %v725, 5
      %v762 = vrot.slane %v761, 4
      %v763 = vrot.slane %v478, 5
      %v764 = vsel %vm748, %v762, %v763
      %v765 = vrot.slane %v726, 5
      %v766 = vrot.slane %v765, 4
      %v767 = vrot.slane %v479, 5
      %v768 = vsel %vm748, %v766, %v767
      %v769 = vrot.slane %v727, 5
      %v770 = vrot.slane %v769, 4
      %v771 = vrot.slane %v480, 5
      %v772 = vsel %vm748, %v770, %v771
      %v773 = vrot.slane %v728, 5
      %v774 = vrot.slane %v773, 4
      %v775 = vrot.slane %v481, 5
      %v776 = vsel %vm748, %v774, %v775
      %v777 = vrot.slane %v729, 5
      %v778 = vrot.slane %v777, 4
      %v779 = vrot.slane %v482, 5
      %v780 = vsel %vm748, %v778, %v779
      %s781 = scalar_lea.vmem %s2, 8
      %v782 = vld [vmem:[%s781] sm:$0xf]
      %v783 = vunpack.c.l.b16 %v752
      %v784 = vunpack.c.l.b16 %v756
      %v785 = vunpack.c.l.b16 %v760
      %v786 = vunpack.c.l.b16 %v764
      %v787 = vunpack.c.l.b16 %v768
      %v788 = vunpack.c.l.b16 %v772
      %v789 = vunpack.c.l.b16 %v776
      %v790 = vunpack.c.l.b16 %v780
      %v791 = vpack.c.b16 %v784, %v783
      %v792 = vpack.c.b16 %v786, %v785
      %v793 = vpack.c.b16 %v788, %v787
      %v794 = vpack.c.b16 %v790, %v789
      %v796 = vsel %vm612, %v791, 0
      %v799 = vsel %vm612, %v792, 0
      %v802 = vsel %vm612, %v793, 0
      %v805 = vsel %vm612, %v794, 0
      %v808 = vsel %vm625, %v782, 0
      %810 = vmatpush.bf16.msra.mxu0 0
      %811 = vmatpush.bf16.msra.mxu0 0
      %812 = vmatpush.bf16.msra.mxu0 0
      %813 = vmatpush.bf16.msra.mxu0 0
      %814 = vmatpush.bf16.msra.mxu0 0
      %815 = vmatpush.bf16.msra.mxu0 0
      %816 = vmatpush.bf16.msra.mxu0 0
      %817 = vmatpush.bf16.msra.mxu0 %v808
      %818 = vmatmul.bf16.gmra.mxu0 %v796
      %v819 = vpop.f32.mrf.mxu0
      %v820 = vadd.f32 0.0, %v819
      %v821 = vpop.f32.mrf.mxu0
      %v822 = vadd.f32 0.0, %v821
      %823 = vmatmul.bf16.gmra.mxu0 %v799
      %v824 = vpop.f32.mrf.mxu0
      %v825 = vadd.f32 0.0, %v824
      %v826 = vpop.f32.mrf.mxu0
      %v827 = vadd.f32 0.0, %v826
      %828 = vmatmul.bf16.gmra.mxu0 %v802
      %v829 = vpop.f32.mrf.mxu0
      %v830 = vadd.f32 0.0, %v829
      %v831 = vpop.f32.mrf.mxu0
      %v832 = vadd.f32 0.0, %v831
      %833 = vmatmul.bf16.gmra.mxu0 %v805
      %v834 = vpop.f32.mrf.mxu0
      %v835 = vadd.f32 0.0, %v834
      %v836 = vpop.f32.mrf.mxu0
      %v837 = vadd.f32 0.0, %v836
      %838 = vdwg.mxu0
      %v839 = vadd.f32 %v703, %v820
      %v840 = vadd.f32 %v705, %v822
      %v841 = vadd.f32 %v708, %v825
      %v842 = vadd.f32 %v710, %v827
      %v843 = vadd.f32 %v713, %v830
      %v844 = vadd.f32 %v715, %v832
      %v845 = vadd.f32 %v718, %v835
      %v846 = vadd.f32 %v720, %v837
      %v847 = vld [vmem:[%s411] sm:$0xf]
      %v848 = vld [vmem:[%s411 + $0x8] sm:$0xf]
      %v849 = vld [vmem:[%s411 + $0x10] sm:$0xf]
      %v850 = vld [vmem:[%s411 + $0x18] sm:$0xf]
      %v851 = vld [vmem:[%s411 + $0x20] sm:$0xf]
      %v852 = vld [vmem:[%s411 + $0x28] sm:$0xf]
      %v853 = vld [vmem:[%s411 + $0x30] sm:$0xf]
      %v854 = vld [vmem:[%s411 + $0x38] sm:$0xf]
      %s855 = scalar_lea.vmem %s2, 12
      %v856 = vld [vmem:[%s855] sm:$0xf]
      %v865 = vunpack.c.l.b16 %v847
      %v866 = vunpack.c.l.b16 %v848
      %v867 = vunpack.c.l.b16 %v849
      %v868 = vunpack.c.l.b16 %v850
      %v869 = vunpack.c.l.b16 %v851
      %v870 = vunpack.c.l.b16 %v852
      %v871 = vunpack.c.l.b16 %v853
      %v872 = vunpack.c.l.b16 %v854
      %v873 = vpack.c.b16 %v866, %v865
      %v874 = vpack.c.b16 %v868, %v867
      %v875 = vpack.c.b16 %v870, %v869
      %v876 = vpack.c.b16 %v872, %v871
      %v878 = vsel %vm612, %v873, 0
      %v881 = vsel %vm612, %v874, 0
      %v884 = vsel %vm612, %v875, 0
      %v887 = vsel %vm612, %v876, 0
      %v890 = vsel %vm625, %v856, 0
      %892 = vmatpush.bf16.msra.mxu0 0
      %893 = vmatpush.bf16.msra.mxu0 0
      %894 = vmatpush.bf16.msra.mxu0 0
      %895 = vmatpush.bf16.msra.mxu0 0
      %896 = vmatpush.bf16.msra.mxu0 0
      %897 = vmatpush.bf16.msra.mxu0 0
      %898 = vmatpush.bf16.msra.mxu0 0
      %899 = vmatpush.bf16.msra.mxu0 %v890
      %900 = vmatmul.bf16.gmra.mxu0 %v878
      %v901 = vpop.f32.mrf.mxu0
      %v902 = vadd.f32 0.0, %v901
      %v903 = vpop.f32.mrf.mxu0
      %v904 = vadd.f32 0.0, %v903
      %905 = vmatmul.bf16.gmra.mxu0 %v881
      %v906 = vpop.f32.mrf.mxu0
      %v907 = vadd.f32 0.0, %v906
      %v908 = vpop.f32.mrf.mxu0
      %v909 = vadd.f32 0.0, %v908
      %910 = vmatmul.bf16.gmra.mxu0 %v884
      %v911 = vpop.f32.mrf.mxu0
      %v912 = vadd.f32 0.0, %v911
      %v913 = vpop.f32.mrf.mxu0
      %v914 = vadd.f32 0.0, %v913
      %915 = vmatmul.bf16.gmra.mxu0 %v887
      %v916 = vpop.f32.mrf.mxu0
      %v917 = vadd.f32 0.0, %v916
      %v918 = vpop.f32.mrf.mxu0
      %v919 = vadd.f32 0.0, %v918
      %920 = vdwg.mxu0
      %v921 = vadd.f32 %v839, %v902
      %v922 = vadd.f32 %v840, %v904
      %v923 = vadd.f32 %v841, %v907
      %v924 = vadd.f32 %v842, %v909
      %v925 = vadd.f32 %v843, %v912
      %v926 = vadd.f32 %v844, %v914
      %v927 = vadd.f32 %v845, %v917
      %v928 = vadd.f32 %v846, %v919
      %v929 = vld [vmem:[%s411] sm:$0xf]
      %v930 = vld [vmem:[%s411 + $0x4] sm:$0x1]
      %v931 = vld [vmem:[%s411 + $0x8] sm:$0xf]
      %v932 = vld [vmem:[%s411 + $0xc] sm:$0x1]
      %v933 = vld [vmem:[%s411 + $0x10] sm:$0xf]
      %v934 = vld [vmem:[%s411 + $0x14] sm:$0x1]
      %v935 = vld [vmem:[%s411 + $0x18] sm:$0xf]
      %v936 = vld [vmem:[%s411 + $0x1c] sm:$0x1]
      %v937 = vld [vmem:[%s411 + $0x20] sm:$0xf]
      %v938 = vld [vmem:[%s411 + $0x24] sm:$0x1]
      %v939 = vld [vmem:[%s411 + $0x28] sm:$0xf]
      %v940 = vld [vmem:[%s411 + $0x2c] sm:$0x1]
      %v941 = vld [vmem:[%s411 + $0x30] sm:$0xf]
      %v942 = vld [vmem:[%s411 + $0x34] sm:$0x1]
      %v943 = vld [vmem:[%s411 + $0x38] sm:$0xf]
      %v944 = vld [vmem:[%s411 + $0x3c] sm:$0x1]
      %v946 = vshrl.u32 %v929, 16
      %v948 = vrot.slane %v946, 4
      %v949 = vshll.u32 %v929, 16
      %v951 = vrot.slane %v949, 5
      %v952 = vor.u32 %v948, %v951
      %v953 = vrot.slane %v952, 4
      %v955 = vshll.u32 %v930, 16
      %v957 = vrot.slane %v955, 5
      %v958 = vsel %vm485, %v953, %v957
      %v960 = vshrl.u32 %v931, 16
      %v962 = vrot.slane %v960, 4
      %v963 = vshll.u32 %v931, 16
      %v965 = vrot.slane %v963, 5
      %v966 = vor.u32 %v962, %v965
      %v967 = vrot.slane %v966, 4
      %v969 = vshll.u32 %v932, 16
      %v971 = vrot.slane %v969, 5
      %v972 = vsel %vm485, %v967, %v971
      %v974 = vshrl.u32 %v933, 16
      %v976 = vrot.slane %v974, 4
      %v977 = vshll.u32 %v933, 16
      %v979 = vrot.slane %v977, 5
      %v980 = vor.u32 %v976, %v979
      %v981 = vrot.slane %v980, 4
      %v983 = vshll.u32 %v934, 16
      %v985 = vrot.slane %v983, 5
      %v986 = vsel %vm485, %v981, %v985
      %v988 = vshrl.u32 %v935, 16
      %v990 = vrot.slane %v988, 4
      %v991 = vshll.u32 %v935, 16
      %v993 = vrot.slane %v991, 5
      %v994 = vor.u32 %v990, %v993
      %v995 = vrot.slane %v994, 4
      %v997 = vshll.u32 %v936, 16
      %v999 = vrot.slane %v997, 5
      %v1000 = vsel %vm485, %v995, %v999
      %v1002 = vshrl.u32 %v937, 16
      %v1004 = vrot.slane %v1002, 4
      %v1005 = vshll.u32 %v937, 16
      %v1007 = vrot.slane %v1005, 5
      %v1008 = vor.u32 %v1004, %v1007
      %v1009 = vrot.slane %v1008, 4
      %v1011 = vshll.u32 %v938, 16
      %v1013 = vrot.slane %v1011, 5
      %v1014 = vsel %vm485, %v1009, %v1013
      %v1016 = vshrl.u32 %v939, 16
      %v1018 = vrot.slane %v1016, 4
      %v1019 = vshll.u32 %v939, 16
      %v1021 = vrot.slane %v1019, 5
      %v1022 = vor.u32 %v1018, %v1021
      %v1023 = vrot.slane %v1022, 4
      %v1025 = vshll.u32 %v940, 16
      %v1027 = vrot.slane %v1025, 5
      %v1028 = vsel %vm485, %v1023, %v1027
      %v1030 = vshrl.u32 %v941, 16
      %v1032 = vrot.slane %v1030, 4
      %v1033 = vshll.u32 %v941, 16
      %v1035 = vrot.slane %v1033, 5
      %v1036 = vor.u32 %v1032, %v1035
      %v1037 = vrot.slane %v1036, 4
      %v1039 = vshll.u32 %v942, 16
      %v1041 = vrot.slane %v1039, 5
      %v1042 = vsel %vm485, %v1037, %v1041
      %v1044 = vshrl.u32 %v943, 16
      %v1046 = vrot.slane %v1044, 4
      %v1047 = vshll.u32 %v943, 16
      %v1049 = vrot.slane %v1047, 5
      %v1050 = vor.u32 %v1046, %v1049
      %v1051 = vrot.slane %v1050, 4
      %v1053 = vshll.u32 %v944, 16
      %v1055 = vrot.slane %v1053, 5
      %v1056 = vsel %vm485, %v1051, %v1055
      %s1057 = scalar_lea.vmem %s2, 16
      %v1058 = vld [vmem:[%s1057] sm:$0xf]
      %v1059 = vunpack.c.l.b16 %v958
      %v1060 = vunpack.c.l.b16 %v972
      %v1061 = vunpack.c.l.b16 %v986
      %v1062 = vunpack.c.l.b16 %v1000
      %v1063 = vunpack.c.l.b16 %v1014
      %v1064 = vunpack.c.l.b16 %v1028
      %v1065 = vunpack.c.l.b16 %v1042
      %v1066 = vunpack.c.l.b16 %v1056
      %v1067 = vpack.c.b16 %v1060, %v1059
      %v1068 = vpack.c.b16 %v1062, %v1061
      %v1069 = vpack.c.b16 %v1064, %v1063
      %v1070 = vpack.c.b16 %v1066, %v1065
      %v1072 = vsel %vm612, %v1067, 0
      %v1075 = vsel %vm612, %v1068, 0
      %v1078 = vsel %vm612, %v1069, 0
      %v1081 = vsel %vm612, %v1070, 0
      %v1084 = vsel %vm625, %v1058, 0
      %1086 = vmatpush.bf16.msra.mxu0 0
      %1087 = vmatpush.bf16.msra.mxu0 0
      %1088 = vmatpush.bf16.msra.mxu0 0
      %1089 = vmatpush.bf16.msra.mxu0 0
      %1090 = vmatpush.bf16.msra.mxu0 0
      %1091 = vmatpush.bf16.msra.mxu0 0
      %1092 = vmatpush.bf16.msra.mxu0 0
      %1093 = vmatpush.bf16.msra.mxu0 %v1084
      %1094 = vmatmul.bf16.gmra.mxu0 %v1072
      %v1095 = vpop.f32.mrf.mxu0
      %v1096 = vadd.f32 0.0, %v1095
      %v1097 = vpop.f32.mrf.mxu0
      %v1098 = vadd.f32 0.0, %v1097
      %1099 = vmatmul.bf16.gmra.mxu0 %v1075
      %v1100 = vpop.f32.mrf.mxu0
      %v1101 = vadd.f32 0.0, %v1100
      %v1102 = vpop.f32.mrf.mxu0
      %v1103 = vadd.f32 0.0, %v1102
      %1104 = vmatmul.bf16.gmra.mxu0 %v1078
      %v1105 = vpop.f32.mrf.mxu0
      %v1106 = vadd.f32 0.0, %v1105
      %v1107 = vpop.f32.mrf.mxu0
      %v1108 = vadd.f32 0.0, %v1107
      %1109 = vmatmul.bf16.gmra.mxu0 %v1081
      %v1110 = vpop.f32.mrf.mxu0
      %v1111 = vadd.f32 0.0, %v1110
      %v1112 = vpop.f32.mrf.mxu0
      %v1113 = vadd.f32 0.0, %v1112
      %1114 = vdwg.mxu0
      %v1115 = vadd.f32 %v921, %v1096
      %v1116 = vadd.f32 %v922, %v1098
      %v1117 = vadd.f32 %v923, %v1101
      %v1118 = vadd.f32 %v924, %v1103
      %v1119 = vadd.f32 %v925, %v1106
      %v1120 = vadd.f32 %v926, %v1108
      %v1121 = vadd.f32 %v927, %v1111
      %v1122 = vadd.f32 %v928, %v1113
      %v1123 = vld [vmem:[%s411] sm:$0xe]
      %v1124 = vld [vmem:[%s411 + $0x8] sm:$0xe]
      %v1125 = vld [vmem:[%s411 + $0x10] sm:$0xe]
      %v1126 = vld [vmem:[%s411 + $0x18] sm:$0xe]
      %v1127 = vld [vmem:[%s411 + $0x20] sm:$0xe]
      %v1128 = vld [vmem:[%s411 + $0x28] sm:$0xe]
      %v1129 = vld [vmem:[%s411 + $0x30] sm:$0xe]
      %v1130 = vld [vmem:[%s411 + $0x38] sm:$0xe]
      %v1147 = vrot.slane %v1123, 5
      %v1148 = vrot.slane %v1147, 4
      %v1149 = vrot.slane %v930, 5
      %v1150 = vsel %vm748, %v1148, %v1149
      %v1151 = vrot.slane %v1124, 5
      %v1152 = vrot.slane %v1151, 4
      %v1153 = vrot.slane %v932, 5
      %v1154 = vsel %vm748, %v1152, %v1153
      %v1155 = vrot.slane %v1125, 5
      %v1156 = vrot.slane %v1155, 4
      %v1157 = vrot.slane %v934, 5
      %v1158 = vsel %vm748, %v1156, %v1157
      %v1159 = vrot.slane %v1126, 5
      %v1160 = vrot.slane %v1159, 4
      %v1161 = vrot.slane %v936, 5
      %v1162 = vsel %vm748, %v1160, %v1161
      %v1163 = vrot.slane %v1127, 5
      %v1164 = vrot.slane %v1163, 4
      %v1165 = vrot.slane %v938, 5
      %v1166 = vsel %vm748, %v1164, %v1165
      %v1167 = vrot.slane %v1128, 5
      %v1168 = vrot.slane %v1167, 4
      %v1169 = vrot.slane %v940, 5
      %v1170 = vsel %vm748, %v1168, %v1169
      %v1171 = vrot.slane %v1129, 5
      %v1172 = vrot.slane %v1171, 4
      %v1173 = vrot.slane %v942, 5
      %v1174 = vsel %vm748, %v1172, %v1173
      %v1175 = vrot.slane %v1130, 5
      %v1176 = vrot.slane %v1175, 4
      %v1177 = vrot.slane %v944, 5
      %v1178 = vsel %vm748, %v1176, %v1177
      %s1179 = scalar_lea.vmem %s2, 20
      %v1180 = vld [vmem:[%s1179] sm:$0xf]
      %v1181 = vunpack.c.l.b16 %v1150
      %v1182 = vunpack.c.l.b16 %v1154
      %v1183 = vunpack.c.l.b16 %v1158
      %v1184 = vunpack.c.l.b16 %v1162
      %v1185 = vunpack.c.l.b16 %v1166
      %v1186 = vunpack.c.l.b16 %v1170
      %v1187 = vunpack.c.l.b16 %v1174
      %v1188 = vunpack.c.l.b16 %v1178
      %v1189 = vpack.c.b16 %v1182, %v1181
      %v1190 = vpack.c.b16 %v1184, %v1183
      %v1191 = vpack.c.b16 %v1186, %v1185
      %v1192 = vpack.c.b16 %v1188, %v1187
      %v1194 = vsel %vm612, %v1189, 0
      %v1197 = vsel %vm612, %v1190, 0
      %v1200 = vsel %vm612, %v1191, 0
      %v1203 = vsel %vm612, %v1192, 0
      %v1206 = vsel %vm625, %v1180, 0
      %1208 = vmatpush.bf16.msra.mxu0 0
      %1209 = vmatpush.bf16.msra.mxu0 0
      %1210 = vmatpush.bf16.msra.mxu0 0
      %1211 = vmatpush.bf16.msra.mxu0 0
      %1212 = vmatpush.bf16.msra.mxu0 0
      %1213 = vmatpush.bf16.msra.mxu0 0
      %1214 = vmatpush.bf16.msra.mxu0 0
      %1215 = vmatpush.bf16.msra.mxu0 %v1206
      %1216 = vmatmul.bf16.gmra.mxu0 %v1194
      %v1217 = vpop.f32.mrf.mxu0
      %v1218 = vadd.f32 0.0, %v1217
      %v1219 = vpop.f32.mrf.mxu0
      %v1220 = vadd.f32 0.0, %v1219
      %1221 = vmatmul.bf16.gmra.mxu0 %v1197
      %v1222 = vpop.f32.mrf.mxu0
      %v1223 = vadd.f32 0.0, %v1222
      %v1224 = vpop.f32.mrf.mxu0
      %v1225 = vadd.f32 0.0, %v1224
      %1226 = vmatmul.bf16.gmra.mxu0 %v1200
      %v1227 = vpop.f32.mrf.mxu0
      %v1228 = vadd.f32 0.0, %v1227
      %v1229 = vpop.f32.mrf.mxu0
      %v1230 = vadd.f32 0.0, %v1229
      %1231 = vmatmul.bf16.gmra.mxu0 %v1203
      %v1232 = vpop.f32.mrf.mxu0
      %v1233 = vadd.f32 0.0, %v1232
      %v1234 = vpop.f32.mrf.mxu0
      %v1235 = vadd.f32 0.0, %v1234
      %1236 = vdwg.mxu0
      %v1237 = vadd.f32 %v1115, %v1218
      %v1238 = vadd.f32 %v1116, %v1220
      %v1239 = vadd.f32 %v1117, %v1223
      %v1240 = vadd.f32 %v1118, %v1225
      %v1241 = vadd.f32 %v1119, %v1228
      %v1242 = vadd.f32 %v1120, %v1230
      %v1243 = vadd.f32 %v1121, %v1233
      %v1244 = vadd.f32 %v1122, %v1235
      %s1245 = scalar_lea.vmem [#allocation2], 16
      %v1246 = vld [vmem:[%s1245] sm:$0xf]
      %v1247 = vld [vmem:[%s1245 + $0x8] sm:$0xf]
      %v1248 = vld [vmem:[%s1245 + $0x10] sm:$0xf]
      %v1249 = vld [vmem:[%s1245 + $0x18] sm:$0xf]
      %v1250 = vld [vmem:[%s1245 + $0x20] sm:$0xf]
      %v1251 = vld [vmem:[%s1245 + $0x28] sm:$0xf]
      %v1252 = vld [vmem:[%s1245 + $0x30] sm:$0xf]
      %v1253 = vld [vmem:[%s1245 + $0x38] sm:$0xf]
      %s1254 = scalar_lea.vmem %s2, 24
      %v1255 = vld [vmem:[%s1254] sm:$0xf]
      %v1264 = vunpack.c.l.b16 %v1246
      %v1265 = vunpack.c.l.b16 %v1247
      %v1266 = vunpack.c.l.b16 %v1248
      %v1267 = vunpack.c.l.b16 %v1249
      %v1268 = vunpack.c.l.b16 %v1250
      %v1269 = vunpack.c.l.b16 %v1251
      %v1270 = vunpack.c.l.b16 %v1252
      %v1271 = vunpack.c.l.b16 %v1253
      %v1272 = vpack.c.b16 %v1265, %v1264
      %v1273 = vpack.c.b16 %v1267, %v1266
      %v1274 = vpack.c.b16 %v1269, %v1268
      %v1275 = vpack.c.b16 %v1271, %v1270
      %v1277 = vsel %vm612, %v1272, 0
      %v1280 = vsel %vm612, %v1273, 0
      %v1283 = vsel %vm612, %v1274, 0
      %v1286 = vsel %vm612, %v1275, 0
      %v1289 = vsel %vm625, %v1255, 0
      %1291 = vmatpush.bf16.msra.mxu0 0
      %1292 = vmatpush.bf16.msra.mxu0 0
      %1293 = vmatpush.bf16.msra.mxu0 0
      %1294 = vmatpush.bf16.msra.mxu0 0
      %1295 = vmatpush.bf16.msra.mxu0 0
      %1296 = vmatpush.bf16.msra.mxu0 0
      %1297 = vmatpush.bf16.msra.mxu0 0
      %1298 = vmatpush.bf16.msra.mxu0 %v1289
      %1299 = vmatmul.bf16.gmra.mxu0 %v1277
      %v1300 = vpop.f32.mrf.mxu0
      %v1301 = vadd.f32 0.0, %v1300
      %v1302 = vpop.f32.mrf.mxu0
      %v1303 = vadd.f32 0.0, %v1302
      %1304 = vmatmul.bf16.gmra.mxu0 %v1280
      %v1305 = vpop.f32.mrf.mxu0
      %v1306 = vadd.f32 0.0, %v1305
      %v1307 = vpop.f32.mrf.mxu0
      %v1308 = vadd.f32 0.0, %v1307
      %1309 = vmatmul.bf16.gmra.mxu0 %v1283
      %v1310 = vpop.f32.mrf.mxu0
      %v1311 = vadd.f32 0.0, %v1310
      %v1312 = vpop.f32.mrf.mxu0
      %v1313 = vadd.f32 0.0, %v1312
      %1314 = vmatmul.bf16.gmra.mxu0 %v1286
      %v1315 = vpop.f32.mrf.mxu0
      %v1316 = vadd.f32 0.0, %v1315
      %v1317 = vpop.f32.mrf.mxu0
      %v1318 = vadd.f32 0.0, %v1317
      %1319 = vdwg.mxu0
      %v1320 = vadd.f32 %v1237, %v1301
      %v1321 = vadd.f32 %v1238, %v1303
      %v1322 = vadd.f32 %v1239, %v1306
      %v1323 = vadd.f32 %v1240, %v1308
      %v1324 = vadd.f32 %v1241, %v1311
      %v1325 = vadd.f32 %v1242, %v1313
      %v1326 = vadd.f32 %v1243, %v1316
      %v1327 = vadd.f32 %v1244, %v1318
      %v1328 = vld [vmem:[%s1245] sm:$0xf]
      %v1329 = vld [vmem:[%s1245 + $0x4] sm:$0x1]
      %v1330 = vld [vmem:[%s1245 + $0x8] sm:$0xf]
      %v1331 = vld [vmem:[%s1245 + $0xc] sm:$0x1]
      %v1332 = vld [vmem:[%s1245 + $0x10] sm:$0xf]
      %v1333 = vld [vmem:[%s1245 + $0x14] sm:$0x1]
      %v1334 = vld [vmem:[%s1245 + $0x18] sm:$0xf]
      %v1335 = vld [vmem:[%s1245 + $0x1c] sm:$0x1]
      %v1336 = vld [vmem:[%s1245 + $0x20] sm:$0xf]
      %v1337 = vld [vmem:[%s1245 + $0x24] sm:$0x1]
      %v1338 = vld [vmem:[%s1245 + $0x28] sm:$0xf]
      %v1339 = vld [vmem:[%s1245 + $0x2c] sm:$0x1]
      %v1340 = vld [vmem:[%s1245 + $0x30] sm:$0xf]
      %v1341 = vld [vmem:[%s1245 + $0x34] sm:$0x1]
      %v1342 = vld [vmem:[%s1245 + $0x38] sm:$0xf]
      %v1343 = vld [vmem:[%s1245 + $0x3c] sm:$0x1]
      %v1345 = vshrl.u32 %v1328, 16
      %v1347 = vrot.slane %v1345, 4
      %v1348 = vshll.u32 %v1328, 16
      %v1350 = vrot.slane %v1348, 5
      %v1351 = vor.u32 %v1347, %v1350
      %v1352 = vrot.slane %v1351, 4
      %v1354 = vshll.u32 %v1329, 16
      %v1356 = vrot.slane %v1354, 5
      %v1357 = vsel %vm485, %v1352, %v1356
      %v1359 = vshrl.u32 %v1330, 16
      %v1361 = vrot.slane %v1359, 4
      %v1362 = vshll.u32 %v1330, 16
      %v1364 = vrot.slane %v1362, 5
      %v1365 = vor.u32 %v1361, %v1364
      %v1366 = vrot.slane %v1365, 4
      %v1368 = vshll.u32 %v1331, 16
      %v1370 = vrot.slane %v1368, 5
      %v1371 = vsel %vm485, %v1366, %v1370
      %v1373 = vshrl.u32 %v1332, 16
      %v1375 = vrot.slane %v1373, 4
      %v1376 = vshll.u32 %v1332, 16
      %v1378 = vrot.slane %v1376, 5
      %v1379 = vor.u32 %v1375, %v1378
      %v1380 = vrot.slane %v1379, 4
      %v1382 = vshll.u32 %v1333, 16
      %v1384 = vrot.slane %v1382, 5
      %v1385 = vsel %vm485, %v1380, %v1384
      %v1387 = vshrl.u32 %v1334, 16
      %v1389 = vrot.slane %v1387, 4
      %v1390 = vshll.u32 %v1334, 16
      %v1392 = vrot.slane %v1390, 5
      %v1393 = vor.u32 %v1389, %v1392
      %v1394 = vrot.slane %v1393, 4
      %v1396 = vshll.u32 %v1335, 16
      %v1398 = vrot.slane %v1396, 5
      %v1399 = vsel %vm485, %v1394, %v1398
      %v1401 = vshrl.u32 %v1336, 16
      %v1403 = vrot.slane %v1401, 4
      %v1404 = vshll.u32 %v1336, 16
      %v1406 = vrot.slane %v1404, 5
      %v1407 = vor.u32 %v1403, %v1406
      %v1408 = vrot.slane %v1407, 4
      %v1410 = vshll.u32 %v1337, 16
      %v1412 = vrot.slane %v1410, 5
      %v1413 = vsel %vm485, %v1408, %v1412
      %v1415 = vshrl.u32 %v1338, 16
      %v1417 = vrot.slane %v1415, 4
      %v1418 = vshll.u32 %v1338, 16
      %v1420 = vrot.slane %v1418, 5
      %v1421 = vor.u32 %v1417, %v1420
      %v1422 = vrot.slane %v1421, 4
      %v1424 = vshll.u32 %v1339, 16
      %v1426 = vrot.slane %v1424, 5
      %v1427 = vsel %vm485, %v1422, %v1426
      %v1429 = vshrl.u32 %v1340, 16
      %v1431 = vrot.slane %v1429, 4
      %v1432 = vshll.u32 %v1340, 16
      %v1434 = vrot.slane %v1432, 5
      %v1435 = vor.u32 %v1431, %v1434
      %v1436 = vrot.slane %v1435, 4
      %v1438 = vshll.u32 %v1341, 16
      %v1440 = vrot.slane %v1438, 5
      %v1441 = vsel %vm485, %v1436, %v1440
      %v1443 = vshrl.u32 %v1342, 16
      %v1445 = vrot.slane %v1443, 4
      %v1446 = vshll.u32 %v1342, 16
      %v1448 = vrot.slane %v1446, 5
      %v1449 = vor.u32 %v1445, %v1448
      %v1450 = vrot.slane %v1449, 4
      %v1452 = vshll.u32 %v1343, 16
      %v1454 = vrot.slane %v1452, 5
      %v1455 = vsel %vm485, %v1450, %v1454
      %s1456 = scalar_lea.vmem %s2, 28
      %v1457 = vld [vmem:[%s1456] sm:$0xf]
      %v1458 = vunpack.c.l.b16 %v1357
      %v1459 = vunpack.c.l.b16 %v1371
      %v1460 = vunpack.c.l.b16 %v1385
      %v1461 = vunpack.c.l.b16 %v1399
      %v1462 = vunpack.c.l.b16 %v1413
      %v1463 = vunpack.c.l.b16 %v1427
      %v1464 = vunpack.c.l.b16 %v1441
      %v1465 = vunpack.c.l.b16 %v1455
      %v1466 = vpack.c.b16 %v1459, %v1458
      %v1467 = vpack.c.b16 %v1461, %v1460
      %v1468 = vpack.c.b16 %v1463, %v1462
      %v1469 = vpack.c.b16 %v1465, %v1464
      %v1471 = vsel %vm612, %v1466, 0
      %v1474 = vsel %vm612, %v1467, 0
      %v1477 = vsel %vm612, %v1468, 0
      %v1480 = vsel %vm612, %v1469, 0
      %v1483 = vsel %vm625, %v1457, 0
      %1485 = vmatpush.bf16.msra.mxu0 0
      %1486 = vmatpush.bf16.msra.mxu0 0
      %1487 = vmatpush.bf16.msra.mxu0 0
      %1488 = vmatpush.bf16.msra.mxu0 0
      %1489 = vmatpush.bf16.msra.mxu0 0
      %1490 = vmatpush.bf16.msra.mxu0 0
      %1491 = vmatpush.bf16.msra.mxu0 0
      %1492 = vmatpush.bf16.msra.mxu0 %v1483
      %1493 = vmatmul.bf16.gmra.mxu0 %v1471
      %v1494 = vpop.f32.mrf.mxu0
      %v1495 = vadd.f32 0.0, %v1494
      %v1496 = vpop.f32.mrf.mxu0
      %v1497 = vadd.f32 0.0, %v1496
      %1498 = vmatmul.bf16.gmra.mxu0 %v1474
      %v1499 = vpop.f32.mrf.mxu0
      %v1500 = vadd.f32 0.0, %v1499
      %v1501 = vpop.f32.mrf.mxu0
      %v1502 = vadd.f32 0.0, %v1501
      %1503 = vmatmul.bf16.gmra.mxu0 %v1477
      %v1504 = vpop.f32.mrf.mxu0
      %v1505 = vadd.f32 0.0, %v1504
      %v1506 = vpop.f32.mrf.mxu0
      %v1507 = vadd.f32 0.0, %v1506
      %1508 = vmatmul.bf16.gmra.mxu0 %v1480
      %v1509 = vpop.f32.mrf.mxu0
      %v1510 = vadd.f32 0.0, %v1509
      %v1511 = vpop.f32.mrf.mxu0
      %v1512 = vadd.f32 0.0, %v1511
      %1513 = vdwg.mxu0
      %v1514 = vadd.f32 %v1320, %v1495
      %v1515 = vadd.f32 %v1321, %v1497
      %v1516 = vadd.f32 %v1322, %v1500
      %v1517 = vadd.f32 %v1323, %v1502
      %v1518 = vadd.f32 %v1324, %v1505
      %v1519 = vadd.f32 %v1325, %v1507
      %v1520 = vadd.f32 %v1326, %v1510
      %v1521 = vadd.f32 %v1327, %v1512
      %v1522 = vld [vmem:[%s1245] sm:$0xe]
      %v1523 = vld [vmem:[%s1245 + $0x8] sm:$0xe]
      %v1524 = vld [vmem:[%s1245 + $0x10] sm:$0xe]
      %v1525 = vld [vmem:[%s1245 + $0x18] sm:$0xe]
      %v1526 = vld [vmem:[%s1245 + $0x20] sm:$0xe]
      %v1527 = vld [vmem:[%s1245 + $0x28] sm:$0xe]
      %v1528 = vld [vmem:[%s1245 + $0x30] sm:$0xe]
      %v1529 = vld [vmem:[%s1245 + $0x38] sm:$0xe]
      %v1546 = vrot.slane %v1522, 5
      %v1547 = vrot.slane %v1546, 4
      %v1548 = vrot.slane %v1329, 5
      %v1549 = vsel %vm748, %v1547, %v1548
      %v1550 = vrot.slane %v1523, 5
      %v1551 = vrot.slane %v1550, 4
      %v1552 = vrot.slane %v1331, 5
      %v1553 = vsel %vm748, %v1551, %v1552
      %v1554 = vrot.slane %v1524, 5
      %v1555 = vrot.slane %v1554, 4
      %v1556 = vrot.slane %v1333, 5
      %v1557 = vsel %vm748, %v1555, %v1556
      %v1558 = vrot.slane %v1525, 5
      %v1559 = vrot.slane %v1558, 4
      %v1560 = vrot.slane %v1335, 5
      %v1561 = vsel %vm748, %v1559, %v1560
      %v1562 = vrot.slane %v1526, 5
      %v1563 = vrot.slane %v1562, 4
      %v1564 = vrot.slane %v1337, 5
      %v1565 = vsel %vm748, %v1563, %v1564
      %v1566 = vrot.slane %v1527, 5
      %v1567 = vrot.slane %v1566, 4
      %v1568 = vrot.slane %v1339, 5
      %v1569 = vsel %vm748, %v1567, %v1568
      %v1570 = vrot.slane %v1528, 5
      %v1571 = vrot.slane %v1570, 4
      %v1572 = vrot.slane %v1341, 5
      %v1573 = vsel %vm748, %v1571, %v1572
      %v1574 = vrot.slane %v1529, 5
      %v1575 = vrot.slane %v1574, 4
      %v1576 = vrot.slane %v1343, 5
      %v1577 = vsel %vm748, %v1575, %v1576
      %s1578 = scalar_lea.vmem %s2, 32
      %v1579 = vld [vmem:[%s1578] sm:$0xf]
      %v1580 = vunpack.c.l.b16 %v1549
      %v1581 = vunpack.c.l.b16 %v1553
      %v1582 = vunpack.c.l.b16 %v1557
      %v1583 = vunpack.c.l.b16 %v1561
      %v1584 = vunpack.c.l.b16 %v1565
      %v1585 = vunpack.c.l.b16 %v1569
      %v1586 = vunpack.c.l.b16 %v1573
      %v1587 = vunpack.c.l.b16 %v1577
      %v1588 = vpack.c.b16 %v1581, %v1580
      %v1589 = vpack.c.b16 %v1583, %v1582
      %v1590 = vpack.c.b16 %v1585, %v1584
      %v1591 = vpack.c.b16 %v1587, %v1586
      %v1593 = vsel %vm612, %v1588, 0
      %v1596 = vsel %vm612, %v1589, 0
      %v1599 = vsel %vm612, %v1590, 0
      %v1602 = vsel %vm612, %v1591, 0
      %v1605 = vsel %vm625, %v1579, 0
      %1607 = vmatpush.bf16.msra.mxu0 0
      %1608 = vmatpush.bf16.msra.mxu0 0
      %1609 = vmatpush.bf16.msra.mxu0 0
      %1610 = vmatpush.bf16.msra.mxu0 0
      %1611 = vmatpush.bf16.msra.mxu0 0
      %1612 = vmatpush.bf16.msra.mxu0 0
      %1613 = vmatpush.bf16.msra.mxu0 0
      %1614 = vmatpush.bf16.msra.mxu0 %v1605
      %1615 = vmatmul.bf16.gmra.mxu0 %v1593
      %v1616 = vpop.f32.mrf.mxu0
      %v1617 = vadd.f32 0.0, %v1616
      %v1618 = vpop.f32.mrf.mxu0
      %v1619 = vadd.f32 0.0, %v1618
      %1620 = vmatmul.bf16.gmra.mxu0 %v1596
      %v1621 = vpop.f32.mrf.mxu0
      %v1622 = vadd.f32 0.0, %v1621
      %v1623 = vpop.f32.mrf.mxu0
      %v1624 = vadd.f32 0.0, %v1623
      %1625 = vmatmul.bf16.gmra.mxu0 %v1599
      %v1626 = vpop.f32.mrf.mxu0
      %v1627 = vadd.f32 0.0, %v1626
      %v1628 = vpop.f32.mrf.mxu0
      %v1629 = vadd.f32 0.0, %v1628
      %1630 = vmatmul.bf16.gmra.mxu0 %v1602
      %v1631 = vpop.f32.mrf.mxu0
      %v1632 = vadd.f32 0.0, %v1631
      %v1633 = vpop.f32.mrf.mxu0
      %v1634 = vadd.f32 0.0, %v1633
      %1635 = vdwg.mxu0
      %v1636 = vadd.f32 %v1514, %v1617
      %v1637 = vadd.f32 %v1515, %v1619
      %v1638 = vadd.f32 %v1516, %v1622
      %v1639 = vadd.f32 %v1517, %v1624
      %v1640 = vadd.f32 %v1518, %v1627
      %v1641 = vadd.f32 %v1519, %v1629
      %v1642 = vadd.f32 %v1520, %v1632
      %v1643 = vadd.f32 %v1521, %v1634
      %v1644 = vld [vmem:[%s246] sm:$0xf]
      %v1645 = vld [vmem:[%s246 + $0x4] sm:$0xf]
      %v1646 = vld [vmem:[%s246 + $0x8] sm:$0xf]
      %v1647 = vld [vmem:[%s246 + $0xc] sm:$0xf]
      %v1648 = vld [vmem:[%s246 + $0x10] sm:$0xf]
      %v1649 = vld [vmem:[%s246 + $0x14] sm:$0xf]
      %v1650 = vld [vmem:[%s246 + $0x18] sm:$0xf]
      %v1651 = vld [vmem:[%s246 + $0x1c] sm:$0xf]
      %v1652 = vunpack.c.l.bf16 %v1644
      %v1653 = vunpack.c.l.bf16 %v1645
      %v1654 = vunpack.c.l.bf16 %v1646
      %v1655 = vunpack.c.l.bf16 %v1647
      %v1656 = vunpack.c.l.bf16 %v1648
      %v1657 = vunpack.c.l.bf16 %v1649
      %v1658 = vunpack.c.l.bf16 %v1650
      %v1659 = vunpack.c.l.bf16 %v1651
      %v1660 = vadd.f32 %v1636, %v1652
      %v1661 = vadd.f32 %v1637, %v1653
      %v1662 = vadd.f32 %v1638, %v1654
      %v1663 = vadd.f32 %v1639, %v1655
      %v1664 = vadd.f32 %v1640, %v1656
      %v1665 = vadd.f32 %v1641, %v1657
      %v1666 = vadd.f32 %v1642, %v1658
      %v1667 = vadd.f32 %v1643, %v1659
      %v1668 = vpack.c.bf16 %v1660, %v1660
      %v1669 = vpack.c.bf16 %v1661, %v1661
      %v1670 = vpack.c.bf16 %v1662, %v1662
      %v1671 = vpack.c.bf16 %v1663, %v1663
      %v1672 = vpack.c.bf16 %v1664, %v1664
      %v1673 = vpack.c.bf16 %v1665, %v1665
      %v1674 = vpack.c.bf16 %v1666, %v1666
      %v1675 = vpack.c.bf16 %v1667, %v1667
      %1676 = vst.msk [vmem:[%s251] sm:$0xf] %vm257, %v1668
      %1677 = vst.msk [vmem:[%s251 + $0x4] sm:$0xf] %vm257, %v1669
      %1678 = vst.msk [vmem:[%s251 + $0x8] sm:$0xf] %vm257, %v1670
      %1679 = vst.msk [vmem:[%s251 + $0xc] sm:$0xf] %vm257, %v1671
      %1680 = vst.msk [vmem:[%s251 + $0x10] sm:$0xf] %vm257, %v1672
      %1681 = vst.msk [vmem:[%s251 + $0x14] sm:$0xf] %vm257, %v1673
      %1682 = vst.msk [vmem:[%s251 + $0x18] sm:$0xf] %vm257, %v1674
      %1683 = vst.msk [vmem:[%s251 + $0x1c] sm:$0xf] %vm257, %v1675
      %v1684 = vsel %vm612, %v1660, 0.0
      %v1685 = vsel %vm612, %v1661, 0.0
      %v1686 = vadd.f32 %v1684, %v1685
      %v1687 = vsel %vm612, %v1662, 0.0
      %v1688 = vadd.f32 %v1686, %v1687
      %v1689 = vsel %vm612, %v1663, 0.0
      %v1690 = vadd.f32 %v1688, %v1689
      %v1691 = vsel %vm612, %v1664, 0.0
      %v1692 = vadd.f32 %v1690, %v1691
      %v1693 = vsel %vm612, %v1665, 0.0
      %v1694 = vadd.f32 %v1692, %v1693
      %v1695 = vsel %vm612, %v1666, 0.0
      %v1696 = vadd.f32 %v1694, %v1695
      %v1697 = vsel %vm612, %v1667, 0.0
      %v1698 = vadd.f32 %v1696, %v1697
      %v1699 = vrot.slane %v1698, 4
      %v1700 = vadd.f32 %v1698, %v1699
      %v1701 = vrot.slane %v1700, 2
      %v1702 = vadd.f32 %v1700, %v1701
      %v1703 = vrot.slane %v1702, 1
      %v1704 = vadd.f32 %v1702, %v1703
      %1705 = vst.msk [vmem:[%s255] sm:$0x1] %vm259, %v1704
      %v1706 = vmul.f32 %v1660, %v1660
      %v1707 = vmul.f32 %v1661, %v1661
      %v1708 = vmul.f32 %v1662, %v1662
      %v1709 = vmul.f32 %v1663, %v1663
      %v1710 = vmul.f32 %v1664, %v1664
      %v1711 = vmul.f32 %v1665, %v1665
      %v1712 = vmul.f32 %v1666, %v1666
      %v1713 = vmul.f32 %v1667, %v1667
      %v1714 = vsel %vm612, %v1706, 0.0
      %v1715 = vsel %vm612, %v1707, 0.0
      %v1716 = vadd.f32 %v1714, %v1715
      %v1717 = vsel %vm612, %v1708, 0.0
      %v1718 = vadd.f32 %v1716, %v1717
      %v1719 = vsel %vm612, %v1709, 0.0
      %v1720 = vadd.f32 %v1718, %v1719
      %v1721 = vsel %vm612, %v1710, 0.0
      %v1722 = vadd.f32 %v1720, %v1721
      %v1723 = vsel %vm612, %v1711, 0.0
      %v1724 = vadd.f32 %v1722, %v1723
      %v1725 = vsel %vm612, %v1712, 0.0
      %v1726 = vadd.f32 %v1724, %v1725
      %v1727 = vsel %vm612, %v1713, 0.0
      %v1728 = vadd.f32 %v1726, %v1727
      %v1729 = vrot.slane %v1728, 4
      %v1730 = vadd.f32 %v1728, %v1729
      %v1731 = vrot.slane %v1730, 2
      %v1732 = vadd.f32 %v1730, %v1731
      %v1733 = vrot.slane %v1732, 1
      %v1734 = vadd.f32 %v1732, %v1733
      %1735 = vst.msk [vmem:[%s255 + $0x1] sm:$0x1] %vm259, %v1734
      %p1736 = scmp.lt.s32.totalorder %s17, 1
      %s1737 = scalar_select %p1736, %s17, 1
      %s1738 = smul.addr %s1737, 8
      %s1739 = smul.addr %s1738, 4
      %s1740 = scalar_lea.vmem %s4, %s1739
      %p1741 = scmp.lt.s32.totalorder %s17, 1
      %s1742 = scalar_select %p1741, %s17, 1
      %s1743 = smul.addr %s1742, 2
      %s1744 = scalar_lea.vmem %s5, %s1743
      // Predicated region
      $region37: #{_lambda_.7} parent=35 // pred_check
        %p1745 = pneg %p129
      $region38: #{_lambda_.7} parent=35 // pred_check_branch
        %1747 = sbr.rel (%p1745) target = $region40
      $region39: #{_lambda_.7} parent=35 // pred_region
        _
      $region40: #{_lambda_.7} parent=35 // pred_fallthru
        _
      // Predicated region
      $region41: #{_lambda_.7} parent=35 // pred_check
        %p1748 = pneg %p155
      $region42: #{_lambda_.7} parent=35 // pred_check_branch
        %1750 = sbr.rel (%p1748) target = $region44
      $region43: #{_lambda_.7} parent=35 // pred_region
        _
      $region44: #{_lambda_.7} parent=35 // pred_fallthru
        _
    $region36: #{_lambda_.7} parent=5 // pred_fallthru
      _
    %p1751 = scmp.le.s32.totalorder 2, %s12
    // Predicated region
    $region45: #{_lambda_.7} parent=5 // pred_check
      %p1752 = pneg %p1751
    $region46: #{_lambda_.7} parent=5 // pred_check_branch
      %1754 = sbr.rel (%p1752) target = $region48
    $region47: #{_lambda_.7} parent=5 // pred_region
      %s1755 = ssub.s32 %s12, 2
      // Predicated region
      $region49: #{_lambda_.7} parent=47 // pred_check
        %p1756 = pneg %p135
      $region50: #{_lambda_.7} parent=47 // pred_check_branch
        %1758 = sbr.rel (%p1756) target = $region52
      $region51: #{_lambda_.7} parent=47 // pred_region
        %p1759 = scmp.lt.s32.totalorder %s18, 1
        %s1760 = scalar_select %p1759, %s18, 1
        %s1761 = smul.addr %s1760, 8
        %s1762 = smul.addr %s1761, 4
        %s1763 = scalar_lea.vmem %s4, %s1762
      $region52: #{_lambda_.7} parent=47 // pred_fallthru
        _
      // Predicated region
      $region53: #{_lambda_.7} parent=47 // pred_check
        %p1764 = pneg %p161
      $region54: #{_lambda_.7} parent=47 // pred_check_branch
        %1766 = sbr.rel (%p1764) target = $region56
      $region55: #{_lambda_.7} parent=47 // pred_region
        %p1767 = scmp.lt.s32.totalorder %s18, 1
        %s1768 = scalar_select %p1767, %s18, 1
        %s1769 = smul.addr %s1768, 2
        %s1770 = scalar_lea.vmem %s5, %s1769
      $region56: #{_lambda_.7} parent=47 // pred_fallthru
        _
    $region48: #{_lambda_.7} parent=5 // pred_fallthru
      _
  $region6: #{_lambda_.7} parent=0 // loop_footer
    %s16 = sadd.s32 1, %s12
  $region7: #{_lambda_.7} parent=0 // loop_footer_branch
    %11 = sbr.rel target = $region3
  $region8: #{_lambda_.7} parent=0 // loop_exit
    _

// kernel: _lambda_.8
$region0: #{_lambda_.8}
  #allocation0 [shape = 'u32[]', space=smem, size = 0x4, offset = 0x4, fixed_abs, tag = 'smem constant byte address 0x4 - core index']
  #allocation1 [shape = 'u32[72,128]{1,0:T(1,128)}', space=vmem, size = 0x9000, scoped, tag = 'internal scratch']
  #allocation2 [shape = 'bf16[10,10,8]{2,1,0:T(8,128)(2,1)}', space=vmem, size = 0xa000, scoped, tag = 'scratch operand']
  %s0 = inlined_call_operand.vmem [shape: bf16[2,8,8,8], index: 0, kind: input, shape index: {}]
  %s1 = inlined_call_operand.vmem [shape: f32[2,8], index: 1, kind: input, shape index: {}]
  %s2 = inlined_call_operand.vmem [shape: bf16[9,8,8], index: 2, kind: input, shape index: {}]
  %s3 = inlined_call_operand.vmem [shape: bf16[2,8,8,8], index: 3, kind: output, shape index: {0}]
  %s4 = inlined_call_operand.vmem [shape: f32[2,2,8], index: 4, kind: output, shape index: {1}]
  %5 = xla_tuple %s3, %s4
  %s6 = sld [smem:[#allocation0]]
  $region53: #{_lambda_.8} parent=0
    _
  %s8 = ssub.s32 1, %s6
  %s9 = scalar_select 0, %s8, %s6
  loop: start=0, step=1, limit=4
  $region2: #{_lambda_.8} parent=0 // loop_pre_header
    _
  $region3: #{_lambda_.8} parent=0 // loop_header
    %s11 = sphi 0, %s15
    %p12 = scmp.ge.s32.totalorder %s11, 4
    %s21 = sphi 0, %s23
    %s24 = sphi 0, %s21
    %s25 = sphi 0, %s24
    %s41 = sphi 0, %s25
    %s45 = sphi 0, %s45
    %s47 = sphi 0, %s45
    %s48 = sphi 0, %s47
    %s62 = sphi 0, %s48
    %s66 = sphi 0, %s66
    %s68 = sphi 0, %s66
    %s69 = sphi 0, %s68
    %s83 = sphi 0, %s69
    %s89 = sphi 0, %s91
    %s92 = sphi 0, %s89
    %s93 = sphi 0, %s92
    %s109 = sphi 0, %s93
    %s115 = sphi 0, %s117
    %s118 = sphi 0, %s115
    %s119 = sphi 0, %s118
    %s135 = sphi 0, %s119
  $region4: #{_lambda_.8} parent=0 // loop_header_branch
    %14 = sbr.rel (%p12) target = $region8
  $region5: #{_lambda_.8} parent=0 // loop_body
    %s16 = ssub.s32 %s11, 1
    %s17 = ssub.s32 %s11, 2
    %s18 = sadd.s32 %s11, 1
    %s19 = ssub.s32 %s11, %s18
    %p20 = scmp.eq.s32.totalorder %s19, 0
    %s22 = sadd.s32 %s21, 1
    %s23 = scalar_select %p20, %s21, %s22
    %p26 = pneg %p20
    %p27 = scmp.eq.s32.totalorder %s11, 1
    %p28 = por %p26, %p27
    %p29 = scmp.ne.s32.totalorder %s21, %s24
    %p30 = scmp.eq.s32.totalorder %s11, 0
    %p31 = por %p29, %p30
    %p32 = scmp.ne.s32.totalorder %s21, %s24
    %p33 = scmp.eq.s32.totalorder %s16, 1
    %p34 = por %p32, %p33
    %p35 = scmp.ne.s32.totalorder %s24, %s25
    %p36 = scmp.eq.s32.totalorder %s16, 0
    %p37 = por %p35, %p36
    %p38 = scmp.ne.s32.totalorder %s24, %s25
    %p39 = scmp.eq.s32.totalorder %s17, 1
    %p40 = por %p38, %p39
    %p42 = scmp.ne.s32.totalorder %s25, %s41
    %p43 = scmp.eq.s32.totalorder %s17, 0
    %p44 = por %p42, %p43
    %s46 = sadd.s32 %s45, 1
    %p49 = scmp.eq.s32.totalorder %s11, 1
    %p50 = scmp.ne.s32.totalorder %s45, %s47
    %p51 = scmp.eq.s32.totalorder %s11, 0
    %p52 = por %p50, %p51
    %p53 = scmp.ne.s32.totalorder %s45, %s47
    %p54 = scmp.eq.s32.totalorder %s16, 1
    %p55 = por %p53, %p54
    %p56 = scmp.ne.s32.totalorder %s47, %s48
    %p57 = scmp.eq.s32.totalorder %s16, 0
    %p58 = por %p56, %p57
    %p59 = scmp.ne.s32.totalorder %s47, %s48
    %p60 = scmp.eq.s32.totalorder %s17, 1
    %p61 = por %p59, %p60
    %p63 = scmp.ne.s32.totalorder %s48, %s62
    %p64 = scmp.eq.s32.totalorder %s17, 0
    %p65 = por %p63, %p64
    %s67 = sadd.s32 %s66, 1
    %p70 = scmp.eq.s32.totalorder %s11, 1
    %p71 = scmp.ne.s32.totalorder %s66, %s68
    %p72 = scmp.eq.s32.totalorder %s11, 0
    %p73 = por %p71, %p72
    %p74 = scmp.ne.s32.totalorder %s66, %s68
    %p75 = scmp.eq.s32.totalorder %s16, 1
    %p76 = por %p74, %p75
    %p77 = scmp.ne.s32.totalorder %s68, %s69
    %p78 = scmp.eq.s32.totalorder %s16, 0
    %p79 = por %p77, %p78
    %p80 = scmp.ne.s32.totalorder %s68, %s69
    %p81 = scmp.eq.s32.totalorder %s17, 1
    %p82 = por %p80, %p81
    %p84 = scmp.ne.s32.totalorder %s69, %s83
    %p85 = scmp.eq.s32.totalorder %s17, 0
    %p86 = por %p84, %p85
    %s87 = ssub.s32 %s11, %s18
    %p88 = scmp.eq.s32.totalorder %s87, 0
    %s90 = sadd.s32 %s89, 1
    %s91 = scalar_select %p88, %s89, %s90
    %p94 = pneg %p88
    %p95 = scmp.eq.s32.totalorder %s11, 1
    %p96 = por %p94, %p95
    %p97 = scmp.ne.s32.totalorder %s89, %s92
    %p98 = scmp.eq.s32.totalorder %s11, 0
    %p99 = por %p97, %p98
    %p100 = scmp.ne.s32.totalorder %s89, %s92
    %p101 = scmp.eq.s32.totalorder %s16, 1
    %p102 = por %p100, %p101
    %p103 = scmp.ne.s32.totalorder %s92, %s93
    %p104 = scmp.eq.s32.totalorder %s16, 0
    %p105 = por %p103, %p104
    %p106 = scmp.ne.s32.totalorder %s92, %s93
    %p107 = scmp.eq.s32.totalorder %s17, 1
    %p108 = por %p106, %p107
    %p110 = scmp.ne.s32.totalorder %s93, %s109
    %p111 = scmp.eq.s32.totalorder %s17, 0
    %p112 = por %p110, %p111
    %s113 = ssub.s32 %s11, %s18
    %p114 = scmp.eq.s32.totalorder %s113, 0
    %s116 = sadd.s32 %s115, 1
    %s117 = scalar_select %p114, %s115, %s116
    %p120 = pneg %p114
    %p121 = scmp.eq.s32.totalorder %s11, 1
    %p122 = por %p120, %p121
    %p123 = scmp.ne.s32.totalorder %s115, %s118
    %p124 = scmp.eq.s32.totalorder %s11, 0
    %p125 = por %p123, %p124
    %p126 = scmp.ne.s32.totalorder %s115, %s118
    %p127 = scmp.eq.s32.totalorder %s16, 1
    %p128 = por %p126, %p127
    %p129 = scmp.ne.s32.totalorder %s118, %s119
    %p130 = scmp.eq.s32.totalorder %s16, 0
    %p131 = por %p129, %p130
    %p132 = scmp.ne.s32.totalorder %s118, %s119
    %p133 = scmp.eq.s32.totalorder %s17, 1
    %p134 = por %p132, %p133
    %p136 = scmp.ne.s32.totalorder %s119, %s135
    %p137 = scmp.eq.s32.totalorder %s17, 0
    %p138 = por %p136, %p137
    %p139 = scmp.le.s32.totalorder 1, %s11
    %p140 = scmp.lt.s32.totalorder %s11, 3
    %p141 = pnand %p139, %p140
    %p142 = pneg %p141
    // Predicated region
    $region9: #{_lambda_.8} parent=5 // pred_check
      _
    $region10: #{_lambda_.8} parent=5 // pred_check_branch
      %144 = sbr.rel (%p141) target = $region12
    $region11: #{_lambda_.8} parent=5 // pred_region
      %s145 = ssub.s32 %s11, 1
      // Predicated region
      $region13: #{_lambda_.8} parent=11 // pred_check
        %p146 = pneg %p58
      $region14: #{_lambda_.8} parent=11 // pred_check_branch
        %148 = sbr.rel (%p146) target = $region16
      $region15: #{_lambda_.8} parent=11 // pred_region
        _
      $region16: #{_lambda_.8} parent=11 // pred_fallthru
        _
      // Predicated region
      $region17: #{_lambda_.8} parent=11 // pred_check
        %p149 = pneg %p79
      $region18: #{_lambda_.8} parent=11 // pred_check_branch
        %151 = sbr.rel (%p149) target = $region20
      $region19: #{_lambda_.8} parent=11 // pred_region
        _
      $region20: #{_lambda_.8} parent=11 // pred_fallthru
        _
    $region12: #{_lambda_.8} parent=5 // pred_fallthru
      _
    %p152 = scmp.lt.s32.totalorder %s11, 2
    // Predicated region
    $region21: #{_lambda_.8} parent=5 // pred_check
      %p153 = pneg %p152
    $region22: #{_lambda_.8} parent=5 // pred_check_branch
      %155 = sbr.rel (%p153) target = $region24
    $region23: #{_lambda_.8} parent=5 // pred_region
      // Predicated region
      $region25: #{_lambda_.8} parent=23 // pred_check
        %p156 = pneg %p31
      $region26: #{_lambda_.8} parent=23 // pred_check_branch
        %158 = sbr.rel (%p156) target = $region28
      $region27: #{_lambda_.8} parent=23 // pred_region
        %p159 = scmp.lt.s32.totalorder %s11, 1
        %s160 = scalar_select %p159, %s11, 1
        %s161 = smul.addr %s160, 8
        %s162 = smul.addr %s161, 4
        %s163 = scalar_lea.vmem %s0, %s162
      $region28: #{_lambda_.8} parent=23 // pred_fallthru
        _
    $region24: #{_lambda_.8} parent=5 // pred_fallthru
      _
    %p164 = scmp.le.s32.totalorder 1, %s11
    %p165 = scmp.lt.s32.totalorder %s11, 3
    %p166 = pnand %p164, %p165
    %p167 = pneg %p166
    // Predicated region
    $region29: #{_lambda_.8} parent=5 // pred_check
      _
    $region30: #{_lambda_.8} parent=5 // pred_check_branch
      %169 = sbr.rel (%p166) target = $region32
    $region31: #{_lambda_.8} parent=5 // pred_region
      %s170 = ssub.s32 %s11, 1
      %p171 = scmp.lt.s32.totalorder %s16, 1
      %s172 = scalar_select %p171, %s16, 1
      %s173 = smul.addr %s172, 8
      %s174 = smul.addr %s173, 4
      %s175 = scalar_lea.vmem %s0, %s174
      %p176 = pneg %p37
      %p177 = pneg %p34
      %p178 = pneg %p58
      %p179 = pneg %p55
      %p180 = pneg %p79
      %p181 = pneg %p76
      %p182 = pneg %p105
      %p183 = pneg %p102
      %p184 = scmp.lt.s32.totalorder %s16, 1
      %s185 = scalar_select %p184, %s16, 1
      %s186 = smul.addr %s185, 8
      %s187 = smul.addr %s186, 4
      %s188 = scalar_lea.vmem %s3, %s187
      %p189 = pneg %p131
      %p190 = pneg %p128
      %p191 = scmp.lt.s32.totalorder %s16, 1
      %s192 = scalar_select %p191, %s16, 1
      %s193 = smul.addr %s192, 2
      %s194 = scalar_lea.vmem %s4, %s193
      %p195 = scmp.lt.s32.totalorder %s16, 1
      %s196 = scalar_select %p195, %s16, 1
      %s197 = smul.addr %s196, 8
      %s198 = smul.addr %s197, 4
      %s199 = scalar_lea.vmem %s0, %s198
      %p200 = scmp.lt.s32.totalorder %s16, 1
      %s201 = scalar_select %p200, %s16, 1
      %s202 = smul.addr %s201, 8
      %s203 = smul.addr %s202, 4
      %s204 = scalar_lea.vmem %s3, %s203
      %p205 = scmp.lt.s32.totalorder %s16, 1
      %s206 = scalar_select %p205, %s16, 1
      %s207 = smul.addr %s206, 2
      %s208 = scalar_lea.vmem %s4, %s207
      %vm210 = vcmask 60416
      %211 = vst.msk [vmem:[#allocation2] sm:$0xf] %vm210, 0
      %vm212 = vcmask 57344
      %213 = vst.msk [vmem:[#allocation2 + $0x4] sm:$0x1] %vm212, 0
      %214 = vst.msk [vmem:[#allocation2 + $0x8] sm:$0xf] %vm210, 0
      %215 = vst.msk [vmem:[#allocation2 + $0xc] sm:$0x1] %vm212, 0
      %216 = vst.msk [vmem:[#allocation2 + $0x10] sm:$0xf] %vm210, 0
      %217 = vst.msk [vmem:[#allocation2 + $0x14] sm:$0x1] %vm212, 0
      %218 = vst.msk [vmem:[#allocation2 + $0x18] sm:$0xf] %vm210, 0
      %219 = vst.msk [vmem:[#allocation2 + $0x1c] sm:$0x1] %vm212, 0
      %220 = vst.msk [vmem:[#allocation2 + $0x20] sm:$0xf] %vm210, 0
      %221 = vst.msk [vmem:[#allocation2 + $0x24] sm:$0x1] %vm212, 0
      %222 = vst.msk [vmem:[#allocation2 + $0x28] sm:$0xf] %vm210, 0
      %223 = vst.msk [vmem:[#allocation2 + $0x2c] sm:$0x1] %vm212, 0
      %224 = vst.msk [vmem:[#allocation2 + $0x30] sm:$0xf] %vm210, 0
      %225 = vst.msk [vmem:[#allocation2 + $0x34] sm:$0x1] %vm212, 0
      %226 = vst.msk [vmem:[#allocation2 + $0x38] sm:$0xf] %vm210, 0
      %227 = vst.msk [vmem:[#allocation2 + $0x3c] sm:$0x1] %vm212, 0
      %228 = vst.msk [vmem:[#allocation2 + $0x40] sm:$0xf] %vm210, 0
      %229 = vst.msk [vmem:[#allocation2 + $0x44] sm:$0x1] %vm212, 0
      %230 = vst.msk [vmem:[#allocation2 + $0x48] sm:$0xf] %vm210, 0
      %231 = vst.msk [vmem:[#allocation2 + $0x4c] sm:$0x1] %vm212, 0
      %v232 = vld [vmem:[%s1] sm:$0x1]
      %v233 = vld [vmem:[%s1 + $0x1] sm:$0x1]
      %v234 = vld [vmem:[%s199] sm:$0xf]
      %v235 = vld [vmem:[%s199 + $0x4] sm:$0xf]
      %v236 = vld [vmem:[%s199 + $0x8] sm:$0xf]
      %v237 = vld [vmem:[%s199 + $0xc] sm:$0xf]
      %v238 = vld [vmem:[%s199 + $0x10] sm:$0xf]
      %v239 = vld [vmem:[%s199 + $0x14] sm:$0xf]
      %v240 = vld [vmem:[%s199 + $0x18] sm:$0xf]
      %v241 = vld [vmem:[%s199 + $0x1c] sm:$0xf]
      %v242 = vunpack.c.l.bf16 %v234
      %v243 = vunpack.c.l.bf16 %v235
      %v244 = vunpack.c.l.bf16 %v236
      %v245 = vunpack.c.l.bf16 %v237
      %v246 = vunpack.c.l.bf16 %v238
      %v247 = vunpack.c.l.bf16 %v239
      %v248 = vunpack.c.l.bf16 %v240
      %v249 = vunpack.c.l.bf16 %v241
      %v250 = vperm.slane %v232, 0
      %v251 = vmul.f32 %v242, %v250
      %v252 = vmul.f32 %v243, %v250
      %v253 = vmul.f32 %v244, %v250
      %v254 = vmul.f32 %v245, %v250
      %v255 = vmul.f32 %v246, %v250
      %v256 = vmul.f32 %v247, %v250
      %v257 = vmul.f32 %v248, %v250
      %v258 = vmul.f32 %v249, %v250
      %v259 = vperm.slane %v233, 0
      %v260 = vadd.f32 %v251, %v259
      %v261 = vadd.f32 %v252, %v259
      %v262 = vadd.f32 %v253, %v259
      %v263 = vadd.f32 %v254, %v259
      %v264 = vadd.f32 %v255, %v259
      %v265 = vadd.f32 %v256, %v259
      %v266 = vadd.f32 %v257, %v259
      %v267 = vadd.f32 %v258, %v259
      %v268 = vmax.f32 %v260, 0.0
      %v269 = vmax.f32 %v261, 0.0
      %v270 = vmax.f32 %v262, 0.0
      %v271 = vmax.f32 %v263, 0.0
      %v272 = vmax.f32 %v264, 0.0
      %v273 = vmax.f32 %v265, 0.0
      %v274 = vmax.f32 %v266, 0.0
      %v275 = vmax.f32 %v267, 0.0
      %v276 = vpack.c.bf16 %v268, %v268
      %v277 = vpack.c.bf16 %v269, %v269
      %v278 = vpack.c.bf16 %v270, %v270
      %v279 = vpack.c.bf16 %v271, %v271
      %v280 = vpack.c.bf16 %v272, %v272
      %v281 = vpack.c.bf16 %v273, %v273
      %v282 = vpack.c.bf16 %v274, %v274
      %v283 = vpack.c.bf16 %v275, %v275
      %v285 = vshrl.u32 %v276, 16
      %v287 = vrot.slane %v285, 7
      %v288 = vshll.u32 %v276, 16
      %v290 = vor.u32 %v287, %v288
      %v291 = vrot.slane %v287, 4
      %v293 = vshrl.u32 %v277, 16
      %v295 = vrot.slane %v293, 7
      %v296 = vshll.u32 %v277, 16
      %v298 = vor.u32 %v295, %v296
      %v299 = vrot.slane %v295, 4
      %v301 = vshrl.u32 %v278, 16
      %v303 = vrot.slane %v301, 7
      %v304 = vshll.u32 %v278, 16
      %v306 = vor.u32 %v303, %v304
      %v307 = vrot.slane %v303, 4
      %v309 = vshrl.u32 %v279, 16
      %v311 = vrot.slane %v309, 7
      %v312 = vshll.u32 %v279, 16
      %v314 = vor.u32 %v311, %v312
      %v315 = vrot.slane %v311, 4
      %v317 = vshrl.u32 %v280, 16
      %v319 = vrot.slane %v317, 7
      %v320 = vshll.u32 %v280, 16
      %v322 = vor.u32 %v319, %v320
      %v323 = vrot.slane %v319, 4
      %v325 = vshrl.u32 %v281, 16
      %v327 = vrot.slane %v325, 7
      %v328 = vshll.u32 %v281, 16
      %v330 = vor.u32 %v327, %v328
      %v331 = vrot.slane %v327, 4
      %v333 = vshrl.u32 %v282, 16
      %v335 = vrot.slane %v333, 7
      %v336 = vshll.u32 %v282, 16
      %v338 = vor.u32 %v335, %v336
      %v339 = vrot.slane %v335, 4
      %v341 = vshrl.u32 %v283, 16
      %v343 = vrot.slane %v341, 7
      %v344 = vshll.u32 %v283, 16
      %v346 = vor.u32 %v343, %v344
      %v347 = vrot.slane %v343, 4
      %s364 = scalar_lea.vmem [#allocation2], 8
      %vm365 = vcmask 60416
      %vm366 = vsmask.f32 7938
      %vm367 = vmand %vm365, %vm366
      %v368 = vld [vmem:[%s364] sm:$0xf]
      %v369 = vsel %vm367, %v290, %v368
      %370 = vst [vmem:[%s364] sm:$0xf] %v369
      %vm371 = vcmask 57344
      %vm372 = vsmask.f32 256
      %vm373 = vmand %vm371, %vm372
      %v374 = vld [vmem:[%s364 + $0x4] sm:$0x1]
      %v375 = vsel %vm373, %v291, %v374
      %376 = vst [vmem:[%s364 + $0x4] sm:$0x1] %v375
      %v377 = vld [vmem:[%s364 + $0x8] sm:$0xf]
      %v378 = vsel %vm367, %v298, %v377
      %379 = vst [vmem:[%s364 + $0x8] sm:$0xf] %v378
      %v380 = vld [vmem:[%s364 + $0xc] sm:$0x1]
      %v381 = vsel %vm373, %v299, %v380
      %382 = vst [vmem:[%s364 + $0xc] sm:$0x1] %v381
      %v383 = vld [vmem:[%s364 + $0x10] sm:$0xf]
      %v384 = vsel %vm367, %v306, %v383
      %385 = vst [vmem:[%s364 + $0x10] sm:$0xf] %v384
      %v386 = vld [vmem:[%s364 + $0x14] sm:$0x1]
      %v387 = vsel %vm373, %v307, %v386
      %388 = vst [vmem:[%s364 + $0x14] sm:$0x1] %v387
      %v389 = vld [vmem:[%s364 + $0x18] sm:$0xf]
      %v390 = vsel %vm367, %v314, %v389
      %391 = vst [vmem:[%s364 + $0x18] sm:$0xf] %v390
      %v392 = vld [vmem:[%s364 + $0x1c] sm:$0x1]
      %v393 = vsel %vm373, %v315, %v392
      %394 = vst [vmem:[%s364 + $0x1c] sm:$0x1] %v393
      %v395 = vld [vmem:[%s364 + $0x20] sm:$0xf]
      %v396 = vsel %vm367, %v322, %v395
      %397 = vst [vmem:[%s364 + $0x20] sm:$0xf] %v396
      %v398 = vld [vmem:[%s364 + $0x24] sm:$0x1]
      %v399 = vsel %vm373, %v323, %v398
      %400 = vst [vmem:[%s364 + $0x24] sm:$0x1] %v399
      %v401 = vld [vmem:[%s364 + $0x28] sm:$0xf]
      %v402 = vsel %vm367, %v330, %v401
      %403 = vst [vmem:[%s364 + $0x28] sm:$0xf] %v402
      %v404 = vld [vmem:[%s364 + $0x2c] sm:$0x1]
      %v405 = vsel %vm373, %v331, %v404
      %406 = vst [vmem:[%s364 + $0x2c] sm:$0x1] %v405
      %v407 = vld [vmem:[%s364 + $0x30] sm:$0xf]
      %v408 = vsel %vm367, %v338, %v407
      %409 = vst [vmem:[%s364 + $0x30] sm:$0xf] %v408
      %v410 = vld [vmem:[%s364 + $0x34] sm:$0x1]
      %v411 = vsel %vm373, %v339, %v410
      %412 = vst [vmem:[%s364 + $0x34] sm:$0x1] %v411
      %v413 = vld [vmem:[%s364 + $0x38] sm:$0xf]
      %v414 = vsel %vm367, %v346, %v413
      %415 = vst [vmem:[%s364 + $0x38] sm:$0xf] %v414
      %v416 = vld [vmem:[%s364 + $0x3c] sm:$0x1]
      %v417 = vsel %vm373, %v347, %v416
      %418 = vst [vmem:[%s364 + $0x3c] sm:$0x1] %v417
      %v419 = vld [vmem:[#allocation2] sm:$0xf]
      %v420 = vld [vmem:[#allocation2 + $0x8] sm:$0xf]
      %v421 = vld [vmem:[#allocation2 + $0x10] sm:$0xf]
      %v422 = vld [vmem:[#allocation2 + $0x18] sm:$0xf]
      %v423 = vld [vmem:[#allocation2 + $0x20] sm:$0xf]
      %v424 = vld [vmem:[#allocation2 + $0x28] sm:$0xf]
      %v425 = vld [vmem:[#allocation2 + $0x30] sm:$0xf]
      %v426 = vld [vmem:[#allocation2 + $0x38] sm:$0xf]
      %v427 = vld [vmem:[%s2] sm:$0xf]
      %v428 = vld [vmem:[#allocation2 + $0x4] sm:$0x1]
      %v429 = vld [vmem:[#allocation2 + $0xc] sm:$0x1]
      %v430 = vld [vmem:[#allocation2 + $0x14] sm:$0x1]
      %v431 = vld [vmem:[#allocation2 + $0x1c] sm:$0x1]
      %v432 = vld [vmem:[#allocation2 + $0x24] sm:$0x1]
      %v433 = vld [vmem:[#allocation2 + $0x2c] sm:$0x1]
      %v434 = vld [vmem:[#allocation2 + $0x34] sm:$0x1]
      %v435 = vld [vmem:[#allocation2 + $0x3c] sm:$0x1]
      %vm436 = vsmask.f32 3328
      %vm437 = vsmask.f32 7440
      %vm438 = vmor %vm436, %vm437
      %v440 = vshrl.u32 %v419, 16
      %v442 = vrot.slane %v440, 4
      %v443 = vshll.u32 %v419, 16
      %v445 = vrot.slane %v443, 5
      %v446 = vor.u32 %v442, %v445
      %v447 = vrot.slane %v446, 4
      %v449 = vshll.u32 %v428, 16
      %v451 = vrot.slane %v449, 5
      %v452 = vsel %vm438, %v447, %v451
      %v454 = vshrl.u32 %v420, 16
      %v456 = vrot.slane %v454, 4
      %v457 = vshll.u32 %v420, 16
      %v459 = vrot.slane %v457, 5
      %v460 = vor.u32 %v456, %v459
      %v461 = vrot.slane %v460, 4
      %v463 = vshll.u32 %v429, 16
      %v465 = vrot.slane %v463, 5
      %v466 = vsel %vm438, %v461, %v465
      %v468 = vshrl.u32 %v421, 16
      %v470 = vrot.slane %v468, 4
      %v471 = vshll.u32 %v421, 16
      %v473 = vrot.slane %v471, 5
      %v474 = vor.u32 %v470, %v473
      %v475 = vrot.slane %v474, 4
      %v477 = vshll.u32 %v430, 16
      %v479 = vrot.slane %v477, 5
      %v480 = vsel %vm438, %v475, %v479
      %v482 = vshrl.u32 %v422, 16
      %v484 = vrot.slane %v482, 4
      %v485 = vshll.u32 %v422, 16
      %v487 = vrot.slane %v485, 5
      %v488 = vor.u32 %v484, %v487
      %v489 = vrot.slane %v488, 4
      %v491 = vshll.u32 %v431, 16
      %v493 = vrot.slane %v491, 5
      %v494 = vsel %vm438, %v489, %v493
      %v496 = vshrl.u32 %v423, 16
      %v498 = vrot.slane %v496, 4
      %v499 = vshll.u32 %v423, 16
      %v501 = vrot.slane %v499, 5
      %v502 = vor.u32 %v498, %v501
      %v503 = vrot.slane %v502, 4
      %v505 = vshll.u32 %v432, 16
      %v507 = vrot.slane %v505, 5
      %v508 = vsel %vm438, %v503, %v507
      %v510 = vshrl.u32 %v424, 16
      %v512 = vrot.slane %v510, 4
      %v513 = vshll.u32 %v424, 16
      %v515 = vrot.slane %v513, 5
      %v516 = vor.u32 %v512, %v515
      %v517 = vrot.slane %v516, 4
      %v519 = vshll.u32 %v433, 16
      %v521 = vrot.slane %v519, 5
      %v522 = vsel %vm438, %v517, %v521
      %v524 = vshrl.u32 %v425, 16
      %v526 = vrot.slane %v524, 4
      %v527 = vshll.u32 %v425, 16
      %v529 = vrot.slane %v527, 5
      %v530 = vor.u32 %v526, %v529
      %v531 = vrot.slane %v530, 4
      %v533 = vshll.u32 %v434, 16
      %v535 = vrot.slane %v533, 5
      %v536 = vsel %vm438, %v531, %v535
      %v538 = vshrl.u32 %v426, 16
      %v540 = vrot.slane %v538, 4
      %v541 = vshll.u32 %v426, 16
      %v543 = vrot.slane %v541, 5
      %v544 = vor.u32 %v540, %v543
      %v545 = vrot.slane %v544, 4
      %v547 = vshll.u32 %v435, 16
      %v549 = vrot.slane %v547, 5
      %v550 = vsel %vm438, %v545, %v549
      %s551 = scalar_lea.vmem %s2, 4
      %v552 = vld [vmem:[%s551] sm:$0xf]
      %v553 = vunpack.c.l.b16 %v452
      %v554 = vunpack.c.l.b16 %v466
      %v555 = vunpack.c.l.b16 %v480
      %v556 = vunpack.c.l.b16 %v494
      %v557 = vunpack.c.l.b16 %v508
      %v558 = vunpack.c.l.b16 %v522
      %v559 = vunpack.c.l.b16 %v536
      %v560 = vunpack.c.l.b16 %v550
      %v561 = vpack.c.b16 %v554, %v553
      %v562 = vpack.c.b16 %v556, %v555
      %v563 = vpack.c.b16 %v558, %v557
      %v564 = vpack.c.b16 %v560, %v559
      %vm565 = vcmask 64512
      %v567 = vsel %vm565, %v561, 0
      %v570 = vsel %vm565, %v562, 0
      %v573 = vsel %vm565, %v563, 0
      %v576 = vsel %vm565, %v564, 0
      %vm578 = vcmask 1043456
      %v580 = vsel %vm578, %v552, 0
      %582 = vmatpush.bf16.msra.mxu0 0
      %583 = vmatpush.bf16.msra.mxu0 0
      %584 = vmatpush.bf16.msra.mxu0 0
      %585 = vmatpush.bf16.msra.mxu0 0
      %586 = vmatpush.bf16.msra.mxu0 0
      %587 = vmatpush.bf16.msra.mxu0 0
      %588 = vmatpush.bf16.msra.mxu0 0
      %589 = vmatpush.bf16.msra.mxu0 %v580
      %590 = vmatmul.bf16.gmra.mxu0 %v567
      %v591 = vpop.f32.mrf.mxu0
      %v592 = vadd.f32 0.0, %v591
      %v593 = vpop.f32.mrf.mxu0
      %v594 = vadd.f32 0.0, %v593
      %595 = vmatmul.bf16.gmra.mxu0 %v570
      %v596 = vpop.f32.mrf.mxu0
      %v597 = vadd.f32 0.0, %v596
      %v598 = vpop.f32.mrf.mxu0
      %v599 = vadd.f32 0.0, %v598
      %600 = vmatmul.bf16.gmra.mxu0 %v573
      %v601 = vpop.f32.mrf.mxu0
      %v602 = vadd.f32 0.0, %v601
      %v603 = vpop.f32.mrf.mxu0
      %v604 = vadd.f32 0.0, %v603
      %605 = vmatmul.bf16.gmra.mxu0 %v576
      %v606 = vpop.f32.mrf.mxu0
      %v607 = vadd.f32 0.0, %v606
      %v608 = vpop.f32.mrf.mxu0
      %v609 = vadd.f32 0.0, %v608
      %610 = vdwg.mxu0
      %v619 = vunpack.c.l.b16 %v419
      %v620 = vunpack.c.l.b16 %v420
      %v621 = vunpack.c.l.b16 %v421
      %v622 = vunpack.c.l.b16 %v422
      %v623 = vunpack.c.l.b16 %v423
      %v624 = vunpack.c.l.b16 %v424
      %v625 = vunpack.c.l.b16 %v425
      %v626 = vunpack.c.l.b16 %v426
      %v627 = vpack.c.b16 %v620, %v619
      %v628 = vpack.c.b16 %v622, %v621
      %v629 = vpack.c.b16 %v624, %v623
      %v630 = vpack.c.b16 %v626, %v625
      %v632 = vsel %vm565, %v627, 0
      %v635 = vsel %vm565, %v628, 0
      %v638 = vsel %vm565, %v629, 0
      %v641 = vsel %vm565, %v630, 0
      %v644 = vsel %vm578, %v427, 0
      %646 = vmatpush.bf16.msra.mxu0 0
      %647 = vmatpush.bf16.msra.mxu0 0
      %648 = vmatpush.bf16.msra.mxu0 0
      %649 = vmatpush.bf16.msra.mxu0 0
      %650 = vmatpush.bf16.msra.mxu0 0
      %651 = vmatpush.bf16.msra.mxu0 0
      %652 = vmatpush.bf16.msra.mxu0 0
      %653 = vmatpush.bf16.msra.mxu0 %v644
      %654 = vmatmul.bf16.gmra.mxu0 %v632
      %v655 = vpop.f32.mrf.mxu0
      %v656 = vadd.f32 %v592, %v655
      %v657 = vpop.f32.mrf.mxu0
      %v658 = vadd.f32 %v594, %v657
      %659 = vmatmul.bf16.gmra.mxu0 %v635
      %v660 = vpop.f32.mrf.mxu0
      %v661 = vadd.f32 %v597, %v660
      %v662 = vpop.f32.mrf.mxu0
      %v663 = vadd.f32 %v599, %v662
      %664 = vmatmul.bf16.gmra.mxu0 %v638
      %v665 = vpop.f32.mrf.mxu0
      %v666 = vadd.f32 %v602, %v665
      %v667 = vpop.f32.mrf.mxu0
      %v668 = vadd.f32 %v604, %v667
      %669 = vmatmul.bf16.gmra.mxu0 %v641
      %v670 = vpop.f32.mrf.mxu0
      %v671 = vadd.f32 %v607, %v670
      %v672 = vpop.f32.mrf.mxu0
      %v673 = vadd.f32 %v609, %v672
      %674 = vdwg.mxu0
      %v675 = vld [vmem:[#allocation2] sm:$0xe]
      %v676 = vld [vmem:[#allocation2 + $0x8] sm:$0xe]
      %v677 = vld [vmem:[#allocation2 + $0x10] sm:$0xe]
      %v678 = vld [vmem:[#allocation2 + $0x18] sm:$0xe]
      %v679 = vld [vmem:[#allocation2 + $0x20] sm:$0xe]
      %v680 = vld [vmem:[#allocation2 + $0x28] sm:$0xe]
      %v681 = vld [vmem:[#allocation2 + $0x30] sm:$0xe]
      %v682 = vld [vmem:[#allocation2 + $0x38] sm:$0xe]
      %vm699 = vcmask 1042432
      %vm700 = vcmask 1046532
      %vm701 = vmor %vm699, %vm700
      %v702 = vrot.slane %v675, 5
      %v703 = vrot.slane %v702, 4
      %v704 = vrot.slane %v428, 5
      %v705 = vsel %vm701, %v703, %v704
      %v706 = vrot.slane %v676, 5
      %v707 = vrot.slane %v706, 4
      %v708 = vrot.slane %v429, 5
      %v709 = vsel %vm701, %v707, %v708
      %v710 = vrot.slane %v677, 5
      %v711 = vrot.slane %v710, 4
      %v712 = vrot.slane %v430, 5
      %v713 = vsel %vm701, %v711, %v712
      %v714 = vrot.slane %v678, 5
      %v715 = vrot.slane %v714, 4
      %v716 = vrot.slane %v431, 5
      %v717 = vsel %vm701, %v715, %v716
      %v718 = vrot.slane %v679, 5
      %v719 = vrot.slane %v718, 4
      %v720 = vrot.slane %v432, 5
      %v721 = vsel %vm701, %v719, %v720
      %v722 = vrot.slane %v680, 5
      %v723 = vrot.slane %v722, 4
      %v724 = vrot.slane %v433, 5
      %v725 = vsel %vm701, %v723, %v724
      %v726 = vrot.slane %v681, 5
      %v727 = vrot.slane %v726, 4
      %v728 = vrot.slane %v434, 5
      %v729 = vsel %vm701, %v727, %v728
      %v730 = vrot.slane %v682, 5
      %v731 = vrot.slane %v730, 4
      %v732 = vrot.slane %v435, 5
      %v733 = vsel %vm701, %v731, %v732
      %s734 = scalar_lea.vmem %s2, 8
      %v735 = vld [vmem:[%s734] sm:$0xf]
      %v736 = vunpack.c.l.b16 %v705
      %v737 = vunpack.c.l.b16 %v709
      %v738 = vunpack.c.l.b16 %v713
      %v739 = vunpack.c.l.b16 %v717
      %v740 = vunpack.c.l.b16 %v721
      %v741 = vunpack.c.l.b16 %v725
      %v742 = vunpack.c.l.b16 %v729
      %v743 = vunpack.c.l.b16 %v733
      %v744 = vpack.c.b16 %v737, %v736
      %v745 = vpack.c.b16 %v739, %v738
      %v746 = vpack.c.b16 %v741, %v740
      %v747 = vpack.c.b16 %v743, %v742
      %v749 = vsel %vm565, %v744, 0
      %v752 = vsel %vm565, %v745, 0
      %v755 = vsel %vm565, %v746, 0
      %v758 = vsel %vm565, %v747, 0
      %v761 = vsel %vm578, %v735, 0
      %763 = vmatpush.bf16.msra.mxu0 0
      %764 = vmatpush.bf16.msra.mxu0 0
      %765 = vmatpush.bf16.msra.mxu0 0
      %766 = vmatpush.bf16.msra.mxu0 0
      %767 = vmatpush.bf16.msra.mxu0 0
      %768 = vmatpush.bf16.msra.mxu0 0
      %769 = vmatpush.bf16.msra.mxu0 0
      %770 = vmatpush.bf16.msra.mxu0 %v761
      %771 = vmatmul.bf16.gmra.mxu0 %v749
      %v772 = vpop.f32.mrf.mxu0
      %v773 = vadd.f32 0.0, %v772
      %v774 = vpop.f32.mrf.mxu0
      %v775 = vadd.f32 0.0, %v774
      %776 = vmatmul.bf16.gmra.mxu0 %v752
      %v777 = vpop.f32.mrf.mxu0
      %v778 = vadd.f32 0.0, %v777
      %v779 = vpop.f32.mrf.mxu0
      %v780 = vadd.f32 0.0, %v779
      %781 = vmatmul.bf16.gmra.mxu0 %v755
      %v782 = vpop.f32.mrf.mxu0
      %v783 = vadd.f32 0.0, %v782
      %v784 = vpop.f32.mrf.mxu0
      %v785 = vadd.f32 0.0, %v784
      %786 = vmatmul.bf16.gmra.mxu0 %v758
      %v787 = vpop.f32.mrf.mxu0
      %v788 = vadd.f32 0.0, %v787
      %v789 = vpop.f32.mrf.mxu0
      %v790 = vadd.f32 0.0, %v789
      %791 = vdwg.mxu0
      %v792 = vadd.f32 %v656, %v773
      %v793 = vadd.f32 %v658, %v775
      %v794 = vadd.f32 %v661, %v778
      %v795 = vadd.f32 %v663, %v780
      %v796 = vadd.f32 %v666, %v783
      %v797 = vadd.f32 %v668, %v785
      %v798 = vadd.f32 %v671, %v788
      %v799 = vadd.f32 %v673, %v790
      %v800 = vld [vmem:[%s364] sm:$0xf]
      %v801 = vld [vmem:[%s364 + $0x8] sm:$0xf]
      %v802 = vld [vmem:[%s364 + $0x10] sm:$0xf]
      %v803 = vld [vmem:[%s364 + $0x18] sm:$0xf]
      %v804 = vld [vmem:[%s364 + $0x20] sm:$0xf]
      %v805 = vld [vmem:[%s364 + $0x28] sm:$0xf]
      %v806 = vld [vmem:[%s364 + $0x30] sm:$0xf]
      %v807 = vld [vmem:[%s364 + $0x38] sm:$0xf]
      %s808 = scalar_lea.vmem %s2, 12
      %v809 = vld [vmem:[%s808] sm:$0xf]
      %v818 = vunpack.c.l.b16 %v800
      %v819 = vunpack.c.l.b16 %v801
      %v820 = vunpack.c.l.b16 %v802
      %v821 = vunpack.c.l.b16 %v803
      %v822 = vunpack.c.l.b16 %v804
      %v823 = vunpack.c.l.b16 %v805
      %v824 = vunpack.c.l.b16 %v806
      %v825 = vunpack.c.l.b16 %v807
      %v826 = vpack.c.b16 %v819, %v818
      %v827 = vpack.c.b16 %v821, %v820
      %v828 = vpack.c.b16 %v823, %v822
      %v829 = vpack.c.b16 %v825, %v824
      %v831 = vsel %vm565, %v826, 0
      %v834 = vsel %vm565, %v827, 0
      %v837 = vsel %vm565, %v828, 0
      %v840 = vsel %vm565, %v829, 0
      %v843 = vsel %vm578, %v809, 0
      %845 = vmatpush.bf16.msra.mxu0 0
      %846 = vmatpush.bf16.msra.mxu0 0
      %847 = vmatpush.bf16.msra.mxu0 0
      %848 = vmatpush.bf16.msra.mxu0 0
      %849 = vmatpush.bf16.msra.mxu0 0
      %850 = vmatpush.bf16.msra.mxu0 0
      %851 = vmatpush.bf16.msra.mxu0 0
      %852 = vmatpush.bf16.msra.mxu0 %v843
      %853 = vmatmul.bf16.gmra.mxu0 %v831
      %v854 = vpop.f32.mrf.mxu0
      %v855 = vadd.f32 0.0, %v854
      %v856 = vpop.f32.mrf.mxu0
      %v857 = vadd.f32 0.0, %v856
      %858 = vmatmul.bf16.gmra.mxu0 %v834
      %v859 = vpop.f32.mrf.mxu0
      %v860 = vadd.f32 0.0, %v859
      %v861 = vpop.f32.mrf.mxu0
      %v862 = vadd.f32 0.0, %v861
      %863 = vmatmul.bf16.gmra.mxu0 %v837
      %v864 = vpop.f32.mrf.mxu0
      %v865 = vadd.f32 0.0, %v864
      %v866 = vpop.f32.mrf.mxu0
      %v867 = vadd.f32 0.0, %v866
      %868 = vmatmul.bf16.gmra.mxu0 %v840
      %v869 = vpop.f32.mrf.mxu0
      %v870 = vadd.f32 0.0, %v869
      %v871 = vpop.f32.mrf.mxu0
      %v872 = vadd.f32 0.0, %v871
      %873 = vdwg.mxu0
      %v874 = vadd.f32 %v792, %v855
      %v875 = vadd.f32 %v793, %v857
      %v876 = vadd.f32 %v794, %v860
      %v877 = vadd.f32 %v795, %v862
      %v878 = vadd.f32 %v796, %v865
      %v879 = vadd.f32 %v797, %v867
      %v880 = vadd.f32 %v798, %v870
      %v881 = vadd.f32 %v799, %v872
      %v882 = vld [vmem:[%s364] sm:$0xf]
      %v883 = vld [vmem:[%s364 + $0x4] sm:$0x1]
      %v884 = vld [vmem:[%s364 + $0x8] sm:$0xf]
      %v885 = vld [vmem:[%s364 + $0xc] sm:$0x1]
      %v886 = vld [vmem:[%s364 + $0x10] sm:$0xf]
      %v887 = vld [vmem:[%s364 + $0x14] sm:$0x1]
      %v888 = vld [vmem:[%s364 + $0x18] sm:$0xf]
      %v889 = vld [vmem:[%s364 + $0x1c] sm:$0x1]
      %v890 = vld [vmem:[%s364 + $0x20] sm:$0xf]
      %v891 = vld [vmem:[%s364 + $0x24] sm:$0x1]
      %v892 = vld [vmem:[%s364 + $0x28] sm:$0xf]
      %v893 = vld [vmem:[%s364 + $0x2c] sm:$0x1]
      %v894 = vld [vmem:[%s364 + $0x30] sm:$0xf]
      %v895 = vld [vmem:[%s364 + $0x34] sm:$0x1]
      %v896 = vld [vmem:[%s364 + $0x38] sm:$0xf]
      %v897 = vld [vmem:[%s364 + $0x3c] sm:$0x1]
      %v899 = vshrl.u32 %v882, 16
      %v901 = vrot.slane %v899, 4
      %v902 = vshll.u32 %v882, 16
      %v904 = vrot.slane %v902, 5
      %v905 = vor.u32 %v901, %v904
      %v906 = vrot.slane %v905, 4
      %v908 = vshll.u32 %v883, 16
      %v910 = vrot.slane %v908, 5
      %v911 = vsel %vm438, %v906, %v910
      %v913 = vshrl.u32 %v884, 16
      %v915 = vrot.slane %v913, 4
      %v916 = vshll.u32 %v884, 16
      %v918 = vrot.slane %v916, 5
      %v919 = vor.u32 %v915, %v918
      %v920 = vrot.slane %v919, 4
      %v922 = vshll.u32 %v885, 16
      %v924 = vrot.slane %v922, 5
      %v925 = vsel %vm438, %v920, %v924
      %v927 = vshrl.u32 %v886, 16
      %v929 = vrot.slane %v927, 4
      %v930 = vshll.u32 %v886, 16
      %v932 = vrot.slane %v930, 5
      %v933 = vor.u32 %v929, %v932
      %v934 = vrot.slane %v933, 4
      %v936 = vshll.u32 %v887, 16
      %v938 = vrot.slane %v936, 5
      %v939 = vsel %vm438, %v934, %v938
      %v941 = vshrl.u32 %v888, 16
      %v943 = vrot.slane %v941, 4
      %v944 = vshll.u32 %v888, 16
      %v946 = vrot.slane %v944, 5
      %v947 = vor.u32 %v943, %v946
      %v948 = vrot.slane %v947, 4
      %v950 = vshll.u32 %v889, 16
      %v952 = vrot.slane %v950, 5
      %v953 = vsel %vm438, %v948, %v952
      %v955 = vshrl.u32 %v890, 16
      %v957 = vrot.slane %v955, 4
      %v958 = vshll.u32 %v890, 16
      %v960 = vrot.slane %v958, 5
      %v961 = vor.u32 %v957, %v960
      %v962 = vrot.slane %v961, 4
      %v964 = vshll.u32 %v891, 16
      %v966 = vrot.slane %v964, 5
      %v967 = vsel %vm438, %v962, %v966
      %v969 = vshrl.u32 %v892, 16
      %v971 = vrot.slane %v969, 4
      %v972 = vshll.u32 %v892, 16
      %v974 = vrot.slane %v972, 5
      %v975 = vor.u32 %v971, %v974
      %v976 = vrot.slane %v975, 4
      %v978 = vshll.u32 %v893, 16
      %v980 = vrot.slane %v978, 5
      %v981 = vsel %vm438, %v976, %v980
      %v983 = vshrl.u32 %v894, 16
      %v985 = vrot.slane %v983, 4
      %v986 = vshll.u32 %v894, 16
      %v988 = vrot.slane %v986, 5
      %v989 = vor.u32 %v985, %v988
      %v990 = vrot.slane %v989, 4
      %v992 = vshll.u32 %v895, 16
      %v994 = vrot.slane %v992, 5
      %v995 = vsel %vm438, %v990, %v994
      %v997 = vshrl.u32 %v896, 16
      %v999 = vrot.slane %v997, 4
      %v1000 = vshll.u32 %v896, 16
      %v1002 = vrot.slane %v1000, 5
      %v1003 = vor.u32 %v999, %v1002
      %v1004 = vrot.slane %v1003, 4
      %v1006 = vshll.u32 %v897, 16
      %v1008 = vrot.slane %v1006, 5
      %v1009 = vsel %vm438, %v1004, %v1008
      %s1010 = scalar_lea.vmem %s2, 16
      %v1011 = vld [vmem:[%s1010] sm:$0xf]
      %v1012 = vunpack.c.l.b16 %v911
      %v1013 = vunpack.c.l.b16 %v925
      %v1014 = vunpack.c.l.b16 %v939
      %v1015 = vunpack.c.l.b16 %v953
      %v1016 = vunpack.c.l.b16 %v967
      %v1017 = vunpack.c.l.b16 %v981
      %v1018 = vunpack.c.l.b16 %v995
      %v1019 = vunpack.c.l.b16 %v1009
      %v1020 = vpack.c.b16 %v1013, %v1012
      %v1021 = vpack.c.b16 %v1015, %v1014
      %v1022 = vpack.c.b16 %v1017, %v1016
      %v1023 = vpack.c.b16 %v1019, %v1018
      %v1025 = vsel %vm565, %v1020, 0
      %v1028 = vsel %vm565, %v1021, 0
      %v1031 = vsel %vm565, %v1022, 0
      %v1034 = vsel %vm565, %v1023, 0
      %v1037 = vsel %vm578, %v1011, 0
      %1039 = vmatpush.bf16.msra.mxu0 0
      %1040 = vmatpush.bf16.msra.mxu0 0
      %1041 = vmatpush.bf16.msra.mxu0 0
      %1042 = vmatpush.bf16.msra.mxu0 0
      %1043 = vmatpush.bf16.msra.mxu0 0
      %1044 = vmatpush.bf16.msra.mxu0 0
      %1045 = vmatpush.bf16.msra.mxu0 0
      %1046 = vmatpush.bf16.msra.mxu0 %v1037
      %1047 = vmatmul.bf16.gmra.mxu0 %v1025
      %v1048 = vpop.f32.mrf.mxu0
      %v1049 = vadd.f32 0.0, %v1048
      %v1050 = vpop.f32.mrf.mxu0
      %v1051 = vadd.f32 0.0, %v1050
      %1052 = vmatmul.bf16.gmra.mxu0 %v1028
      %v1053 = vpop.f32.mrf.mxu0
      %v1054 = vadd.f32 0.0, %v1053
      %v1055 = vpop.f32.mrf.mxu0
      %v1056 = vadd.f32 0.0, %v1055
      %1057 = vmatmul.bf16.gmra.mxu0 %v1031
      %v1058 = vpop.f32.mrf.mxu0
      %v1059 = vadd.f32 0.0, %v1058
      %v1060 = vpop.f32.mrf.mxu0
      %v1061 = vadd.f32 0.0, %v1060
      %1062 = vmatmul.bf16.gmra.mxu0 %v1034
      %v1063 = vpop.f32.mrf.mxu0
      %v1064 = vadd.f32 0.0, %v1063
      %v1065 = vpop.f32.mrf.mxu0
      %v1066 = vadd.f32 0.0, %v1065
      %1067 = vdwg.mxu0
      %v1068 = vadd.f32 %v874, %v1049
      %v1069 = vadd.f32 %v875, %v1051
      %v1070 = vadd.f32 %v876, %v1054
      %v1071 = vadd.f32 %v877, %v1056
      %v1072 = vadd.f32 %v878, %v1059
      %v1073 = vadd.f32 %v879, %v1061
      %v1074 = vadd.f32 %v880, %v1064
      %v1075 = vadd.f32 %v881, %v1066
      %v1076 = vld [vmem:[%s364] sm:$0xe]
      %v1077 = vld [vmem:[%s364 + $0x8] sm:$0xe]
      %v1078 = vld [vmem:[%s364 + $0x10] sm:$0xe]
      %v1079 = vld [vmem:[%s364 + $0x18] sm:$0xe]
      %v1080 = vld [vmem:[%s364 + $0x20] sm:$0xe]
      %v1081 = vld [vmem:[%s364 + $0x28] sm:$0xe]
      %v1082 = vld [vmem:[%s364 + $0x30] sm:$0xe]
      %v1083 = vld [vmem:[%s364 + $0x38] sm:$0xe]
      %v1100 = vrot.slane %v1076, 5
      %v1101 = vrot.slane %v1100, 4
      %v1102 = vrot.slane %v883, 5
      %v1103 = vsel %vm701, %v1101, %v1102
      %v1104 = vrot.slane %v1077, 5
      %v1105 = vrot.slane %v1104, 4
      %v1106 = vrot.slane %v885, 5
      %v1107 = vsel %vm701, %v1105, %v1106
      %v1108 = vrot.slane %v1078, 5
      %v1109 = vrot.slane %v1108, 4
      %v1110 = vrot.slane %v887, 5
      %v1111 = vsel %vm701, %v1109, %v1110
      %v1112 = vrot.slane %v1079, 5
      %v1113 = vrot.slane %v1112, 4
      %v1114 = vrot.slane %v889, 5
      %v1115 = vsel %vm701, %v1113, %v1114
      %v1116 = vrot.slane %v1080, 5
      %v1117 = vrot.slane %v1116, 4
      %v1118 = vrot.slane %v891, 5
      %v1119 = vsel %vm701, %v1117, %v1118
      %v1120 = vrot.slane %v1081, 5
      %v1121 = vrot.slane %v1120, 4
      %v1122 = vrot.slane %v893, 5
      %v1123 = vsel %vm701, %v1121, %v1122
      %v1124 = vrot.slane %v1082, 5
      %v1125 = vrot.slane %v1124, 4
      %v1126 = vrot.slane %v895, 5
      %v1127 = vsel %vm701, %v1125, %v1126
      %v1128 = vrot.slane %v1083, 5
      %v1129 = vrot.slane %v1128, 4
      %v1130 = vrot.slane %v897, 5
      %v1131 = vsel %vm701, %v1129, %v1130
      %s1132 = scalar_lea.vmem %s2, 20
      %v1133 = vld [vmem:[%s1132] sm:$0xf]
      %v1134 = vunpack.c.l.b16 %v1103
      %v1135 = vunpack.c.l.b16 %v1107
      %v1136 = vunpack.c.l.b16 %v1111
      %v1137 = vunpack.c.l.b16 %v1115
      %v1138 = vunpack.c.l.b16 %v1119
      %v1139 = vunpack.c.l.b16 %v1123
      %v1140 = vunpack.c.l.b16 %v1127
      %v1141 = vunpack.c.l.b16 %v1131
      %v1142 = vpack.c.b16 %v1135, %v1134
      %v1143 = vpack.c.b16 %v1137, %v1136
      %v1144 = vpack.c.b16 %v1139, %v1138
      %v1145 = vpack.c.b16 %v1141, %v1140
      %v1147 = vsel %vm565, %v1142, 0
      %v1150 = vsel %vm565, %v1143, 0
      %v1153 = vsel %vm565, %v1144, 0
      %v1156 = vsel %vm565, %v1145, 0
      %v1159 = vsel %vm578, %v1133, 0
      %1161 = vmatpush.bf16.msra.mxu0 0
      %1162 = vmatpush.bf16.msra.mxu0 0
      %1163 = vmatpush.bf16.msra.mxu0 0
      %1164 = vmatpush.bf16.msra.mxu0 0
      %1165 = vmatpush.bf16.msra.mxu0 0
      %1166 = vmatpush.bf16.msra.mxu0 0
      %1167 = vmatpush.bf16.msra.mxu0 0
      %1168 = vmatpush.bf16.msra.mxu0 %v1159
      %1169 = vmatmul.bf16.gmra.mxu0 %v1147
      %v1170 = vpop.f32.mrf.mxu0
      %v1171 = vadd.f32 0.0, %v1170
      %v1172 = vpop.f32.mrf.mxu0
      %v1173 = vadd.f32 0.0, %v1172
      %1174 = vmatmul.bf16.gmra.mxu0 %v1150
      %v1175 = vpop.f32.mrf.mxu0
      %v1176 = vadd.f32 0.0, %v1175
      %v1177 = vpop.f32.mrf.mxu0
      %v1178 = vadd.f32 0.0, %v1177
      %1179 = vmatmul.bf16.gmra.mxu0 %v1153
      %v1180 = vpop.f32.mrf.mxu0
      %v1181 = vadd.f32 0.0, %v1180
      %v1182 = vpop.f32.mrf.mxu0
      %v1183 = vadd.f32 0.0, %v1182
      %1184 = vmatmul.bf16.gmra.mxu0 %v1156
      %v1185 = vpop.f32.mrf.mxu0
      %v1186 = vadd.f32 0.0, %v1185
      %v1187 = vpop.f32.mrf.mxu0
      %v1188 = vadd.f32 0.0, %v1187
      %1189 = vdwg.mxu0
      %v1190 = vadd.f32 %v1068, %v1171
      %v1191 = vadd.f32 %v1069, %v1173
      %v1192 = vadd.f32 %v1070, %v1176
      %v1193 = vadd.f32 %v1071, %v1178
      %v1194 = vadd.f32 %v1072, %v1181
      %v1195 = vadd.f32 %v1073, %v1183
      %v1196 = vadd.f32 %v1074, %v1186
      %v1197 = vadd.f32 %v1075, %v1188
      %s1198 = scalar_lea.vmem [#allocation2], 16
      %v1199 = vld [vmem:[%s1198] sm:$0xf]
      %v1200 = vld [vmem:[%s1198 + $0x8] sm:$0xf]
      %v1201 = vld [vmem:[%s1198 + $0x10] sm:$0xf]
      %v1202 = vld [vmem:[%s1198 + $0x18] sm:$0xf]
      %v1203 = vld [vmem:[%s1198 + $0x20] sm:$0xf]
      %v1204 = vld [vmem:[%s1198 + $0x28] sm:$0xf]
      %v1205 = vld [vmem:[%s1198 + $0x30] sm:$0xf]
      %v1206 = vld [vmem:[%s1198 + $0x38] sm:$0xf]
      %s1207 = scalar_lea.vmem %s2, 24
      %v1208 = vld [vmem:[%s1207] sm:$0xf]
      %v1217 = vunpack.c.l.b16 %v1199
      %v1218 = vunpack.c.l.b16 %v1200
      %v1219 = vunpack.c.l.b16 %v1201
      %v1220 = vunpack.c.l.b16 %v1202
      %v1221 = vunpack.c.l.b16 %v1203
      %v1222 = vunpack.c.l.b16 %v1204
      %v1223 = vunpack.c.l.b16 %v1205
      %v1224 = vunpack.c.l.b16 %v1206
      %v1225 = vpack.c.b16 %v1218, %v1217
      %v1226 = vpack.c.b16 %v1220, %v1219
      %v1227 = vpack.c.b16 %v1222, %v1221
      %v1228 = vpack.c.b16 %v1224, %v1223
      %v1230 = vsel %vm565, %v1225, 0
      %v1233 = vsel %vm565, %v1226, 0
      %v1236 = vsel %vm565, %v1227, 0
      %v1239 = vsel %vm565, %v1228, 0
      %v1242 = vsel %vm578, %v1208, 0
      %1244 = vmatpush.bf16.msra.mxu0 0
      %1245 = vmatpush.bf16.msra.mxu0 0
      %1246 = vmatpush.bf16.msra.mxu0 0
      %1247 = vmatpush.bf16.msra.mxu0 0
      %1248 = vmatpush.bf16.msra.mxu0 0
      %1249 = vmatpush.bf16.msra.mxu0 0
      %1250 = vmatpush.bf16.msra.mxu0 0
      %1251 = vmatpush.bf16.msra.mxu0 %v1242
      %1252 = vmatmul.bf16.gmra.mxu0 %v1230
      %v1253 = vpop.f32.mrf.mxu0
      %v1254 = vadd.f32 0.0, %v1253
      %v1255 = vpop.f32.mrf.mxu0
      %v1256 = vadd.f32 0.0, %v1255
      %1257 = vmatmul.bf16.gmra.mxu0 %v1233
      %v1258 = vpop.f32.mrf.mxu0
      %v1259 = vadd.f32 0.0, %v1258
      %v1260 = vpop.f32.mrf.mxu0
      %v1261 = vadd.f32 0.0, %v1260
      %1262 = vmatmul.bf16.gmra.mxu0 %v1236
      %v1263 = vpop.f32.mrf.mxu0
      %v1264 = vadd.f32 0.0, %v1263
      %v1265 = vpop.f32.mrf.mxu0
      %v1266 = vadd.f32 0.0, %v1265
      %1267 = vmatmul.bf16.gmra.mxu0 %v1239
      %v1268 = vpop.f32.mrf.mxu0
      %v1269 = vadd.f32 0.0, %v1268
      %v1270 = vpop.f32.mrf.mxu0
      %v1271 = vadd.f32 0.0, %v1270
      %1272 = vdwg.mxu0
      %v1273 = vadd.f32 %v1190, %v1254
      %v1274 = vadd.f32 %v1191, %v1256
      %v1275 = vadd.f32 %v1192, %v1259
      %v1276 = vadd.f32 %v1193, %v1261
      %v1277 = vadd.f32 %v1194, %v1264
      %v1278 = vadd.f32 %v1195, %v1266
      %v1279 = vadd.f32 %v1196, %v1269
      %v1280 = vadd.f32 %v1197, %v1271
      %v1281 = vld [vmem:[%s1198] sm:$0xf]
      %v1282 = vld [vmem:[%s1198 + $0x4] sm:$0x1]
      %v1283 = vld [vmem:[%s1198 + $0x8] sm:$0xf]
      %v1284 = vld [vmem:[%s1198 + $0xc] sm:$0x1]
      %v1285 = vld [vmem:[%s1198 + $0x10] sm:$0xf]
      %v1286 = vld [vmem:[%s1198 + $0x14] sm:$0x1]
      %v1287 = vld [vmem:[%s1198 + $0x18] sm:$0xf]
      %v1288 = vld [vmem:[%s1198 + $0x1c] sm:$0x1]
      %v1289 = vld [vmem:[%s1198 + $0x20] sm:$0xf]
      %v1290 = vld [vmem:[%s1198 + $0x24] sm:$0x1]
      %v1291 = vld [vmem:[%s1198 + $0x28] sm:$0xf]
      %v1292 = vld [vmem:[%s1198 + $0x2c] sm:$0x1]
      %v1293 = vld [vmem:[%s1198 + $0x30] sm:$0xf]
      %v1294 = vld [vmem:[%s1198 + $0x34] sm:$0x1]
      %v1295 = vld [vmem:[%s1198 + $0x38] sm:$0xf]
      %v1296 = vld [vmem:[%s1198 + $0x3c] sm:$0x1]
      %v1298 = vshrl.u32 %v1281, 16
      %v1300 = vrot.slane %v1298, 4
      %v1301 = vshll.u32 %v1281, 16
      %v1303 = vrot.slane %v1301, 5
      %v1304 = vor.u32 %v1300, %v1303
      %v1305 = vrot.slane %v1304, 4
      %v1307 = vshll.u32 %v1282, 16
      %v1309 = vrot.slane %v1307, 5
      %v1310 = vsel %vm438, %v1305, %v1309
      %v1312 = vshrl.u32 %v1283, 16
      %v1314 = vrot.slane %v1312, 4
      %v1315 = vshll.u32 %v1283, 16
      %v1317 = vrot.slane %v1315, 5
      %v1318 = vor.u32 %v1314, %v1317
      %v1319 = vrot.slane %v1318, 4
      %v1321 = vshll.u32 %v1284, 16
      %v1323 = vrot.slane %v1321, 5
      %v1324 = vsel %vm438, %v1319, %v1323
      %v1326 = vshrl.u32 %v1285, 16
      %v1328 = vrot.slane %v1326, 4
      %v1329 = vshll.u32 %v1285, 16
      %v1331 = vrot.slane %v1329, 5
      %v1332 = vor.u32 %v1328, %v1331
      %v1333 = vrot.slane %v1332, 4
      %v1335 = vshll.u32 %v1286, 16
      %v1337 = vrot.slane %v1335, 5
      %v1338 = vsel %vm438, %v1333, %v1337
      %v1340 = vshrl.u32 %v1287, 16
      %v1342 = vrot.slane %v1340, 4
      %v1343 = vshll.u32 %v1287, 16
      %v1345 = vrot.slane %v1343, 5
      %v1346 = vor.u32 %v1342, %v1345
      %v1347 = vrot.slane %v1346, 4
      %v1349 = vshll.u32 %v1288, 16
      %v1351 = vrot.slane %v1349, 5
      %v1352 = vsel %vm438, %v1347, %v1351
      %v1354 = vshrl.u32 %v1289, 16
      %v1356 = vrot.slane %v1354, 4
      %v1357 = vshll.u32 %v1289, 16
      %v1359 = vrot.slane %v1357, 5
      %v1360 = vor.u32 %v1356, %v1359
      %v1361 = vrot.slane %v1360, 4
      %v1363 = vshll.u32 %v1290, 16
      %v1365 = vrot.slane %v1363, 5
      %v1366 = vsel %vm438, %v1361, %v1365
      %v1368 = vshrl.u32 %v1291, 16
      %v1370 = vrot.slane %v1368, 4
      %v1371 = vshll.u32 %v1291, 16
      %v1373 = vrot.slane %v1371, 5
      %v1374 = vor.u32 %v1370, %v1373
      %v1375 = vrot.slane %v1374, 4
      %v1377 = vshll.u32 %v1292, 16
      %v1379 = vrot.slane %v1377, 5
      %v1380 = vsel %vm438, %v1375, %v1379
      %v1382 = vshrl.u32 %v1293, 16
      %v1384 = vrot.slane %v1382, 4
      %v1385 = vshll.u32 %v1293, 16
      %v1387 = vrot.slane %v1385, 5
      %v1388 = vor.u32 %v1384, %v1387
      %v1389 = vrot.slane %v1388, 4
      %v1391 = vshll.u32 %v1294, 16
      %v1393 = vrot.slane %v1391, 5
      %v1394 = vsel %vm438, %v1389, %v1393
      %v1396 = vshrl.u32 %v1295, 16
      %v1398 = vrot.slane %v1396, 4
      %v1399 = vshll.u32 %v1295, 16
      %v1401 = vrot.slane %v1399, 5
      %v1402 = vor.u32 %v1398, %v1401
      %v1403 = vrot.slane %v1402, 4
      %v1405 = vshll.u32 %v1296, 16
      %v1407 = vrot.slane %v1405, 5
      %v1408 = vsel %vm438, %v1403, %v1407
      %s1409 = scalar_lea.vmem %s2, 28
      %v1410 = vld [vmem:[%s1409] sm:$0xf]
      %v1411 = vunpack.c.l.b16 %v1310
      %v1412 = vunpack.c.l.b16 %v1324
      %v1413 = vunpack.c.l.b16 %v1338
      %v1414 = vunpack.c.l.b16 %v1352
      %v1415 = vunpack.c.l.b16 %v1366
      %v1416 = vunpack.c.l.b16 %v1380
      %v1417 = vunpack.c.l.b16 %v1394
      %v1418 = vunpack.c.l.b16 %v1408
      %v1419 = vpack.c.b16 %v1412, %v1411
      %v1420 = vpack.c.b16 %v1414, %v1413
      %v1421 = vpack.c.b16 %v1416, %v1415
      %v1422 = vpack.c.b16 %v1418, %v1417
      %v1424 = vsel %vm565, %v1419, 0
      %v1427 = vsel %vm565, %v1420, 0
      %v1430 = vsel %vm565, %v1421, 0
      %v1433 = vsel %vm565, %v1422, 0
      %v1436 = vsel %vm578, %v1410, 0
      %1438 = vmatpush.bf16.msra.mxu0 0
      %1439 = vmatpush.bf16.msra.mxu0 0
      %1440 = vmatpush.bf16.msra.mxu0 0
      %1441 = vmatpush.bf16.msra.mxu0 0
      %1442 = vmatpush.bf16.msra.mxu0 0
      %1443 = vmatpush.bf16.msra.mxu0 0
      %1444 = vmatpush.bf16.msra.mxu0 0
      %1445 = vmatpush.bf16.msra.mxu0 %v1436
      %1446 = vmatmul.bf16.gmra.mxu0 %v1424
      %v1447 = vpop.f32.mrf.mxu0
      %v1448 = vadd.f32 0.0, %v1447
      %v1449 = vpop.f32.mrf.mxu0
      %v1450 = vadd.f32 0.0, %v1449
      %1451 = vmatmul.bf16.gmra.mxu0 %v1427
      %v1452 = vpop.f32.mrf.mxu0
      %v1453 = vadd.f32 0.0, %v1452
      %v1454 = vpop.f32.mrf.mxu0
      %v1455 = vadd.f32 0.0, %v1454
      %1456 = vmatmul.bf16.gmra.mxu0 %v1430
      %v1457 = vpop.f32.mrf.mxu0
      %v1458 = vadd.f32 0.0, %v1457
      %v1459 = vpop.f32.mrf.mxu0
      %v1460 = vadd.f32 0.0, %v1459
      %1461 = vmatmul.bf16.gmra.mxu0 %v1433
      %v1462 = vpop.f32.mrf.mxu0
      %v1463 = vadd.f32 0.0, %v1462
      %v1464 = vpop.f32.mrf.mxu0
      %v1465 = vadd.f32 0.0, %v1464
      %1466 = vdwg.mxu0
      %v1467 = vadd.f32 %v1273, %v1448
      %v1468 = vadd.f32 %v1274, %v1450
      %v1469 = vadd.f32 %v1275, %v1453
      %v1470 = vadd.f32 %v1276, %v1455
      %v1471 = vadd.f32 %v1277, %v1458
      %v1472 = vadd.f32 %v1278, %v1460
      %v1473 = vadd.f32 %v1279, %v1463
      %v1474 = vadd.f32 %v1280, %v1465
      %v1475 = vld [vmem:[%s1198] sm:$0xe]
      %v1476 = vld [vmem:[%s1198 + $0x8] sm:$0xe]
      %v1477 = vld [vmem:[%s1198 + $0x10] sm:$0xe]
      %v1478 = vld [vmem:[%s1198 + $0x18] sm:$0xe]
      %v1479 = vld [vmem:[%s1198 + $0x20] sm:$0xe]
      %v1480 = vld [vmem:[%s1198 + $0x28] sm:$0xe]
      %v1481 = vld [vmem:[%s1198 + $0x30] sm:$0xe]
      %v1482 = vld [vmem:[%s1198 + $0x38] sm:$0xe]
      %v1499 = vrot.slane %v1475, 5
      %v1500 = vrot.slane %v1499, 4
      %v1501 = vrot.slane %v1282, 5
      %v1502 = vsel %vm701, %v1500, %v1501
      %v1503 = vrot.slane %v1476, 5
      %v1504 = vrot.slane %v1503, 4
      %v1505 = vrot.slane %v1284, 5
      %v1506 = vsel %vm701, %v1504, %v1505
      %v1507 = vrot.slane %v1477, 5
      %v1508 = vrot.slane %v1507, 4
      %v1509 = vrot.slane %v1286, 5
      %v1510 = vsel %vm701, %v1508, %v1509
      %v1511 = vrot.slane %v1478, 5
      %v1512 = vrot.slane %v1511, 4
      %v1513 = vrot.slane %v1288, 5
      %v1514 = vsel %vm701, %v1512, %v1513
      %v1515 = vrot.slane %v1479, 5
      %v1516 = vrot.slane %v1515, 4
      %v1517 = vrot.slane %v1290, 5
      %v1518 = vsel %vm701, %v1516, %v1517
      %v1519 = vrot.slane %v1480, 5
      %v1520 = vrot.slane %v1519, 4
      %v1521 = vrot.slane %v1292, 5
      %v1522 = vsel %vm701, %v1520, %v1521
      %v1523 = vrot.slane %v1481, 5
      %v1524 = vrot.slane %v1523, 4
      %v1525 = vrot.slane %v1294, 5
      %v1526 = vsel %vm701, %v1524, %v1525
      %v1527 = vrot.slane %v1482, 5
      %v1528 = vrot.slane %v1527, 4
      %v1529 = vrot.slane %v1296, 5
      %v1530 = vsel %vm701, %v1528, %v1529
      %s1531 = scalar_lea.vmem %s2, 32
      %v1532 = vld [vmem:[%s1531] sm:$0xf]
      %v1533 = vunpack.c.l.b16 %v1502
      %v1534 = vunpack.c.l.b16 %v1506
      %v1535 = vunpack.c.l.b16 %v1510
      %v1536 = vunpack.c.l.b16 %v1514
      %v1537 = vunpack.c.l.b16 %v1518
      %v1538 = vunpack.c.l.b16 %v1522
      %v1539 = vunpack.c.l.b16 %v1526
      %v1540 = vunpack.c.l.b16 %v1530
      %v1541 = vpack.c.b16 %v1534, %v1533
      %v1542 = vpack.c.b16 %v1536, %v1535
      %v1543 = vpack.c.b16 %v1538, %v1537
      %v1544 = vpack.c.b16 %v1540, %v1539
      %v1546 = vsel %vm565, %v1541, 0
      %v1549 = vsel %vm565, %v1542, 0
      %v1552 = vsel %vm565, %v1543, 0
      %v1555 = vsel %vm565, %v1544, 0
      %v1558 = vsel %vm578, %v1532, 0
      %1560 = vmatpush.bf16.msra.mxu0 0
      %1561 = vmatpush.bf16.msra.mxu0 0
      %1562 = vmatpush.bf16.msra.mxu0 0
      %1563 = vmatpush.bf16.msra.mxu0 0
      %1564 = vmatpush.bf16.msra.mxu0 0
      %1565 = vmatpush.bf16.msra.mxu0 0
      %1566 = vmatpush.bf16.msra.mxu0 0
      %1567 = vmatpush.bf16.msra.mxu0 %v1558
      %1568 = vmatmul.bf16.gmra.mxu0 %v1546
      %v1569 = vpop.f32.mrf.mxu0
      %v1570 = vadd.f32 0.0, %v1569
      %v1571 = vpop.f32.mrf.mxu0
      %v1572 = vadd.f32 0.0, %v1571
      %1573 = vmatmul.bf16.gmra.mxu0 %v1549
      %v1574 = vpop.f32.mrf.mxu0
      %v1575 = vadd.f32 0.0, %v1574
      %v1576 = vpop.f32.mrf.mxu0
      %v1577 = vadd.f32 0.0, %v1576
      %1578 = vmatmul.bf16.gmra.mxu0 %v1552
      %v1579 = vpop.f32.mrf.mxu0
      %v1580 = vadd.f32 0.0, %v1579
      %v1581 = vpop.f32.mrf.mxu0
      %v1582 = vadd.f32 0.0, %v1581
      %1583 = vmatmul.bf16.gmra.mxu0 %v1555
      %v1584 = vpop.f32.mrf.mxu0
      %v1585 = vadd.f32 0.0, %v1584
      %v1586 = vpop.f32.mrf.mxu0
      %v1587 = vadd.f32 0.0, %v1586
      %1588 = vdwg.mxu0
      %v1589 = vadd.f32 %v1467, %v1570
      %v1590 = vadd.f32 %v1468, %v1572
      %v1591 = vadd.f32 %v1469, %v1575
      %v1592 = vadd.f32 %v1470, %v1577
      %v1593 = vadd.f32 %v1471, %v1580
      %v1594 = vadd.f32 %v1472, %v1582
      %v1595 = vadd.f32 %v1473, %v1585
      %v1596 = vadd.f32 %v1474, %v1587
      %v1597 = vpack.c.bf16 %v1589, %v1589
      %v1598 = vpack.c.bf16 %v1590, %v1590
      %v1599 = vpack.c.bf16 %v1591, %v1591
      %v1600 = vpack.c.bf16 %v1592, %v1592
      %v1601 = vpack.c.bf16 %v1593, %v1593
      %v1602 = vpack.c.bf16 %v1594, %v1594
      %v1603 = vpack.c.bf16 %v1595, %v1595
      %v1604 = vpack.c.bf16 %v1596, %v1596
      %1605 = vst.msk [vmem:[%s204] sm:$0xf] %vm210, %v1597
      %1606 = vst.msk [vmem:[%s204 + $0x4] sm:$0xf] %vm210, %v1598
      %1607 = vst.msk [vmem:[%s204 + $0x8] sm:$0xf] %vm210, %v1599
      %1608 = vst.msk [vmem:[%s204 + $0xc] sm:$0xf] %vm210, %v1600
      %1609 = vst.msk [vmem:[%s204 + $0x10] sm:$0xf] %vm210, %v1601
      %1610 = vst.msk [vmem:[%s204 + $0x14] sm:$0xf] %vm210, %v1602
      %1611 = vst.msk [vmem:[%s204 + $0x18] sm:$0xf] %vm210, %v1603
      %1612 = vst.msk [vmem:[%s204 + $0x1c] sm:$0xf] %vm210, %v1604
      %v1613 = vsel %vm565, %v1589, 0.0
      %v1614 = vsel %vm565, %v1590, 0.0
      %v1615 = vadd.f32 %v1613, %v1614
      %v1616 = vsel %vm565, %v1591, 0.0
      %v1617 = vadd.f32 %v1615, %v1616
      %v1618 = vsel %vm565, %v1592, 0.0
      %v1619 = vadd.f32 %v1617, %v1618
      %v1620 = vsel %vm565, %v1593, 0.0
      %v1621 = vadd.f32 %v1619, %v1620
      %v1622 = vsel %vm565, %v1594, 0.0
      %v1623 = vadd.f32 %v1621, %v1622
      %v1624 = vsel %vm565, %v1595, 0.0
      %v1625 = vadd.f32 %v1623, %v1624
      %v1626 = vsel %vm565, %v1596, 0.0
      %v1627 = vadd.f32 %v1625, %v1626
      %v1628 = vrot.slane %v1627, 4
      %v1629 = vadd.f32 %v1627, %v1628
      %v1630 = vrot.slane %v1629, 2
      %v1631 = vadd.f32 %v1629, %v1630
      %v1632 = vrot.slane %v1631, 1
      %v1633 = vadd.f32 %v1631, %v1632
      %1634 = vst.msk [vmem:[%s208] sm:$0x1] %vm212, %v1633
      %v1635 = vmul.f32 %v1589, %v1589
      %v1636 = vmul.f32 %v1590, %v1590
      %v1637 = vmul.f32 %v1591, %v1591
      %v1638 = vmul.f32 %v1592, %v1592
      %v1639 = vmul.f32 %v1593, %v1593
      %v1640 = vmul.f32 %v1594, %v1594
      %v1641 = vmul.f32 %v1595, %v1595
      %v1642 = vmul.f32 %v1596, %v1596
      %v1643 = vsel %vm565, %v1635, 0.0
      %v1644 = vsel %vm565, %v1636, 0.0
      %v1645 = vadd.f32 %v1643, %v1644
      %v1646 = vsel %vm565, %v1637, 0.0
      %v1647 = vadd.f32 %v1645, %v1646
      %v1648 = vsel %vm565, %v1638, 0.0
      %v1649 = vadd.f32 %v1647, %v1648
      %v1650 = vsel %vm565, %v1639, 0.0
      %v1651 = vadd.f32 %v1649, %v1650
      %v1652 = vsel %vm565, %v1640, 0.0
      %v1653 = vadd.f32 %v1651, %v1652
      %v1654 = vsel %vm565, %v1641, 0.0
      %v1655 = vadd.f32 %v1653, %v1654
      %v1656 = vsel %vm565, %v1642, 0.0
      %v1657 = vadd.f32 %v1655, %v1656
      %v1658 = vrot.slane %v1657, 4
      %v1659 = vadd.f32 %v1657, %v1658
      %v1660 = vrot.slane %v1659, 2
      %v1661 = vadd.f32 %v1659, %v1660
      %v1662 = vrot.slane %v1661, 1
      %v1663 = vadd.f32 %v1661, %v1662
      %1664 = vst.msk [vmem:[%s208 + $0x1] sm:$0x1] %vm212, %v1663
      %p1665 = scmp.lt.s32.totalorder %s16, 1
      %s1666 = scalar_select %p1665, %s16, 1
      %s1667 = smul.addr %s1666, 8
      %s1668 = smul.addr %s1667, 4
      %s1669 = scalar_lea.vmem %s3, %s1668
      %p1670 = scmp.lt.s32.totalorder %s16, 1
      %s1671 = scalar_select %p1670, %s16, 1
      %s1672 = smul.addr %s1671, 2
      %s1673 = scalar_lea.vmem %s4, %s1672
      // Predicated region
      $region33: #{_lambda_.8} parent=31 // pred_check
        %p1674 = pneg %p102
      $region34: #{_lambda_.8} parent=31 // pred_check_branch
        %1676 = sbr.rel (%p1674) target = $region36
      $region35: #{_lambda_.8} parent=31 // pred_region
        _
      $region36: #{_lambda_.8} parent=31 // pred_fallthru
        _
      // Predicated region
      $region37: #{_lambda_.8} parent=31 // pred_check
        %p1677 = pneg %p128
      $region38: #{_lambda_.8} parent=31 // pred_check_branch
        %1679 = sbr.rel (%p1677) target = $region40
      $region39: #{_lambda_.8} parent=31 // pred_region
        _
      $region40: #{_lambda_.8} parent=31 // pred_fallthru
        _
    $region32: #{_lambda_.8} parent=5 // pred_fallthru
      _
    %p1680 = scmp.le.s32.totalorder 2, %s11
    // Predicated region
    $region41: #{_lambda_.8} parent=5 // pred_check
      %p1681 = pneg %p1680
    $region42: #{_lambda_.8} parent=5 // pred_check_branch
      %1683 = sbr.rel (%p1681) target = $region44
    $region43: #{_lambda_.8} parent=5 // pred_region
      %s1684 = ssub.s32 %s11, 2
      // Predicated region
      $region45: #{_lambda_.8} parent=43 // pred_check
        %p1685 = pneg %p108
      $region46: #{_lambda_.8} parent=43 // pred_check_branch
        %1687 = sbr.rel (%p1685) target = $region48
      $region47: #{_lambda_.8} parent=43 // pred_region
        %p1688 = scmp.lt.s32.totalorder %s17, 1
        %s1689 = scalar_select %p1688, %s17, 1
        %s1690 = smul.addr %s1689, 8
        %s1691 = smul.addr %s1690, 4
        %s1692 = scalar_lea.vmem %s3, %s1691
      $region48: #{_lambda_.8} parent=43 // pred_fallthru
        _
      // Predicated region
      $region49: #{_lambda_.8} parent=43 // pred_check
        %p1693 = pneg %p134
      $region50: #{_lambda_.8} parent=43 // pred_check_branch
        %1695 = sbr.rel (%p1693) target = $region52
      $region51: #{_lambda_.8} parent=43 // pred_region
        %p1696 = scmp.lt.s32.totalorder %s17, 1
        %s1697 = scalar_select %p1696, %s17, 1
        %s1698 = smul.addr %s1697, 2
        %s1699 = scalar_lea.vmem %s4, %s1698
      $region52: #{_lambda_.8} parent=43 // pred_fallthru
        _
    $region44: #{_lambda_.8} parent=5 // pred_fallthru
      _
  $region6: #{_lambda_.8} parent=0 // loop_footer
    %s15 = sadd.s32 1, %s11
  $region7: #{_lambda_.8} parent=0 // loop_footer_branch
    %10 = sbr.rel target = $region3
  $region8: #{_lambda_.8} parent=0 // loop_exit
    _

// kernel: _lambda_.9
$region0: #{_lambda_.9}
  #allocation0 [shape = 'u32[]', space=smem, size = 0x4, offset = 0x4, fixed_abs, tag = 'smem constant byte address 0x4 - core index']
  #allocation1 [shape = 'u32[72,128]{1,0:T(1,128)}', space=vmem, size = 0x9000, scoped, tag = 'internal scratch']
  #allocation2 [shape = 'bf16[10,10,8]{2,1,0:T(8,128)(2,1)}', space=vmem, size = 0xa000, scoped, tag = 'scratch operand']
  %s0 = inlined_call_operand.vmem [shape: bf16[2,8,8,8], index: 0, kind: input, shape index: {}]
  %s1 = inlined_call_operand.vmem [shape: f32[2,8], index: 1, kind: input, shape index: {}]
  %s2 = inlined_call_operand.vmem [shape: bf16[9,8,8], index: 2, kind: input, shape index: {}]
  %s3 = inlined_call_operand.vmem [shape: bf16[2,8,8,8], index: 3, kind: input, shape index: {}]
  %s4 = inlined_call_operand.vmem [shape: bf16[2,8,8,8], index: 4, kind: output, shape index: {0}]
  %s5 = inlined_call_operand.hbm [shape: f32[2,2,8], index: 5, kind: output, shape index: {1}]
  %6 = xla_tuple %s4, %s5
  %s7 = sld [smem:[#allocation0]]
  $region57: #{_lambda_.9} parent=0
    _
  %s9 = ssub.s32 1, %s7
  %s10 = scalar_select 0, %s9, %s7
  $region1: #{_lambda_.9} parent=0
    #allocation3 [shape = 'u8[2048]{0}', space=vmem, size = 0x800, scoped, tag = 'output window, operand 1']
    #allocation4 [shape = 's32[2]{0}', space=sflag, size = 0x8, scoped, tag = 'scoped memory for _lambda_.9']
    %11 = vsyncpa [#allocation4], 0
    %s12 = scalar_lea.sflag [#allocation4], 1
    %13 = vsyncpa %s12, 0
    loop: start=0, step=1, limit=4
    $region2: #{_lambda_.9} parent=1 // loop_pre_header
      _
    $region3: #{_lambda_.9} parent=1 // loop_header
      %s15 = sphi 0, %s19
      %p16 = scmp.ge.s32.totalorder %s15, 4
      %s25 = sphi 0, %s27
      %s28 = sphi 0, %s25
      %s29 = sphi 0, %s28
      %s45 = sphi 0, %s29
      %s49 = sphi 0, %s49
      %s51 = sphi 0, %s49
      %s52 = sphi 0, %s51
      %s66 = sphi 0, %s52
      %s70 = sphi 0, %s70
      %s72 = sphi 0, %s70
      %s73 = sphi 0, %s72
      %s87 = sphi 0, %s73
      %s93 = sphi 0, %s95
      %s96 = sphi 0, %s93
      %s97 = sphi 0, %s96
      %s113 = sphi 0, %s97
      %s119 = sphi 0, %s121
      %s122 = sphi 0, %s119
      %s123 = sphi 0, %s122
      %s139 = sphi 0, %s123
      %s145 = sphi 0, %s147
      %s148 = sphi 0, %s145
      %s149 = sphi 0, %s148
      %s165 = sphi 0, %s149
    $region4: #{_lambda_.9} parent=1 // loop_header_branch
      %18 = sbr.rel (%p16) target = $region8
    $region5: #{_lambda_.9} parent=1 // loop_body
      %s20 = ssub.s32 %s15, 1
      %s21 = ssub.s32 %s15, 2
      %s22 = sadd.s32 %s15, 1
      %s23 = ssub.s32 %s15, %s22
      %p24 = scmp.eq.s32.totalorder %s23, 0
      %s26 = sadd.s32 %s25, 1
      %s27 = scalar_select %p24, %s25, %s26
      %p30 = pneg %p24
      %p31 = scmp.eq.s32.totalorder %s15, 1
      %p32 = por %p30, %p31
      %p33 = scmp.ne.s32.totalorder %s25, %s28
      %p34 = scmp.eq.s32.totalorder %s15, 0
      %p35 = por %p33, %p34
      %p36 = scmp.ne.s32.totalorder %s25, %s28
      %p37 = scmp.eq.s32.totalorder %s20, 1
      %p38 = por %p36, %p37
      %p39 = scmp.ne.s32.totalorder %s28, %s29
      %p40 = scmp.eq.s32.totalorder %s20, 0
      %p41 = por %p39, %p40
      %p42 = scmp.ne.s32.totalorder %s28, %s29
      %p43 = scmp.eq.s32.totalorder %s21, 1
      %p44 = por %p42, %p43
      %p46 = scmp.ne.s32.totalorder %s29, %s45
      %p47 = scmp.eq.s32.totalorder %s21, 0
      %p48 = por %p46, %p47
      %s50 = sadd.s32 %s49, 1
      %p53 = scmp.eq.s32.totalorder %s15, 1
      %p54 = scmp.ne.s32.totalorder %s49, %s51
      %p55 = scmp.eq.s32.totalorder %s15, 0
      %p56 = por %p54, %p55
      %p57 = scmp.ne.s32.totalorder %s49, %s51
      %p58 = scmp.eq.s32.totalorder %s20, 1
      %p59 = por %p57, %p58
      %p60 = scmp.ne.s32.totalorder %s51, %s52
      %p61 = scmp.eq.s32.totalorder %s20, 0
      %p62 = por %p60, %p61
      %p63 = scmp.ne.s32.totalorder %s51, %s52
      %p64 = scmp.eq.s32.totalorder %s21, 1
      %p65 = por %p63, %p64
      %p67 = scmp.ne.s32.totalorder %s52, %s66
      %p68 = scmp.eq.s32.totalorder %s21, 0
      %p69 = por %p67, %p68
      %s71 = sadd.s32 %s70, 1
      %p74 = scmp.eq.s32.totalorder %s15, 1
      %p75 = scmp.ne.s32.totalorder %s70, %s72
      %p76 = scmp.eq.s32.totalorder %s15, 0
      %p77 = por %p75, %p76
      %p78 = scmp.ne.s32.totalorder %s70, %s72
      %p79 = scmp.eq.s32.totalorder %s20, 1
      %p80 = por %p78, %p79
      %p81 = scmp.ne.s32.totalorder %s72, %s73
      %p82 = scmp.eq.s32.totalorder %s20, 0
      %p83 = por %p81, %p82
      %p84 = scmp.ne.s32.totalorder %s72, %s73
      %p85 = scmp.eq.s32.totalorder %s21, 1
      %p86 = por %p84, %p85
      %p88 = scmp.ne.s32.totalorder %s73, %s87
      %p89 = scmp.eq.s32.totalorder %s21, 0
      %p90 = por %p88, %p89
      %s91 = ssub.s32 %s15, %s22
      %p92 = scmp.eq.s32.totalorder %s91, 0
      %s94 = sadd.s32 %s93, 1
      %s95 = scalar_select %p92, %s93, %s94
      %p98 = pneg %p92
      %p99 = scmp.eq.s32.totalorder %s15, 1
      %p100 = por %p98, %p99
      %p101 = scmp.ne.s32.totalorder %s93, %s96
      %p102 = scmp.eq.s32.totalorder %s15, 0
      %p103 = por %p101, %p102
      %p104 = scmp.ne.s32.totalorder %s93, %s96
      %p105 = scmp.eq.s32.totalorder %s20, 1
      %p106 = por %p104, %p105
      %p107 = scmp.ne.s32.totalorder %s96, %s97
      %p108 = scmp.eq.s32.totalorder %s20, 0
      %p109 = por %p107, %p108
      %p110 = scmp.ne.s32.totalorder %s96, %s97
      %p111 = scmp.eq.s32.totalorder %s21, 1
      %p112 = por %p110, %p111
      %p114 = scmp.ne.s32.totalorder %s97, %s113
      %p115 = scmp.eq.s32.totalorder %s21, 0
      %p116 = por %p114, %p115
      %s117 = ssub.s32 %s15, %s22
      %p118 = scmp.eq.s32.totalorder %s117, 0
      %s120 = sadd.s32 %s119, 1
      %s121 = scalar_select %p118, %s119, %s120
      %p124 = pneg %p118
      %p125 = scmp.eq.s32.totalorder %s15, 1
      %p126 = por %p124, %p125
      %p127 = scmp.ne.s32.totalorder %s119, %s122
      %p128 = scmp.eq.s32.totalorder %s15, 0
      %p129 = por %p127, %p128
      %p130 = scmp.ne.s32.totalorder %s119, %s122
      %p131 = scmp.eq.s32.totalorder %s20, 1
      %p132 = por %p130, %p131
      %p133 = scmp.ne.s32.totalorder %s122, %s123
      %p134 = scmp.eq.s32.totalorder %s20, 0
      %p135 = por %p133, %p134
      %p136 = scmp.ne.s32.totalorder %s122, %s123
      %p137 = scmp.eq.s32.totalorder %s21, 1
      %p138 = por %p136, %p137
      %p140 = scmp.ne.s32.totalorder %s123, %s139
      %p141 = scmp.eq.s32.totalorder %s21, 0
      %p142 = por %p140, %p141
      %s143 = ssub.s32 %s15, %s22
      %p144 = scmp.eq.s32.totalorder %s143, 0
      %s146 = sadd.s32 %s145, 1
      %s147 = scalar_select %p144, %s145, %s146
      %p150 = pneg %p144
      %p151 = scmp.eq.s32.totalorder %s15, 1
      %p152 = por %p150, %p151
      %p153 = scmp.ne.s32.totalorder %s145, %s148
      %p154 = scmp.eq.s32.totalorder %s15, 0
      %p155 = por %p153, %p154
      %p156 = scmp.ne.s32.totalorder %s145, %s148
      %p157 = scmp.eq.s32.totalorder %s20, 1
      %p158 = por %p156, %p157
      %p159 = scmp.ne.s32.totalorder %s148, %s149
      %p160 = scmp.eq.s32.totalorder %s20, 0
      %p161 = por %p159, %p160
      %p162 = scmp.ne.s32.totalorder %s148, %s149
      %p163 = scmp.eq.s32.totalorder %s21, 1
      %p164 = por %p162, %p163
      %p166 = scmp.ne.s32.totalorder %s149, %s165
      %p167 = scmp.eq.s32.totalorder %s21, 0
      %p168 = por %p166, %p167
      %p169 = scmp.le.s32.totalorder 1, %s15
      %p170 = scmp.lt.s32.totalorder %s15, 3
      %p171 = pnand %p169, %p170
      %p172 = pneg %p171
      // Predicated region
      $region9: #{_lambda_.9} parent=5 // pred_check
        _
      $region10: #{_lambda_.9} parent=5 // pred_check_branch
        %174 = sbr.rel (%p171) target = $region12
      $region11: #{_lambda_.9} parent=5 // pred_region
        %s175 = ssub.s32 %s15, 1
        // Predicated region
        $region13: #{_lambda_.9} parent=11 // pred_check
          %p176 = pneg %p62
        $region14: #{_lambda_.9} parent=11 // pred_check_branch
          %178 = sbr.rel (%p176) target = $region16
        $region15: #{_lambda_.9} parent=11 // pred_region
          _
        $region16: #{_lambda_.9} parent=11 // pred_fallthru
          _
        // Predicated region
        $region17: #{_lambda_.9} parent=11 // pred_check
          %p179 = pneg %p83
        $region18: #{_lambda_.9} parent=11 // pred_check_branch
          %181 = sbr.rel (%p179) target = $region20
        $region19: #{_lambda_.9} parent=11 // pred_region
          _
        $region20: #{_lambda_.9} parent=11 // pred_fallthru
          _
      $region12: #{_lambda_.9} parent=5 // pred_fallthru
        _
      %p182 = scmp.lt.s32.totalorder %s15, 2
      // Predicated region
      $region21: #{_lambda_.9} parent=5 // pred_check
        %p183 = pneg %p182
      $region22: #{_lambda_.9} parent=5 // pred_check_branch
        %185 = sbr.rel (%p183) target = $region24
      $region23: #{_lambda_.9} parent=5 // pred_region
        // Predicated region
        $region25: #{_lambda_.9} parent=23 // pred_check
          %p186 = pneg %p35
        $region26: #{_lambda_.9} parent=23 // pred_check_branch
          %188 = sbr.rel (%p186) target = $region28
        $region27: #{_lambda_.9} parent=23 // pred_region
          %p189 = scmp.lt.s32.totalorder %s15, 1
          %s190 = scalar_select %p189, %s15, 1
          %s191 = smul.addr %s190, 8
          %s192 = smul.addr %s191, 4
          %s193 = scalar_lea.vmem %s0, %s192
        $region28: #{_lambda_.9} parent=23 // pred_fallthru
          _
        // Predicated region
        $region29: #{_lambda_.9} parent=23 // pred_check
          %p194 = pneg %p103
        $region30: #{_lambda_.9} parent=23 // pred_check_branch
          %196 = sbr.rel (%p194) target = $region32
        $region31: #{_lambda_.9} parent=23 // pred_region
          %p197 = scmp.lt.s32.totalorder %s15, 1
          %s198 = scalar_select %p197, %s15, 1
          %s199 = smul.addr %s198, 8
          %s200 = smul.addr %s199, 4
          %s201 = scalar_lea.vmem %s3, %s200
        $region32: #{_lambda_.9} parent=23 // pred_fallthru
          _
      $region24: #{_lambda_.9} parent=5 // pred_fallthru
        _
      %p202 = scmp.le.s32.totalorder 1, %s15
      %p203 = scmp.lt.s32.totalorder %s15, 3
      %p204 = pnand %p202, %p203
      %p205 = pneg %p204
      // Predicated region
      $region33: #{_lambda_.9} parent=5 // pred_check
        _
      $region34: #{_lambda_.9} parent=5 // pred_check_branch
        %207 = sbr.rel (%p204) target = $region36
      $region35: #{_lambda_.9} parent=5 // pred_region
        %s208 = ssub.s32 %s15, 1
        %p209 = scmp.lt.s32.totalorder %s20, 1
        %s210 = scalar_select %p209, %s20, 1
        %s211 = smul.addr %s210, 8
        %s212 = smul.addr %s211, 4
        %s213 = scalar_lea.vmem %s0, %s212
        %p214 = pneg %p41
        %p215 = pneg %p38
        %p216 = pneg %p62
        %p217 = pneg %p59
        %p218 = pneg %p83
        %p219 = pneg %p80
        %p220 = scmp.lt.s32.totalorder %s20, 1
        %s221 = scalar_select %p220, %s20, 1
        %s222 = smul.addr %s221, 8
        %s223 = smul.addr %s222, 4
        %s224 = scalar_lea.vmem %s3, %s223
        %p225 = pneg %p109
        %p226 = pneg %p106
        %p227 = pneg %p135
        %p228 = pneg %p132
        %p229 = scmp.lt.s32.totalorder %s20, 1
        %s230 = scalar_select %p229, %s20, 1
        %s231 = smul.addr %s230, 8
        %s232 = smul.addr %s231, 4
        %s233 = scalar_lea.vmem %s4, %s232
        %p234 = pneg %p161
        %p235 = pneg %p158
        %s236 = sand.u32 %s148, 1
        %s237 = scalar_lea.sflag [#allocation4], %s236
        %s238 = sand.u32 %s148, 1
        %s239 = smul.addr %s238, 2
        %s240 = scalar_lea.vmem [#allocation3], %s239
        %p241 = scmp.lt.s32.totalorder %s20, 1
        %s242 = scalar_select %p241, %s20, 1
        %s243 = smul.addr %s242, 8
        %s244 = smul.addr %s243, 4
        %s245 = scalar_lea.vmem %s0, %s244
        %p246 = scmp.lt.s32.totalorder %s20, 1
        %s247 = scalar_select %p246, %s20, 1
        %s248 = smul.addr %s247, 8
        %s249 = smul.addr %s248, 4
        %s250 = scalar_lea.vmem %s3, %s249
        %p251 = scmp.lt.s32.totalorder %s20, 1
        %s252 = scalar_select %p251, %s20, 1
        %s253 = smul.addr %s252, 8
        %s254 = smul.addr %s253, 4
        %s255 = scalar_lea.vmem %s4, %s254
        %vm257 = vcmask 60416
        %258 = vst.msk [vmem:[#allocation2] sm:$0xf] %vm257, 0
        %vm259 = vcmask 57344
        %260 = vst.msk [vmem:[#allocation2 + $0x4] sm:$0x1] %vm259, 0
        %261 = vst.msk [vmem:[#allocation2 + $0x8] sm:$0xf] %vm257, 0
        %262 = vst.msk [vmem:[#allocation2 + $0xc] sm:$0x1] %vm259, 0
        %263 = vst.msk [vmem:[#allocation2 + $0x10] sm:$0xf] %vm257, 0
        %264 = vst.msk [vmem:[#allocation2 + $0x14] sm:$0x1] %vm259, 0
        %265 = vst.msk [vmem:[#allocation2 + $0x18] sm:$0xf] %vm257, 0
        %266 = vst.msk [vmem:[#allocation2 + $0x1c] sm:$0x1] %vm259, 0
        %267 = vst.msk [vmem:[#allocation2 + $0x20] sm:$0xf] %vm257, 0
        %268 = vst.msk [vmem:[#allocation2 + $0x24] sm:$0x1] %vm259, 0
        %269 = vst.msk [vmem:[#allocation2 + $0x28] sm:$0xf] %vm257, 0
        %270 = vst.msk [vmem:[#allocation2 + $0x2c] sm:$0x1] %vm259, 0
        %271 = vst.msk [vmem:[#allocation2 + $0x30] sm:$0xf] %vm257, 0
        %272 = vst.msk [vmem:[#allocation2 + $0x34] sm:$0x1] %vm259, 0
        %273 = vst.msk [vmem:[#allocation2 + $0x38] sm:$0xf] %vm257, 0
        %274 = vst.msk [vmem:[#allocation2 + $0x3c] sm:$0x1] %vm259, 0
        %275 = vst.msk [vmem:[#allocation2 + $0x40] sm:$0xf] %vm257, 0
        %276 = vst.msk [vmem:[#allocation2 + $0x44] sm:$0x1] %vm259, 0
        %277 = vst.msk [vmem:[#allocation2 + $0x48] sm:$0xf] %vm257, 0
        %278 = vst.msk [vmem:[#allocation2 + $0x4c] sm:$0x1] %vm259, 0
        %v279 = vld [vmem:[%s1] sm:$0x1]
        %v280 = vld [vmem:[%s1 + $0x1] sm:$0x1]
        %v281 = vld [vmem:[%s245] sm:$0xf]
        %v282 = vld [vmem:[%s245 + $0x4] sm:$0xf]
        %v283 = vld [vmem:[%s245 + $0x8] sm:$0xf]
        %v284 = vld [vmem:[%s245 + $0xc] sm:$0xf]
        %v285 = vld [vmem:[%s245 + $0x10] sm:$0xf]
        %v286 = vld [vmem:[%s245 + $0x14] sm:$0xf]
        %v287 = vld [vmem:[%s245 + $0x18] sm:$0xf]
        %v288 = vld [vmem:[%s245 + $0x1c] sm:$0xf]
        %v289 = vunpack.c.l.bf16 %v281
        %v290 = vunpack.c.l.bf16 %v282
        %v291 = vunpack.c.l.bf16 %v283
        %v292 = vunpack.c.l.bf16 %v284
        %v293 = vunpack.c.l.bf16 %v285
        %v294 = vunpack.c.l.bf16 %v286
        %v295 = vunpack.c.l.bf16 %v287
        %v296 = vunpack.c.l.bf16 %v288
        %v297 = vperm.slane %v279, 0
        %v298 = vmul.f32 %v289, %v297
        %v299 = vmul.f32 %v290, %v297
        %v300 = vmul.f32 %v291, %v297
        %v301 = vmul.f32 %v292, %v297
        %v302 = vmul.f32 %v293, %v297
        %v303 = vmul.f32 %v294, %v297
        %v304 = vmul.f32 %v295, %v297
        %v305 = vmul.f32 %v296, %v297
        %v306 = vperm.slane %v280, 0
        %v307 = vadd.f32 %v298, %v306
        %v308 = vadd.f32 %v299, %v306
        %v309 = vadd.f32 %v300, %v306
        %v310 = vadd.f32 %v301, %v306
        %v311 = vadd.f32 %v302, %v306
        %v312 = vadd.f32 %v303, %v306
        %v313 = vadd.f32 %v304, %v306
        %v314 = vadd.f32 %v305, %v306
        %v315 = vmax.f32 %v307, 0.0
        %v316 = vmax.f32 %v308, 0.0
        %v317 = vmax.f32 %v309, 0.0
        %v318 = vmax.f32 %v310, 0.0
        %v319 = vmax.f32 %v311, 0.0
        %v320 = vmax.f32 %v312, 0.0
        %v321 = vmax.f32 %v313, 0.0
        %v322 = vmax.f32 %v314, 0.0
        %v323 = vpack.c.bf16 %v315, %v315
        %v324 = vpack.c.bf16 %v316, %v316
        %v325 = vpack.c.bf16 %v317, %v317
        %v326 = vpack.c.bf16 %v318, %v318
        %v327 = vpack.c.bf16 %v319, %v319
        %v328 = vpack.c.bf16 %v320, %v320
        %v329 = vpack.c.bf16 %v321, %v321
        %v330 = vpack.c.bf16 %v322, %v322
        %v332 = vshrl.u32 %v323, 16
        %v334 = vrot.slane %v332, 7
        %v335 = vshll.u32 %v323, 16
        %v337 = vor.u32 %v334, %v335
        %v338 = vrot.slane %v334, 4
        %v340 = vshrl.u32 %v324, 16
        %v342 = vrot.slane %v340, 7
        %v343 = vshll.u32 %v324, 16
        %v345 = vor.u32 %v342, %v343
        %v346 = vrot.slane %v342, 4
        %v348 = vshrl.u32 %v325, 16
        %v350 = vrot.slane %v348, 7
        %v351 = vshll.u32 %v325, 16
        %v353 = vor.u32 %v350, %v351
        %v354 = vrot.slane %v350, 4
        %v356 = vshrl.u32 %v326, 16
        %v358 = vrot.slane %v356, 7
        %v359 = vshll.u32 %v326, 16
        %v361 = vor.u32 %v358, %v359
        %v362 = vrot.slane %v358, 4
        %v364 = vshrl.u32 %v327, 16
        %v366 = vrot.slane %v364, 7
        %v367 = vshll.u32 %v327, 16
        %v369 = vor.u32 %v366, %v367
        %v370 = vrot.slane %v366, 4
        %v372 = vshrl.u32 %v328, 16
        %v374 = vrot.slane %v372, 7
        %v375 = vshll.u32 %v328, 16
        %v377 = vor.u32 %v374, %v375
        %v378 = vrot.slane %v374, 4
        %v380 = vshrl.u32 %v329, 16
        %v382 = vrot.slane %v380, 7
        %v383 = vshll.u32 %v329, 16
        %v385 = vor.u32 %v382, %v383
        %v386 = vrot.slane %v382, 4
        %v388 = vshrl.u32 %v330, 16
        %v390 = vrot.slane %v388, 7
        %v391 = vshll.u32 %v330, 16
        %v393 = vor.u32 %v390, %v391
        %v394 = vrot.slane %v390, 4
        %s411 = scalar_lea.vmem [#allocation2], 8
        %vm412 = vcmask 60416
        %vm413 = vsmask.f32 7938
        %vm414 = vmand %vm412, %vm413
        %v415 = vld [vmem:[%s411] sm:$0xf]
        %v416 = vsel %vm414, %v337, %v415
        %417 = vst [vmem:[%s411] sm:$0xf] %v416
        %vm418 = vcmask 57344
        %vm419 = vsmask.f32 256
        %vm420 = vmand %vm418, %vm419
        %v421 = vld [vmem:[%s411 + $0x4] sm:$0x1]
        %v422 = vsel %vm420, %v338, %v421
        %423 = vst [vmem:[%s411 + $0x4] sm:$0x1] %v422
        %v424 = vld [vmem:[%s411 + $0x8] sm:$0xf]
        %v425 = vsel %vm414, %v345, %v424
        %426 = vst [vmem:[%s411 + $0x8] sm:$0xf] %v425
        %v427 = vld [vmem:[%s411 + $0xc] sm:$0x1]
        %v428 = vsel %vm420, %v346, %v427
        %429 = vst [vmem:[%s411 + $0xc] sm:$0x1] %v428
        %v430 = vld [vmem:[%s411 + $0x10] sm:$0xf]
        %v431 = vsel %vm414, %v353, %v430
        %432 = vst [vmem:[%s411 + $0x10] sm:$0xf] %v431
        %v433 = vld [vmem:[%s411 + $0x14] sm:$0x1]
        %v434 = vsel %vm420, %v354, %v433
        %435 = vst [vmem:[%s411 + $0x14] sm:$0x1] %v434
        %v436 = vld [vmem:[%s411 + $0x18] sm:$0xf]
        %v437 = vsel %vm414, %v361, %v436
        %438 = vst [vmem:[%s411 + $0x18] sm:$0xf] %v437
        %v439 = vld [vmem:[%s411 + $0x1c] sm:$0x1]
        %v440 = vsel %vm420, %v362, %v439
        %441 = vst [vmem:[%s411 + $0x1c] sm:$0x1] %v440
        %v442 = vld [vmem:[%s411 + $0x20] sm:$0xf]
        %v443 = vsel %vm414, %v369, %v442
        %444 = vst [vmem:[%s411 + $0x20] sm:$0xf] %v443
        %v445 = vld [vmem:[%s411 + $0x24] sm:$0x1]
        %v446 = vsel %vm420, %v370, %v445
        %447 = vst [vmem:[%s411 + $0x24] sm:$0x1] %v446
        %v448 = vld [vmem:[%s411 + $0x28] sm:$0xf]
        %v449 = vsel %vm414, %v377, %v448
        %450 = vst [vmem:[%s411 + $0x28] sm:$0xf] %v449
        %v451 = vld [vmem:[%s411 + $0x2c] sm:$0x1]
        %v452 = vsel %vm420, %v378, %v451
        %453 = vst [vmem:[%s411 + $0x2c] sm:$0x1] %v452
        %v454 = vld [vmem:[%s411 + $0x30] sm:$0xf]
        %v455 = vsel %vm414, %v385, %v454
        %456 = vst [vmem:[%s411 + $0x30] sm:$0xf] %v455
        %v457 = vld [vmem:[%s411 + $0x34] sm:$0x1]
        %v458 = vsel %vm420, %v386, %v457
        %459 = vst [vmem:[%s411 + $0x34] sm:$0x1] %v458
        %v460 = vld [vmem:[%s411 + $0x38] sm:$0xf]
        %v461 = vsel %vm414, %v393, %v460
        %462 = vst [vmem:[%s411 + $0x38] sm:$0xf] %v461
        %v463 = vld [vmem:[%s411 + $0x3c] sm:$0x1]
        %v464 = vsel %vm420, %v394, %v463
        %465 = vst [vmem:[%s411 + $0x3c] sm:$0x1] %v464
        %v466 = vld [vmem:[#allocation2] sm:$0xf]
        %v467 = vld [vmem:[#allocation2 + $0x8] sm:$0xf]
        %v468 = vld [vmem:[#allocation2 + $0x10] sm:$0xf]
        %v469 = vld [vmem:[#allocation2 + $0x18] sm:$0xf]
        %v470 = vld [vmem:[#allocation2 + $0x20] sm:$0xf]
        %v471 = vld [vmem:[#allocation2 + $0x28] sm:$0xf]
        %v472 = vld [vmem:[#allocation2 + $0x30] sm:$0xf]
        %v473 = vld [vmem:[#allocation2 + $0x38] sm:$0xf]
        %v474 = vld [vmem:[%s2] sm:$0xf]
        %v475 = vld [vmem:[#allocation2 + $0x4] sm:$0x1]
        %v476 = vld [vmem:[#allocation2 + $0xc] sm:$0x1]
        %v477 = vld [vmem:[#allocation2 + $0x14] sm:$0x1]
        %v478 = vld [vmem:[#allocation2 + $0x1c] sm:$0x1]
        %v479 = vld [vmem:[#allocation2 + $0x24] sm:$0x1]
        %v480 = vld [vmem:[#allocation2 + $0x2c] sm:$0x1]
        %v481 = vld [vmem:[#allocation2 + $0x34] sm:$0x1]
        %v482 = vld [vmem:[#allocation2 + $0x3c] sm:$0x1]
        %vm483 = vsmask.f32 3328
        %vm484 = vsmask.f32 7440
        %vm485 = vmor %vm483, %vm484
        %v487 = vshrl.u32 %v466, 16
        %v489 = vrot.slane %v487, 4
        %v490 = vshll.u32 %v466, 16
        %v492 = vrot.slane %v490, 5
        %v493 = vor.u32 %v489, %v492
        %v494 = vrot.slane %v493, 4
        %v496 = vshll.u32 %v475, 16
        %v498 = vrot.slane %v496, 5
        %v499 = vsel %vm485, %v494, %v498
        %v501 = vshrl.u32 %v467, 16
        %v503 = vrot.slane %v501, 4
        %v504 = vshll.u32 %v467, 16
        %v506 = vrot.slane %v504, 5
        %v507 = vor.u32 %v503, %v506
        %v508 = vrot.slane %v507, 4
        %v510 = vshll.u32 %v476, 16
        %v512 = vrot.slane %v510, 5
        %v513 = vsel %vm485, %v508, %v512
        %v515 = vshrl.u32 %v468, 16
        %v517 = vrot.slane %v515, 4
        %v518 = vshll.u32 %v468, 16
        %v520 = vrot.slane %v518, 5
        %v521 = vor.u32 %v517, %v520
        %v522 = vrot.slane %v521, 4
        %v524 = vshll.u32 %v477, 16
        %v526 = vrot.slane %v524, 5
        %v527 = vsel %vm485, %v522, %v526
        %v529 = vshrl.u32 %v469, 16
        %v531 = vrot.slane %v529, 4
        %v532 = vshll.u32 %v469, 16
        %v534 = vrot.slane %v532, 5
        %v535 = vor.u32 %v531, %v534
        %v536 = vrot.slane %v535, 4
        %v538 = vshll.u32 %v478, 16
        %v540 = vrot.slane %v538, 5
        %v541 = vsel %vm485, %v536, %v540
        %v543 = vshrl.u32 %v470, 16
        %v545 = vrot.slane %v543, 4
        %v546 = vshll.u32 %v470, 16
        %v548 = vrot.slane %v546, 5
        %v549 = vor.u32 %v545, %v548
        %v550 = vrot.slane %v549, 4
        %v552 = vshll.u32 %v479, 16
        %v554 = vrot.slane %v552, 5
        %v555 = vsel %vm485, %v550, %v554
        %v557 = vshrl.u32 %v471, 16
        %v559 = vrot.slane %v557, 4
        %v560 = vshll.u32 %v471, 16
        %v562 = vrot.slane %v560, 5
        %v563 = vor.u32 %v559, %v562
        %v564 = vrot.slane %v563, 4
        %v566 = vshll.u32 %v480, 16
        %v568 = vrot.slane %v566, 5
        %v569 = vsel %vm485, %v564, %v568
        %v571 = vshrl.u32 %v472, 16
        %v573 = vrot.slane %v571, 4
        %v574 = vshll.u32 %v472, 16
        %v576 = vrot.slane %v574, 5
        %v577 = vor.u32 %v573, %v576
        %v578 = vrot.slane %v577, 4
        %v580 = vshll.u32 %v481, 16
        %v582 = vrot.slane %v580, 5
        %v583 = vsel %vm485, %v578, %v582
        %v585 = vshrl.u32 %v473, 16
        %v587 = vrot.slane %v585, 4
        %v588 = vshll.u32 %v473, 16
        %v590 = vrot.slane %v588, 5
        %v591 = vor.u32 %v587, %v590
        %v592 = vrot.slane %v591, 4
        %v594 = vshll.u32 %v482, 16
        %v596 = vrot.slane %v594, 5
        %v597 = vsel %vm485, %v592, %v596
        %s598 = scalar_lea.vmem %s2, 4
        %v599 = vld [vmem:[%s598] sm:$0xf]
        %v600 = vunpack.c.l.b16 %v499
        %v601 = vunpack.c.l.b16 %v513
        %v602 = vunpack.c.l.b16 %v527
        %v603 = vunpack.c.l.b16 %v541
        %v604 = vunpack.c.l.b16 %v555
        %v605 = vunpack.c.l.b16 %v569
        %v606 = vunpack.c.l.b16 %v583
        %v607 = vunpack.c.l.b16 %v597
        %v608 = vpack.c.b16 %v601, %v600
        %v609 = vpack.c.b16 %v603, %v602
        %v610 = vpack.c.b16 %v605, %v604
        %v611 = vpack.c.b16 %v607, %v606
        %vm612 = vcmask 64512
        %v614 = vsel %vm612, %v608, 0
        %v617 = vsel %vm612, %v609, 0
        %v620 = vsel %vm612, %v610, 0
        %v623 = vsel %vm612, %v611, 0
        %vm625 = vcmask 1043456
        %v627 = vsel %vm625, %v599, 0
        %629 = vmatpush.bf16.msra.mxu0 0
        %630 = vmatpush.bf16.msra.mxu0 0
        %631 = vmatpush.bf16.msra.mxu0 0
        %632 = vmatpush.bf16.msra.mxu0 0
        %633 = vmatpush.bf16.msra.mxu0 0
        %634 = vmatpush.bf16.msra.mxu0 0
        %635 = vmatpush.bf16.msra.mxu0 0
        %636 = vmatpush.bf16.msra.mxu0 %v627
        %637 = vmatmul.bf16.gmra.mxu0 %v614
        %v638 = vpop.f32.mrf.mxu0
        %v639 = vadd.f32 0.0, %v638
        %v640 = vpop.f32.mrf.mxu0
        %v641 = vadd.f32 0.0, %v640
        %642 = vmatmul.bf16.gmra.mxu0 %v617
        %v643 = vpop.f32.mrf.mxu0
        %v644 = vadd.f32 0.0, %v643
        %v645 = vpop.f32.mrf.mxu0
        %v646 = vadd.f32 0.0, %v645
        %647 = vmatmul.bf16.gmra.mxu0 %v620
        %v648 = vpop.f32.mrf.mxu0
        %v649 = vadd.f32 0.0, %v648
        %v650 = vpop.f32.mrf.mxu0
        %v651 = vadd.f32 0.0, %v650
        %652 = vmatmul.bf16.gmra.mxu0 %v623
        %v653 = vpop.f32.mrf.mxu0
        %v654 = vadd.f32 0.0, %v653
        %v655 = vpop.f32.mrf.mxu0
        %v656 = vadd.f32 0.0, %v655
        %657 = vdwg.mxu0
        %v666 = vunpack.c.l.b16 %v466
        %v667 = vunpack.c.l.b16 %v467
        %v668 = vunpack.c.l.b16 %v468
        %v669 = vunpack.c.l.b16 %v469
        %v670 = vunpack.c.l.b16 %v470
        %v671 = vunpack.c.l.b16 %v471
        %v672 = vunpack.c.l.b16 %v472
        %v673 = vunpack.c.l.b16 %v473
        %v674 = vpack.c.b16 %v667, %v666
        %v675 = vpack.c.b16 %v669, %v668
        %v676 = vpack.c.b16 %v671, %v670
        %v677 = vpack.c.b16 %v673, %v672
        %v679 = vsel %vm612, %v674, 0
        %v682 = vsel %vm612, %v675, 0
        %v685 = vsel %vm612, %v676, 0
        %v688 = vsel %vm612, %v677, 0
        %v691 = vsel %vm625, %v474, 0
        %693 = vmatpush.bf16.msra.mxu0 0
        %694 = vmatpush.bf16.msra.mxu0 0
        %695 = vmatpush.bf16.msra.mxu0 0
        %696 = vmatpush.bf16.msra.mxu0 0
        %697 = vmatpush.bf16.msra.mxu0 0
        %698 = vmatpush.bf16.msra.mxu0 0
        %699 = vmatpush.bf16.msra.mxu0 0
        %700 = vmatpush.bf16.msra.mxu0 %v691
        %701 = vmatmul.bf16.gmra.mxu0 %v679
        %v702 = vpop.f32.mrf.mxu0
        %v703 = vadd.f32 %v639, %v702
        %v704 = vpop.f32.mrf.mxu0
        %v705 = vadd.f32 %v641, %v704
        %706 = vmatmul.bf16.gmra.mxu0 %v682
        %v707 = vpop.f32.mrf.mxu0
        %v708 = vadd.f32 %v644, %v707
        %v709 = vpop.f32.mrf.mxu0
        %v710 = vadd.f32 %v646, %v709
        %711 = vmatmul.bf16.gmra.mxu0 %v685
        %v712 = vpop.f32.mrf.mxu0
        %v713 = vadd.f32 %v649, %v712
        %v714 = vpop.f32.mrf.mxu0
        %v715 = vadd.f32 %v651, %v714
        %716 = vmatmul.bf16.gmra.mxu0 %v688
        %v717 = vpop.f32.mrf.mxu0
        %v718 = vadd.f32 %v654, %v717
        %v719 = vpop.f32.mrf.mxu0
        %v720 = vadd.f32 %v656, %v719
        %721 = vdwg.mxu0
        %v722 = vld [vmem:[#allocation2] sm:$0xe]
        %v723 = vld [vmem:[#allocation2 + $0x8] sm:$0xe]
        %v724 = vld [vmem:[#allocation2 + $0x10] sm:$0xe]
        %v725 = vld [vmem:[#allocation2 + $0x18] sm:$0xe]
        %v726 = vld [vmem:[#allocation2 + $0x20] sm:$0xe]
        %v727 = vld [vmem:[#allocation2 + $0x28] sm:$0xe]
        %v728 = vld [vmem:[#allocation2 + $0x30] sm:$0xe]
        %v729 = vld [vmem:[#allocation2 + $0x38] sm:$0xe]
        %vm746 = vcmask 1042432
        %vm747 = vcmask 1046532
        %vm748 = vmor %vm746, %vm747
        %v749 = vrot.slane %v722, 5
        %v750 = vrot.slane %v749, 4
        %v751 = vrot.slane %v475, 5
        %v752 = vsel %vm748, %v750, %v751
        %v753 = vrot.slane %v723, 5
        %v754 = vrot.slane %v753, 4
        %v755 = vrot.slane %v476, 5
        %v756 = vsel %vm748, %v754, %v755
        %v757 = vrot.slane %v724, 5
        %v758 = vrot.slane %v757, 4
        %v759 = vrot.slane %v477, 5
        %v760 = vsel %vm748, %v758, %v759
        %v761 = vrot.slane %v725, 5
        %v762 = vrot.slane %v761, 4
        %v763 = vrot.slane %v478, 5
        %v764 = vsel %vm748, %v762, %v763
        %v765 = vrot.slane %v726, 5
        %v766 = vrot.slane %v765, 4
        %v767 = vrot.slane %v479, 5
        %v768 = vsel %vm748, %v766, %v767
        %v769 = vrot.slane %v727, 5
        %v770 = vrot.slane %v769, 4
        %v771 = vrot.slane %v480, 5
        %v772 = vsel %vm748, %v770, %v771
        %v773 = vrot.slane %v728, 5
        %v774 = vrot.slane %v773, 4
        %v775 = vrot.slane %v481, 5
        %v776 = vsel %vm748, %v774, %v775
        %v777 = vrot.slane %v729, 5
        %v778 = vrot.slane %v777, 4
        %v779 = vrot.slane %v482, 5
        %v780 = vsel %vm748, %v778, %v779
        %s781 = scalar_lea.vmem %s2, 8
        %v782 = vld [vmem:[%s781] sm:$0xf]
        %v783 = vunpack.c.l.b16 %v752
        %v784 = vunpack.c.l.b16 %v756
        %v785 = vunpack.c.l.b16 %v760
        %v786 = vunpack.c.l.b16 %v764
        %v787 = vunpack.c.l.b16 %v768
        %v788 = vunpack.c.l.b16 %v772
        %v789 = vunpack.c.l.b16 %v776
        %v790 = vunpack.c.l.b16 %v780
        %v791 = vpack.c.b16 %v784, %v783
        %v792 = vpack.c.b16 %v786, %v785
        %v793 = vpack.c.b16 %v788, %v787
        %v794 = vpack.c.b16 %v790, %v789
        %v796 = vsel %vm612, %v791, 0
        %v799 = vsel %vm612, %v792, 0
        %v802 = vsel %vm612, %v793, 0
        %v805 = vsel %vm612, %v794, 0
        %v808 = vsel %vm625, %v782, 0
        %810 = vmatpush.bf16.msra.mxu0 0
        %811 = vmatpush.bf16.msra.mxu0 0
        %812 = vmatpush.bf16.msra.mxu0 0
        %813 = vmatpush.bf16.msra.mxu0 0
        %814 = vmatpush.bf16.msra.mxu0 0
        %815 = vmatpush.bf16.msra.mxu0 0
        %816 = vmatpush.bf16.msra.mxu0 0
        %817 = vmatpush.bf16.msra.mxu0 %v808
        %818 = vmatmul.bf16.gmra.mxu0 %v796
        %v819 = vpop.f32.mrf.mxu0
        %v820 = vadd.f32 0.0, %v819
        %v821 = vpop.f32.mrf.mxu0
        %v822 = vadd.f32 0.0, %v821
        %823 = vmatmul.bf16.gmra.mxu0 %v799
        %v824 = vpop.f32.mrf.mxu0
        %v825 = vadd.f32 0.0, %v824
        %v826 = vpop.f32.mrf.mxu0
        %v827 = vadd.f32 0.0, %v826
        %828 = vmatmul.bf16.gmra.mxu0 %v802
        %v829 = vpop.f32.mrf.mxu0
        %v830 = vadd.f32 0.0, %v829
        %v831 = vpop.f32.mrf.mxu0
        %v832 = vadd.f32 0.0, %v831
        %833 = vmatmul.bf16.gmra.mxu0 %v805
        %v834 = vpop.f32.mrf.mxu0
        %v835 = vadd.f32 0.0, %v834
        %v836 = vpop.f32.mrf.mxu0
        %v837 = vadd.f32 0.0, %v836
        %838 = vdwg.mxu0
        %v839 = vadd.f32 %v703, %v820
        %v840 = vadd.f32 %v705, %v822
        %v841 = vadd.f32 %v708, %v825
        %v842 = vadd.f32 %v710, %v827
        %v843 = vadd.f32 %v713, %v830
        %v844 = vadd.f32 %v715, %v832
        %v845 = vadd.f32 %v718, %v835
        %v846 = vadd.f32 %v720, %v837
        %v847 = vld [vmem:[%s411] sm:$0xf]
        %v848 = vld [vmem:[%s411 + $0x8] sm:$0xf]
        %v849 = vld [vmem:[%s411 + $0x10] sm:$0xf]
        %v850 = vld [vmem:[%s411 + $0x18] sm:$0xf]
        %v851 = vld [vmem:[%s411 + $0x20] sm:$0xf]
        %v852 = vld [vmem:[%s411 + $0x28] sm:$0xf]
        %v853 = vld [vmem:[%s411 + $0x30] sm:$0xf]
        %v854 = vld [vmem:[%s411 + $0x38] sm:$0xf]
        %s855 = scalar_lea.vmem %s2, 12
        %v856 = vld [vmem:[%s855] sm:$0xf]
        %v865 = vunpack.c.l.b16 %v847
        %v866 = vunpack.c.l.b16 %v848
        %v867 = vunpack.c.l.b16 %v849
        %v868 = vunpack.c.l.b16 %v850
        %v869 = vunpack.c.l.b16 %v851
        %v870 = vunpack.c.l.b16 %v852
        %v871 = vunpack.c.l.b16 %v853
        %v872 = vunpack.c.l.b16 %v854
        %v873 = vpack.c.b16 %v866, %v865
        %v874 = vpack.c.b16 %v868, %v867
        %v875 = vpack.c.b16 %v870, %v869
        %v876 = vpack.c.b16 %v872, %v871
        %v878 = vsel %vm612, %v873, 0
        %v881 = vsel %vm612, %v874, 0
        %v884 = vsel %vm612, %v875, 0
        %v887 = vsel %vm612, %v876, 0
        %v890 = vsel %vm625, %v856, 0
        %892 = vmatpush.bf16.msra.mxu0 0
        %893 = vmatpush.bf16.msra.mxu0 0
        %894 = vmatpush.bf16.msra.mxu0 0
        %895 = vmatpush.bf16.msra.mxu0 0
        %896 = vmatpush.bf16.msra.mxu0 0
        %897 = vmatpush.bf16.msra.mxu0 0
        %898 = vmatpush.bf16.msra.mxu0 0
        %899 = vmatpush.bf16.msra.mxu0 %v890
        %900 = vmatmul.bf16.gmra.mxu0 %v878
        %v901 = vpop.f32.mrf.mxu0
        %v902 = vadd.f32 0.0, %v901
        %v903 = vpop.f32.mrf.mxu0
        %v904 = vadd.f32 0.0, %v903
        %905 = vmatmul.bf16.gmra.mxu0 %v881
        %v906 = vpop.f32.mrf.mxu0
        %v907 = vadd.f32 0.0, %v906
        %v908 = vpop.f32.mrf.mxu0
        %v909 = vadd.f32 0.0, %v908
        %910 = vmatmul.bf16.gmra.mxu0 %v884
        %v911 = vpop.f32.mrf.mxu0
        %v912 = vadd.f32 0.0, %v911
        %v913 = vpop.f32.mrf.mxu0
        %v914 = vadd.f32 0.0, %v913
        %915 = vmatmul.bf16.gmra.mxu0 %v887
        %v916 = vpop.f32.mrf.mxu0
        %v917 = vadd.f32 0.0, %v916
        %v918 = vpop.f32.mrf.mxu0
        %v919 = vadd.f32 0.0, %v918
        %920 = vdwg.mxu0
        %v921 = vadd.f32 %v839, %v902
        %v922 = vadd.f32 %v840, %v904
        %v923 = vadd.f32 %v841, %v907
        %v924 = vadd.f32 %v842, %v909
        %v925 = vadd.f32 %v843, %v912
        %v926 = vadd.f32 %v844, %v914
        %v927 = vadd.f32 %v845, %v917
        %v928 = vadd.f32 %v846, %v919
        %v929 = vld [vmem:[%s411] sm:$0xf]
        %v930 = vld [vmem:[%s411 + $0x4] sm:$0x1]
        %v931 = vld [vmem:[%s411 + $0x8] sm:$0xf]
        %v932 = vld [vmem:[%s411 + $0xc] sm:$0x1]
        %v933 = vld [vmem:[%s411 + $0x10] sm:$0xf]
        %v934 = vld [vmem:[%s411 + $0x14] sm:$0x1]
        %v935 = vld [vmem:[%s411 + $0x18] sm:$0xf]
        %v936 = vld [vmem:[%s411 + $0x1c] sm:$0x1]
        %v937 = vld [vmem:[%s411 + $0x20] sm:$0xf]
        %v938 = vld [vmem:[%s411 + $0x24] sm:$0x1]
        %v939 = vld [vmem:[%s411 + $0x28] sm:$0xf]
        %v940 = vld [vmem:[%s411 + $0x2c] sm:$0x1]
        %v941 = vld [vmem:[%s411 + $0x30] sm:$0xf]
        %v942 = vld [vmem:[%s411 + $0x34] sm:$0x1]
        %v943 = vld [vmem:[%s411 + $0x38] sm:$0xf]
        %v944 = vld [vmem:[%s411 + $0x3c] sm:$0x1]
        %v946 = vshrl.u32 %v929, 16
        %v948 = vrot.slane %v946, 4
        %v949 = vshll.u32 %v929, 16
        %v951 = vrot.slane %v949, 5
        %v952 = vor.u32 %v948, %v951
        %v953 = vrot.slane %v952, 4
        %v955 = vshll.u32 %v930, 16
        %v957 = vrot.slane %v955, 5
        %v958 = vsel %vm485, %v953, %v957
        %v960 = vshrl.u32 %v931, 16
        %v962 = vrot.slane %v960, 4
        %v963 = vshll.u32 %v931, 16
        %v965 = vrot.slane %v963, 5
        %v966 = vor.u32 %v962, %v965
        %v967 = vrot.slane %v966, 4
        %v969 = vshll.u32 %v932, 16
        %v971 = vrot.slane %v969, 5
        %v972 = vsel %vm485, %v967, %v971
        %v974 = vshrl.u32 %v933, 16
        %v976 = vrot.slane %v974, 4
        %v977 = vshll.u32 %v933, 16
        %v979 = vrot.slane %v977, 5
        %v980 = vor.u32 %v976, %v979
        %v981 = vrot.slane %v980, 4
        %v983 = vshll.u32 %v934, 16
        %v985 = vrot.slane %v983, 5
        %v986 = vsel %vm485, %v981, %v985
        %v988 = vshrl.u32 %v935, 16
        %v990 = vrot.slane %v988, 4
        %v991 = vshll.u32 %v935, 16
        %v993 = vrot.slane %v991, 5
        %v994 = vor.u32 %v990, %v993
        %v995 = vrot.slane %v994, 4
        %v997 = vshll.u32 %v936, 16
        %v999 = vrot.slane %v997, 5
        %v1000 = vsel %vm485, %v995, %v999
        %v1002 = vshrl.u32 %v937, 16
        %v1004 = vrot.slane %v1002, 4
        %v1005 = vshll.u32 %v937, 16
        %v1007 = vrot.slane %v1005, 5
        %v1008 = vor.u32 %v1004, %v1007
        %v1009 = vrot.slane %v1008, 4
        %v1011 = vshll.u32 %v938, 16
        %v1013 = vrot.slane %v1011, 5
        %v1014 = vsel %vm485, %v1009, %v1013
        %v1016 = vshrl.u32 %v939, 16
        %v1018 = vrot.slane %v1016, 4
        %v1019 = vshll.u32 %v939, 16
        %v1021 = vrot.slane %v1019, 5
        %v1022 = vor.u32 %v1018, %v1021
        %v1023 = vrot.slane %v1022, 4
        %v1025 = vshll.u32 %v940, 16
        %v1027 = vrot.slane %v1025, 5
        %v1028 = vsel %vm485, %v1023, %v1027
        %v1030 = vshrl.u32 %v941, 16
        %v1032 = vrot.slane %v1030, 4
        %v1033 = vshll.u32 %v941, 16
        %v1035 = vrot.slane %v1033, 5
        %v1036 = vor.u32 %v1032, %v1035
        %v1037 = vrot.slane %v1036, 4
        %v1039 = vshll.u32 %v942, 16
        %v1041 = vrot.slane %v1039, 5
        %v1042 = vsel %vm485, %v1037, %v1041
        %v1044 = vshrl.u32 %v943, 16
        %v1046 = vrot.slane %v1044, 4
        %v1047 = vshll.u32 %v943, 16
        %v1049 = vrot.slane %v1047, 5
        %v1050 = vor.u32 %v1046, %v1049
        %v1051 = vrot.slane %v1050, 4
        %v1053 = vshll.u32 %v944, 16
        %v1055 = vrot.slane %v1053, 5
        %v1056 = vsel %vm485, %v1051, %v1055
        %s1057 = scalar_lea.vmem %s2, 16
        %v1058 = vld [vmem:[%s1057] sm:$0xf]
        %v1059 = vunpack.c.l.b16 %v958
        %v1060 = vunpack.c.l.b16 %v972
        %v1061 = vunpack.c.l.b16 %v986
        %v1062 = vunpack.c.l.b16 %v1000
        %v1063 = vunpack.c.l.b16 %v1014
        %v1064 = vunpack.c.l.b16 %v1028
        %v1065 = vunpack.c.l.b16 %v1042
        %v1066 = vunpack.c.l.b16 %v1056
        %v1067 = vpack.c.b16 %v1060, %v1059
        %v1068 = vpack.c.b16 %v1062, %v1061
        %v1069 = vpack.c.b16 %v1064, %v1063
        %v1070 = vpack.c.b16 %v1066, %v1065
        %v1072 = vsel %vm612, %v1067, 0
        %v1075 = vsel %vm612, %v1068, 0
        %v1078 = vsel %vm612, %v1069, 0
        %v1081 = vsel %vm612, %v1070, 0
        %v1084 = vsel %vm625, %v1058, 0
        %1086 = vmatpush.bf16.msra.mxu0 0
        %1087 = vmatpush.bf16.msra.mxu0 0
        %1088 = vmatpush.bf16.msra.mxu0 0
        %1089 = vmatpush.bf16.msra.mxu0 0
        %1090 = vmatpush.bf16.msra.mxu0 0
        %1091 = vmatpush.bf16.msra.mxu0 0
        %1092 = vmatpush.bf16.msra.mxu0 0
        %1093 = vmatpush.bf16.msra.mxu0 %v1084
        %1094 = vmatmul.bf16.gmra.mxu0 %v1072
        %v1095 = vpop.f32.mrf.mxu0
        %v1096 = vadd.f32 0.0, %v1095
        %v1097 = vpop.f32.mrf.mxu0
        %v1098 = vadd.f32 0.0, %v1097
        %1099 = vmatmul.bf16.gmra.mxu0 %v1075
        %v1100 = vpop.f32.mrf.mxu0
        %v1101 = vadd.f32 0.0, %v1100
        %v1102 = vpop.f32.mrf.mxu0
        %v1103 = vadd.f32 0.0, %v1102
        %1104 = vmatmul.bf16.gmra.mxu0 %v1078
        %v1105 = vpop.f32.mrf.mxu0
        %v1106 = vadd.f32 0.0, %v1105
        %v1107 = vpop.f32.mrf.mxu0
        %v1108 = vadd.f32 0.0, %v1107
        %1109 = vmatmul.bf16.gmra.mxu0 %v1081
        %v1110 = vpop.f32.mrf.mxu0
        %v1111 = vadd.f32 0.0, %v1110
        %v1112 = vpop.f32.mrf.mxu0
        %v1113 = vadd.f32 0.0, %v1112
        %1114 = vdwg.mxu0
        %v1115 = vadd.f32 %v921, %v1096
        %v1116 = vadd.f32 %v922, %v1098
        %v1117 = vadd.f32 %v923, %v1101
        %v1118 = vadd.f32 %v924, %v1103
        %v1119 = vadd.f32 %v925, %v1106
        %v1120 = vadd.f32 %v926, %v1108
        %v1121 = vadd.f32 %v927, %v1111
        %v1122 = vadd.f32 %v928, %v1113
        %v1123 = vld [vmem:[%s411] sm:$0xe]
        %v1124 = vld [vmem:[%s411 + $0x8] sm:$0xe]
        %v1125 = vld [vmem:[%s411 + $0x10] sm:$0xe]
        %v1126 = vld [vmem:[%s411 + $0x18] sm:$0xe]
        %v1127 = vld [vmem:[%s411 + $0x20] sm:$0xe]
        %v1128 = vld [vmem:[%s411 + $0x28] sm:$0xe]
        %v1129 = vld [vmem:[%s411 + $0x30] sm:$0xe]
        %v1130 = vld [vmem:[%s411 + $0x38] sm:$0xe]
        %v1147 = vrot.slane %v1123, 5
        %v1148 = vrot.slane %v1147, 4
        %v1149 = vrot.slane %v930, 5
        %v1150 = vsel %vm748, %v1148, %v1149
        %v1151 = vrot.slane %v1124, 5
        %v1152 = vrot.slane %v1151, 4
        %v1153 = vrot.slane %v932, 5
        %v1154 = vsel %vm748, %v1152, %v1153
        %v1155 = vrot.slane %v1125, 5
        %v1156 = vrot.slane %v1155, 4
        %v1157 = vrot.slane %v934, 5
        %v1158 = vsel %vm748, %v1156, %v1157
        %v1159 = vrot.slane %v1126, 5
        %v1160 = vrot.slane %v1159, 4
        %v1161 = vrot.slane %v936, 5
        %v1162 = vsel %vm748, %v1160, %v1161
        %v1163 = vrot.slane %v1127, 5
        %v1164 = vrot.slane %v1163, 4
        %v1165 = vrot.slane %v938, 5
        %v1166 = vsel %vm748, %v1164, %v1165
        %v1167 = vrot.slane %v1128, 5
        %v1168 = vrot.slane %v1167, 4
        %v1169 = vrot.slane %v940, 5
        %v1170 = vsel %vm748, %v1168, %v1169
        %v1171 = vrot.slane %v1129, 5
        %v1172 = vrot.slane %v1171, 4
        %v1173 = vrot.slane %v942, 5
        %v1174 = vsel %vm748, %v1172, %v1173
        %v1175 = vrot.slane %v1130, 5
        %v1176 = vrot.slane %v1175, 4
        %v1177 = vrot.slane %v944, 5
        %v1178 = vsel %vm748, %v1176, %v1177
        %s1179 = scalar_lea.vmem %s2, 20
        %v1180 = vld [vmem:[%s1179] sm:$0xf]
        %v1181 = vunpack.c.l.b16 %v1150
        %v1182 = vunpack.c.l.b16 %v1154
        %v1183 = vunpack.c.l.b16 %v1158
        %v1184 = vunpack.c.l.b16 %v1162
        %v1185 = vunpack.c.l.b16 %v1166
        %v1186 = vunpack.c.l.b16 %v1170
        %v1187 = vunpack.c.l.b16 %v1174
        %v1188 = vunpack.c.l.b16 %v1178
        %v1189 = vpack.c.b16 %v1182, %v1181
        %v1190 = vpack.c.b16 %v1184, %v1183
        %v1191 = vpack.c.b16 %v1186, %v1185
        %v1192 = vpack.c.b16 %v1188, %v1187
        %v1194 = vsel %vm612, %v1189, 0
        %v1197 = vsel %vm612, %v1190, 0
        %v1200 = vsel %vm612, %v1191, 0
        %v1203 = vsel %vm612, %v1192, 0
        %v1206 = vsel %vm625, %v1180, 0
        %1208 = vmatpush.bf16.msra.mxu0 0
        %1209 = vmatpush.bf16.msra.mxu0 0
        %1210 = vmatpush.bf16.msra.mxu0 0
        %1211 = vmatpush.bf16.msra.mxu0 0
        %1212 = vmatpush.bf16.msra.mxu0 0
        %1213 = vmatpush.bf16.msra.mxu0 0
        %1214 = vmatpush.bf16.msra.mxu0 0
        %1215 = vmatpush.bf16.msra.mxu0 %v1206
        %1216 = vmatmul.bf16.gmra.mxu0 %v1194
        %v1217 = vpop.f32.mrf.mxu0
        %v1218 = vadd.f32 0.0, %v1217
        %v1219 = vpop.f32.mrf.mxu0
        %v1220 = vadd.f32 0.0, %v1219
        %1221 = vmatmul.bf16.gmra.mxu0 %v1197
        %v1222 = vpop.f32.mrf.mxu0
        %v1223 = vadd.f32 0.0, %v1222
        %v1224 = vpop.f32.mrf.mxu0
        %v1225 = vadd.f32 0.0, %v1224
        %1226 = vmatmul.bf16.gmra.mxu0 %v1200
        %v1227 = vpop.f32.mrf.mxu0
        %v1228 = vadd.f32 0.0, %v1227
        %v1229 = vpop.f32.mrf.mxu0
        %v1230 = vadd.f32 0.0, %v1229
        %1231 = vmatmul.bf16.gmra.mxu0 %v1203
        %v1232 = vpop.f32.mrf.mxu0
        %v1233 = vadd.f32 0.0, %v1232
        %v1234 = vpop.f32.mrf.mxu0
        %v1235 = vadd.f32 0.0, %v1234
        %1236 = vdwg.mxu0
        %v1237 = vadd.f32 %v1115, %v1218
        %v1238 = vadd.f32 %v1116, %v1220
        %v1239 = vadd.f32 %v1117, %v1223
        %v1240 = vadd.f32 %v1118, %v1225
        %v1241 = vadd.f32 %v1119, %v1228
        %v1242 = vadd.f32 %v1120, %v1230
        %v1243 = vadd.f32 %v1121, %v1233
        %v1244 = vadd.f32 %v1122, %v1235
        %s1245 = scalar_lea.vmem [#allocation2], 16
        %v1246 = vld [vmem:[%s1245] sm:$0xf]
        %v1247 = vld [vmem:[%s1245 + $0x8] sm:$0xf]
        %v1248 = vld [vmem:[%s1245 + $0x10] sm:$0xf]
        %v1249 = vld [vmem:[%s1245 + $0x18] sm:$0xf]
        %v1250 = vld [vmem:[%s1245 + $0x20] sm:$0xf]
        %v1251 = vld [vmem:[%s1245 + $0x28] sm:$0xf]
        %v1252 = vld [vmem:[%s1245 + $0x30] sm:$0xf]
        %v1253 = vld [vmem:[%s1245 + $0x38] sm:$0xf]
        %s1254 = scalar_lea.vmem %s2, 24
        %v1255 = vld [vmem:[%s1254] sm:$0xf]
        %v1264 = vunpack.c.l.b16 %v1246
        %v1265 = vunpack.c.l.b16 %v1247
        %v1266 = vunpack.c.l.b16 %v1248
        %v1267 = vunpack.c.l.b16 %v1249
        %v1268 = vunpack.c.l.b16 %v1250
        %v1269 = vunpack.c.l.b16 %v1251
        %v1270 = vunpack.c.l.b16 %v1252
        %v1271 = vunpack.c.l.b16 %v1253
        %v1272 = vpack.c.b16 %v1265, %v1264
        %v1273 = vpack.c.b16 %v1267, %v1266
        %v1274 = vpack.c.b16 %v1269, %v1268
        %v1275 = vpack.c.b16 %v1271, %v1270
        %v1277 = vsel %vm612, %v1272, 0
        %v1280 = vsel %vm612, %v1273, 0
        %v1283 = vsel %vm612, %v1274, 0
        %v1286 = vsel %vm612, %v1275, 0
        %v1289 = vsel %vm625, %v1255, 0
        %1291 = vmatpush.bf16.msra.mxu0 0
        %1292 = vmatpush.bf16.msra.mxu0 0
        %1293 = vmatpush.bf16.msra.mxu0 0
        %1294 = vmatpush.bf16.msra.mxu0 0
        %1295 = vmatpush.bf16.msra.mxu0 0
        %1296 = vmatpush.bf16.msra.mxu0 0
        %1297 = vmatpush.bf16.msra.mxu0 0
        %1298 = vmatpush.bf16.msra.mxu0 %v1289
        %1299 = vmatmul.bf16.gmra.mxu0 %v1277
        %v1300 = vpop.f32.mrf.mxu0
        %v1301 = vadd.f32 0.0, %v1300
        %v1302 = vpop.f32.mrf.mxu0
        %v1303 = vadd.f32 0.0, %v1302
        %1304 = vmatmul.bf16.gmra.mxu0 %v1280
        %v1305 = vpop.f32.mrf.mxu0
        %v1306 = vadd.f32 0.0, %v1305
        %v1307 = vpop.f32.mrf.mxu0
        %v1308 = vadd.f32 0.0, %v1307
        %1309 = vmatmul.bf16.gmra.mxu0 %v1283
        %v1310 = vpop.f32.mrf.mxu0
        %v1311 = vadd.f32 0.0, %v1310
        %v1312 = vpop.f32.mrf.mxu0
        %v1313 = vadd.f32 0.0, %v1312
        %1314 = vmatmul.bf16.gmra.mxu0 %v1286
        %v1315 = vpop.f32.mrf.mxu0
        %v1316 = vadd.f32 0.0, %v1315
        %v1317 = vpop.f32.mrf.mxu0
        %v1318 = vadd.f32 0.0, %v1317
        %1319 = vdwg.mxu0
        %v1320 = vadd.f32 %v1237, %v1301
        %v1321 = vadd.f32 %v1238, %v1303
        %v1322 = vadd.f32 %v1239, %v1306
        %v1323 = vadd.f32 %v1240, %v1308
        %v1324 = vadd.f32 %v1241, %v1311
        %v1325 = vadd.f32 %v1242, %v1313
        %v1326 = vadd.f32 %v1243, %v1316
        %v1327 = vadd.f32 %v1244, %v1318
        %v1328 = vld [vmem:[%s1245] sm:$0xf]
        %v1329 = vld [vmem:[%s1245 + $0x4] sm:$0x1]
        %v1330 = vld [vmem:[%s1245 + $0x8] sm:$0xf]
        %v1331 = vld [vmem:[%s1245 + $0xc] sm:$0x1]
        %v1332 = vld [vmem:[%s1245 + $0x10] sm:$0xf]
        %v1333 = vld [vmem:[%s1245 + $0x14] sm:$0x1]
        %v1334 = vld [vmem:[%s1245 + $0x18] sm:$0xf]
        %v1335 = vld [vmem:[%s1245 + $0x1c] sm:$0x1]
        %v1336 = vld [vmem:[%s1245 + $0x20] sm:$0xf]
        %v1337 = vld [vmem:[%s1245 + $0x24] sm:$0x1]
        %v1338 = vld [vmem:[%s1245 + $0x28] sm:$0xf]
        %v1339 = vld [vmem:[%s1245 + $0x2c] sm:$0x1]
        %v1340 = vld [vmem:[%s1245 + $0x30] sm:$0xf]
        %v1341 = vld [vmem:[%s1245 + $0x34] sm:$0x1]
        %v1342 = vld [vmem:[%s1245 + $0x38] sm:$0xf]
        %v1343 = vld [vmem:[%s1245 + $0x3c] sm:$0x1]
        %v1345 = vshrl.u32 %v1328, 16
        %v1347 = vrot.slane %v1345, 4
        %v1348 = vshll.u32 %v1328, 16
        %v1350 = vrot.slane %v1348, 5
        %v1351 = vor.u32 %v1347, %v1350
        %v1352 = vrot.slane %v1351, 4
        %v1354 = vshll.u32 %v1329, 16
        %v1356 = vrot.slane %v1354, 5
        %v1357 = vsel %vm485, %v1352, %v1356
        %v1359 = vshrl.u32 %v1330, 16
        %v1361 = vrot.slane %v1359, 4
        %v1362 = vshll.u32 %v1330, 16
        %v1364 = vrot.slane %v1362, 5
        %v1365 = vor.u32 %v1361, %v1364
        %v1366 = vrot.slane %v1365, 4
        %v1368 = vshll.u32 %v1331, 16
        %v1370 = vrot.slane %v1368, 5
        %v1371 = vsel %vm485, %v1366, %v1370
        %v1373 = vshrl.u32 %v1332, 16
        %v1375 = vrot.slane %v1373, 4
        %v1376 = vshll.u32 %v1332, 16
        %v1378 = vrot.slane %v1376, 5
        %v1379 = vor.u32 %v1375, %v1378
        %v1380 = vrot.slane %v1379, 4
        %v1382 = vshll.u32 %v1333, 16
        %v1384 = vrot.slane %v1382, 5
        %v1385 = vsel %vm485, %v1380, %v1384
        %v1387 = vshrl.u32 %v1334, 16
        %v1389 = vrot.slane %v1387, 4
        %v1390 = vshll.u32 %v1334, 16
        %v1392 = vrot.slane %v1390, 5
        %v1393 = vor.u32 %v1389, %v1392
        %v1394 = vrot.slane %v1393, 4
        %v1396 = vshll.u32 %v1335, 16
        %v1398 = vrot.slane %v1396, 5
        %v1399 = vsel %vm485, %v1394, %v1398
        %v1401 = vshrl.u32 %v1336, 16
        %v1403 = vrot.slane %v1401, 4
        %v1404 = vshll.u32 %v1336, 16
        %v1406 = vrot.slane %v1404, 5
        %v1407 = vor.u32 %v1403, %v1406
        %v1408 = vrot.slane %v1407, 4
        %v1410 = vshll.u32 %v1337, 16
        %v1412 = vrot.slane %v1410, 5
        %v1413 = vsel %vm485, %v1408, %v1412
        %v1415 = vshrl.u32 %v1338, 16
        %v1417 = vrot.slane %v1415, 4
        %v1418 = vshll.u32 %v1338, 16
        %v1420 = vrot.slane %v1418, 5
        %v1421 = vor.u32 %v1417, %v1420
        %v1422 = vrot.slane %v1421, 4
        %v1424 = vshll.u32 %v1339, 16
        %v1426 = vrot.slane %v1424, 5
        %v1427 = vsel %vm485, %v1422, %v1426
        %v1429 = vshrl.u32 %v1340, 16
        %v1431 = vrot.slane %v1429, 4
        %v1432 = vshll.u32 %v1340, 16
        %v1434 = vrot.slane %v1432, 5
        %v1435 = vor.u32 %v1431, %v1434
        %v1436 = vrot.slane %v1435, 4
        %v1438 = vshll.u32 %v1341, 16
        %v1440 = vrot.slane %v1438, 5
        %v1441 = vsel %vm485, %v1436, %v1440
        %v1443 = vshrl.u32 %v1342, 16
        %v1445 = vrot.slane %v1443, 4
        %v1446 = vshll.u32 %v1342, 16
        %v1448 = vrot.slane %v1446, 5
        %v1449 = vor.u32 %v1445, %v1448
        %v1450 = vrot.slane %v1449, 4
        %v1452 = vshll.u32 %v1343, 16
        %v1454 = vrot.slane %v1452, 5
        %v1455 = vsel %vm485, %v1450, %v1454
        %s1456 = scalar_lea.vmem %s2, 28
        %v1457 = vld [vmem:[%s1456] sm:$0xf]
        %v1458 = vunpack.c.l.b16 %v1357
        %v1459 = vunpack.c.l.b16 %v1371
        %v1460 = vunpack.c.l.b16 %v1385
        %v1461 = vunpack.c.l.b16 %v1399
        %v1462 = vunpack.c.l.b16 %v1413
        %v1463 = vunpack.c.l.b16 %v1427
        %v1464 = vunpack.c.l.b16 %v1441
        %v1465 = vunpack.c.l.b16 %v1455
        %v1466 = vpack.c.b16 %v1459, %v1458
        %v1467 = vpack.c.b16 %v1461, %v1460
        %v1468 = vpack.c.b16 %v1463, %v1462
        %v1469 = vpack.c.b16 %v1465, %v1464
        %v1471 = vsel %vm612, %v1466, 0
        %v1474 = vsel %vm612, %v1467, 0
        %v1477 = vsel %vm612, %v1468, 0
        %v1480 = vsel %vm612, %v1469, 0
        %v1483 = vsel %vm625, %v1457, 0
        %1485 = vmatpush.bf16.msra.mxu0 0
        %1486 = vmatpush.bf16.msra.mxu0 0
        %1487 = vmatpush.bf16.msra.mxu0 0
        %1488 = vmatpush.bf16.msra.mxu0 0
        %1489 = vmatpush.bf16.msra.mxu0 0
        %1490 = vmatpush.bf16.msra.mxu0 0
        %1491 = vmatpush.bf16.msra.mxu0 0
        %1492 = vmatpush.bf16.msra.mxu0 %v1483
        %1493 = vmatmul.bf16.gmra.mxu0 %v1471
        %v1494 = vpop.f32.mrf.mxu0
        %v1495 = vadd.f32 0.0, %v1494
        %v1496 = vpop.f32.mrf.mxu0
        %v1497 = vadd.f32 0.0, %v1496
        %1498 = vmatmul.bf16.gmra.mxu0 %v1474
        %v1499 = vpop.f32.mrf.mxu0
        %v1500 = vadd.f32 0.0, %v1499
        %v1501 = vpop.f32.mrf.mxu0
        %v1502 = vadd.f32 0.0, %v1501
        %1503 = vmatmul.bf16.gmra.mxu0 %v1477
        %v1504 = vpop.f32.mrf.mxu0
        %v1505 = vadd.f32 0.0, %v1504
        %v1506 = vpop.f32.mrf.mxu0
        %v1507 = vadd.f32 0.0, %v1506
        %1508 = vmatmul.bf16.gmra.mxu0 %v1480
        %v1509 = vpop.f32.mrf.mxu0
        %v1510 = vadd.f32 0.0, %v1509
        %v1511 = vpop.f32.mrf.mxu0
        %v1512 = vadd.f32 0.0, %v1511
        %1513 = vdwg.mxu0
        %v1514 = vadd.f32 %v1320, %v1495
        %v1515 = vadd.f32 %v1321, %v1497
        %v1516 = vadd.f32 %v1322, %v1500
        %v1517 = vadd.f32 %v1323, %v1502
        %v1518 = vadd.f32 %v1324, %v1505
        %v1519 = vadd.f32 %v1325, %v1507
        %v1520 = vadd.f32 %v1326, %v1510
        %v1521 = vadd.f32 %v1327, %v1512
        %v1522 = vld [vmem:[%s1245] sm:$0xe]
        %v1523 = vld [vmem:[%s1245 + $0x8] sm:$0xe]
        %v1524 = vld [vmem:[%s1245 + $0x10] sm:$0xe]
        %v1525 = vld [vmem:[%s1245 + $0x18] sm:$0xe]
        %v1526 = vld [vmem:[%s1245 + $0x20] sm:$0xe]
        %v1527 = vld [vmem:[%s1245 + $0x28] sm:$0xe]
        %v1528 = vld [vmem:[%s1245 + $0x30] sm:$0xe]
        %v1529 = vld [vmem:[%s1245 + $0x38] sm:$0xe]
        %v1546 = vrot.slane %v1522, 5
        %v1547 = vrot.slane %v1546, 4
        %v1548 = vrot.slane %v1329, 5
        %v1549 = vsel %vm748, %v1547, %v1548
        %v1550 = vrot.slane %v1523, 5
        %v1551 = vrot.slane %v1550, 4
        %v1552 = vrot.slane %v1331, 5
        %v1553 = vsel %vm748, %v1551, %v1552
        %v1554 = vrot.slane %v1524, 5
        %v1555 = vrot.slane %v1554, 4
        %v1556 = vrot.slane %v1333, 5
        %v1557 = vsel %vm748, %v1555, %v1556
        %v1558 = vrot.slane %v1525, 5
        %v1559 = vrot.slane %v1558, 4
        %v1560 = vrot.slane %v1335, 5
        %v1561 = vsel %vm748, %v1559, %v1560
        %v1562 = vrot.slane %v1526, 5
        %v1563 = vrot.slane %v1562, 4
        %v1564 = vrot.slane %v1337, 5
        %v1565 = vsel %vm748, %v1563, %v1564
        %v1566 = vrot.slane %v1527, 5
        %v1567 = vrot.slane %v1566, 4
        %v1568 = vrot.slane %v1339, 5
        %v1569 = vsel %vm748, %v1567, %v1568
        %v1570 = vrot.slane %v1528, 5
        %v1571 = vrot.slane %v1570, 4
        %v1572 = vrot.slane %v1341, 5
        %v1573 = vsel %vm748, %v1571, %v1572
        %v1574 = vrot.slane %v1529, 5
        %v1575 = vrot.slane %v1574, 4
        %v1576 = vrot.slane %v1343, 5
        %v1577 = vsel %vm748, %v1575, %v1576
        %s1578 = scalar_lea.vmem %s2, 32
        %v1579 = vld [vmem:[%s1578] sm:$0xf]
        %v1580 = vunpack.c.l.b16 %v1549
        %v1581 = vunpack.c.l.b16 %v1553
        %v1582 = vunpack.c.l.b16 %v1557
        %v1583 = vunpack.c.l.b16 %v1561
        %v1584 = vunpack.c.l.b16 %v1565
        %v1585 = vunpack.c.l.b16 %v1569
        %v1586 = vunpack.c.l.b16 %v1573
        %v1587 = vunpack.c.l.b16 %v1577
        %v1588 = vpack.c.b16 %v1581, %v1580
        %v1589 = vpack.c.b16 %v1583, %v1582
        %v1590 = vpack.c.b16 %v1585, %v1584
        %v1591 = vpack.c.b16 %v1587, %v1586
        %v1593 = vsel %vm612, %v1588, 0
        %v1596 = vsel %vm612, %v1589, 0
        %v1599 = vsel %vm612, %v1590, 0
        %v1602 = vsel %vm612, %v1591, 0
        %v1605 = vsel %vm625, %v1579, 0
        %1607 = vmatpush.bf16.msra.mxu0 0
        %1608 = vmatpush.bf16.msra.mxu0 0
        %1609 = vmatpush.bf16.msra.mxu0 0
        %1610 = vmatpush.bf16.msra.mxu0 0
        %1611 = vmatpush.bf16.msra.mxu0 0
        %1612 = vmatpush.bf16.msra.mxu0 0
        %1613 = vmatpush.bf16.msra.mxu0 0
        %1614 = vmatpush.bf16.msra.mxu0 %v1605
        %1615 = vmatmul.bf16.gmra.mxu0 %v1593
        %v1616 = vpop.f32.mrf.mxu0
        %v1617 = vadd.f32 0.0, %v1616
        %v1618 = vpop.f32.mrf.mxu0
        %v1619 = vadd.f32 0.0, %v1618
        %1620 = vmatmul.bf16.gmra.mxu0 %v1596
        %v1621 = vpop.f32.mrf.mxu0
        %v1622 = vadd.f32 0.0, %v1621
        %v1623 = vpop.f32.mrf.mxu0
        %v1624 = vadd.f32 0.0, %v1623
        %1625 = vmatmul.bf16.gmra.mxu0 %v1599
        %v1626 = vpop.f32.mrf.mxu0
        %v1627 = vadd.f32 0.0, %v1626
        %v1628 = vpop.f32.mrf.mxu0
        %v1629 = vadd.f32 0.0, %v1628
        %1630 = vmatmul.bf16.gmra.mxu0 %v1602
        %v1631 = vpop.f32.mrf.mxu0
        %v1632 = vadd.f32 0.0, %v1631
        %v1633 = vpop.f32.mrf.mxu0
        %v1634 = vadd.f32 0.0, %v1633
        %1635 = vdwg.mxu0
        %v1636 = vadd.f32 %v1514, %v1617
        %v1637 = vadd.f32 %v1515, %v1619
        %v1638 = vadd.f32 %v1516, %v1622
        %v1639 = vadd.f32 %v1517, %v1624
        %v1640 = vadd.f32 %v1518, %v1627
        %v1641 = vadd.f32 %v1519, %v1629
        %v1642 = vadd.f32 %v1520, %v1632
        %v1643 = vadd.f32 %v1521, %v1634
        %v1644 = vld [vmem:[%s250] sm:$0xf]
        %v1645 = vld [vmem:[%s250 + $0x4] sm:$0xf]
        %v1646 = vld [vmem:[%s250 + $0x8] sm:$0xf]
        %v1647 = vld [vmem:[%s250 + $0xc] sm:$0xf]
        %v1648 = vld [vmem:[%s250 + $0x10] sm:$0xf]
        %v1649 = vld [vmem:[%s250 + $0x14] sm:$0xf]
        %v1650 = vld [vmem:[%s250 + $0x18] sm:$0xf]
        %v1651 = vld [vmem:[%s250 + $0x1c] sm:$0xf]
        %v1652 = vunpack.c.l.bf16 %v1644
        %v1653 = vunpack.c.l.bf16 %v1645
        %v1654 = vunpack.c.l.bf16 %v1646
        %v1655 = vunpack.c.l.bf16 %v1647
        %v1656 = vunpack.c.l.bf16 %v1648
        %v1657 = vunpack.c.l.bf16 %v1649
        %v1658 = vunpack.c.l.bf16 %v1650
        %v1659 = vunpack.c.l.bf16 %v1651
        %v1660 = vadd.f32 %v1636, %v1652
        %v1661 = vadd.f32 %v1637, %v1653
        %v1662 = vadd.f32 %v1638, %v1654
        %v1663 = vadd.f32 %v1639, %v1655
        %v1664 = vadd.f32 %v1640, %v1656
        %v1665 = vadd.f32 %v1641, %v1657
        %v1666 = vadd.f32 %v1642, %v1658
        %v1667 = vadd.f32 %v1643, %v1659
        %v1668 = vpack.c.bf16 %v1660, %v1660
        %v1669 = vpack.c.bf16 %v1661, %v1661
        %v1670 = vpack.c.bf16 %v1662, %v1662
        %v1671 = vpack.c.bf16 %v1663, %v1663
        %v1672 = vpack.c.bf16 %v1664, %v1664
        %v1673 = vpack.c.bf16 %v1665, %v1665
        %v1674 = vpack.c.bf16 %v1666, %v1666
        %v1675 = vpack.c.bf16 %v1667, %v1667
        %1676 = vst.msk [vmem:[%s255] sm:$0xf] %vm257, %v1668
        %1677 = vst.msk [vmem:[%s255 + $0x4] sm:$0xf] %vm257, %v1669
        %1678 = vst.msk [vmem:[%s255 + $0x8] sm:$0xf] %vm257, %v1670
        %1679 = vst.msk [vmem:[%s255 + $0xc] sm:$0xf] %vm257, %v1671
        %1680 = vst.msk [vmem:[%s255 + $0x10] sm:$0xf] %vm257, %v1672
        %1681 = vst.msk [vmem:[%s255 + $0x14] sm:$0xf] %vm257, %v1673
        %1682 = vst.msk [vmem:[%s255 + $0x18] sm:$0xf] %vm257, %v1674
        %1683 = vst.msk [vmem:[%s255 + $0x1c] sm:$0xf] %vm257, %v1675
        %v1684 = vsel %vm612, %v1660, 0.0
        %v1685 = vsel %vm612, %v1661, 0.0
        %v1686 = vadd.f32 %v1684, %v1685
        %v1687 = vsel %vm612, %v1662, 0.0
        %v1688 = vadd.f32 %v1686, %v1687
        %v1689 = vsel %vm612, %v1663, 0.0
        %v1690 = vadd.f32 %v1688, %v1689
        %v1691 = vsel %vm612, %v1664, 0.0
        %v1692 = vadd.f32 %v1690, %v1691
        %v1693 = vsel %vm612, %v1665, 0.0
        %v1694 = vadd.f32 %v1692, %v1693
        %v1695 = vsel %vm612, %v1666, 0.0
        %v1696 = vadd.f32 %v1694, %v1695
        %v1697 = vsel %vm612, %v1667, 0.0
        %v1698 = vadd.f32 %v1696, %v1697
        %v1699 = vrot.slane %v1698, 4
        %v1700 = vadd.f32 %v1698, %v1699
        %v1701 = vrot.slane %v1700, 2
        %v1702 = vadd.f32 %v1700, %v1701
        %v1703 = vrot.slane %v1702, 1
        %v1704 = vadd.f32 %v1702, %v1703
        %1705 = vst.msk [vmem:[%s240] sm:$0x1] %vm259, %v1704
        %v1706 = vmul.f32 %v1660, %v1660
        %v1707 = vmul.f32 %v1661, %v1661
        %v1708 = vmul.f32 %v1662, %v1662
        %v1709 = vmul.f32 %v1663, %v1663
        %v1710 = vmul.f32 %v1664, %v1664
        %v1711 = vmul.f32 %v1665, %v1665
        %v1712 = vmul.f32 %v1666, %v1666
        %v1713 = vmul.f32 %v1667, %v1667
        %v1714 = vsel %vm612, %v1706, 0.0
        %v1715 = vsel %vm612, %v1707, 0.0
        %v1716 = vadd.f32 %v1714, %v1715
        %v1717 = vsel %vm612, %v1708, 0.0
        %v1718 = vadd.f32 %v1716, %v1717
        %v1719 = vsel %vm612, %v1709, 0.0
        %v1720 = vadd.f32 %v1718, %v1719
        %v1721 = vsel %vm612, %v1710, 0.0
        %v1722 = vadd.f32 %v1720, %v1721
        %v1723 = vsel %vm612, %v1711, 0.0
        %v1724 = vadd.f32 %v1722, %v1723
        %v1725 = vsel %vm612, %v1712, 0.0
        %v1726 = vadd.f32 %v1724, %v1725
        %v1727 = vsel %vm612, %v1713, 0.0
        %v1728 = vadd.f32 %v1726, %v1727
        %v1729 = vrot.slane %v1728, 4
        %v1730 = vadd.f32 %v1728, %v1729
        %v1731 = vrot.slane %v1730, 2
        %v1732 = vadd.f32 %v1730, %v1731
        %v1733 = vrot.slane %v1732, 1
        %v1734 = vadd.f32 %v1732, %v1733
        %1735 = vst.msk [vmem:[%s240 + $0x1] sm:$0x1] %vm259, %v1734
        %p1736 = scmp.lt.s32.totalorder %s20, 1
        %s1737 = scalar_select %p1736, %s20, 1
        %s1738 = smul.addr %s1737, 8
        %s1739 = smul.addr %s1738, 4
        %s1740 = scalar_lea.vmem %s4, %s1739
        %s1741 = sand.u32 %s148, 1
        %s1742 = scalar_lea.sflag [#allocation4], %s1741
        %s1743 = sand.u32 %s148, 1
        %s1744 = smul.addr %s1743, 2
        %s1745 = scalar_lea.vmem [#allocation3], %s1744
        // Predicated region
        $region37: #{_lambda_.9} parent=35 // pred_check
          %p1746 = pneg %p132
        $region38: #{_lambda_.9} parent=35 // pred_check_branch
          %1748 = sbr.rel (%p1746) target = $region40
        $region39: #{_lambda_.9} parent=35 // pred_region
          _
        $region40: #{_lambda_.9} parent=35 // pred_fallthru
          _
        // Predicated region
        $region41: #{_lambda_.9} parent=35 // pred_check
          %p1749 = pneg %p158
        $region42: #{_lambda_.9} parent=35 // pred_check_branch
          %1751 = sbr.rel (%p1749) target = $region44
        $region43: #{_lambda_.9} parent=35 // pred_region
          %1753 = vsyncadd %s1742, 0
          %s1754 = smul.addr %s20, 2
          %s1755 = scalar_lea.hbm %s5, %s1754
          %s1757 = sshll.u32 %s1745, 4
          %s1758 = int_to_ptr.vmem [resolvable:$true] %s1757
          %s1759 = sshll.u32 %s1755, 4
          %s1760 = int_to_ptr.hbm [resolvable:$true] %s1759
          %1762 = dma.vmem_to_hbm [thread:$0]  %s1758, 32, %s1760, %s1742
        $region44: #{_lambda_.9} parent=35 // pred_fallthru
          _
      $region36: #{_lambda_.9} parent=5 // pred_fallthru
        _
      %p1763 = scmp.le.s32.totalorder 2, %s15
      // Predicated region
      $region45: #{_lambda_.9} parent=5 // pred_check
        %p1764 = pneg %p1763
      $region46: #{_lambda_.9} parent=5 // pred_check_branch
        %1766 = sbr.rel (%p1764) target = $region48
      $region47: #{_lambda_.9} parent=5 // pred_region
        %s1767 = ssub.s32 %s15, 2
        // Predicated region
        $region49: #{_lambda_.9} parent=47 // pred_check
          %p1768 = pneg %p138
        $region50: #{_lambda_.9} parent=47 // pred_check_branch
          %1770 = sbr.rel (%p1768) target = $region52
        $region51: #{_lambda_.9} parent=47 // pred_region
          %p1771 = scmp.lt.s32.totalorder %s21, 1
          %s1772 = scalar_select %p1771, %s21, 1
          %s1773 = smul.addr %s1772, 8
          %s1774 = smul.addr %s1773, 4
          %s1775 = scalar_lea.vmem %s4, %s1774
        $region52: #{_lambda_.9} parent=47 // pred_fallthru
          _
        // Predicated region
        $region53: #{_lambda_.9} parent=47 // pred_check
          %p1776 = pneg %p164
        $region54: #{_lambda_.9} parent=47 // pred_check_branch
          %1778 = sbr.rel (%p1776) target = $region56
        $region55: #{_lambda_.9} parent=47 // pred_region
          %s1779 = sand.u32 %s149, 1
          %s1780 = scalar_lea.sflag [#allocation4], %s1779
          %s1781 = sand.u32 %s149, 1
          %s1782 = smul.addr %s1781, 2
          %s1783 = scalar_lea.vmem [#allocation3], %s1782
          %1785 = dma.done %s1780, 32
        $region56: #{_lambda_.9} parent=47 // pred_fallthru
          _
      $region48: #{_lambda_.9} parent=5 // pred_fallthru
        _
    $region6: #{_lambda_.9} parent=1 // loop_footer
      %s19 = sadd.s32 1, %s15
    $region7: #{_lambda_.9} parent=1 // loop_footer_branch
      %14 = sbr.rel target = $region3
    $region8: #{_lambda_.9} parent=1 // loop_exit
      _
    %1786 = vsyncpa [#allocation4], 1
    %s1787 = scalar_lea.sflag [#allocation4], 1
    %1788 = vsyncpa %s1787, 1

</llo_original>
